<compile_context>
chip_gen: v6e
topology: v6e:2x2x1
jax: 0.10.0
libtpu: 0.0.40
codegen_flags: <defaults>
</compile_context>

<pallas_src>
import jax
import jax.numpy as jnp
from jax import lax
from jax.experimental import pallas as pl
from jax.experimental.pallas import tpu as pltpu

NEG_SLOPE = 0.01                      # nn.LeakyReLU default negative_slope
G_CH_1X, G_CH_2X, G_CH_4X = 48, 64, 96
CDT = jnp.bfloat16                    # MXU operand / stored-activation dtype


def _lrelu(x):
    # LeakyReLU(0.01): one mul + one max (vs cmp+mul+select).
    return jnp.maximum(x, NEG_SLOPE * x)


# --------------------------- in-kernel conv helpers ---------------------------

def _pad1_hw(x):
    """Zero-pad 1 px on each side of the (H, W) dims of a (H, W, C) VMEM value."""
    H, W, C = x.shape
    zr = jnp.zeros((1, W, C), x.dtype)
    x = jnp.concatenate([zr, x, zr], axis=0)            # (H+2, W, C)
    zc = jnp.zeros((H + 2, 1, C), x.dtype)
    return jnp.concatenate([zc, x, zc], axis=1)         # (H+2, W+2, C)


def _conv3x3_value(x, w3_ref, b_ref):
    """3x3 / stride 1 / pad 1 on an in-VMEM value x: (H, W, Cin) bf16 -> (H, W, Cout) f32.

    w3_ref: (3, 3*Cin, Cout) bf16 with K ordered (kx, cin); b_ref: (1, Cout) f32.
    Per ky: ONE matmul with K = 3*Cin (kx slabs lane-concatenated once, outside the
    ky loop), f32 accumulation seeded from the bias.
    """
    H, W, Cin = x.shape
    Cout = w3_ref.shape[-1]
    xp = _pad1_hw(x)                                     # (H+2, W+2, Cin), halo in VMEM
    xk = jnp.concatenate(                                # (H+2, W, 3*Cin)
        [xp[:, 0:W, :], xp[:, 1:W + 1, :], xp[:, 2:W + 2, :]], axis=-1)
    acc = jnp.broadcast_to(b_ref[...], (H * W, Cout))    # f32, init from bias
    for ky in range(3):                                  # chained acc + dot (MRB on v7x)
        slab = xk[ky:ky + H].reshape(H * W, 3 * Cin)
        acc = acc + jnp.dot(slab, w3_ref[ky], preferred_element_type=jnp.float32)
    return acc.reshape(H, W, Cout)


def _conv3x3_s2_value(ph_ref, w3_ref, b_ref):
    """3x3 / stride 2 / pad 1, computed directly from the 4 stride-2 phases.

    ph_ref: (4, Ho+1, Wo+1, Cin) bf16; phase p = 2*py+px holds x_pad[py::2, px::2, :].
    Output pixel (i, j), tap (ky, kx): x_pad[2i+ky, 2j+kx] = phase[2*(ky%2)+(kx%2)]
    [i + ky//2, j + kx//2].  Per ky: ONE matmul with K = 3*Cin (kx order 0,1,2 matches
    the (3, 3*Cin, Cout) weight layout).  Returns (Ho, Wo, Cout) f32.
    """
    _, Hp, Wp, Cin = ph_ref.shape
    Ho, Wo = Hp - 1, Wp - 1
    Cout = w3_ref.shape[-1]
    ph = ph_ref[...]
    acc = jnp.broadcast_to(b_ref[...], (Ho * Wo, Cout))
    for ky in range(3):
        py, dy = ky % 2, ky // 2
        slab = jnp.concatenate(
            [ph[2 * py + 0, dy:dy + Ho, 0:Wo, :],        # kx = 0
             ph[2 * py + 1, dy:dy + Ho, 0:Wo, :],        # kx = 1
             ph[2 * py + 0, dy:dy + Ho, 1:Wo + 1, :]],   # kx = 2
            axis=-1)                                     # (Ho, Wo, 3*Cin)
        acc = acc + jnp.dot(slab.reshape(Ho * Wo, 3 * Cin), w3_ref[ky],
                            preferred_element_type=jnp.float32)
    return acc.reshape(Ho, Wo, Cout)


def _res_block_value(l, w1_ref, b1_ref, w2_ref, b2_ref):
    """DCVC ResBlock on an f32 VMEM value: l + conv2(lrelu(conv1(lrelu(l))))."""
    a = _lrelu(l).astype(CDT)                 # activation in f32, downcast for MXU
    y = _conv3x3_value(a, w1_ref, b1_ref)
    a2 = _lrelu(y).astype(CDT)
    return _conv3x3_value(a2, w2_ref, b2_ref) + l


# --------------------------------- kernels ------------------------------------

def _level1_kernel(x_ref, w0, b0, w1, b1, w2, b2, o_ref):
    # conv1 (s1) + ResBlock fused; x_ref (H, W, 48), o_ref (H, W, 48).
    l = _conv3x3_value(x_ref[...], w0, b0)
    z = _res_block_value(l, w1, b1, w2, b2)
    o_ref[...] = z.astype(o_ref.dtype)


def _level_s2_kernel(ph_ref, w0, b0, w1, b1, w2, b2, o_ref):
    # conv (s2, from phases) + ResBlock fused; ph_ref (4, Ho+1, Wo+1, Cin).
    l = _conv3x3_s2_value(ph_ref, w0, b0)
    z = _res_block_value(l, w1, b1, w2, b2)
    o_ref[...] = z.astype(o_ref.dtype)


# --------------------------------- wrappers ------------------------------------

def _prep_conv(w, b):
    """(3,3,Cin,Cout) HWIO f32 -> ((3, 3*Cin, Cout) bf16, (1, Cout) f32)."""
    _, _, cin, cout = w.shape
    return (w.reshape(3, 3 * cin, cout).astype(CDT),
            b.reshape(1, cout).astype(jnp.float32))


def _full_spec(shape):
    nd = len(shape)
    return pl.BlockSpec(shape, lambda n, _nd=nd: (0,) * _nd)


def _level_call(kernel, x, x_spec, out_shape, out_spec, conv_p, res_p):
    w0, b0 = _prep_conv(*conv_p)
    w1, b1 = _prep_conv(*res_p["conv1"])
    w2, b2 = _prep_conv(*res_p["conv2"])
    N = out_shape.shape[0]
    return pl.pallas_call(
        kernel,
        out_shape=out_shape,
        grid=(N,),
        in_specs=[x_spec,
                  _full_spec(w0.shape), _full_spec(b0.shape),
                  _full_spec(w1.shape), _full_spec(b1.shape),
                  _full_spec(w2.shape), _full_spec(b2.shape)],
        out_specs=out_spec,
        compiler_params=pltpu.CompilerParams(dimension_semantics=("parallel",)),
    )(x, w0, b0, w1, b1, w2, b2)


def level_s1(conv_p, res_p, x):
    """Stride-1 conv + ResBlock fused in one pallas_call (grid over batch)."""
    N, H, W, Cin = x.shape
    Cout = conv_p[0].shape[-1]
    x_spec = pl.BlockSpec((pl.Squeezed(), H, W, Cin), lambda n: (n, 0, 0, 0))
    out_spec = pl.BlockSpec((pl.Squeezed(), H, W, Cout), lambda n: (n, 0, 0, 0))
    out_shape = jax.ShapeDtypeStruct((N, H, W, Cout), CDT)
    return _level_call(_level1_kernel, x.astype(CDT), x_spec, out_shape, out_spec,
                       conv_p, res_p)


def level_s2(conv_p, res_p, x):
    """Stride-2 conv + ResBlock fused in one pallas_call.

    The 4 stride-2 phases of the zero-padded input are built in a single fused XLA
    pass with a LEADING phase axis, so in-kernel phase selection is a cheap
    leading-dim index and there is no wasted stride-2 compute.
    """
    N, H, W, Cin = x.shape
    assert H % 2 == 0 and W % 2 == 0
    Ho, Wo = H // 2, W // 2
    Hp, Wp = Ho + 1, Wo + 1
    Cout = conv_p[0].shape[-1]
    xp = jnp.pad(x.astype(CDT), ((0, 0), (1, 1), (1, 1), (0, 0)))
    ph = jnp.stack([xp[:, a::2, b::2, :] for a in (0, 1) for b in (0, 1)], axis=1)
    ph_spec = pl.BlockSpec((pl.Squeezed(), 4, Hp, Wp, Cin),
                           lambda n: (n, 0, 0, 0, 0))
    out_spec = pl.BlockSpec((pl.Squeezed(), Ho, Wo, Cout), lambda n: (n, 0, 0, 0))
    out_shape = jax.ShapeDtypeStruct((N, Ho, Wo, Cout), CDT)
    return _level_call(_level_s2_kernel, ph, ph_spec, out_shape, out_spec,
                       conv_p, res_p)


def feature_extractor(params, feature):
    l1 = level_s1(params["conv1"], params["res1"], feature)
    l2 = level_s2(params["conv2"], params["res2"], l1)
    l3 = level_s2(params["conv3"], params["res3"], l2)
    return (l1.astype(jnp.float32), l2.astype(jnp.float32), l3.astype(jnp.float32))


# ---------------------------------- params ------------------------------------

def _init_conv(key, cin, cout, scale=0.05):
    kw, kb = jax.random.split(key)
    w = scale * jax.random.normal(kw, (3, 3, cin, cout), jnp.float32)
    b = scale * jax.random.normal(kb, (cout,), jnp.float32)
    return w, b


def init_feature_extractor(key):
    ks = jax.random.split(key, 9)
    return {
        "conv1": _init_conv(ks[0], G_CH_1X, G_CH_1X),
        "res1": {"conv1": _init_conv(ks[1], G_CH_1X, G_CH_1X),
                 "conv2": _init_conv(ks[2], G_CH_1X, G_CH_1X)},
        "conv2": _init_conv(ks[3], G_CH_1X, G_CH_2X),
        "res2": {"conv1": _init_conv(ks[4], G_CH_2X, G_CH_2X),
                 "conv2": _init_conv(ks[5], G_CH_2X, G_CH_2X)},
        "conv3": _init_conv(ks[6], G_CH_2X, G_CH_4X),
        "res3": {"conv1": _init_conv(ks[7], G_CH_4X, G_CH_4X),
                 "conv2": _init_conv(ks[8], G_CH_4X, G_CH_4X)},
    }


# ----------------------- pure-JAX reference (same precision) -------------------

def _conv_ref(x, w, b, stride):
    y = lax.conv_general_dilated(
        x.astype(CDT), w.astype(CDT), window_strides=(stride, stride),
        padding=((1, 1), (1, 1)), dimension_numbers=("NHWC", "HWIO", "NHWC"),
        preferred_element_type=jnp.float32)
    return y + b.astype(jnp.float32)


def _level_ref(conv_p, res_p, x, stride):
    l = _conv_ref(x, *conv_p, stride=stride)
    a = _lrelu(l).astype(CDT)
    y = _conv_ref(a, *res_p["conv1"], stride=1)
    a2 = _lrelu(y).astype(CDT)
    z = _conv_ref(a2, *res_p["conv2"], stride=1) + l
    return z.astype(CDT)


def feature_extractor_ref(params, feature):
    l1 = _level_ref(params["conv1"], params["res1"], feature.astype(CDT), 1)
    l2 = _level_ref(params["conv2"], params["res2"], l1, 2)
    l3 = _level_ref(params["conv3"], params["res3"], l2, 2)
    return (l1.astype(jnp.float32), l2.astype(jnp.float32), l3.astype(jnp.float32))


# ------------------------------------ main -------------------------------------

if __name__ == "__main__":
    key = jax.random.PRNGKey(0)
    kp, kx = jax.random.split(key)

    N, H, W = 2, 16, 16                       # spatial must be divisible by 4
    params = init_feature_extractor(kp)
    feature = jax.random.normal(kx, (N, H, W, G_CH_1X), jnp.float32)

    l1, l2, l3 = jax.jit(feature_extractor)(params, feature)
    jax.block_until_ready((l1, l2, l3))

    assert l1.shape == (N, H, W, G_CH_1X), l1.shape
    assert l2.shape == (N, H // 2, W // 2, G_CH_2X), l2.shape
    assert l3.shape == (N, H // 4, W // 4, G_CH_4X), l3.shape

    r1, r2, r3 = jax.jit(feature_extractor_ref)(params, feature)
    for got, ref in ((l1, r1), (l2, r2), (l3, r3)):
        assert bool(jnp.all(jnp.isfinite(got)))
        err = float(jnp.max(jnp.abs(got - ref)))
        assert err < 5e-2, err

    print("KERNEL_OK")
</pallas_src>

<mosaic_0001>
module attributes {stable_mosaic.version = 11 : i64} {
  func.func @_level1_kernel(%arg0: i32, %arg1: memref<1x16x16x48xbf16, #tpu.memory_space<vmem>>, %arg2: memref<3x144x48xbf16, #tpu.memory_space<vmem>>, %arg3: memref<1x48xf32, #tpu.memory_space<vmem>>, %arg4: memref<3x144x48xbf16, #tpu.memory_space<vmem>>, %arg5: memref<1x48xf32, #tpu.memory_space<vmem>>, %arg6: memref<3x144x48xbf16, #tpu.memory_space<vmem>>, %arg7: memref<1x48xf32, #tpu.memory_space<vmem>>, %arg8: memref<1x16x16x48xbf16, #tpu.memory_space<vmem>>) attributes {dimension_semantics = [#tpu.dimension_semantics<parallel>], iteration_bounds = array<i64: 2>, scalar_prefetch = 0 : i64, scratch_operands = 0 : i64, tpu.core_type = #tpu.core_type<tc>, window_params = [{transform_indices = @transform_0, window_bounds = array<i64: 1, 16, 16, 48>}, {pipeline_mode = #tpu.pipeline_mode<synchronous>, transform_indices = @transform_1, window_bounds = array<i64: 3, 144, 48>}, {pipeline_mode = #tpu.pipeline_mode<synchronous>, transform_indices = @transform_2, window_bounds = array<i64: 1, 48>}, {pipeline_mode = #tpu.pipeline_mode<synchronous>, transform_indices = @transform_3, window_bounds = array<i64: 3, 144, 48>}, {pipeline_mode = #tpu.pipeline_mode<synchronous>, transform_indices = @transform_4, window_bounds = array<i64: 1, 48>}, {pipeline_mode = #tpu.pipeline_mode<synchronous>, transform_indices = @transform_5, window_bounds = array<i64: 3, 144, 48>}, {pipeline_mode = #tpu.pipeline_mode<synchronous>, transform_indices = @transform_6, window_bounds = array<i64: 1, 48>}, {transform_indices = @transform_7, window_bounds = array<i64: 1, 16, 16, 48>}]} {
    %c0 = arith.constant 0 : index
    %c0_0 = arith.constant 0 : index
    %c0_1 = arith.constant 0 : index
    %c0_2 = arith.constant 0 : index
    %0 = vector.load %arg1[%c0, %c0_0, %c0_1, %c0_2] : memref<1x16x16x48xbf16, #tpu.memory_space<vmem>>, vector<1x16x16x48xbf16>
    %1 = vector.shape_cast %0 : vector<1x16x16x48xbf16> to vector<16x16x48xbf16>
    %cst = arith.constant 0.000000e+00 : bf16
    %2 = vector.broadcast %cst : bf16 to vector<1x16x48xbf16>
    %3 = tpu.concatenate %2, %1, %2 in 0 : vector<1x16x48xbf16>, vector<16x16x48xbf16>, vector<1x16x48xbf16> -> vector<18x16x48xbf16>
    %cst_3 = arith.constant 0.000000e+00 : bf16
    %4 = vector.broadcast %cst_3 : bf16 to vector<18x1x48xbf16>
    %5 = tpu.concatenate %4, %3, %4 in 1 : vector<18x1x48xbf16>, vector<18x16x48xbf16>, vector<18x1x48xbf16> -> vector<18x18x48xbf16>
    %6 = vector.extract_strided_slice %5 {offsets = [0, 0, 0], sizes = [18, 16, 48], strides = [1, 1, 1]} : vector<18x18x48xbf16> to vector<18x16x48xbf16>
    %7 = vector.extract_strided_slice %5 {offsets = [0, 1, 0], sizes = [18, 16, 48], strides = [1, 1, 1]} : vector<18x18x48xbf16> to vector<18x16x48xbf16>
    %8 = vector.extract_strided_slice %5 {offsets = [0, 2, 0], sizes = [18, 16, 48], strides = [1, 1, 1]} : vector<18x18x48xbf16> to vector<18x16x48xbf16>
    %9 = tpu.concatenate %6, %7, %8 in 2 : vector<18x16x48xbf16>, vector<18x16x48xbf16>, vector<18x16x48xbf16> -> vector<18x16x144xbf16>
    %c0_4 = arith.constant 0 : index
    %c0_5 = arith.constant 0 : index
    %10 = vector.load %arg3[%c0_4, %c0_5] : memref<1x48xf32, #tpu.memory_space<vmem>>, vector<1x48xf32>
    %11 = vector.shape_cast %10 : vector<1x48xf32> to vector<1x48xf32>
    %12 = vector.broadcast %11 : vector<1x48xf32> to vector<256x48xf32>
    %13 = vector.extract_strided_slice %9 {offsets = [0, 0, 0], sizes = [16, 16, 144], strides = [1, 1, 1]} : vector<18x16x144xbf16> to vector<16x16x144xbf16>
    %14 = vector.shape_cast %13 : vector<16x16x144xbf16> to vector<256x144xbf16>
    %c0_6 = arith.constant 0 : index
    %c0_7 = arith.constant 0 : index
    %c0_8 = arith.constant 0 : index
    %15 = vector.load %arg2[%c0_6, %c0_7, %c0_8] : memref<3x144x48xbf16, #tpu.memory_space<vmem>>, vector<1x144x48xbf16>
    %16 = vector.shape_cast %15 : vector<1x144x48xbf16> to vector<144x48xbf16>
    %cst_9 = arith.constant dense<0.000000e+00> : vector<256x48xf32>
    %17 = tpu.matmul %14, %16, %cst_9 {dimension_numbers = #tpu.dot_dimension_numbers<[1], [0], [0], [1], [0, 0, 1, 1], [], []>} : vector<256x144xbf16>, vector<144x48xbf16>, vector<256x48xf32> -> vector<256x48xf32>
    %18 = arith.addf %12, %17 : vector<256x48xf32>
    %19 = vector.extract_strided_slice %9 {offsets = [1, 0, 0], sizes = [16, 16, 144], strides = [1, 1, 1]} : vector<18x16x144xbf16> to vector<16x16x144xbf16>
    %20 = vector.shape_cast %19 : vector<16x16x144xbf16> to vector<256x144xbf16>
    %c1 = arith.constant 1 : index
    %c0_10 = arith.constant 0 : index
    %c0_11 = arith.constant 0 : index
    %21 = vector.load %arg2[%c1, %c0_10, %c0_11] : memref<3x144x48xbf16, #tpu.memory_space<vmem>>, vector<1x144x48xbf16>
    %22 = vector.shape_cast %21 : vector<1x144x48xbf16> to vector<144x48xbf16>
    %cst_12 = arith.constant dense<0.000000e+00> : vector<256x48xf32>
    %23 = tpu.matmul %20, %22, %cst_12 {dimension_numbers = #tpu.dot_dimension_numbers<[1], [0], [0], [1], [0, 0, 1, 1], [], []>} : vector<256x144xbf16>, vector<144x48xbf16>, vector<256x48xf32> -> vector<256x48xf32>
    %24 = arith.addf %18, %23 : vector<256x48xf32>
    %25 = vector.extract_strided_slice %9 {offsets = [2, 0, 0], sizes = [16, 16, 144], strides = [1, 1, 1]} : vector<18x16x144xbf16> to vector<16x16x144xbf16>
    %26 = vector.shape_cast %25 : vector<16x16x144xbf16> to vector<256x144xbf16>
    %c2 = arith.constant 2 : index
    %c0_13 = arith.constant 0 : index
    %c0_14 = arith.constant 0 : index
    %27 = vector.load %arg2[%c2, %c0_13, %c0_14] : memref<3x144x48xbf16, #tpu.memory_space<vmem>>, vector<1x144x48xbf16>
    %28 = vector.shape_cast %27 : vector<1x144x48xbf16> to vector<144x48xbf16>
    %cst_15 = arith.constant dense<0.000000e+00> : vector<256x48xf32>
    %29 = tpu.matmul %26, %28, %cst_15 {dimension_numbers = #tpu.dot_dimension_numbers<[1], [0], [0], [1], [0, 0, 1, 1], [], []>} : vector<256x144xbf16>, vector<144x48xbf16>, vector<256x48xf32> -> vector<256x48xf32>
    %30 = arith.addf %24, %29 : vector<256x48xf32>
    %31 = vector.shape_cast %30 : vector<256x48xf32> to vector<16x16x48xf32>
    %cst_16 = arith.constant 0.00999999977 : f32
    %32 = vector.broadcast %cst_16 : f32 to vector<16x16x48xf32>
    %33 = arith.mulf %32, %31 : vector<16x16x48xf32>
    %34 = arith.maximumf %31, %33 : vector<16x16x48xf32>
    %35 = arith.truncf %34 : vector<16x16x48xf32> to vector<16x16x48xbf16>
    %cst_17 = arith.constant 0.000000e+00 : bf16
    %36 = vector.broadcast %cst_17 : bf16 to vector<1x16x48xbf16>
    %37 = tpu.concatenate %36, %35, %36 in 0 : vector<1x16x48xbf16>, vector<16x16x48xbf16>, vector<1x16x48xbf16> -> vector<18x16x48xbf16>
    %cst_18 = arith.constant 0.000000e+00 : bf16
    %38 = vector.broadcast %cst_18 : bf16 to vector<18x1x48xbf16>
    %39 = tpu.concatenate %38, %37, %38 in 1 : vector<18x1x48xbf16>, vector<18x16x48xbf16>, vector<18x1x48xbf16> -> vector<18x18x48xbf16>
    %40 = vector.extract_strided_slice %39 {offsets = [0, 0, 0], sizes = [18, 16, 48], strides = [1, 1, 1]} : vector<18x18x48xbf16> to vector<18x16x48xbf16>
    %41 = vector.extract_strided_slice %39 {offsets = [0, 1, 0], sizes = [18, 16, 48], strides = [1, 1, 1]} : vector<18x18x48xbf16> to vector<18x16x48xbf16>
    %42 = vector.extract_strided_slice %39 {offsets = [0, 2, 0], sizes = [18, 16, 48], strides = [1, 1, 1]} : vector<18x18x48xbf16> to vector<18x16x48xbf16>
    %43 = tpu.concatenate %40, %41, %42 in 2 : vector<18x16x48xbf16>, vector<18x16x48xbf16>, vector<18x16x48xbf16> -> vector<18x16x144xbf16>
    %c0_19 = arith.constant 0 : index
    %c0_20 = arith.constant 0 : index
    %44 = vector.load %arg5[%c0_19, %c0_20] : memref<1x48xf32, #tpu.memory_space<vmem>>, vector<1x48xf32>
    %45 = vector.shape_cast %44 : vector<1x48xf32> to vector<1x48xf32>
    %46 = vector.broadcast %45 : vector<1x48xf32> to vector<256x48xf32>
    %47 = vector.extract_strided_slice %43 {offsets = [0, 0, 0], sizes = [16, 16, 144], strides = [1, 1, 1]} : vector<18x16x144xbf16> to vector<16x16x144xbf16>
    %48 = vector.shape_cast %47 : vector<16x16x144xbf16> to vector<256x144xbf16>
    %c0_21 = arith.constant 0 : index
    %c0_22 = arith.constant 0 : index
    %c0_23 = arith.constant 0 : index
    %49 = vector.load %arg4[%c0_21, %c0_22, %c0_23] : memref<3x144x48xbf16, #tpu.memory_space<vmem>>, vector<1x144x48xbf16>
    %50 = vector.shape_cast %49 : vector<1x144x48xbf16> to vector<144x48xbf16>
    %cst_24 = arith.constant dense<0.000000e+00> : vector<256x48xf32>
    %51 = tpu.matmul %48, %50, %cst_24 {dimension_numbers = #tpu.dot_dimension_numbers<[1], [0], [0], [1], [0, 0, 1, 1], [], []>} : vector<256x144xbf16>, vector<144x48xbf16>, vector<256x48xf32> -> vector<256x48xf32>
    %52 = arith.addf %46, %51 : vector<256x48xf32>
    %53 = vector.extract_strided_slice %43 {offsets = [1, 0, 0], sizes = [16, 16, 144], strides = [1, 1, 1]} : vector<18x16x144xbf16> to vector<16x16x144xbf16>
    %54 = vector.shape_cast %53 : vector<16x16x144xbf16> to vector<256x144xbf16>
    %c1_25 = arith.constant 1 : index
    %c0_26 = arith.constant 0 : index
    %c0_27 = arith.constant 0 : index
    %55 = vector.load %arg4[%c1_25, %c0_26, %c0_27] : memref<3x144x48xbf16, #tpu.memory_space<vmem>>, vector<1x144x48xbf16>
    %56 = vector.shape_cast %55 : vector<1x144x48xbf16> to vector<144x48xbf16>
    %cst_28 = arith.constant dense<0.000000e+00> : vector<256x48xf32>
    %57 = tpu.matmul %54, %56, %cst_28 {dimension_numbers = #tpu.dot_dimension_numbers<[1], [0], [0], [1], [0, 0, 1, 1], [], []>} : vector<256x144xbf16>, vector<144x48xbf16>, vector<256x48xf32> -> vector<256x48xf32>
    %58 = arith.addf %52, %57 : vector<256x48xf32>
    %59 = vector.extract_strided_slice %43 {offsets = [2, 0, 0], sizes = [16, 16, 144], strides = [1, 1, 1]} : vector<18x16x144xbf16> to vector<16x16x144xbf16>
    %60 = vector.shape_cast %59 : vector<16x16x144xbf16> to vector<256x144xbf16>
    %c2_29 = arith.constant 2 : index
    %c0_30 = arith.constant 0 : index
    %c0_31 = arith.constant 0 : index
    %61 = vector.load %arg4[%c2_29, %c0_30, %c0_31] : memref<3x144x48xbf16, #tpu.memory_space<vmem>>, vector<1x144x48xbf16>
    %62 = vector.shape_cast %61 : vector<1x144x48xbf16> to vector<144x48xbf16>
    %cst_32 = arith.constant dense<0.000000e+00> : vector<256x48xf32>
    %63 = tpu.matmul %60, %62, %cst_32 {dimension_numbers = #tpu.dot_dimension_numbers<[1], [0], [0], [1], [0, 0, 1, 1], [], []>} : vector<256x144xbf16>, vector<144x48xbf16>, vector<256x48xf32> -> vector<256x48xf32>
    %64 = arith.addf %58, %63 : vector<256x48xf32>
    %65 = vector.shape_cast %64 : vector<256x48xf32> to vector<16x16x48xf32>
    %cst_33 = arith.constant 0.00999999977 : f32
    %66 = vector.broadcast %cst_33 : f32 to vector<16x16x48xf32>
    %67 = arith.mulf %66, %65 : vector<16x16x48xf32>
    %68 = arith.maximumf %65, %67 : vector<16x16x48xf32>
    %69 = arith.truncf %68 : vector<16x16x48xf32> to vector<16x16x48xbf16>
    %cst_34 = arith.constant 0.000000e+00 : bf16
    %70 = vector.broadcast %cst_34 : bf16 to vector<1x16x48xbf16>
    %71 = tpu.concatenate %70, %69, %70 in 0 : vector<1x16x48xbf16>, vector<16x16x48xbf16>, vector<1x16x48xbf16> -> vector<18x16x48xbf16>
    %cst_35 = arith.constant 0.000000e+00 : bf16
    %72 = vector.broadcast %cst_35 : bf16 to vector<18x1x48xbf16>
    %73 = tpu.concatenate %72, %71, %72 in 1 : vector<18x1x48xbf16>, vector<18x16x48xbf16>, vector<18x1x48xbf16> -> vector<18x18x48xbf16>
    %74 = vector.extract_strided_slice %73 {offsets = [0, 0, 0], sizes = [18, 16, 48], strides = [1, 1, 1]} : vector<18x18x48xbf16> to vector<18x16x48xbf16>
    %75 = vector.extract_strided_slice %73 {offsets = [0, 1, 0], sizes = [18, 16, 48], strides = [1, 1, 1]} : vector<18x18x48xbf16> to vector<18x16x48xbf16>
    %76 = vector.extract_strided_slice %73 {offsets = [0, 2, 0], sizes = [18, 16, 48], strides = [1, 1, 1]} : vector<18x18x48xbf16> to vector<18x16x48xbf16>
    %77 = tpu.concatenate %74, %75, %76 in 2 : vector<18x16x48xbf16>, vector<18x16x48xbf16>, vector<18x16x48xbf16> -> vector<18x16x144xbf16>
    %c0_36 = arith.constant 0 : index
    %c0_37 = arith.constant 0 : index
    %78 = vector.load %arg7[%c0_36, %c0_37] : memref<1x48xf32, #tpu.memory_space<vmem>>, vector<1x48xf32>
    %79 = vector.shape_cast %78 : vector<1x48xf32> to vector<1x48xf32>
    %80 = vector.broadcast %79 : vector<1x48xf32> to vector<256x48xf32>
    %81 = vector.extract_strided_slice %77 {offsets = [0, 0, 0], sizes = [16, 16, 144], strides = [1, 1, 1]} : vector<18x16x144xbf16> to vector<16x16x144xbf16>
    %82 = vector.shape_cast %81 : vector<16x16x144xbf16> to vector<256x144xbf16>
    %c0_38 = arith.constant 0 : index
    %c0_39 = arith.constant 0 : index
    %c0_40 = arith.constant 0 : index
    %83 = vector.load %arg6[%c0_38, %c0_39, %c0_40] : memref<3x144x48xbf16, #tpu.memory_space<vmem>>, vector<1x144x48xbf16>
    %84 = vector.shape_cast %83 : vector<1x144x48xbf16> to vector<144x48xbf16>
    %cst_41 = arith.constant dense<0.000000e+00> : vector<256x48xf32>
    %85 = tpu.matmul %82, %84, %cst_41 {dimension_numbers = #tpu.dot_dimension_numbers<[1], [0], [0], [1], [0, 0, 1, 1], [], []>} : vector<256x144xbf16>, vector<144x48xbf16>, vector<256x48xf32> -> vector<256x48xf32>
    %86 = arith.addf %80, %85 : vector<256x48xf32>
    %87 = vector.extract_strided_slice %77 {offsets = [1, 0, 0], sizes = [16, 16, 144], strides = [1, 1, 1]} : vector<18x16x144xbf16> to vector<16x16x144xbf16>
    %88 = vector.shape_cast %87 : vector<16x16x144xbf16> to vector<256x144xbf16>
    %c1_42 = arith.constant 1 : index
    %c0_43 = arith.constant 0 : index
    %c0_44 = arith.constant 0 : index
    %89 = vector.load %arg6[%c1_42, %c0_43, %c0_44] : memref<3x144x48xbf16, #tpu.memory_space<vmem>>, vector<1x144x48xbf16>
    %90 = vector.shape_cast %89 : vector<1x144x48xbf16> to vector<144x48xbf16>
    %cst_45 = arith.constant dense<0.000000e+00> : vector<256x48xf32>
    %91 = tpu.matmul %88, %90, %cst_45 {dimension_numbers = #tpu.dot_dimension_numbers<[1], [0], [0], [1], [0, 0, 1, 1], [], []>} : vector<256x144xbf16>, vector<144x48xbf16>, vector<256x48xf32> -> vector<256x48xf32>
    %92 = arith.addf %86, %91 : vector<256x48xf32>
    %93 = vector.extract_strided_slice %77 {offsets = [2, 0, 0], sizes = [16, 16, 144], strides = [1, 1, 1]} : vector<18x16x144xbf16> to vector<16x16x144xbf16>
    %94 = vector.shape_cast %93 : vector<16x16x144xbf16> to vector<256x144xbf16>
    %c2_46 = arith.constant 2 : index
    %c0_47 = arith.constant 0 : index
    %c0_48 = arith.constant 0 : index
    %95 = vector.load %arg6[%c2_46, %c0_47, %c0_48] : memref<3x144x48xbf16, #tpu.memory_space<vmem>>, vector<1x144x48xbf16>
    %96 = vector.shape_cast %95 : vector<1x144x48xbf16> to vector<144x48xbf16>
    %cst_49 = arith.constant dense<0.000000e+00> : vector<256x48xf32>
    %97 = tpu.matmul %94, %96, %cst_49 {dimension_numbers = #tpu.dot_dimension_numbers<[1], [0], [0], [1], [0, 0, 1, 1], [], []>} : vector<256x144xbf16>, vector<144x48xbf16>, vector<256x48xf32> -> vector<256x48xf32>
    %98 = arith.addf %92, %97 : vector<256x48xf32>
    %99 = vector.shape_cast %98 : vector<256x48xf32> to vector<16x16x48xf32>
    %100 = arith.addf %99, %31 : vector<16x16x48xf32>
    %101 = arith.truncf %100 : vector<16x16x48xf32> to vector<16x16x48xbf16>
    %c0_50 = arith.constant 0 : index
    %c0_51 = arith.constant 0 : index
    %c0_52 = arith.constant 0 : index
    %c0_53 = arith.constant 0 : index
    %102 = vector.load %arg8[%c0_50, %c0_51, %c0_52, %c0_53] : memref<1x16x16x48xbf16, #tpu.memory_space<vmem>>, vector<1x16x16x48xbf16>
    %103 = vector.shape_cast %102 : vector<1x16x16x48xbf16> to vector<16x16x48xbf16>
    %104 = vector.shape_cast %101 : vector<16x16x48xbf16> to vector<1x16x16x48xbf16>
    tpu.vector_store %arg8[%c0_50, %c0_51, %c0_52, %c0_53], %104 {strides = array<i32>} : memref<1x16x16x48xbf16, #tpu.memory_space<vmem>>, vector<1x16x16x48xbf16>,
    return
  }
  func.func @transform_0(%arg0: i32) -> (i32, i32, i32, i32) {
    %c0_i32 = arith.constant 0 : i32
    %c0_i32_0 = arith.constant 0 : i32
    %c0_i32_1 = arith.constant 0 : i32
    %c0_i32_2 = arith.constant 0 : i32
    return %arg0, %c0_i32, %c0_i32_0, %c0_i32_1 : i32, i32, i32, i32
  }
  func.func @transform_1(%arg0: i32) -> (i32, i32, i32) {
    %c0_i32 = arith.constant 0 : i32
    %c0_i32_0 = arith.constant 0 : i32
    %c0_i32_1 = arith.constant 0 : i32
    %c0_i32_2 = arith.constant 0 : i32
    return %c0_i32, %c0_i32_0, %c0_i32_1 : i32, i32, i32
  }
  func.func @transform_2(%arg0: i32) -> (i32, i32) {
    %c0_i32 = arith.constant 0 : i32
    %c0_i32_0 = arith.constant 0 : i32
    %c0_i32_1 = arith.constant 0 : i32
    return %c0_i32, %c0_i32_0 : i32, i32
  }
  func.func @transform_3(%arg0: i32) -> (i32, i32, i32) {
    %c0_i32 = arith.constant 0 : i32
    %c0_i32_0 = arith.constant 0 : i32
    %c0_i32_1 = arith.constant 0 : i32
    %c0_i32_2 = arith.constant 0 : i32
    return %c0_i32, %c0_i32_0, %c0_i32_1 : i32, i32, i32
  }
  func.func @transform_4(%arg0: i32) -> (i32, i32) {
    %c0_i32 = arith.constant 0 : i32
    %c0_i32_0 = arith.constant 0 : i32
    %c0_i32_1 = arith.constant 0 : i32
    return %c0_i32, %c0_i32_0 : i32, i32
  }
  func.func @transform_5(%arg0: i32) -> (i32, i32, i32) {
    %c0_i32 = arith.constant 0 : i32
    %c0_i32_0 = arith.constant 0 : i32
    %c0_i32_1 = arith.constant 0 : i32
    %c0_i32_2 = arith.constant 0 : i32
    return %c0_i32, %c0_i32_0, %c0_i32_1 : i32, i32, i32
  }
  func.func @transform_6(%arg0: i32) -> (i32, i32) {
    %c0_i32 = arith.constant 0 : i32
    %c0_i32_0 = arith.constant 0 : i32
    %c0_i32_1 = arith.constant 0 : i32
    return %c0_i32, %c0_i32_0 : i32, i32
  }
  func.func @transform_7(%arg0: i32) -> (i32, i32, i32, i32) {
    %c0_i32 = arith.constant 0 : i32
    %c0_i32_0 = arith.constant 0 : i32
    %c0_i32_1 = arith.constant 0 : i32
    %c0_i32_2 = arith.constant 0 : i32
    return %arg0, %c0_i32, %c0_i32_0, %c0_i32_1 : i32, i32, i32, i32
  }
}

module attributes {stable_mosaic.version = 11 : i64} {
  func.func @_level_s2_kernel(%arg0: i32, %arg1: memref<1x4x9x9x48xbf16, #tpu.memory_space<vmem>>, %arg2: memref<3x144x64xbf16, #tpu.memory_space<vmem>>, %arg3: memref<1x64xf32, #tpu.memory_space<vmem>>, %arg4: memref<3x192x64xbf16, #tpu.memory_space<vmem>>, %arg5: memref<1x64xf32, #tpu.memory_space<vmem>>, %arg6: memref<3x192x64xbf16, #tpu.memory_space<vmem>>, %arg7: memref<1x64xf32, #tpu.memory_space<vmem>>, %arg8: memref<1x8x8x64xbf16, #tpu.memory_space<vmem>>) attributes {dimension_semantics = [#tpu.dimension_semantics<parallel>], iteration_bounds = array<i64: 2>, scalar_prefetch = 0 : i64, scratch_operands = 0 : i64, tpu.core_type = #tpu.core_type<tc>, window_params = [{transform_indices = @transform_0, window_bounds = array<i64: 1, 4, 9, 9, 48>}, {pipeline_mode = #tpu.pipeline_mode<synchronous>, transform_indices = @transform_1, window_bounds = array<i64: 3, 144, 64>}, {pipeline_mode = #tpu.pipeline_mode<synchronous>, transform_indices = @transform_2, window_bounds = array<i64: 1, 64>}, {pipeline_mode = #tpu.pipeline_mode<synchronous>, transform_indices = @transform_3, window_bounds = array<i64: 3, 192, 64>}, {pipeline_mode = #tpu.pipeline_mode<synchronous>, transform_indices = @transform_4, window_bounds = array<i64: 1, 64>}, {pipeline_mode = #tpu.pipeline_mode<synchronous>, transform_indices = @transform_5, window_bounds = array<i64: 3, 192, 64>}, {pipeline_mode = #tpu.pipeline_mode<synchronous>, transform_indices = @transform_6, window_bounds = array<i64: 1, 64>}, {transform_indices = @transform_7, window_bounds = array<i64: 1, 8, 8, 64>}]} {
    %c0 = arith.constant 0 : index
    %c0_0 = arith.constant 0 : index
    %c0_1 = arith.constant 0 : index
    %c0_2 = arith.constant 0 : index
    %c0_3 = arith.constant 0 : index
    %0 = vector.load %arg1[%c0, %c0_0, %c0_1, %c0_2, %c0_3] : memref<1x4x9x9x48xbf16, #tpu.memory_space<vmem>>, vector<1x4x9x9x48xbf16>
    %1 = vector.shape_cast %0 : vector<1x4x9x9x48xbf16> to vector<4x9x9x48xbf16>
    %c0_4 = arith.constant 0 : index
    %c0_5 = arith.constant 0 : index
    %2 = vector.load %arg3[%c0_4, %c0_5] : memref<1x64xf32, #tpu.memory_space<vmem>>, vector<1x64xf32>
    %3 = vector.shape_cast %2 : vector<1x64xf32> to vector<1x64xf32>
    %4 = vector.broadcast %3 : vector<1x64xf32> to vector<64x64xf32>
    %5 = vector.extract_strided_slice %1 {offsets = [0, 0, 0, 0], sizes = [1, 8, 8, 48], strides = [1, 1, 1, 1]} : vector<4x9x9x48xbf16> to vector<1x8x8x48xbf16>
    %6 = vector.shape_cast %5 : vector<1x8x8x48xbf16> to vector<8x8x48xbf16>
    %7 = vector.extract_strided_slice %1 {offsets = [1, 0, 0, 0], sizes = [1, 8, 8, 48], strides = [1, 1, 1, 1]} : vector<4x9x9x48xbf16> to vector<1x8x8x48xbf16>
    %8 = vector.shape_cast %7 : vector<1x8x8x48xbf16> to vector<8x8x48xbf16>
    %9 = vector.extract_strided_slice %1 {offsets = [0, 0, 1, 0], sizes = [1, 8, 8, 48], strides = [1, 1, 1, 1]} : vector<4x9x9x48xbf16> to vector<1x8x8x48xbf16>
    %10 = vector.shape_cast %9 : vector<1x8x8x48xbf16> to vector<8x8x48xbf16>
    %11 = tpu.concatenate %6, %8, %10 in 2 : vector<8x8x48xbf16>, vector<8x8x48xbf16>, vector<8x8x48xbf16> -> vector<8x8x144xbf16>
    %12 = vector.shape_cast %11 : vector<8x8x144xbf16> to vector<64x144xbf16>
    %c0_6 = arith.constant 0 : index
    %c0_7 = arith.constant 0 : index
    %c0_8 = arith.constant 0 : index
    %13 = vector.load %arg2[%c0_6, %c0_7, %c0_8] : memref<3x144x64xbf16, #tpu.memory_space<vmem>>, vector<1x144x64xbf16>
    %14 = vector.shape_cast %13 : vector<1x144x64xbf16> to vector<144x64xbf16>
    %cst = arith.constant dense<0.000000e+00> : vector<64x64xf32>
    %15 = tpu.matmul %12, %14, %cst {dimension_numbers = #tpu.dot_dimension_numbers<[1], [0], [0], [1], [0, 0, 1, 1], [], []>} : vector<64x144xbf16>, vector<144x64xbf16>, vector<64x64xf32> -> vector<64x64xf32>
    %16 = arith.addf %4, %15 : vector<64x64xf32>
    %17 = vector.extract_strided_slice %1 {offsets = [2, 0, 0, 0], sizes = [1, 8, 8, 48], strides = [1, 1, 1, 1]} : vector<4x9x9x48xbf16> to vector<1x8x8x48xbf16>
    %18 = vector.shape_cast %17 : vector<1x8x8x48xbf16> to vector<8x8x48xbf16>
    %19 = vector.extract_strided_slice %1 {offsets = [3, 0, 0, 0], sizes = [1, 8, 8, 48], strides = [1, 1, 1, 1]} : vector<4x9x9x48xbf16> to vector<1x8x8x48xbf16>
    %20 = vector.shape_cast %19 : vector<1x8x8x48xbf16> to vector<8x8x48xbf16>
    %21 = vector.extract_strided_slice %1 {offsets = [2, 0, 1, 0], sizes = [1, 8, 8, 48], strides = [1, 1, 1, 1]} : vector<4x9x9x48xbf16> to vector<1x8x8x48xbf16>
    %22 = vector.shape_cast %21 : vector<1x8x8x48xbf16> to vector<8x8x48xbf16>
    %23 = tpu.concatenate %18, %20, %22 in 2 : vector<8x8x48xbf16>, vector<8x8x48xbf16>, vector<8x8x48xbf16> -> vector<8x8x144xbf16>
    %24 = vector.shape_cast %23 : vector<8x8x144xbf16> to vector<64x144xbf16>
    %c1 = arith.constant 1 : index
    %c0_9 = arith.constant 0 : index
    %c0_10 = arith.constant 0 : index
    %25 = vector.load %arg2[%c1, %c0_9, %c0_10] : memref<3x144x64xbf16, #tpu.memory_space<vmem>>, vector<1x144x64xbf16>
    %26 = vector.shape_cast %25 : vector<1x144x64xbf16> to vector<144x64xbf16>
    %cst_11 = arith.constant dense<0.000000e+00> : vector<64x64xf32>
    %27 = tpu.matmul %24, %26, %cst_11 {dimension_numbers = #tpu.dot_dimension_numbers<[1], [0], [0], [1], [0, 0, 1, 1], [], []>} : vector<64x144xbf16>, vector<144x64xbf16>, vector<64x64xf32> -> vector<64x64xf32>
    %28 = arith.addf %16, %27 : vector<64x64xf32>
    %29 = vector.extract_strided_slice %1 {offsets = [0, 1, 0, 0], sizes = [1, 8, 8, 48], strides = [1, 1, 1, 1]} : vector<4x9x9x48xbf16> to vector<1x8x8x48xbf16>
    %30 = vector.shape_cast %29 : vector<1x8x8x48xbf16> to vector<8x8x48xbf16>
    %31 = vector.extract_strided_slice %1 {offsets = [1, 1, 0, 0], sizes = [1, 8, 8, 48], strides = [1, 1, 1, 1]} : vector<4x9x9x48xbf16> to vector<1x8x8x48xbf16>
    %32 = vector.shape_cast %31 : vector<1x8x8x48xbf16> to vector<8x8x48xbf16>
    %33 = vector.extract_strided_slice %1 {offsets = [0, 1, 1, 0], sizes = [1, 8, 8, 48], strides = [1, 1, 1, 1]} : vector<4x9x9x48xbf16> to vector<1x8x8x48xbf16>
    %34 = vector.shape_cast %33 : vector<1x8x8x48xbf16> to vector<8x8x48xbf16>
    %35 = tpu.concatenate %30, %32, %34 in 2 : vector<8x8x48xbf16>, vector<8x8x48xbf16>, vector<8x8x48xbf16> -> vector<8x8x144xbf16>
    %36 = vector.shape_cast %35 : vector<8x8x144xbf16> to vector<64x144xbf16>
    %c2 = arith.constant 2 : index
    %c0_12 = arith.constant 0 : index
    %c0_13 = arith.constant 0 : index
    %37 = vector.load %arg2[%c2, %c0_12, %c0_13] : memref<3x144x64xbf16, #tpu.memory_space<vmem>>, vector<1x144x64xbf16>
    %38 = vector.shape_cast %37 : vector<1x144x64xbf16> to vector<144x64xbf16>
    %cst_14 = arith.constant dense<0.000000e+00> : vector<64x64xf32>
    %39 = tpu.matmul %36, %38, %cst_14 {dimension_numbers = #tpu.dot_dimension_numbers<[1], [0], [0], [1], [0, 0, 1, 1], [], []>} : vector<64x144xbf16>, vector<144x64xbf16>, vector<64x64xf32> -> vector<64x64xf32>
    %40 = arith.addf %28, %39 : vector<64x64xf32>
    %41 = vector.shape_cast %40 : vector<64x64xf32> to vector<8x8x64xf32>
    %cst_15 = arith.constant 0.00999999977 : f32
    %42 = vector.broadcast %cst_15 : f32 to vector<8x8x64xf32>
    %43 = arith.mulf %42, %41 : vector<8x8x64xf32>
    %44 = arith.maximumf %41, %43 : vector<8x8x64xf32>
    %45 = arith.truncf %44 : vector<8x8x64xf32> to vector<8x8x64xbf16>
    %cst_16 = arith.constant 0.000000e+00 : bf16
    %46 = vector.broadcast %cst_16 : bf16 to vector<1x8x64xbf16>
    %47 = tpu.concatenate %46, %45, %46 in 0 : vector<1x8x64xbf16>, vector<8x8x64xbf16>, vector<1x8x64xbf16> -> vector<10x8x64xbf16>
    %cst_17 = arith.constant 0.000000e+00 : bf16
    %48 = vector.broadcast %cst_17 : bf16 to vector<10x1x64xbf16>
    %49 = tpu.concatenate %48, %47, %48 in 1 : vector<10x1x64xbf16>, vector<10x8x64xbf16>, vector<10x1x64xbf16> -> vector<10x10x64xbf16>
    %50 = vector.extract_strided_slice %49 {offsets = [0, 0, 0], sizes = [10, 8, 64], strides = [1, 1, 1]} : vector<10x10x64xbf16> to vector<10x8x64xbf16>
    %51 = vector.extract_strided_slice %49 {offsets = [0, 1, 0], sizes = [10, 8, 64], strides = [1, 1, 1]} : vector<10x10x64xbf16> to vector<10x8x64xbf16>
    %52 = vector.extract_strided_slice %49 {offsets = [0, 2, 0], sizes = [10, 8, 64], strides = [1, 1, 1]} : vector<10x10x64xbf16> to vector<10x8x64xbf16>
    %53 = tpu.concatenate %50, %51, %52 in 2 : vector<10x8x64xbf16>, vector<10x8x64xbf16>, vector<10x8x64xbf16> -> vector<10x8x192xbf16>
    %c0_18 = arith.constant 0 : index
    %c0_19 = arith.constant 0 : index
    %54 = vector.load %arg5[%c0_18, %c0_19] : memref<1x64xf32, #tpu.memory_space<vmem>>, vector<1x64xf32>
    %55 = vector.shape_cast %54 : vector<1x64xf32> to vector<1x64xf32>
    %56 = vector.broadcast %55 : vector<1x64xf32> to vector<64x64xf32>
    %57 = vector.extract_strided_slice %53 {offsets = [0, 0, 0], sizes = [8, 8, 192], strides = [1, 1, 1]} : vector<10x8x192xbf16> to vector<8x8x192xbf16>
    %58 = vector.shape_cast %57 : vector<8x8x192xbf16> to vector<64x192xbf16>
    %c0_20 = arith.constant 0 : index
    %c0_21 = arith.constant 0 : index
    %c0_22 = arith.constant 0 : index
    %59 = vector.load %arg4[%c0_20, %c0_21, %c0_22] : memref<3x192x64xbf16, #tpu.memory_space<vmem>>, vector<1x192x64xbf16>
    %60 = vector.shape_cast %59 : vector<1x192x64xbf16> to vector<192x64xbf16>
    %cst_23 = arith.constant dense<0.000000e+00> : vector<64x64xf32>
    %61 = tpu.matmul %58, %60, %cst_23 {dimension_numbers = #tpu.dot_dimension_numbers<[1], [0], [0], [1], [0, 0, 1, 1], [], []>} : vector<64x192xbf16>, vector<192x64xbf16>, vector<64x64xf32> -> vector<64x64xf32>
    %62 = arith.addf %56, %61 : vector<64x64xf32>
    %63 = vector.extract_strided_slice %53 {offsets = [1, 0, 0], sizes = [8, 8, 192], strides = [1, 1, 1]} : vector<10x8x192xbf16> to vector<8x8x192xbf16>
    %64 = vector.shape_cast %63 : vector<8x8x192xbf16> to vector<64x192xbf16>
    %c1_24 = arith.constant 1 : index
    %c0_25 = arith.constant 0 : index
    %c0_26 = arith.constant 0 : index
    %65 = vector.load %arg4[%c1_24, %c0_25, %c0_26] : memref<3x192x64xbf16, #tpu.memory_space<vmem>>, vector<1x192x64xbf16>
    %66 = vector.shape_cast %65 : vector<1x192x64xbf16> to vector<192x64xbf16>
    %cst_27 = arith.constant dense<0.000000e+00> : vector<64x64xf32>
    %67 = tpu.matmul %64, %66, %cst_27 {dimension_numbers = #tpu.dot_dimension_numbers<[1], [0], [0], [1], [0, 0, 1, 1], [], []>} : vector<64x192xbf16>, vector<192x64xbf16>, vector<64x64xf32> -> vector<64x64xf32>
    %68 = arith.addf %62, %67 : vector<64x64xf32>
    %69 = vector.extract_strided_slice %53 {offsets = [2, 0, 0], sizes = [8, 8, 192], strides = [1, 1, 1]} : vector<10x8x192xbf16> to vector<8x8x192xbf16>
    %70 = vector.shape_cast %69 : vector<8x8x192xbf16> to vector<64x192xbf16>
    %c2_28 = arith.constant 2 : index
    %c0_29 = arith.constant 0 : index
    %c0_30 = arith.constant 0 : index
    %71 = vector.load %arg4[%c2_28, %c0_29, %c0_30] : memref<3x192x64xbf16, #tpu.memory_space<vmem>>, vector<1x192x64xbf16>
    %72 = vector.shape_cast %71 : vector<1x192x64xbf16> to vector<192x64xbf16>
    %cst_31 = arith.constant dense<0.000000e+00> : vector<64x64xf32>
    %73 = tpu.matmul %70, %72, %cst_31 {dimension_numbers = #tpu.dot_dimension_numbers<[1], [0], [0], [1], [0, 0, 1, 1], [], []>} : vector<64x192xbf16>, vector<192x64xbf16>, vector<64x64xf32> -> vector<64x64xf32>
    %74 = arith.addf %68, %73 : vector<64x64xf32>
    %75 = vector.shape_cast %74 : vector<64x64xf32> to vector<8x8x64xf32>
    %cst_32 = arith.constant 0.00999999977 : f32
    %76 = vector.broadcast %cst_32 : f32 to vector<8x8x64xf32>
    %77 = arith.mulf %76, %75 : vector<8x8x64xf32>
    %78 = arith.maximumf %75, %77 : vector<8x8x64xf32>
    %79 = arith.truncf %78 : vector<8x8x64xf32> to vector<8x8x64xbf16>
    %cst_33 = arith.constant 0.000000e+00 : bf16
    %80 = vector.broadcast %cst_33 : bf16 to vector<1x8x64xbf16>
    %81 = tpu.concatenate %80, %79, %80 in 0 : vector<1x8x64xbf16>, vector<8x8x64xbf16>, vector<1x8x64xbf16> -> vector<10x8x64xbf16>
    %cst_34 = arith.constant 0.000000e+00 : bf16
    %82 = vector.broadcast %cst_34 : bf16 to vector<10x1x64xbf16>
    %83 = tpu.concatenate %82, %81, %82 in 1 : vector<10x1x64xbf16>, vector<10x8x64xbf16>, vector<10x1x64xbf16> -> vector<10x10x64xbf16>
    %84 = vector.extract_strided_slice %83 {offsets = [0, 0, 0], sizes = [10, 8, 64], strides = [1, 1, 1]} : vector<10x10x64xbf16> to vector<10x8x64xbf16>
    %85 = vector.extract_strided_slice %83 {offsets = [0, 1, 0], sizes = [10, 8, 64], strides = [1, 1, 1]} : vector<10x10x64xbf16> to vector<10x8x64xbf16>
    %86 = vector.extract_strided_slice %83 {offsets = [0, 2, 0], sizes = [10, 8, 64], strides = [1, 1, 1]} : vector<10x10x64xbf16> to vector<10x8x64xbf16>
    %87 = tpu.concatenate %84, %85, %86 in 2 : vector<10x8x64xbf16>, vector<10x8x64xbf16>, vector<10x8x64xbf16> -> vector<10x8x192xbf16>
    %c0_35 = arith.constant 0 : index
    %c0_36 = arith.constant 0 : index
    %88 = vector.load %arg7[%c0_35, %c0_36] : memref<1x64xf32, #tpu.memory_space<vmem>>, vector<1x64xf32>
    %89 = vector.shape_cast %88 : vector<1x64xf32> to vector<1x64xf32>
    %90 = vector.broadcast %89 : vector<1x64xf32> to vector<64x64xf32>
    %91 = vector.extract_strided_slice %87 {offsets = [0, 0, 0], sizes = [8, 8, 192], strides = [1, 1, 1]} : vector<10x8x192xbf16> to vector<8x8x192xbf16>
    %92 = vector.shape_cast %91 : vector<8x8x192xbf16> to vector<64x192xbf16>
    %c0_37 = arith.constant 0 : index
    %c0_38 = arith.constant 0 : index
    %c0_39 = arith.constant 0 : index
    %93 = vector.load %arg6[%c0_37, %c0_38, %c0_39] : memref<3x192x64xbf16, #tpu.memory_space<vmem>>, vector<1x192x64xbf16>
    %94 = vector.shape_cast %93 : vector<1x192x64xbf16> to vector<192x64xbf16>
    %cst_40 = arith.constant dense<0.000000e+00> : vector<64x64xf32>
    %95 = tpu.matmul %92, %94, %cst_40 {dimension_numbers = #tpu.dot_dimension_numbers<[1], [0], [0], [1], [0, 0, 1, 1], [], []>} : vector<64x192xbf16>, vector<192x64xbf16>, vector<64x64xf32> -> vector<64x64xf32>
    %96 = arith.addf %90, %95 : vector<64x64xf32>
    %97 = vector.extract_strided_slice %87 {offsets = [1, 0, 0], sizes = [8, 8, 192], strides = [1, 1, 1]} : vector<10x8x192xbf16> to vector<8x8x192xbf16>
    %98 = vector.shape_cast %97 : vector<8x8x192xbf16> to vector<64x192xbf16>
    %c1_41 = arith.constant 1 : index
    %c0_42 = arith.constant 0 : index
    %c0_43 = arith.constant 0 : index
    %99 = vector.load %arg6[%c1_41, %c0_42, %c0_43] : memref<3x192x64xbf16, #tpu.memory_space<vmem>>, vector<1x192x64xbf16>
    %100 = vector.shape_cast %99 : vector<1x192x64xbf16> to vector<192x64xbf16>
    %cst_44 = arith.constant dense<0.000000e+00> : vector<64x64xf32>
    %101 = tpu.matmul %98, %100, %cst_44 {dimension_numbers = #tpu.dot_dimension_numbers<[1], [0], [0], [1], [0, 0, 1, 1], [], []>} : vector<64x192xbf16>, vector<192x64xbf16>, vector<64x64xf32> -> vector<64x64xf32>
    %102 = arith.addf %96, %101 : vector<64x64xf32>
    %103 = vector.extract_strided_slice %87 {offsets = [2, 0, 0], sizes = [8, 8, 192], strides = [1, 1, 1]} : vector<10x8x192xbf16> to vector<8x8x192xbf16>
    %104 = vector.shape_cast %103 : vector<8x8x192xbf16> to vector<64x192xbf16>
    %c2_45 = arith.constant 2 : index
    %c0_46 = arith.constant 0 : index
    %c0_47 = arith.constant 0 : index
    %105 = vector.load %arg6[%c2_45, %c0_46, %c0_47] : memref<3x192x64xbf16, #tpu.memory_space<vmem>>, vector<1x192x64xbf16>
    %106 = vector.shape_cast %105 : vector<1x192x64xbf16> to vector<192x64xbf16>
    %cst_48 = arith.constant dense<0.000000e+00> : vector<64x64xf32>
    %107 = tpu.matmul %104, %106, %cst_48 {dimension_numbers = #tpu.dot_dimension_numbers<[1], [0], [0], [1], [0, 0, 1, 1], [], []>} : vector<64x192xbf16>, vector<192x64xbf16>, vector<64x64xf32> -> vector<64x64xf32>
    %108 = arith.addf %102, %107 : vector<64x64xf32>
    %109 = vector.shape_cast %108 : vector<64x64xf32> to vector<8x8x64xf32>
    %110 = arith.addf %109, %41 : vector<8x8x64xf32>
    %111 = arith.truncf %110 : vector<8x8x64xf32> to vector<8x8x64xbf16>
    %c0_49 = arith.constant 0 : index
    %c0_50 = arith.constant 0 : index
    %c0_51 = arith.constant 0 : index
    %c0_52 = arith.constant 0 : index
    %112 = vector.load %arg8[%c0_49, %c0_50, %c0_51, %c0_52] : memref<1x8x8x64xbf16, #tpu.memory_space<vmem>>, vector<1x8x8x64xbf16>
    %113 = vector.shape_cast %112 : vector<1x8x8x64xbf16> to vector<8x8x64xbf16>
    %114 = vector.shape_cast %111 : vector<8x8x64xbf16> to vector<1x8x8x64xbf16>
    tpu.vector_store %arg8[%c0_49, %c0_50, %c0_51, %c0_52], %114 {strides = array<i32>} : memref<1x8x8x64xbf16, #tpu.memory_space<vmem>>, vector<1x8x8x64xbf16>,
    return
  }
  func.func @transform_0(%arg0: i32) -> (i32, i32, i32, i32, i32) {
    %c0_i32 = arith.constant 0 : i32
    %c0_i32_0 = arith.constant 0 : i32
    %c0_i32_1 = arith.constant 0 : i32
    %c0_i32_2 = arith.constant 0 : i32
    %c0_i32_3 = arith.constant 0 : i32
    return %arg0, %c0_i32, %c0_i32_0, %c0_i32_1, %c0_i32_2 : i32, i32, i32, i32, i32
  }
  func.func @transform_1(%arg0: i32) -> (i32, i32, i32) {
    %c0_i32 = arith.constant 0 : i32
    %c0_i32_0 = arith.constant 0 : i32
    %c0_i32_1 = arith.constant 0 : i32
    %c0_i32_2 = arith.constant 0 : i32
    return %c0_i32, %c0_i32_0, %c0_i32_1 : i32, i32, i32
  }
  func.func @transform_2(%arg0: i32) -> (i32, i32) {
    %c0_i32 = arith.constant 0 : i32
    %c0_i32_0 = arith.constant 0 : i32
    %c0_i32_1 = arith.constant 0 : i32
    return %c0_i32, %c0_i32_0 : i32, i32
  }
  func.func @transform_3(%arg0: i32) -> (i32, i32, i32) {
    %c0_i32 = arith.constant 0 : i32
    %c0_i32_0 = arith.constant 0 : i32
    %c0_i32_1 = arith.constant 0 : i32
    %c0_i32_2 = arith.constant 0 : i32
    return %c0_i32, %c0_i32_0, %c0_i32_1 : i32, i32, i32
  }
  func.func @transform_4(%arg0: i32) -> (i32, i32) {
    %c0_i32 = arith.constant 0 : i32
    %c0_i32_0 = arith.constant 0 : i32
    %c0_i32_1 = arith.constant 0 : i32
    return %c0_i32, %c0_i32_0 : i32, i32
  }
  func.func @transform_5(%arg0: i32) -> (i32, i32, i32) {
    %c0_i32 = arith.constant 0 : i32
    %c0_i32_0 = arith.constant 0 : i32
    %c0_i32_1 = arith.constant 0 : i32
    %c0_i32_2 = arith.constant 0 : i32
    return %c0_i32, %c0_i32_0, %c0_i32_1 : i32, i32, i32
  }
  func.func @transform_6(%arg0: i32) -> (i32, i32) {
    %c0_i32 = arith.constant 0 : i32
    %c0_i32_0 = arith.constant 0 : i32
    %c0_i32_1 = arith.constant 0 : i32
    return %c0_i32, %c0_i32_0 : i32, i32
  }
  func.func @transform_7(%arg0: i32) -> (i32, i32, i32, i32) {
    %c0_i32 = arith.constant 0 : i32
    %c0_i32_0 = arith.constant 0 : i32
    %c0_i32_1 = arith.constant 0 : i32
    %c0_i32_2 = arith.constant 0 : i32
    return %arg0, %c0_i32, %c0_i32_0, %c0_i32_1 : i32, i32, i32, i32
  }
}

module attributes {stable_mosaic.version = 11 : i64} {
  func.func @_level_s2_kernel(%arg0: i32, %arg1: memref<1x4x5x5x64xbf16, #tpu.memory_space<vmem>>, %arg2: memref<3x192x96xbf16, #tpu.memory_space<vmem>>, %arg3: memref<1x96xf32, #tpu.memory_space<vmem>>, %arg4: memref<3x288x96xbf16, #tpu.memory_space<vmem>>, %arg5: memref<1x96xf32, #tpu.memory_space<vmem>>, %arg6: memref<3x288x96xbf16, #tpu.memory_space<vmem>>, %arg7: memref<1x96xf32, #tpu.memory_space<vmem>>, %arg8: memref<1x4x4x96xbf16, #tpu.memory_space<vmem>>) attributes {dimension_semantics = [#tpu.dimension_semantics<parallel>], iteration_bounds = array<i64: 2>, scalar_prefetch = 0 : i64, scratch_operands = 0 : i64, tpu.core_type = #tpu.core_type<tc>, window_params = [{transform_indices = @transform_0, window_bounds = array<i64: 1, 4, 5, 5, 64>}, {pipeline_mode = #tpu.pipeline_mode<synchronous>, transform_indices = @transform_1, window_bounds = array<i64: 3, 192, 96>}, {pipeline_mode = #tpu.pipeline_mode<synchronous>, transform_indices = @transform_2, window_bounds = array<i64: 1, 96>}, {pipeline_mode = #tpu.pipeline_mode<synchronous>, transform_indices = @transform_3, window_bounds = array<i64: 3, 288, 96>}, {pipeline_mode = #tpu.pipeline_mode<synchronous>, transform_indices = @transform_4, window_bounds = array<i64: 1, 96>}, {pipeline_mode = #tpu.pipeline_mode<synchronous>, transform_indices = @transform_5, window_bounds = array<i64: 3, 288, 96>}, {pipeline_mode = #tpu.pipeline_mode<synchronous>, transform_indices = @transform_6, window_bounds = array<i64: 1, 96>}, {transform_indices = @transform_7, window_bounds = array<i64: 1, 4, 4, 96>}]} {
    %c0 = arith.constant 0 : index
    %c0_0 = arith.constant 0 : index
    %c0_1 = arith.constant 0 : index
    %c0_2 = arith.constant 0 : index
    %c0_3 = arith.constant 0 : index
    %0 = vector.load %arg1[%c0, %c0_0, %c0_1, %c0_2, %c0_3] : memref<1x4x5x5x64xbf16, #tpu.memory_space<vmem>>, vector<1x4x5x5x64xbf16>
    %1 = vector.shape_cast %0 : vector<1x4x5x5x64xbf16> to vector<4x5x5x64xbf16>
    %c0_4 = arith.constant 0 : index
    %c0_5 = arith.constant 0 : index
    %2 = vector.load %arg3[%c0_4, %c0_5] : memref<1x96xf32, #tpu.memory_space<vmem>>, vector<1x96xf32>
    %3 = vector.shape_cast %2 : vector<1x96xf32> to vector<1x96xf32>
    %4 = vector.broadcast %3 : vector<1x96xf32> to vector<16x96xf32>
    %5 = vector.extract_strided_slice %1 {offsets = [0, 0, 0, 0], sizes = [1, 4, 4, 64], strides = [1, 1, 1, 1]} : vector<4x5x5x64xbf16> to vector<1x4x4x64xbf16>
    %6 = vector.shape_cast %5 : vector<1x4x4x64xbf16> to vector<4x4x64xbf16>
    %7 = vector.extract_strided_slice %1 {offsets = [1, 0, 0, 0], sizes = [1, 4, 4, 64], strides = [1, 1, 1, 1]} : vector<4x5x5x64xbf16> to vector<1x4x4x64xbf16>
    %8 = vector.shape_cast %7 : vector<1x4x4x64xbf16> to vector<4x4x64xbf16>
    %9 = vector.extract_strided_slice %1 {offsets = [0, 0, 1, 0], sizes = [1, 4, 4, 64], strides = [1, 1, 1, 1]} : vector<4x5x5x64xbf16> to vector<1x4x4x64xbf16>
    %10 = vector.shape_cast %9 : vector<1x4x4x64xbf16> to vector<4x4x64xbf16>
    %11 = tpu.concatenate %6, %8, %10 in 2 : vector<4x4x64xbf16>, vector<4x4x64xbf16>, vector<4x4x64xbf16> -> vector<4x4x192xbf16>
    %12 = vector.shape_cast %11 : vector<4x4x192xbf16> to vector<16x192xbf16>
    %c0_6 = arith.constant 0 : index
    %c0_7 = arith.constant 0 : index
    %c0_8 = arith.constant 0 : index
    %13 = vector.load %arg2[%c0_6, %c0_7, %c0_8] : memref<3x192x96xbf16, #tpu.memory_space<vmem>>, vector<1x192x96xbf16>
    %14 = vector.shape_cast %13 : vector<1x192x96xbf16> to vector<192x96xbf16>
    %cst = arith.constant dense<0.000000e+00> : vector<16x96xf32>
    %15 = tpu.matmul %12, %14, %cst {dimension_numbers = #tpu.dot_dimension_numbers<[1], [0], [0], [1], [0, 0, 1, 1], [], []>} : vector<16x192xbf16>, vector<192x96xbf16>, vector<16x96xf32> -> vector<16x96xf32>
    %16 = arith.addf %4, %15 : vector<16x96xf32>
    %17 = vector.extract_strided_slice %1 {offsets = [2, 0, 0, 0], sizes = [1, 4, 4, 64], strides = [1, 1, 1, 1]} : vector<4x5x5x64xbf16> to vector<1x4x4x64xbf16>
    %18 = vector.shape_cast %17 : vector<1x4x4x64xbf16> to vector<4x4x64xbf16>
    %19 = vector.extract_strided_slice %1 {offsets = [3, 0, 0, 0], sizes = [1, 4, 4, 64], strides = [1, 1, 1, 1]} : vector<4x5x5x64xbf16> to vector<1x4x4x64xbf16>
    %20 = vector.shape_cast %19 : vector<1x4x4x64xbf16> to vector<4x4x64xbf16>
    %21 = vector.extract_strided_slice %1 {offsets = [2, 0, 1, 0], sizes = [1, 4, 4, 64], strides = [1, 1, 1, 1]} : vector<4x5x5x64xbf16> to vector<1x4x4x64xbf16>
    %22 = vector.shape_cast %21 : vector<1x4x4x64xbf16> to vector<4x4x64xbf16>
    %23 = tpu.concatenate %18, %20, %22 in 2 : vector<4x4x64xbf16>, vector<4x4x64xbf16>, vector<4x4x64xbf16> -> vector<4x4x192xbf16>
    %24 = vector.shape_cast %23 : vector<4x4x192xbf16> to vector<16x192xbf16>
    %c1 = arith.constant 1 : index
    %c0_9 = arith.constant 0 : index
    %c0_10 = arith.constant 0 : index
    %25 = vector.load %arg2[%c1, %c0_9, %c0_10] : memref<3x192x96xbf16, #tpu.memory_space<vmem>>, vector<1x192x96xbf16>
    %26 = vector.shape_cast %25 : vector<1x192x96xbf16> to vector<192x96xbf16>
    %cst_11 = arith.constant dense<0.000000e+00> : vector<16x96xf32>
    %27 = tpu.matmul %24, %26, %cst_11 {dimension_numbers = #tpu.dot_dimension_numbers<[1], [0], [0], [1], [0, 0, 1, 1], [], []>} : vector<16x192xbf16>, vector<192x96xbf16>, vector<16x96xf32> -> vector<16x96xf32>
    %28 = arith.addf %16, %27 : vector<16x96xf32>
    %29 = vector.extract_strided_slice %1 {offsets = [0, 1, 0, 0], sizes = [1, 4, 4, 64], strides = [1, 1, 1, 1]} : vector<4x5x5x64xbf16> to vector<1x4x4x64xbf16>
    %30 = vector.shape_cast %29 : vector<1x4x4x64xbf16> to vector<4x4x64xbf16>
    %31 = vector.extract_strided_slice %1 {offsets = [1, 1, 0, 0], sizes = [1, 4, 4, 64], strides = [1, 1, 1, 1]} : vector<4x5x5x64xbf16> to vector<1x4x4x64xbf16>
    %32 = vector.shape_cast %31 : vector<1x4x4x64xbf16> to vector<4x4x64xbf16>
    %33 = vector.extract_strided_slice %1 {offsets = [0, 1, 1, 0], sizes = [1, 4, 4, 64], strides = [1, 1, 1, 1]} : vector<4x5x5x64xbf16> to vector<1x4x4x64xbf16>
    %34 = vector.shape_cast %33 : vector<1x4x4x64xbf16> to vector<4x4x64xbf16>
    %35 = tpu.concatenate %30, %32, %34 in 2 : vector<4x4x64xbf16>, vector<4x4x64xbf16>, vector<4x4x64xbf16> -> vector<4x4x192xbf16>
    %36 = vector.shape_cast %35 : vector<4x4x192xbf16> to vector<16x192xbf16>
    %c2 = arith.constant 2 : index
    %c0_12 = arith.constant 0 : index
    %c0_13 = arith.constant 0 : index
    %37 = vector.load %arg2[%c2, %c0_12, %c0_13] : memref<3x192x96xbf16, #tpu.memory_space<vmem>>, vector<1x192x96xbf16>
    %38 = vector.shape_cast %37 : vector<1x192x96xbf16> to vector<192x96xbf16>
    %cst_14 = arith.constant dense<0.000000e+00> : vector<16x96xf32>
    %39 = tpu.matmul %36, %38, %cst_14 {dimension_numbers = #tpu.dot_dimension_numbers<[1], [0], [0], [1], [0, 0, 1, 1], [], []>} : vector<16x192xbf16>, vector<192x96xbf16>, vector<16x96xf32> -> vector<16x96xf32>
    %40 = arith.addf %28, %39 : vector<16x96xf32>
    %41 = vector.shape_cast %40 : vector<16x96xf32> to vector<4x4x96xf32>
    %cst_15 = arith.constant 0.00999999977 : f32
    %42 = vector.broadcast %cst_15 : f32 to vector<4x4x96xf32>
    %43 = arith.mulf %42, %41 : vector<4x4x96xf32>
    %44 = arith.maximumf %41, %43 : vector<4x4x96xf32>
    %45 = arith.truncf %44 : vector<4x4x96xf32> to vector<4x4x96xbf16>
    %cst_16 = arith.constant 0.000000e+00 : bf16
    %46 = vector.broadcast %cst_16 : bf16 to vector<1x4x96xbf16>
    %47 = tpu.concatenate %46, %45, %46 in 0 : vector<1x4x96xbf16>, vector<4x4x96xbf16>, vector<1x4x96xbf16> -> vector<6x4x96xbf16>
    %cst_17 = arith.constant 0.000000e+00 : bf16
    %48 = vector.broadcast %cst_17 : bf16 to vector<6x1x96xbf16>
    %49 = tpu.concatenate %48, %47, %48 in 1 : vector<6x1x96xbf16>, vector<6x4x96xbf16>, vector<6x1x96xbf16> -> vector<6x6x96xbf16>
    %50 = vector.extract_strided_slice %49 {offsets = [0, 0, 0], sizes = [6, 4, 96], strides = [1, 1, 1]} : vector<6x6x96xbf16> to vector<6x4x96xbf16>
    %51 = vector.extract_strided_slice %49 {offsets = [0, 1, 0], sizes = [6, 4, 96], strides = [1, 1, 1]} : vector<6x6x96xbf16> to vector<6x4x96xbf16>
    %52 = vector.extract_strided_slice %49 {offsets = [0, 2, 0], sizes = [6, 4, 96], strides = [1, 1, 1]} : vector<6x6x96xbf16> to vector<6x4x96xbf16>
    %53 = tpu.concatenate %50, %51, %52 in 2 : vector<6x4x96xbf16>, vector<6x4x96xbf16>, vector<6x4x96xbf16> -> vector<6x4x288xbf16>
    %c0_18 = arith.constant 0 : index
    %c0_19 = arith.constant 0 : index
    %54 = vector.load %arg5[%c0_18, %c0_19] : memref<1x96xf32, #tpu.memory_space<vmem>>, vector<1x96xf32>
    %55 = vector.shape_cast %54 : vector<1x96xf32> to vector<1x96xf32>
    %56 = vector.broadcast %55 : vector<1x96xf32> to vector<16x96xf32>
    %57 = vector.extract_strided_slice %53 {offsets = [0, 0, 0], sizes = [4, 4, 288], strides = [1, 1, 1]} : vector<6x4x288xbf16> to vector<4x4x288xbf16>
    %58 = vector.shape_cast %57 : vector<4x4x288xbf16> to vector<16x288xbf16>
    %c0_20 = arith.constant 0 : index
    %c0_21 = arith.constant 0 : index
    %c0_22 = arith.constant 0 : index
    %59 = vector.load %arg4[%c0_20, %c0_21, %c0_22] : memref<3x288x96xbf16, #tpu.memory_space<vmem>>, vector<1x288x96xbf16>
    %60 = vector.shape_cast %59 : vector<1x288x96xbf16> to vector<288x96xbf16>
    %cst_23 = arith.constant dense<0.000000e+00> : vector<16x96xf32>
    %61 = tpu.matmul %58, %60, %cst_23 {dimension_numbers = #tpu.dot_dimension_numbers<[1], [0], [0], [1], [0, 0, 1, 1], [], []>} : vector<16x288xbf16>, vector<288x96xbf16>, vector<16x96xf32> -> vector<16x96xf32>
    %62 = arith.addf %56, %61 : vector<16x96xf32>
    %63 = vector.extract_strided_slice %53 {offsets = [1, 0, 0], sizes = [4, 4, 288], strides = [1, 1, 1]} : vector<6x4x288xbf16> to vector<4x4x288xbf16>
    %64 = vector.shape_cast %63 : vector<4x4x288xbf16> to vector<16x288xbf16>
    %c1_24 = arith.constant 1 : index
    %c0_25 = arith.constant 0 : index
    %c0_26 = arith.constant 0 : index
    %65 = vector.load %arg4[%c1_24, %c0_25, %c0_26] : memref<3x288x96xbf16, #tpu.memory_space<vmem>>, vector<1x288x96xbf16>
    %66 = vector.shape_cast %65 : vector<1x288x96xbf16> to vector<288x96xbf16>
    %cst_27 = arith.constant dense<0.000000e+00> : vector<16x96xf32>
    %67 = tpu.matmul %64, %66, %cst_27 {dimension_numbers = #tpu.dot_dimension_numbers<[1], [0], [0], [1], [0, 0, 1, 1], [], []>} : vector<16x288xbf16>, vector<288x96xbf16>, vector<16x96xf32> -> vector<16x96xf32>
    %68 = arith.addf %62, %67 : vector<16x96xf32>
    %69 = vector.extract_strided_slice %53 {offsets = [2, 0, 0], sizes = [4, 4, 288], strides = [1, 1, 1]} : vector<6x4x288xbf16> to vector<4x4x288xbf16>
    %70 = vector.shape_cast %69 : vector<4x4x288xbf16> to vector<16x288xbf16>
    %c2_28 = arith.constant 2 : index
    %c0_29 = arith.constant 0 : index
    %c0_30 = arith.constant 0 : index
    %71 = vector.load %arg4[%c2_28, %c0_29, %c0_30] : memref<3x288x96xbf16, #tpu.memory_space<vmem>>, vector<1x288x96xbf16>
    %72 = vector.shape_cast %71 : vector<1x288x96xbf16> to vector<288x96xbf16>
    %cst_31 = arith.constant dense<0.000000e+00> : vector<16x96xf32>
    %73 = tpu.matmul %70, %72, %cst_31 {dimension_numbers = #tpu.dot_dimension_numbers<[1], [0], [0], [1], [0, 0, 1, 1], [], []>} : vector<16x288xbf16>, vector<288x96xbf16>, vector<16x96xf32> -> vector<16x96xf32>
    %74 = arith.addf %68, %73 : vector<16x96xf32>
    %75 = vector.shape_cast %74 : vector<16x96xf32> to vector<4x4x96xf32>
    %cst_32 = arith.constant 0.00999999977 : f32
    %76 = vector.broadcast %cst_32 : f32 to vector<4x4x96xf32>
    %77 = arith.mulf %76, %75 : vector<4x4x96xf32>
    %78 = arith.maximumf %75, %77 : vector<4x4x96xf32>
    %79 = arith.truncf %78 : vector<4x4x96xf32> to vector<4x4x96xbf16>
    %cst_33 = arith.constant 0.000000e+00 : bf16
    %80 = vector.broadcast %cst_33 : bf16 to vector<1x4x96xbf16>
    %81 = tpu.concatenate %80, %79, %80 in 0 : vector<1x4x96xbf16>, vector<4x4x96xbf16>, vector<1x4x96xbf16> -> vector<6x4x96xbf16>
    %cst_34 = arith.constant 0.000000e+00 : bf16
    %82 = vector.broadcast %cst_34 : bf16 to vector<6x1x96xbf16>
    %83 = tpu.concatenate %82, %81, %82 in 1 : vector<6x1x96xbf16>, vector<6x4x96xbf16>, vector<6x1x96xbf16> -> vector<6x6x96xbf16>
    %84 = vector.extract_strided_slice %83 {offsets = [0, 0, 0], sizes = [6, 4, 96], strides = [1, 1, 1]} : vector<6x6x96xbf16> to vector<6x4x96xbf16>
    %85 = vector.extract_strided_slice %83 {offsets = [0, 1, 0], sizes = [6, 4, 96], strides = [1, 1, 1]} : vector<6x6x96xbf16> to vector<6x4x96xbf16>
    %86 = vector.extract_strided_slice %83 {offsets = [0, 2, 0], sizes = [6, 4, 96], strides = [1, 1, 1]} : vector<6x6x96xbf16> to vector<6x4x96xbf16>
    %87 = tpu.concatenate %84, %85, %86 in 2 : vector<6x4x96xbf16>, vector<6x4x96xbf16>, vector<6x4x96xbf16> -> vector<6x4x288xbf16>
    %c0_35 = arith.constant 0 : index
    %c0_36 = arith.constant 0 : index
    %88 = vector.load %arg7[%c0_35, %c0_36] : memref<1x96xf32, #tpu.memory_space<vmem>>, vector<1x96xf32>
    %89 = vector.shape_cast %88 : vector<1x96xf32> to vector<1x96xf32>
    %90 = vector.broadcast %89 : vector<1x96xf32> to vector<16x96xf32>
    %91 = vector.extract_strided_slice %87 {offsets = [0, 0, 0], sizes = [4, 4, 288], strides = [1, 1, 1]} : vector<6x4x288xbf16> to vector<4x4x288xbf16>
    %92 = vector.shape_cast %91 : vector<4x4x288xbf16> to vector<16x288xbf16>
    %c0_37 = arith.constant 0 : index
    %c0_38 = arith.constant 0 : index
    %c0_39 = arith.constant 0 : index
    %93 = vector.load %arg6[%c0_37, %c0_38, %c0_39] : memref<3x288x96xbf16, #tpu.memory_space<vmem>>, vector<1x288x96xbf16>
    %94 = vector.shape_cast %93 : vector<1x288x96xbf16> to vector<288x96xbf16>
    %cst_40 = arith.constant dense<0.000000e+00> : vector<16x96xf32>
    %95 = tpu.matmul %92, %94, %cst_40 {dimension_numbers = #tpu.dot_dimension_numbers<[1], [0], [0], [1], [0, 0, 1, 1], [], []>} : vector<16x288xbf16>, vector<288x96xbf16>, vector<16x96xf32> -> vector<16x96xf32>
    %96 = arith.addf %90, %95 : vector<16x96xf32>
    %97 = vector.extract_strided_slice %87 {offsets = [1, 0, 0], sizes = [4, 4, 288], strides = [1, 1, 1]} : vector<6x4x288xbf16> to vector<4x4x288xbf16>
    %98 = vector.shape_cast %97 : vector<4x4x288xbf16> to vector<16x288xbf16>
    %c1_41 = arith.constant 1 : index
    %c0_42 = arith.constant 0 : index
    %c0_43 = arith.constant 0 : index
    %99 = vector.load %arg6[%c1_41, %c0_42, %c0_43] : memref<3x288x96xbf16, #tpu.memory_space<vmem>>, vector<1x288x96xbf16>
    %100 = vector.shape_cast %99 : vector<1x288x96xbf16> to vector<288x96xbf16>
    %cst_44 = arith.constant dense<0.000000e+00> : vector<16x96xf32>
    %101 = tpu.matmul %98, %100, %cst_44 {dimension_numbers = #tpu.dot_dimension_numbers<[1], [0], [0], [1], [0, 0, 1, 1], [], []>} : vector<16x288xbf16>, vector<288x96xbf16>, vector<16x96xf32> -> vector<16x96xf32>
    %102 = arith.addf %96, %101 : vector<16x96xf32>
    %103 = vector.extract_strided_slice %87 {offsets = [2, 0, 0], sizes = [4, 4, 288], strides = [1, 1, 1]} : vector<6x4x288xbf16> to vector<4x4x288xbf16>
    %104 = vector.shape_cast %103 : vector<4x4x288xbf16> to vector<16x288xbf16>
    %c2_45 = arith.constant 2 : index
    %c0_46 = arith.constant 0 : index
    %c0_47 = arith.constant 0 : index
    %105 = vector.load %arg6[%c2_45, %c0_46, %c0_47] : memref<3x288x96xbf16, #tpu.memory_space<vmem>>, vector<1x288x96xbf16>
    %106 = vector.shape_cast %105 : vector<1x288x96xbf16> to vector<288x96xbf16>
    %cst_48 = arith.constant dense<0.000000e+00> : vector<16x96xf32>
    %107 = tpu.matmul %104, %106, %cst_48 {dimension_numbers = #tpu.dot_dimension_numbers<[1], [0], [0], [1], [0, 0, 1, 1], [], []>} : vector<16x288xbf16>, vector<288x96xbf16>, vector<16x96xf32> -> vector<16x96xf32>
    %108 = arith.addf %102, %107 : vector<16x96xf32>
    %109 = vector.shape_cast %108 : vector<16x96xf32> to vector<4x4x96xf32>
    %110 = arith.addf %109, %41 : vector<4x4x96xf32>
    %111 = arith.truncf %110 : vector<4x4x96xf32> to vector<4x4x96xbf16>
    %c0_49 = arith.constant 0 : index
    %c0_50 = arith.constant 0 : index
    %c0_51 = arith.constant 0 : index
    %c0_52 = arith.constant 0 : index
    %112 = vector.load %arg8[%c0_49, %c0_50, %c0_51, %c0_52] : memref<1x4x4x96xbf16, #tpu.memory_space<vmem>>, vector<1x4x4x96xbf16>
    %113 = vector.shape_cast %112 : vector<1x4x4x96xbf16> to vector<4x4x96xbf16>
    %114 = vector.shape_cast %111 : vector<4x4x96xbf16> to vector<1x4x4x96xbf16>
    tpu.vector_store %arg8[%c0_49, %c0_50, %c0_51, %c0_52], %114 {strides = array<i32>} : memref<1x4x4x96xbf16, #tpu.memory_space<vmem>>, vector<1x4x4x96xbf16>,
    return
  }
  func.func @transform_0(%arg0: i32) -> (i32, i32, i32, i32, i32) {
    %c0_i32 = arith.constant 0 : i32
    %c0_i32_0 = arith.constant 0 : i32
    %c0_i32_1 = arith.constant 0 : i32
    %c0_i32_2 = arith.constant 0 : i32
    %c0_i32_3 = arith.constant 0 : i32
    return %arg0, %c0_i32, %c0_i32_0, %c0_i32_1, %c0_i32_2 : i32, i32, i32, i32, i32
  }
  func.func @transform_1(%arg0: i32) -> (i32, i32, i32) {
    %c0_i32 = arith.constant 0 : i32
    %c0_i32_0 = arith.constant 0 : i32
    %c0_i32_1 = arith.constant 0 : i32
    %c0_i32_2 = arith.constant 0 : i32
    return %c0_i32, %c0_i32_0, %c0_i32_1 : i32, i32, i32
  }
  func.func @transform_2(%arg0: i32) -> (i32, i32) {
    %c0_i32 = arith.constant 0 : i32
    %c0_i32_0 = arith.constant 0 : i32
    %c0_i32_1 = arith.constant 0 : i32
    return %c0_i32, %c0_i32_0 : i32, i32
  }
  func.func @transform_3(%arg0: i32) -> (i32, i32, i32) {
    %c0_i32 = arith.constant 0 : i32
    %c0_i32_0 = arith.constant 0 : i32
    %c0_i32_1 = arith.constant 0 : i32
    %c0_i32_2 = arith.constant 0 : i32
    return %c0_i32, %c0_i32_0, %c0_i32_1 : i32, i32, i32
  }
  func.func @transform_4(%arg0: i32) -> (i32, i32) {
    %c0_i32 = arith.constant 0 : i32
    %c0_i32_0 = arith.constant 0 : i32
    %c0_i32_1 = arith.constant 0 : i32
    return %c0_i32, %c0_i32_0 : i32, i32
  }
  func.func @transform_5(%arg0: i32) -> (i32, i32, i32) {
    %c0_i32 = arith.constant 0 : i32
    %c0_i32_0 = arith.constant 0 : i32
    %c0_i32_1 = arith.constant 0 : i32
    %c0_i32_2 = arith.constant 0 : i32
    return %c0_i32, %c0_i32_0, %c0_i32_1 : i32, i32, i32
  }
  func.func @transform_6(%arg0: i32) -> (i32, i32) {
    %c0_i32 = arith.constant 0 : i32
    %c0_i32_0 = arith.constant 0 : i32
    %c0_i32_1 = arith.constant 0 : i32
    return %c0_i32, %c0_i32_0 : i32, i32
  }
  func.func @transform_7(%arg0: i32) -> (i32, i32, i32, i32) {
    %c0_i32 = arith.constant 0 : i32
    %c0_i32_0 = arith.constant 0 : i32
    %c0_i32_1 = arith.constant 0 : i32
    %c0_i32_2 = arith.constant 0 : i32
    return %arg0, %c0_i32, %c0_i32_0, %c0_i32_1 : i32, i32, i32, i32
  }
}

</mosaic_0001>

<llo_original>
// kernel: feature_extractor.3
$region0: #{feature_extractor.3}
  #allocation0 [shape = 'u32[]', space=smem, size = 0x4, offset = 0x4, fixed_abs, tag = 'smem constant byte address 0x4 - core index']
  #allocation1 [shape = 'u32[144,128]{1,0:T(1,128)}', space=vmem, size = 0x12000, scoped, tag = 'internal scratch']
  %s0 = inlined_call_operand.vmem [shape: bf16[2,16,16,48], index: 0, kind: input, shape index: {}]
  %s1 = inlined_call_operand.vmem [shape: bf16[3,144,48], index: 1, kind: input, shape index: {}]
  %s2 = inlined_call_operand.vmem [shape: f32[1,48], index: 2, kind: input, shape index: {}]
  %s3 = inlined_call_operand.vmem [shape: bf16[3,144,48], index: 3, kind: input, shape index: {}]
  %s4 = inlined_call_operand.vmem [shape: f32[1,48], index: 4, kind: input, shape index: {}]
  %s5 = inlined_call_operand.vmem [shape: bf16[3,144,48], index: 5, kind: input, shape index: {}]
  %s6 = inlined_call_operand.vmem [shape: f32[1,48], index: 6, kind: input, shape index: {}]
  %s7 = inlined_call_operand.vmem [shape: bf16[2,16,16,48], index: 7, kind: output, shape index: {}]
  %s8 = sld [smem:[#allocation0]]
  $region61: #{feature_extractor.3} parent=0
    _
  %s10 = ssub.s32 1, %s8
  %s11 = scalar_select 0, %s10, %s8
  loop: start=0, step=1, limit=4
  $region2: #{feature_extractor.3} parent=0 // loop_pre_header
    _
  $region3: #{feature_extractor.3} parent=0 // loop_header
    %s13 = sphi 0, %s17
    %p14 = scmp.ge.s32.totalorder %s13, 4
    %s23 = sphi 0, %s25
    %s26 = sphi 0, %s23
    %s27 = sphi 0, %s26
    %s43 = sphi 0, %s27
    %s47 = sphi 0, %s47
    %s49 = sphi 0, %s47
    %s50 = sphi 0, %s49
    %s64 = sphi 0, %s50
    %s68 = sphi 0, %s68
    %s70 = sphi 0, %s68
    %s71 = sphi 0, %s70
    %s85 = sphi 0, %s71
    %s89 = sphi 0, %s89
    %s91 = sphi 0, %s89
    %s92 = sphi 0, %s91
    %s106 = sphi 0, %s92
    %s110 = sphi 0, %s110
    %s112 = sphi 0, %s110
    %s113 = sphi 0, %s112
    %s127 = sphi 0, %s113
    %s131 = sphi 0, %s131
    %s133 = sphi 0, %s131
    %s134 = sphi 0, %s133
    %s148 = sphi 0, %s134
    %s152 = sphi 0, %s152
    %s154 = sphi 0, %s152
    %s155 = sphi 0, %s154
    %s169 = sphi 0, %s155
    %s175 = sphi 0, %s177
    %s178 = sphi 0, %s175
    %s179 = sphi 0, %s178
    %s195 = sphi 0, %s179
  $region4: #{feature_extractor.3} parent=0 // loop_header_branch
    %16 = sbr.rel (%p14) target = $region8
  $region5: #{feature_extractor.3} parent=0 // loop_body
    %s18 = ssub.s32 %s13, 1
    %s19 = ssub.s32 %s13, 2
    %s20 = sadd.s32 %s13, 1
    %s21 = ssub.s32 %s13, %s20
    %p22 = scmp.eq.s32.totalorder %s21, 0
    %s24 = sadd.s32 %s23, 1
    %s25 = scalar_select %p22, %s23, %s24
    %p28 = pneg %p22
    %p29 = scmp.eq.s32.totalorder %s13, 1
    %p30 = por %p28, %p29
    %p31 = scmp.ne.s32.totalorder %s23, %s26
    %p32 = scmp.eq.s32.totalorder %s13, 0
    %p33 = por %p31, %p32
    %p34 = scmp.ne.s32.totalorder %s23, %s26
    %p35 = scmp.eq.s32.totalorder %s18, 1
    %p36 = por %p34, %p35
    %p37 = scmp.ne.s32.totalorder %s26, %s27
    %p38 = scmp.eq.s32.totalorder %s18, 0
    %p39 = por %p37, %p38
    %p40 = scmp.ne.s32.totalorder %s26, %s27
    %p41 = scmp.eq.s32.totalorder %s19, 1
    %p42 = por %p40, %p41
    %p44 = scmp.ne.s32.totalorder %s27, %s43
    %p45 = scmp.eq.s32.totalorder %s19, 0
    %p46 = por %p44, %p45
    %s48 = sadd.s32 %s47, 1
    %p51 = scmp.eq.s32.totalorder %s13, 1
    %p52 = scmp.ne.s32.totalorder %s47, %s49
    %p53 = scmp.eq.s32.totalorder %s13, 0
    %p54 = por %p52, %p53
    %p55 = scmp.ne.s32.totalorder %s47, %s49
    %p56 = scmp.eq.s32.totalorder %s18, 1
    %p57 = por %p55, %p56
    %p58 = scmp.ne.s32.totalorder %s49, %s50
    %p59 = scmp.eq.s32.totalorder %s18, 0
    %p60 = por %p58, %p59
    %p61 = scmp.ne.s32.totalorder %s49, %s50
    %p62 = scmp.eq.s32.totalorder %s19, 1
    %p63 = por %p61, %p62
    %p65 = scmp.ne.s32.totalorder %s50, %s64
    %p66 = scmp.eq.s32.totalorder %s19, 0
    %p67 = por %p65, %p66
    %s69 = sadd.s32 %s68, 1
    %p72 = scmp.eq.s32.totalorder %s13, 1
    %p73 = scmp.ne.s32.totalorder %s68, %s70
    %p74 = scmp.eq.s32.totalorder %s13, 0
    %p75 = por %p73, %p74
    %p76 = scmp.ne.s32.totalorder %s68, %s70
    %p77 = scmp.eq.s32.totalorder %s18, 1
    %p78 = por %p76, %p77
    %p79 = scmp.ne.s32.totalorder %s70, %s71
    %p80 = scmp.eq.s32.totalorder %s18, 0
    %p81 = por %p79, %p80
    %p82 = scmp.ne.s32.totalorder %s70, %s71
    %p83 = scmp.eq.s32.totalorder %s19, 1
    %p84 = por %p82, %p83
    %p86 = scmp.ne.s32.totalorder %s71, %s85
    %p87 = scmp.eq.s32.totalorder %s19, 0
    %p88 = por %p86, %p87
    %s90 = sadd.s32 %s89, 1
    %p93 = scmp.eq.s32.totalorder %s13, 1
    %p94 = scmp.ne.s32.totalorder %s89, %s91
    %p95 = scmp.eq.s32.totalorder %s13, 0
    %p96 = por %p94, %p95
    %p97 = scmp.ne.s32.totalorder %s89, %s91
    %p98 = scmp.eq.s32.totalorder %s18, 1
    %p99 = por %p97, %p98
    %p100 = scmp.ne.s32.totalorder %s91, %s92
    %p101 = scmp.eq.s32.totalorder %s18, 0
    %p102 = por %p100, %p101
    %p103 = scmp.ne.s32.totalorder %s91, %s92
    %p104 = scmp.eq.s32.totalorder %s19, 1
    %p105 = por %p103, %p104
    %p107 = scmp.ne.s32.totalorder %s92, %s106
    %p108 = scmp.eq.s32.totalorder %s19, 0
    %p109 = por %p107, %p108
    %s111 = sadd.s32 %s110, 1
    %p114 = scmp.eq.s32.totalorder %s13, 1
    %p115 = scmp.ne.s32.totalorder %s110, %s112
    %p116 = scmp.eq.s32.totalorder %s13, 0
    %p117 = por %p115, %p116
    %p118 = scmp.ne.s32.totalorder %s110, %s112
    %p119 = scmp.eq.s32.totalorder %s18, 1
    %p120 = por %p118, %p119
    %p121 = scmp.ne.s32.totalorder %s112, %s113
    %p122 = scmp.eq.s32.totalorder %s18, 0
    %p123 = por %p121, %p122
    %p124 = scmp.ne.s32.totalorder %s112, %s113
    %p125 = scmp.eq.s32.totalorder %s19, 1
    %p126 = por %p124, %p125
    %p128 = scmp.ne.s32.totalorder %s113, %s127
    %p129 = scmp.eq.s32.totalorder %s19, 0
    %p130 = por %p128, %p129
    %s132 = sadd.s32 %s131, 1
    %p135 = scmp.eq.s32.totalorder %s13, 1
    %p136 = scmp.ne.s32.totalorder %s131, %s133
    %p137 = scmp.eq.s32.totalorder %s13, 0
    %p138 = por %p136, %p137
    %p139 = scmp.ne.s32.totalorder %s131, %s133
    %p140 = scmp.eq.s32.totalorder %s18, 1
    %p141 = por %p139, %p140
    %p142 = scmp.ne.s32.totalorder %s133, %s134
    %p143 = scmp.eq.s32.totalorder %s18, 0
    %p144 = por %p142, %p143
    %p145 = scmp.ne.s32.totalorder %s133, %s134
    %p146 = scmp.eq.s32.totalorder %s19, 1
    %p147 = por %p145, %p146
    %p149 = scmp.ne.s32.totalorder %s134, %s148
    %p150 = scmp.eq.s32.totalorder %s19, 0
    %p151 = por %p149, %p150
    %s153 = sadd.s32 %s152, 1
    %p156 = scmp.eq.s32.totalorder %s13, 1
    %p157 = scmp.ne.s32.totalorder %s152, %s154
    %p158 = scmp.eq.s32.totalorder %s13, 0
    %p159 = por %p157, %p158
    %p160 = scmp.ne.s32.totalorder %s152, %s154
    %p161 = scmp.eq.s32.totalorder %s18, 1
    %p162 = por %p160, %p161
    %p163 = scmp.ne.s32.totalorder %s154, %s155
    %p164 = scmp.eq.s32.totalorder %s18, 0
    %p165 = por %p163, %p164
    %p166 = scmp.ne.s32.totalorder %s154, %s155
    %p167 = scmp.eq.s32.totalorder %s19, 1
    %p168 = por %p166, %p167
    %p170 = scmp.ne.s32.totalorder %s155, %s169
    %p171 = scmp.eq.s32.totalorder %s19, 0
    %p172 = por %p170, %p171
    %s173 = ssub.s32 %s13, %s20
    %p174 = scmp.eq.s32.totalorder %s173, 0
    %s176 = sadd.s32 %s175, 1
    %s177 = scalar_select %p174, %s175, %s176
    %p180 = pneg %p174
    %p181 = scmp.eq.s32.totalorder %s13, 1
    %p182 = por %p180, %p181
    %p183 = scmp.ne.s32.totalorder %s175, %s178
    %p184 = scmp.eq.s32.totalorder %s13, 0
    %p185 = por %p183, %p184
    %p186 = scmp.ne.s32.totalorder %s175, %s178
    %p187 = scmp.eq.s32.totalorder %s18, 1
    %p188 = por %p186, %p187
    %p189 = scmp.ne.s32.totalorder %s178, %s179
    %p190 = scmp.eq.s32.totalorder %s18, 0
    %p191 = por %p189, %p190
    %p192 = scmp.ne.s32.totalorder %s178, %s179
    %p193 = scmp.eq.s32.totalorder %s19, 1
    %p194 = por %p192, %p193
    %p196 = scmp.ne.s32.totalorder %s179, %s195
    %p197 = scmp.eq.s32.totalorder %s19, 0
    %p198 = por %p196, %p197
    %p199 = scmp.le.s32.totalorder 1, %s13
    %p200 = scmp.lt.s32.totalorder %s13, 3
    %p201 = pnand %p199, %p200
    %p202 = pneg %p201
    // Predicated region
    $region9: #{feature_extractor.3} parent=5 // pred_check
      _
    $region10: #{feature_extractor.3} parent=5 // pred_check_branch
      %204 = sbr.rel (%p201) target = $region12
    $region11: #{feature_extractor.3} parent=5 // pred_region
      %s205 = ssub.s32 %s13, 1
      // Predicated region
      $region13: #{feature_extractor.3} parent=11 // pred_check
        %p206 = pneg %p60
      $region14: #{feature_extractor.3} parent=11 // pred_check_branch
        %208 = sbr.rel (%p206) target = $region16
      $region15: #{feature_extractor.3} parent=11 // pred_region
        _
      $region16: #{feature_extractor.3} parent=11 // pred_fallthru
        _
      // Predicated region
      $region17: #{feature_extractor.3} parent=11 // pred_check
        %p209 = pneg %p81
      $region18: #{feature_extractor.3} parent=11 // pred_check_branch
        %211 = sbr.rel (%p209) target = $region20
      $region19: #{feature_extractor.3} parent=11 // pred_region
        _
      $region20: #{feature_extractor.3} parent=11 // pred_fallthru
        _
      // Predicated region
      $region21: #{feature_extractor.3} parent=11 // pred_check
        %p212 = pneg %p102
      $region22: #{feature_extractor.3} parent=11 // pred_check_branch
        %214 = sbr.rel (%p212) target = $region24
      $region23: #{feature_extractor.3} parent=11 // pred_region
        _
      $region24: #{feature_extractor.3} parent=11 // pred_fallthru
        _
      // Predicated region
      $region25: #{feature_extractor.3} parent=11 // pred_check
        %p215 = pneg %p123
      $region26: #{feature_extractor.3} parent=11 // pred_check_branch
        %217 = sbr.rel (%p215) target = $region28
      $region27: #{feature_extractor.3} parent=11 // pred_region
        _
      $region28: #{feature_extractor.3} parent=11 // pred_fallthru
        _
      // Predicated region
      $region29: #{feature_extractor.3} parent=11 // pred_check
        %p218 = pneg %p144
      $region30: #{feature_extractor.3} parent=11 // pred_check_branch
        %220 = sbr.rel (%p218) target = $region32
      $region31: #{feature_extractor.3} parent=11 // pred_region
        _
      $region32: #{feature_extractor.3} parent=11 // pred_fallthru
        _
      // Predicated region
      $region33: #{feature_extractor.3} parent=11 // pred_check
        %p221 = pneg %p165
      $region34: #{feature_extractor.3} parent=11 // pred_check_branch
        %223 = sbr.rel (%p221) target = $region36
      $region35: #{feature_extractor.3} parent=11 // pred_region
        _
      $region36: #{feature_extractor.3} parent=11 // pred_fallthru
        _
    $region12: #{feature_extractor.3} parent=5 // pred_fallthru
      _
    %p224 = scmp.lt.s32.totalorder %s13, 2
    // Predicated region
    $region37: #{feature_extractor.3} parent=5 // pred_check
      %p225 = pneg %p224
    $region38: #{feature_extractor.3} parent=5 // pred_check_branch
      %227 = sbr.rel (%p225) target = $region40
    $region39: #{feature_extractor.3} parent=5 // pred_region
      // Predicated region
      $region41: #{feature_extractor.3} parent=39 // pred_check
        %p228 = pneg %p33
      $region42: #{feature_extractor.3} parent=39 // pred_check_branch
        %230 = sbr.rel (%p228) target = $region44
      $region43: #{feature_extractor.3} parent=39 // pred_region
        %p231 = scmp.lt.s32.totalorder %s13, 1
        %s232 = scalar_select %p231, %s13, 1
        %s233 = smul.addr %s232, 32
        %s234 = smul.addr %s233, 4
        %s235 = scalar_lea.vmem %s0, %s234
      $region44: #{feature_extractor.3} parent=39 // pred_fallthru
        _
    $region40: #{feature_extractor.3} parent=5 // pred_fallthru
      _
    %p236 = scmp.le.s32.totalorder 1, %s13
    %p237 = scmp.lt.s32.totalorder %s13, 3
    %p238 = pnand %p236, %p237
    %p239 = pneg %p238
    // Predicated region
    $region45: #{feature_extractor.3} parent=5 // pred_check
      _
    $region46: #{feature_extractor.3} parent=5 // pred_check_branch
      %241 = sbr.rel (%p238) target = $region48
    $region47: #{feature_extractor.3} parent=5 // pred_region
      %s242 = ssub.s32 %s13, 1
      %p243 = scmp.lt.s32.totalorder %s18, 1
      %s244 = scalar_select %p243, %s18, 1
      %s245 = smul.addr %s244, 32
      %s246 = smul.addr %s245, 4
      %s247 = scalar_lea.vmem %s0, %s246
      %p248 = pneg %p39
      %p249 = pneg %p36
      %p250 = pneg %p60
      %p251 = pneg %p57
      %p252 = pneg %p81
      %p253 = pneg %p78
      %p254 = pneg %p102
      %p255 = pneg %p99
      %p256 = pneg %p123
      %p257 = pneg %p120
      %p258 = pneg %p144
      %p259 = pneg %p141
      %p260 = pneg %p165
      %p261 = pneg %p162
      %p262 = pneg %p191
      %p263 = pneg %p188
      %p264 = scmp.lt.s32.totalorder %s18, 1
      %s265 = scalar_select %p264, %s18, 1
      %s266 = smul.addr %s265, 32
      %s267 = smul.addr %s266, 4
      %s268 = scalar_lea.vmem %s7, %s267
      %p269 = scmp.lt.s32.totalorder %s18, 1
      %s270 = scalar_select %p269, %s18, 1
      %s271 = smul.addr %s270, 32
      %s272 = smul.addr %s271, 4
      %s273 = scalar_lea.vmem %s0, %s272
      %p274 = scmp.lt.s32.totalorder %s18, 1
      %s275 = scalar_select %p274, %s18, 1
      %s276 = smul.addr %s275, 32
      %s277 = smul.addr %s276, 4
      %s278 = scalar_lea.vmem %s7, %s277
      %v280 = vld [vmem:[%s273] sm:$0xf]
      %v281 = vld [vmem:[%s273 + $0x4] sm:$0xf]
      %v282 = vld [vmem:[%s273 + $0x8] sm:$0xf]
      %v283 = vld [vmem:[%s273 + $0xc] sm:$0xf]
      %v284 = vld [vmem:[%s273 + $0x10] sm:$0xf]
      %v285 = vld [vmem:[%s273 + $0x14] sm:$0xf]
      %v286 = vld [vmem:[%s273 + $0x18] sm:$0xf]
      %v287 = vld [vmem:[%s273 + $0x1c] sm:$0xf]
      %v288 = vld [vmem:[%s273 + $0x20] sm:$0xf]
      %v289 = vld [vmem:[%s273 + $0x24] sm:$0xf]
      %v290 = vld [vmem:[%s273 + $0x28] sm:$0xf]
      %v291 = vld [vmem:[%s273 + $0x2c] sm:$0xf]
      %v292 = vld [vmem:[%s273 + $0x30] sm:$0xf]
      %v293 = vld [vmem:[%s273 + $0x34] sm:$0xf]
      %v294 = vld [vmem:[%s273 + $0x38] sm:$0xf]
      %v295 = vld [vmem:[%s273 + $0x3c] sm:$0xf]
      %v296 = vld [vmem:[%s273 + $0x40] sm:$0xf]
      %v297 = vld [vmem:[%s273 + $0x44] sm:$0xf]
      %v298 = vld [vmem:[%s273 + $0x48] sm:$0xf]
      %v299 = vld [vmem:[%s273 + $0x4c] sm:$0xf]
      %v300 = vld [vmem:[%s273 + $0x50] sm:$0xf]
      %v301 = vld [vmem:[%s273 + $0x54] sm:$0xf]
      %v302 = vld [vmem:[%s273 + $0x58] sm:$0xf]
      %v303 = vld [vmem:[%s273 + $0x5c] sm:$0xf]
      %v304 = vld [vmem:[%s273 + $0x60] sm:$0xf]
      %v305 = vld [vmem:[%s273 + $0x64] sm:$0xf]
      %v306 = vld [vmem:[%s273 + $0x68] sm:$0xf]
      %v307 = vld [vmem:[%s273 + $0x6c] sm:$0xf]
      %v308 = vld [vmem:[%s273 + $0x70] sm:$0xf]
      %v309 = vld [vmem:[%s273 + $0x74] sm:$0xf]
      %v310 = vld [vmem:[%s273 + $0x78] sm:$0xf]
      %v311 = vld [vmem:[%s273 + $0x7c] sm:$0xf]
      %v344 = vunpack.c.l.b16 %v280
      %v345 = vunpack.c.l.b16 %v281
      %v346 = vunpack.c.l.b16 %v282
      %v347 = vunpack.c.l.b16 %v283
      %v348 = vunpack.c.l.b16 %v284
      %v349 = vunpack.c.l.b16 %v285
      %v350 = vunpack.c.l.b16 %v286
      %v351 = vunpack.c.l.b16 %v287
      %v352 = vunpack.c.l.b16 %v288
      %v353 = vunpack.c.l.b16 %v289
      %v354 = vunpack.c.l.b16 %v290
      %v355 = vunpack.c.l.b16 %v291
      %v356 = vunpack.c.l.b16 %v292
      %v357 = vunpack.c.l.b16 %v293
      %v358 = vunpack.c.l.b16 %v294
      %v359 = vunpack.c.l.b16 %v295
      %v360 = vunpack.c.l.b16 %v296
      %v361 = vunpack.c.l.b16 %v297
      %v362 = vunpack.c.l.b16 %v298
      %v363 = vunpack.c.l.b16 %v299
      %v364 = vunpack.c.l.b16 %v300
      %v365 = vunpack.c.l.b16 %v301
      %v366 = vunpack.c.l.b16 %v302
      %v367 = vunpack.c.l.b16 %v303
      %v368 = vunpack.c.l.b16 %v304
      %v369 = vunpack.c.l.b16 %v305
      %v370 = vunpack.c.l.b16 %v306
      %v371 = vunpack.c.l.b16 %v307
      %v372 = vunpack.c.l.b16 %v308
      %v373 = vunpack.c.l.b16 %v309
      %v374 = vunpack.c.l.b16 %v310
      %v375 = vunpack.c.l.b16 %v311
      %v376 = vpack.c.b16 %v345, %v344
      %v377 = vpack.c.b16 %v347, %v346
      %v378 = vpack.c.b16 %v349, %v348
      %v379 = vpack.c.b16 %v351, %v350
      %v380 = vpack.c.b16 %v353, %v352
      %v381 = vpack.c.b16 %v355, %v354
      %v382 = vpack.c.b16 %v357, %v356
      %v383 = vpack.c.b16 %v359, %v358
      %v384 = vpack.c.b16 %v361, %v360
      %v385 = vpack.c.b16 %v363, %v362
      %v386 = vpack.c.b16 %v365, %v364
      %v387 = vpack.c.b16 %v367, %v366
      %v388 = vpack.c.b16 %v369, %v368
      %v389 = vpack.c.b16 %v371, %v370
      %v390 = vpack.c.b16 %v373, %v372
      %v391 = vpack.c.b16 %v375, %v374
      %v393 = vshrl.u32 0, 16
      %v395 = vrot.slane %v393, 7
      %v396 = vshll.u32 0, 16
      %v398 = vor.u32 %v395, %v396
      %v400 = vshrl.u32 %v376, 16
      %v402 = vrot.slane %v400, 7
      %v403 = vshll.u32 %v376, 16
      %v405 = vor.u32 %v402, %v403
      %v407 = vshrl.u32 %v377, 16
      %v409 = vrot.slane %v407, 7
      %v410 = vshll.u32 %v377, 16
      %v412 = vor.u32 %v409, %v410
      %v414 = vshrl.u32 %v378, 16
      %v416 = vrot.slane %v414, 7
      %v417 = vshll.u32 %v378, 16
      %v419 = vor.u32 %v416, %v417
      %v421 = vshrl.u32 %v379, 16
      %v423 = vrot.slane %v421, 7
      %v424 = vshll.u32 %v379, 16
      %v426 = vor.u32 %v423, %v424
      %v428 = vshrl.u32 %v380, 16
      %v430 = vrot.slane %v428, 7
      %v431 = vshll.u32 %v380, 16
      %v433 = vor.u32 %v430, %v431
      %v435 = vshrl.u32 %v381, 16
      %v437 = vrot.slane %v435, 7
      %v438 = vshll.u32 %v381, 16
      %v440 = vor.u32 %v437, %v438
      %v442 = vshrl.u32 %v382, 16
      %v444 = vrot.slane %v442, 7
      %v445 = vshll.u32 %v382, 16
      %v447 = vor.u32 %v444, %v445
      %v449 = vshrl.u32 %v383, 16
      %v451 = vrot.slane %v449, 7
      %v452 = vshll.u32 %v383, 16
      %v454 = vor.u32 %v451, %v452
      %v456 = vshrl.u32 %v384, 16
      %v458 = vrot.slane %v456, 7
      %v459 = vshll.u32 %v384, 16
      %v461 = vor.u32 %v458, %v459
      %v463 = vshrl.u32 %v385, 16
      %v465 = vrot.slane %v463, 7
      %v466 = vshll.u32 %v385, 16
      %v468 = vor.u32 %v465, %v466
      %v470 = vshrl.u32 %v386, 16
      %v472 = vrot.slane %v470, 7
      %v473 = vshll.u32 %v386, 16
      %v475 = vor.u32 %v472, %v473
      %v477 = vshrl.u32 %v387, 16
      %v479 = vrot.slane %v477, 7
      %v480 = vshll.u32 %v387, 16
      %v482 = vor.u32 %v479, %v480
      %v484 = vshrl.u32 %v388, 16
      %v486 = vrot.slane %v484, 7
      %v487 = vshll.u32 %v388, 16
      %v489 = vor.u32 %v486, %v487
      %v491 = vshrl.u32 %v389, 16
      %v493 = vrot.slane %v491, 7
      %v494 = vshll.u32 %v389, 16
      %v496 = vor.u32 %v493, %v494
      %v498 = vshrl.u32 %v390, 16
      %v500 = vrot.slane %v498, 7
      %v501 = vshll.u32 %v390, 16
      %v503 = vor.u32 %v500, %v501
      %v505 = vshrl.u32 %v391, 16
      %v507 = vrot.slane %v505, 7
      %v508 = vshll.u32 %v391, 16
      %v510 = vor.u32 %v507, %v508
      %vm545 = vcmask 1040384
      %vm546 = vsmask.f32 256
      %vm547 = vmand %vm545, %vm546
      %v548 = vsel %vm547, 0, %v398
      %v549 = vsel %vm547, 0, %v405
      %v550 = vsel %vm547, 0, %v412
      %v551 = vsel %vm547, 0, %v419
      %v552 = vsel %vm547, 0, %v426
      %v553 = vsel %vm547, 0, %v433
      %v554 = vsel %vm547, 0, %v440
      %v555 = vsel %vm547, 0, %v447
      %v556 = vsel %vm547, 0, %v454
      %v557 = vsel %vm547, 0, %v461
      %v558 = vsel %vm547, 0, %v468
      %v559 = vsel %vm547, 0, %v475
      %v560 = vsel %vm547, 0, %v482
      %v561 = vsel %vm547, 0, %v489
      %v562 = vsel %vm547, 0, %v496
      %v563 = vsel %vm547, 0, %v503
      %v564 = vsel %vm547, 0, %v510
      %v565 = vsel %vm547, %v395, 0
      %v566 = vsel %vm547, %v402, 0
      %v567 = vsel %vm547, %v409, 0
      %v568 = vsel %vm547, %v416, 0
      %v569 = vsel %vm547, %v423, 0
      %v570 = vsel %vm547, %v430, 0
      %v571 = vsel %vm547, %v437, 0
      %v572 = vsel %vm547, %v444, 0
      %v573 = vsel %vm547, %v451, 0
      %v574 = vsel %vm547, %v458, 0
      %v575 = vsel %vm547, %v465, 0
      %v576 = vsel %vm547, %v472, 0
      %v577 = vsel %vm547, %v479, 0
      %v578 = vsel %vm547, %v486, 0
      %v579 = vsel %vm547, %v493, 0
      %v580 = vsel %vm547, %v500, 0
      %v581 = vsel %vm547, %v507, 0
      %vm582 = vsmask.f32 7424
      %v584 = vshrl.u32 %v548, 16
      %v586 = vshll.u32 %v548, 16
      %v588 = vrot.slane %v586, 1
      %v589 = vor.u32 %v584, %v588
      %v591 = vshll.u32 %v565, 16
      %v593 = vrot.slane %v591, 1
      %v594 = vsel %vm582, %v589, %v593
      %v596 = vshrl.u32 %v549, 16
      %v598 = vshll.u32 %v549, 16
      %v600 = vrot.slane %v598, 1
      %v601 = vor.u32 %v596, %v600
      %v603 = vshll.u32 %v566, 16
      %v605 = vrot.slane %v603, 1
      %v606 = vsel %vm582, %v601, %v605
      %v608 = vshrl.u32 %v550, 16
      %v610 = vshll.u32 %v550, 16
      %v612 = vrot.slane %v610, 1
      %v613 = vor.u32 %v608, %v612
      %v615 = vshll.u32 %v567, 16
      %v617 = vrot.slane %v615, 1
      %v618 = vsel %vm582, %v613, %v617
      %v620 = vshrl.u32 %v551, 16
      %v622 = vshll.u32 %v551, 16
      %v624 = vrot.slane %v622, 1
      %v625 = vor.u32 %v620, %v624
      %v627 = vshll.u32 %v568, 16
      %v629 = vrot.slane %v627, 1
      %v630 = vsel %vm582, %v625, %v629
      %v632 = vshrl.u32 %v552, 16
      %v634 = vshll.u32 %v552, 16
      %v636 = vrot.slane %v634, 1
      %v637 = vor.u32 %v632, %v636
      %v639 = vshll.u32 %v569, 16
      %v641 = vrot.slane %v639, 1
      %v642 = vsel %vm582, %v637, %v641
      %v644 = vshrl.u32 %v553, 16
      %v646 = vshll.u32 %v553, 16
      %v648 = vrot.slane %v646, 1
      %v649 = vor.u32 %v644, %v648
      %v651 = vshll.u32 %v570, 16
      %v653 = vrot.slane %v651, 1
      %v654 = vsel %vm582, %v649, %v653
      %v656 = vshrl.u32 %v554, 16
      %v658 = vshll.u32 %v554, 16
      %v660 = vrot.slane %v658, 1
      %v661 = vor.u32 %v656, %v660
      %v663 = vshll.u32 %v571, 16
      %v665 = vrot.slane %v663, 1
      %v666 = vsel %vm582, %v661, %v665
      %v668 = vshrl.u32 %v555, 16
      %v670 = vshll.u32 %v555, 16
      %v672 = vrot.slane %v670, 1
      %v673 = vor.u32 %v668, %v672
      %v675 = vshll.u32 %v572, 16
      %v677 = vrot.slane %v675, 1
      %v678 = vsel %vm582, %v673, %v677
      %v680 = vshrl.u32 %v556, 16
      %v682 = vshll.u32 %v556, 16
      %v684 = vrot.slane %v682, 1
      %v685 = vor.u32 %v680, %v684
      %v687 = vshll.u32 %v573, 16
      %v689 = vrot.slane %v687, 1
      %v690 = vsel %vm582, %v685, %v689
      %v692 = vshrl.u32 %v557, 16
      %v694 = vshll.u32 %v557, 16
      %v696 = vrot.slane %v694, 1
      %v697 = vor.u32 %v692, %v696
      %v699 = vshll.u32 %v574, 16
      %v701 = vrot.slane %v699, 1
      %v702 = vsel %vm582, %v697, %v701
      %v704 = vshrl.u32 %v558, 16
      %v706 = vshll.u32 %v558, 16
      %v708 = vrot.slane %v706, 1
      %v709 = vor.u32 %v704, %v708
      %v711 = vshll.u32 %v575, 16
      %v713 = vrot.slane %v711, 1
      %v714 = vsel %vm582, %v709, %v713
      %v716 = vshrl.u32 %v559, 16
      %v718 = vshll.u32 %v559, 16
      %v720 = vrot.slane %v718, 1
      %v721 = vor.u32 %v716, %v720
      %v723 = vshll.u32 %v576, 16
      %v725 = vrot.slane %v723, 1
      %v726 = vsel %vm582, %v721, %v725
      %v728 = vshrl.u32 %v560, 16
      %v730 = vshll.u32 %v560, 16
      %v732 = vrot.slane %v730, 1
      %v733 = vor.u32 %v728, %v732
      %v735 = vshll.u32 %v577, 16
      %v737 = vrot.slane %v735, 1
      %v738 = vsel %vm582, %v733, %v737
      %v740 = vshrl.u32 %v561, 16
      %v742 = vshll.u32 %v561, 16
      %v744 = vrot.slane %v742, 1
      %v745 = vor.u32 %v740, %v744
      %v747 = vshll.u32 %v578, 16
      %v749 = vrot.slane %v747, 1
      %v750 = vsel %vm582, %v745, %v749
      %v752 = vshrl.u32 %v562, 16
      %v754 = vshll.u32 %v562, 16
      %v756 = vrot.slane %v754, 1
      %v757 = vor.u32 %v752, %v756
      %v759 = vshll.u32 %v579, 16
      %v761 = vrot.slane %v759, 1
      %v762 = vsel %vm582, %v757, %v761
      %v764 = vshrl.u32 %v563, 16
      %v766 = vshll.u32 %v563, 16
      %v768 = vrot.slane %v766, 1
      %v769 = vor.u32 %v764, %v768
      %v771 = vshll.u32 %v580, 16
      %v773 = vrot.slane %v771, 1
      %v774 = vsel %vm582, %v769, %v773
      %v776 = vshrl.u32 %v564, 16
      %v778 = vshll.u32 %v564, 16
      %v780 = vrot.slane %v778, 1
      %v781 = vor.u32 %v776, %v780
      %v783 = vshll.u32 %v581, 16
      %v785 = vrot.slane %v783, 1
      %v786 = vsel %vm582, %v781, %v785
      %787 = vrot.lane.b32.xlu0 %v594, 48
      %v788 = vpop.permute.xlu0 %787
      %789 = vrot.lane.b32.xlu0 %v606, 48
      %v790 = vpop.permute.xlu0 %789
      %791 = vrot.lane.b32.xlu0 %v618, 48
      %v792 = vpop.permute.xlu0 %791
      %793 = vrot.lane.b32.xlu0 %v630, 48
      %v794 = vpop.permute.xlu0 %793
      %795 = vrot.lane.b32.xlu0 %v642, 48
      %v796 = vpop.permute.xlu0 %795
      %797 = vrot.lane.b32.xlu0 %v654, 48
      %v798 = vpop.permute.xlu0 %797
      %799 = vrot.lane.b32.xlu0 %v666, 48
      %v800 = vpop.permute.xlu0 %799
      %801 = vrot.lane.b32.xlu0 %v678, 48
      %v802 = vpop.permute.xlu0 %801
      %803 = vrot.lane.b32.xlu0 %v690, 48
      %v804 = vpop.permute.xlu0 %803
      %805 = vrot.lane.b32.xlu0 %v702, 48
      %v806 = vpop.permute.xlu0 %805
      %807 = vrot.lane.b32.xlu0 %v714, 48
      %v808 = vpop.permute.xlu0 %807
      %809 = vrot.lane.b32.xlu0 %v726, 48
      %v810 = vpop.permute.xlu0 %809
      %811 = vrot.lane.b32.xlu0 %v738, 48
      %v812 = vpop.permute.xlu0 %811
      %813 = vrot.lane.b32.xlu0 %v750, 48
      %v814 = vpop.permute.xlu0 %813
      %815 = vrot.lane.b32.xlu0 %v762, 48
      %v816 = vpop.permute.xlu0 %815
      %817 = vrot.lane.b32.xlu0 %v774, 48
      %v818 = vpop.permute.xlu0 %817
      %819 = vrot.lane.b32.xlu0 %v786, 48
      %v820 = vpop.permute.xlu0 %819
      %vm855 = vcmask 1046528
      %v856 = vrot.slane %v548, 1
      %v857 = vrot.slane %v565, 1
      %v858 = vsel %vm855, %v856, %v857
      %v859 = vrot.slane %v549, 1
      %v860 = vrot.slane %v566, 1
      %v861 = vsel %vm855, %v859, %v860
      %v862 = vrot.slane %v550, 1
      %v863 = vrot.slane %v567, 1
      %v864 = vsel %vm855, %v862, %v863
      %v865 = vrot.slane %v551, 1
      %v866 = vrot.slane %v568, 1
      %v867 = vsel %vm855, %v865, %v866
      %v868 = vrot.slane %v552, 1
      %v869 = vrot.slane %v569, 1
      %v870 = vsel %vm855, %v868, %v869
      %v871 = vrot.slane %v553, 1
      %v872 = vrot.slane %v570, 1
      %v873 = vsel %vm855, %v871, %v872
      %v874 = vrot.slane %v554, 1
      %v875 = vrot.slane %v571, 1
      %v876 = vsel %vm855, %v874, %v875
      %v877 = vrot.slane %v555, 1
      %v878 = vrot.slane %v572, 1
      %v879 = vsel %vm855, %v877, %v878
      %v880 = vrot.slane %v556, 1
      %v881 = vrot.slane %v573, 1
      %v882 = vsel %vm855, %v880, %v881
      %v883 = vrot.slane %v557, 1
      %v884 = vrot.slane %v574, 1
      %v885 = vsel %vm855, %v883, %v884
      %v886 = vrot.slane %v558, 1
      %v887 = vrot.slane %v575, 1
      %v888 = vsel %vm855, %v886, %v887
      %v889 = vrot.slane %v559, 1
      %v890 = vrot.slane %v576, 1
      %v891 = vsel %vm855, %v889, %v890
      %v892 = vrot.slane %v560, 1
      %v893 = vrot.slane %v577, 1
      %v894 = vsel %vm855, %v892, %v893
      %v895 = vrot.slane %v561, 1
      %v896 = vrot.slane %v578, 1
      %v897 = vsel %vm855, %v895, %v896
      %v898 = vrot.slane %v562, 1
      %v899 = vrot.slane %v579, 1
      %v900 = vsel %vm855, %v898, %v899
      %v901 = vrot.slane %v563, 1
      %v902 = vrot.slane %v580, 1
      %v903 = vsel %vm855, %v901, %v902
      %v904 = vrot.slane %v564, 1
      %v905 = vrot.slane %v581, 1
      %v906 = vsel %vm855, %v904, %v905
      %907 = vrot.lane.b32.xlu0 %v858, 96
      %v908 = vpop.permute.xlu0 %907
      %909 = vrot.lane.b32.xlu0 %v861, 96
      %v910 = vpop.permute.xlu0 %909
      %911 = vrot.lane.b32.xlu0 %v864, 96
      %v912 = vpop.permute.xlu0 %911
      %913 = vrot.lane.b32.xlu0 %v867, 96
      %v914 = vpop.permute.xlu0 %913
      %915 = vrot.lane.b32.xlu0 %v870, 96
      %v916 = vpop.permute.xlu0 %915
      %917 = vrot.lane.b32.xlu0 %v873, 96
      %v918 = vpop.permute.xlu0 %917
      %919 = vrot.lane.b32.xlu0 %v876, 96
      %v920 = vpop.permute.xlu0 %919
      %921 = vrot.lane.b32.xlu0 %v879, 96
      %v922 = vpop.permute.xlu0 %921
      %923 = vrot.lane.b32.xlu0 %v882, 96
      %v924 = vpop.permute.xlu0 %923
      %925 = vrot.lane.b32.xlu0 %v885, 96
      %v926 = vpop.permute.xlu0 %925
      %927 = vrot.lane.b32.xlu0 %v888, 96
      %v928 = vpop.permute.xlu0 %927
      %929 = vrot.lane.b32.xlu0 %v891, 96
      %v930 = vpop.permute.xlu0 %929
      %931 = vrot.lane.b32.xlu0 %v894, 96
      %v932 = vpop.permute.xlu0 %931
      %933 = vrot.lane.b32.xlu0 %v897, 96
      %v934 = vpop.permute.xlu0 %933
      %935 = vrot.lane.b32.xlu0 %v900, 96
      %v936 = vpop.permute.xlu0 %935
      %937 = vrot.lane.b32.xlu0 %v903, 96
      %v938 = vpop.permute.xlu0 %937
      %939 = vrot.lane.b32.xlu0 %v906, 96
      %v940 = vpop.permute.xlu0 %939
      %vm941 = vcmask 392192
      %v943 = vsel %vm941, %v548, %v788
      %v945 = vsel %vm941, %v549, %v790
      %v947 = vsel %vm941, %v550, %v792
      %v949 = vsel %vm941, %v551, %v794
      %v951 = vsel %vm941, %v552, %v796
      %v953 = vsel %vm941, %v553, %v798
      %v955 = vsel %vm941, %v554, %v800
      %v957 = vsel %vm941, %v555, %v802
      %v959 = vsel %vm941, %v556, %v804
      %v961 = vsel %vm941, %v557, %v806
      %v963 = vsel %vm941, %v558, %v808
      %v965 = vsel %vm941, %v559, %v810
      %v967 = vsel %vm941, %v560, %v812
      %v969 = vsel %vm941, %v561, %v814
      %v971 = vsel %vm941, %v562, %v816
      %v973 = vsel %vm941, %v563, %v818
      %v975 = vsel %vm941, %v564, %v820
      %vm976 = vcmask 785408
      %v978 = vsel %vm976, %v943, %v908
      %v981 = vsel %vm976, %v945, %v910
      %v984 = vsel %vm976, %v947, %v912
      %v987 = vsel %vm976, %v949, %v914
      %v990 = vsel %vm976, %v951, %v916
      %v993 = vsel %vm976, %v953, %v918
      %v996 = vsel %vm976, %v955, %v920
      %v999 = vsel %vm976, %v957, %v922
      %v1002 = vsel %vm976, %v959, %v924
      %v1005 = vsel %vm976, %v961, %v926
      %v1008 = vsel %vm976, %v963, %v928
      %v1011 = vsel %vm976, %v965, %v930
      %v1014 = vsel %vm976, %v967, %v932
      %v1017 = vsel %vm976, %v969, %v934
      %v1020 = vsel %vm976, %v971, %v936
      %v1023 = vsel %vm976, %v973, %v938
      %v1026 = vsel %vm976, %v975, %v940
      %v1028 = vld [vmem:[%s2] sm:$0x1]
      %v1030 = vlaneseq
      %v1031 = vshrl.u32 %v1030, 7
      %v1032 = vsub.s32 0, %v1031
      %v1033 = vrot.slane %v1028, %v1032
      %v1035 = vld [vmem:[%s1] sm:$0xf]
      %v1036 = vld [vmem:[%s1 + $0x4] sm:$0xf]
      %v1037 = vld [vmem:[%s1 + $0x8] sm:$0xf]
      %v1038 = vld [vmem:[%s1 + $0xc] sm:$0xf]
      %v1039 = vld [vmem:[%s1 + $0x10] sm:$0xf]
      %v1040 = vld [vmem:[%s1 + $0x14] sm:$0xf]
      %v1041 = vld [vmem:[%s1 + $0x18] sm:$0xf]
      %v1042 = vld [vmem:[%s1 + $0x1c] sm:$0xf]
      %v1043 = vld [vmem:[%s1 + $0x20] sm:$0xf]
      %v1044 = vld [vmem:[%s1 + $0x24] sm:$0xf]
      %v1045 = vld [vmem:[%s1 + $0x28] sm:$0xf]
      %v1046 = vld [vmem:[%s1 + $0x2c] sm:$0xf]
      %v1047 = vld [vmem:[%s1 + $0x30] sm:$0xf]
      %v1048 = vld [vmem:[%s1 + $0x34] sm:$0xf]
      %v1049 = vld [vmem:[%s1 + $0x38] sm:$0xf]
      %v1050 = vld [vmem:[%s1 + $0x3c] sm:$0xf]
      %v1051 = vld [vmem:[%s1 + $0x40] sm:$0xf]
      %v1052 = vld [vmem:[%s1 + $0x44] sm:$0xf]
      %v1071 = vunpack.c.l.b16 %v1035
      %v1072 = vunpack.c.l.b16 %v1036
      %v1073 = vunpack.c.l.b16 %v1037
      %v1074 = vunpack.c.l.b16 %v1038
      %v1075 = vunpack.c.l.b16 %v1039
      %v1076 = vunpack.c.l.b16 %v1040
      %v1077 = vunpack.c.l.b16 %v1041
      %v1078 = vunpack.c.l.b16 %v1042
      %v1079 = vunpack.c.l.b16 %v1043
      %v1080 = vunpack.c.l.b16 %v1044
      %v1081 = vunpack.c.l.b16 %v1045
      %v1082 = vunpack.c.l.b16 %v1046
      %v1083 = vunpack.c.l.b16 %v1047
      %v1084 = vunpack.c.l.b16 %v1048
      %v1085 = vunpack.c.l.b16 %v1049
      %v1086 = vunpack.c.l.b16 %v1050
      %v1087 = vunpack.c.l.b16 %v1051
      %v1088 = vunpack.c.l.b16 %v1052
      %v1089 = vpack.c.b16 %v1072, %v1071
      %v1090 = vpack.c.b16 %v1074, %v1073
      %v1091 = vpack.c.b16 %v1076, %v1075
      %v1092 = vpack.c.b16 %v1078, %v1077
      %v1093 = vpack.c.b16 %v1080, %v1079
      %v1094 = vpack.c.b16 %v1082, %v1081
      %v1095 = vpack.c.b16 %v1084, %v1083
      %v1096 = vpack.c.b16 %v1086, %v1085
      %v1097 = vpack.c.b16 %v1088, %v1087
      %vm1107 = vcmask 130048
      %v1108 = vsel %vm1107, %v908, 0
      %v1110 = vsel %vm1107, %v910, 0
      %v1112 = vsel %vm1107, %v912, 0
      %v1114 = vsel %vm1107, %v914, 0
      %v1116 = vsel %vm1107, %v916, 0
      %v1118 = vsel %vm1107, %v918, 0
      %v1120 = vsel %vm1107, %v920, 0
      %v1122 = vsel %vm1107, %v922, 0
      %v1124 = vsel %vm1107, %v924, 0
      %v1126 = vsel %vm1107, %v926, 0
      %v1128 = vsel %vm1107, %v928, 0
      %v1130 = vsel %vm1107, %v930, 0
      %v1132 = vsel %vm1107, %v932, 0
      %v1134 = vsel %vm1107, %v934, 0
      %v1136 = vsel %vm1107, %v936, 0
      %v1138 = vsel %vm1107, %v938, 0
      %1140 = vmatprep.subr.bf16.mxu0 0
      %1141 = vmatpush1.bf16.msra.mxu0 %v1096
      %1142 = vmatprep.subr.bf16.mxu0 0
      %1143 = vmatpush1.bf16.msra.mxu0 %v1095
      %1144 = vmatprep.subr.bf16.mxu0 0
      %1145 = vmatpush1.bf16.msra.mxu0 %v1094
      %1146 = vmatprep.subr.bf16.mxu0 0
      %1147 = vmatpush1.bf16.msra.mxu0 %v1093
      %1148 = vmatprep.subr.bf16.mxu0 0
      %1149 = vmatpush1.bf16.msra.mxu0 %v1092
      %1150 = vmatprep.subr.bf16.mxu0 0
      %1151 = vmatpush1.bf16.msra.mxu0 %v1091
      %1152 = vmatprep.subr.bf16.mxu0 0
      %1153 = vmatpush1.bf16.msra.mxu0 %v1090
      %1154 = vmatprep.subr.bf16.mxu0 0
      %1155 = vmatpush1.bf16.msra.mxu0 %v1089
      %1156 = vmatprep.subr.bf16.mxu0 0
      %1157 = vmatpush2.bf16.msra.mxu0 0
      %1158 = vmatprep.subr.bf16.mxu0 0
      %1159 = vmatpush2.bf16.msra.mxu0 0
      %1160 = vmatprep.subr.bf16.mxu0 0
      %1161 = vmatpush2.bf16.msra.mxu0 0
      %1162 = vmatprep.subr.bf16.mxu0 0
      %1163 = vmatpush2.bf16.msra.mxu0 0
      %1164 = vmatprep.subr.bf16.mxu0 0
      %1165 = vmatpush2.bf16.msra.mxu0 0
      %1166 = vmatprep.subr.bf16.mxu0 0
      %1167 = vmatpush2.bf16.msra.mxu0 0
      %1168 = vmatprep.subr.bf16.mxu0 0
      %1169 = vmatpush2.bf16.msra.mxu0 0
      %1170 = vmatprep.subr.bf16.mxu0 0
      %1171 = vmatpush2.bf16.msra.mxu0 %v1097
      %1172 = vmatprep.mubr.bf16.mxu0 %v1108
      %1173 = vmatmul.mubr.bf16.gmra.mxu0 %v978
      %v1174 = vpop.f32.mrf.mxu0
      %v1175 = vadd.f32 0.0, %v1174
      %v1176 = vpop.f32.mrf.mxu0
      %v1177 = vpop.f32.mrf.mxu0
      %v1178 = vadd.f32 0.0, %v1177
      %v1179 = vpop.f32.mrf.mxu0
      %1180 = vmatprep.mubr.bf16.mxu0 %v1110
      %1181 = vmatmul.mubr.bf16.gmra.mxu0 %v981
      %v1182 = vpop.f32.mrf.mxu0
      %v1183 = vadd.f32 0.0, %v1182
      %v1184 = vpop.f32.mrf.mxu0
      %v1185 = vpop.f32.mrf.mxu0
      %v1186 = vadd.f32 0.0, %v1185
      %v1187 = vpop.f32.mrf.mxu0
      %1188 = vmatprep.mubr.bf16.mxu0 %v1112
      %1189 = vmatmul.mubr.bf16.gmra.mxu0 %v984
      %v1190 = vpop.f32.mrf.mxu0
      %v1191 = vadd.f32 0.0, %v1190
      %v1192 = vpop.f32.mrf.mxu0
      %v1193 = vpop.f32.mrf.mxu0
      %v1194 = vadd.f32 0.0, %v1193
      %v1195 = vpop.f32.mrf.mxu0
      %1196 = vmatprep.mubr.bf16.mxu0 %v1114
      %1197 = vmatmul.mubr.bf16.gmra.mxu0 %v987
      %v1198 = vpop.f32.mrf.mxu0
      %v1199 = vadd.f32 0.0, %v1198
      %v1200 = vpop.f32.mrf.mxu0
      %v1201 = vpop.f32.mrf.mxu0
      %v1202 = vadd.f32 0.0, %v1201
      %v1203 = vpop.f32.mrf.mxu0
      %1204 = vmatprep.mubr.bf16.mxu0 %v1116
      %1205 = vmatmul.mubr.bf16.gmra.mxu0 %v990
      %v1206 = vpop.f32.mrf.mxu0
      %v1207 = vadd.f32 0.0, %v1206
      %v1208 = vpop.f32.mrf.mxu0
      %v1209 = vpop.f32.mrf.mxu0
      %v1210 = vadd.f32 0.0, %v1209
      %v1211 = vpop.f32.mrf.mxu0
      %1212 = vmatprep.mubr.bf16.mxu0 %v1118
      %1213 = vmatmul.mubr.bf16.gmra.mxu0 %v993
      %v1214 = vpop.f32.mrf.mxu0
      %v1215 = vadd.f32 0.0, %v1214
      %v1216 = vpop.f32.mrf.mxu0
      %v1217 = vpop.f32.mrf.mxu0
      %v1218 = vadd.f32 0.0, %v1217
      %v1219 = vpop.f32.mrf.mxu0
      %1220 = vmatprep.mubr.bf16.mxu0 %v1120
      %1221 = vmatmul.mubr.bf16.gmra.mxu0 %v996
      %v1222 = vpop.f32.mrf.mxu0
      %v1223 = vadd.f32 0.0, %v1222
      %v1224 = vpop.f32.mrf.mxu0
      %v1225 = vpop.f32.mrf.mxu0
      %v1226 = vadd.f32 0.0, %v1225
      %v1227 = vpop.f32.mrf.mxu0
      %1228 = vmatprep.mubr.bf16.mxu0 %v1122
      %1229 = vmatmul.mubr.bf16.gmra.mxu0 %v999
      %v1230 = vpop.f32.mrf.mxu0
      %v1231 = vadd.f32 0.0, %v1230
      %v1232 = vpop.f32.mrf.mxu0
      %v1233 = vpop.f32.mrf.mxu0
      %v1234 = vadd.f32 0.0, %v1233
      %v1235 = vpop.f32.mrf.mxu0
      %1236 = vmatprep.mubr.bf16.mxu0 %v1124
      %1237 = vmatmul.mubr.bf16.gmra.mxu0 %v1002
      %v1238 = vpop.f32.mrf.mxu0
      %v1239 = vadd.f32 0.0, %v1238
      %v1240 = vpop.f32.mrf.mxu0
      %v1241 = vpop.f32.mrf.mxu0
      %v1242 = vadd.f32 0.0, %v1241
      %v1243 = vpop.f32.mrf.mxu0
      %1244 = vmatprep.mubr.bf16.mxu0 %v1126
      %1245 = vmatmul.mubr.bf16.gmra.mxu0 %v1005
      %v1246 = vpop.f32.mrf.mxu0
      %v1247 = vadd.f32 0.0, %v1246
      %v1248 = vpop.f32.mrf.mxu0
      %v1249 = vpop.f32.mrf.mxu0
      %v1250 = vadd.f32 0.0, %v1249
      %v1251 = vpop.f32.mrf.mxu0
      %1252 = vmatprep.mubr.bf16.mxu0 %v1128
      %1253 = vmatmul.mubr.bf16.gmra.mxu0 %v1008
      %v1254 = vpop.f32.mrf.mxu0
      %v1255 = vadd.f32 0.0, %v1254
      %v1256 = vpop.f32.mrf.mxu0
      %v1257 = vpop.f32.mrf.mxu0
      %v1258 = vadd.f32 0.0, %v1257
      %v1259 = vpop.f32.mrf.mxu0
      %1260 = vmatprep.mubr.bf16.mxu0 %v1130
      %1261 = vmatmul.mubr.bf16.gmra.mxu0 %v1011
      %v1262 = vpop.f32.mrf.mxu0
      %v1263 = vadd.f32 0.0, %v1262
      %v1264 = vpop.f32.mrf.mxu0
      %v1265 = vpop.f32.mrf.mxu0
      %v1266 = vadd.f32 0.0, %v1265
      %v1267 = vpop.f32.mrf.mxu0
      %1268 = vmatprep.mubr.bf16.mxu0 %v1132
      %1269 = vmatmul.mubr.bf16.gmra.mxu0 %v1014
      %v1270 = vpop.f32.mrf.mxu0
      %v1271 = vadd.f32 0.0, %v1270
      %v1272 = vpop.f32.mrf.mxu0
      %v1273 = vpop.f32.mrf.mxu0
      %v1274 = vadd.f32 0.0, %v1273
      %v1275 = vpop.f32.mrf.mxu0
      %1276 = vmatprep.mubr.bf16.mxu0 %v1134
      %1277 = vmatmul.mubr.bf16.gmra.mxu0 %v1017
      %v1278 = vpop.f32.mrf.mxu0
      %v1279 = vadd.f32 0.0, %v1278
      %v1280 = vpop.f32.mrf.mxu0
      %v1281 = vpop.f32.mrf.mxu0
      %v1282 = vadd.f32 0.0, %v1281
      %v1283 = vpop.f32.mrf.mxu0
      %1284 = vmatprep.mubr.bf16.mxu0 %v1136
      %1285 = vmatmul.mubr.bf16.gmra.mxu0 %v1020
      %v1286 = vpop.f32.mrf.mxu0
      %v1287 = vadd.f32 0.0, %v1286
      %v1288 = vpop.f32.mrf.mxu0
      %v1289 = vpop.f32.mrf.mxu0
      %v1290 = vadd.f32 0.0, %v1289
      %v1291 = vpop.f32.mrf.mxu0
      %1292 = vmatprep.mubr.bf16.mxu0 %v1138
      %1293 = vmatmul.mubr.bf16.gmra.mxu0 %v1023
      %v1294 = vpop.f32.mrf.mxu0
      %v1295 = vadd.f32 0.0, %v1294
      %v1296 = vpop.f32.mrf.mxu0
      %v1297 = vpop.f32.mrf.mxu0
      %v1298 = vadd.f32 0.0, %v1297
      %v1299 = vpop.f32.mrf.mxu0
      %1300 = vdwg.mxu0
      %v1301 = vadd.f32 %v1033, %v1175
      %v1302 = vadd.f32 %v1033, %v1178
      %v1303 = vadd.f32 %v1033, %v1183
      %v1304 = vadd.f32 %v1033, %v1186
      %v1305 = vadd.f32 %v1033, %v1191
      %v1306 = vadd.f32 %v1033, %v1194
      %v1307 = vadd.f32 %v1033, %v1199
      %v1308 = vadd.f32 %v1033, %v1202
      %v1309 = vadd.f32 %v1033, %v1207
      %v1310 = vadd.f32 %v1033, %v1210
      %v1311 = vadd.f32 %v1033, %v1215
      %v1312 = vadd.f32 %v1033, %v1218
      %v1313 = vadd.f32 %v1033, %v1223
      %v1314 = vadd.f32 %v1033, %v1226
      %v1315 = vadd.f32 %v1033, %v1231
      %v1316 = vadd.f32 %v1033, %v1234
      %v1317 = vadd.f32 %v1033, %v1239
      %v1318 = vadd.f32 %v1033, %v1242
      %v1319 = vadd.f32 %v1033, %v1247
      %v1320 = vadd.f32 %v1033, %v1250
      %v1321 = vadd.f32 %v1033, %v1255
      %v1322 = vadd.f32 %v1033, %v1258
      %v1323 = vadd.f32 %v1033, %v1263
      %v1324 = vadd.f32 %v1033, %v1266
      %v1325 = vadd.f32 %v1033, %v1271
      %v1326 = vadd.f32 %v1033, %v1274
      %v1327 = vadd.f32 %v1033, %v1279
      %v1328 = vadd.f32 %v1033, %v1282
      %v1329 = vadd.f32 %v1033, %v1287
      %v1330 = vadd.f32 %v1033, %v1290
      %v1331 = vadd.f32 %v1033, %v1295
      %v1332 = vadd.f32 %v1033, %v1298
      %s1333 = scalar_lea.vmem %s1, 72
      %v1334 = vld [vmem:[%s1333] sm:$0xf]
      %v1335 = vld [vmem:[%s1333 + $0x4] sm:$0xf]
      %v1336 = vld [vmem:[%s1333 + $0x8] sm:$0xf]
      %v1337 = vld [vmem:[%s1333 + $0xc] sm:$0xf]
      %v1338 = vld [vmem:[%s1333 + $0x10] sm:$0xf]
      %v1339 = vld [vmem:[%s1333 + $0x14] sm:$0xf]
      %v1340 = vld [vmem:[%s1333 + $0x18] sm:$0xf]
      %v1341 = vld [vmem:[%s1333 + $0x1c] sm:$0xf]
      %v1342 = vld [vmem:[%s1333 + $0x20] sm:$0xf]
      %v1343 = vld [vmem:[%s1333 + $0x24] sm:$0xf]
      %v1344 = vld [vmem:[%s1333 + $0x28] sm:$0xf]
      %v1345 = vld [vmem:[%s1333 + $0x2c] sm:$0xf]
      %v1346 = vld [vmem:[%s1333 + $0x30] sm:$0xf]
      %v1347 = vld [vmem:[%s1333 + $0x34] sm:$0xf]
      %v1348 = vld [vmem:[%s1333 + $0x38] sm:$0xf]
      %v1349 = vld [vmem:[%s1333 + $0x3c] sm:$0xf]
      %v1350 = vld [vmem:[%s1333 + $0x40] sm:$0xf]
      %v1351 = vld [vmem:[%s1333 + $0x44] sm:$0xf]
      %v1370 = vunpack.c.l.b16 %v1334
      %v1371 = vunpack.c.l.b16 %v1335
      %v1372 = vunpack.c.l.b16 %v1336
      %v1373 = vunpack.c.l.b16 %v1337
      %v1374 = vunpack.c.l.b16 %v1338
      %v1375 = vunpack.c.l.b16 %v1339
      %v1376 = vunpack.c.l.b16 %v1340
      %v1377 = vunpack.c.l.b16 %v1341
      %v1378 = vunpack.c.l.b16 %v1342
      %v1379 = vunpack.c.l.b16 %v1343
      %v1380 = vunpack.c.l.b16 %v1344
      %v1381 = vunpack.c.l.b16 %v1345
      %v1382 = vunpack.c.l.b16 %v1346
      %v1383 = vunpack.c.l.b16 %v1347
      %v1384 = vunpack.c.l.b16 %v1348
      %v1385 = vunpack.c.l.b16 %v1349
      %v1386 = vunpack.c.l.b16 %v1350
      %v1387 = vunpack.c.l.b16 %v1351
      %v1388 = vpack.c.b16 %v1371, %v1370
      %v1389 = vpack.c.b16 %v1373, %v1372
      %v1390 = vpack.c.b16 %v1375, %v1374
      %v1391 = vpack.c.b16 %v1377, %v1376
      %v1392 = vpack.c.b16 %v1379, %v1378
      %v1393 = vpack.c.b16 %v1381, %v1380
      %v1394 = vpack.c.b16 %v1383, %v1382
      %v1395 = vpack.c.b16 %v1385, %v1384
      %v1396 = vpack.c.b16 %v1387, %v1386
      %v1406 = vsel %vm1107, %v940, 0
      %1408 = vmatprep.subr.bf16.mxu0 0
      %1409 = vmatpush1.bf16.msra.mxu0 %v1395
      %1410 = vmatprep.subr.bf16.mxu0 0
      %1411 = vmatpush1.bf16.msra.mxu0 %v1394
      %1412 = vmatprep.subr.bf16.mxu0 0
      %1413 = vmatpush1.bf16.msra.mxu0 %v1393
      %1414 = vmatprep.subr.bf16.mxu0 0
      %1415 = vmatpush1.bf16.msra.mxu0 %v1392
      %1416 = vmatprep.subr.bf16.mxu0 0
      %1417 = vmatpush1.bf16.msra.mxu0 %v1391
      %1418 = vmatprep.subr.bf16.mxu0 0
      %1419 = vmatpush1.bf16.msra.mxu0 %v1390
      %1420 = vmatprep.subr.bf16.mxu0 0
      %1421 = vmatpush1.bf16.msra.mxu0 %v1389
      %1422 = vmatprep.subr.bf16.mxu0 0
      %1423 = vmatpush1.bf16.msra.mxu0 %v1388
      %1424 = vmatprep.subr.bf16.mxu0 0
      %1425 = vmatpush2.bf16.msra.mxu0 0
      %1426 = vmatprep.subr.bf16.mxu0 0
      %1427 = vmatpush2.bf16.msra.mxu0 0
      %1428 = vmatprep.subr.bf16.mxu0 0
      %1429 = vmatpush2.bf16.msra.mxu0 0
      %1430 = vmatprep.subr.bf16.mxu0 0
      %1431 = vmatpush2.bf16.msra.mxu0 0
      %1432 = vmatprep.subr.bf16.mxu0 0
      %1433 = vmatpush2.bf16.msra.mxu0 0
      %1434 = vmatprep.subr.bf16.mxu0 0
      %1435 = vmatpush2.bf16.msra.mxu0 0
      %1436 = vmatprep.subr.bf16.mxu0 0
      %1437 = vmatpush2.bf16.msra.mxu0 0
      %1438 = vmatprep.subr.bf16.mxu0 0
      %1439 = vmatpush2.bf16.msra.mxu0 %v1396
      %1440 = vmatprep.mubr.bf16.mxu0 %v1110
      %1441 = vmatmul.mubr.bf16.gmra.mxu0 %v981
      %v1442 = vpop.f32.mrf.mxu0
      %v1443 = vadd.f32 0.0, %v1442
      %v1444 = vpop.f32.mrf.mxu0
      %v1445 = vpop.f32.mrf.mxu0
      %v1446 = vadd.f32 0.0, %v1445
      %v1447 = vpop.f32.mrf.mxu0
      %1448 = vmatprep.mubr.bf16.mxu0 %v1112
      %1449 = vmatmul.mubr.bf16.gmra.mxu0 %v984
      %v1450 = vpop.f32.mrf.mxu0
      %v1451 = vadd.f32 0.0, %v1450
      %v1452 = vpop.f32.mrf.mxu0
      %v1453 = vpop.f32.mrf.mxu0
      %v1454 = vadd.f32 0.0, %v1453
      %v1455 = vpop.f32.mrf.mxu0
      %1456 = vmatprep.mubr.bf16.mxu0 %v1114
      %1457 = vmatmul.mubr.bf16.gmra.mxu0 %v987
      %v1458 = vpop.f32.mrf.mxu0
      %v1459 = vadd.f32 0.0, %v1458
      %v1460 = vpop.f32.mrf.mxu0
      %v1461 = vpop.f32.mrf.mxu0
      %v1462 = vadd.f32 0.0, %v1461
      %v1463 = vpop.f32.mrf.mxu0
      %1464 = vmatprep.mubr.bf16.mxu0 %v1116
      %1465 = vmatmul.mubr.bf16.gmra.mxu0 %v990
      %v1466 = vpop.f32.mrf.mxu0
      %v1467 = vadd.f32 0.0, %v1466
      %v1468 = vpop.f32.mrf.mxu0
      %v1469 = vpop.f32.mrf.mxu0
      %v1470 = vadd.f32 0.0, %v1469
      %v1471 = vpop.f32.mrf.mxu0
      %1472 = vmatprep.mubr.bf16.mxu0 %v1118
      %1473 = vmatmul.mubr.bf16.gmra.mxu0 %v993
      %v1474 = vpop.f32.mrf.mxu0
      %v1475 = vadd.f32 0.0, %v1474
      %v1476 = vpop.f32.mrf.mxu0
      %v1477 = vpop.f32.mrf.mxu0
      %v1478 = vadd.f32 0.0, %v1477
      %v1479 = vpop.f32.mrf.mxu0
      %1480 = vmatprep.mubr.bf16.mxu0 %v1120
      %1481 = vmatmul.mubr.bf16.gmra.mxu0 %v996
      %v1482 = vpop.f32.mrf.mxu0
      %v1483 = vadd.f32 0.0, %v1482
      %v1484 = vpop.f32.mrf.mxu0
      %v1485 = vpop.f32.mrf.mxu0
      %v1486 = vadd.f32 0.0, %v1485
      %v1487 = vpop.f32.mrf.mxu0
      %1488 = vmatprep.mubr.bf16.mxu0 %v1122
      %1489 = vmatmul.mubr.bf16.gmra.mxu0 %v999
      %v1490 = vpop.f32.mrf.mxu0
      %v1491 = vadd.f32 0.0, %v1490
      %v1492 = vpop.f32.mrf.mxu0
      %v1493 = vpop.f32.mrf.mxu0
      %v1494 = vadd.f32 0.0, %v1493
      %v1495 = vpop.f32.mrf.mxu0
      %1496 = vmatprep.mubr.bf16.mxu0 %v1124
      %1497 = vmatmul.mubr.bf16.gmra.mxu0 %v1002
      %v1498 = vpop.f32.mrf.mxu0
      %v1499 = vadd.f32 0.0, %v1498
      %v1500 = vpop.f32.mrf.mxu0
      %v1501 = vpop.f32.mrf.mxu0
      %v1502 = vadd.f32 0.0, %v1501
      %v1503 = vpop.f32.mrf.mxu0
      %1504 = vmatprep.mubr.bf16.mxu0 %v1126
      %1505 = vmatmul.mubr.bf16.gmra.mxu0 %v1005
      %v1506 = vpop.f32.mrf.mxu0
      %v1507 = vadd.f32 0.0, %v1506
      %v1508 = vpop.f32.mrf.mxu0
      %v1509 = vpop.f32.mrf.mxu0
      %v1510 = vadd.f32 0.0, %v1509
      %v1511 = vpop.f32.mrf.mxu0
      %1512 = vmatprep.mubr.bf16.mxu0 %v1128
      %1513 = vmatmul.mubr.bf16.gmra.mxu0 %v1008
      %v1514 = vpop.f32.mrf.mxu0
      %v1515 = vadd.f32 0.0, %v1514
      %v1516 = vpop.f32.mrf.mxu0
      %v1517 = vpop.f32.mrf.mxu0
      %v1518 = vadd.f32 0.0, %v1517
      %v1519 = vpop.f32.mrf.mxu0
      %1520 = vmatprep.mubr.bf16.mxu0 %v1130
      %1521 = vmatmul.mubr.bf16.gmra.mxu0 %v1011
      %v1522 = vpop.f32.mrf.mxu0
      %v1523 = vadd.f32 0.0, %v1522
      %v1524 = vpop.f32.mrf.mxu0
      %v1525 = vpop.f32.mrf.mxu0
      %v1526 = vadd.f32 0.0, %v1525
      %v1527 = vpop.f32.mrf.mxu0
      %1528 = vmatprep.mubr.bf16.mxu0 %v1132
      %1529 = vmatmul.mubr.bf16.gmra.mxu0 %v1014
      %v1530 = vpop.f32.mrf.mxu0
      %v1531 = vadd.f32 0.0, %v1530
      %v1532 = vpop.f32.mrf.mxu0
      %v1533 = vpop.f32.mrf.mxu0
      %v1534 = vadd.f32 0.0, %v1533
      %v1535 = vpop.f32.mrf.mxu0
      %1536 = vmatprep.mubr.bf16.mxu0 %v1134
      %1537 = vmatmul.mubr.bf16.gmra.mxu0 %v1017
      %v1538 = vpop.f32.mrf.mxu0
      %v1539 = vadd.f32 0.0, %v1538
      %v1540 = vpop.f32.mrf.mxu0
      %v1541 = vpop.f32.mrf.mxu0
      %v1542 = vadd.f32 0.0, %v1541
      %v1543 = vpop.f32.mrf.mxu0
      %1544 = vmatprep.mubr.bf16.mxu0 %v1136
      %1545 = vmatmul.mubr.bf16.gmra.mxu0 %v1020
      %v1546 = vpop.f32.mrf.mxu0
      %v1547 = vadd.f32 0.0, %v1546
      %v1548 = vpop.f32.mrf.mxu0
      %v1549 = vpop.f32.mrf.mxu0
      %v1550 = vadd.f32 0.0, %v1549
      %v1551 = vpop.f32.mrf.mxu0
      %1552 = vmatprep.mubr.bf16.mxu0 %v1138
      %1553 = vmatmul.mubr.bf16.gmra.mxu0 %v1023
      %v1554 = vpop.f32.mrf.mxu0
      %v1555 = vadd.f32 0.0, %v1554
      %v1556 = vpop.f32.mrf.mxu0
      %v1557 = vpop.f32.mrf.mxu0
      %v1558 = vadd.f32 0.0, %v1557
      %v1559 = vpop.f32.mrf.mxu0
      %1560 = vmatprep.mubr.bf16.mxu0 %v1406
      %1561 = vmatmul.mubr.bf16.gmra.mxu0 %v1026
      %v1562 = vpop.f32.mrf.mxu0
      %v1563 = vadd.f32 0.0, %v1562
      %v1564 = vpop.f32.mrf.mxu0
      %v1565 = vpop.f32.mrf.mxu0
      %v1566 = vadd.f32 0.0, %v1565
      %v1567 = vpop.f32.mrf.mxu0
      %1568 = vdwg.mxu0
      %v1569 = vadd.f32 %v1301, %v1443
      %v1570 = vadd.f32 %v1302, %v1446
      %v1571 = vadd.f32 %v1303, %v1451
      %v1572 = vadd.f32 %v1304, %v1454
      %v1573 = vadd.f32 %v1305, %v1459
      %v1574 = vadd.f32 %v1306, %v1462
      %v1575 = vadd.f32 %v1307, %v1467
      %v1576 = vadd.f32 %v1308, %v1470
      %v1577 = vadd.f32 %v1309, %v1475
      %v1578 = vadd.f32 %v1310, %v1478
      %v1579 = vadd.f32 %v1311, %v1483
      %v1580 = vadd.f32 %v1312, %v1486
      %v1581 = vadd.f32 %v1313, %v1491
      %v1582 = vadd.f32 %v1314, %v1494
      %v1583 = vadd.f32 %v1315, %v1499
      %v1584 = vadd.f32 %v1316, %v1502
      %v1585 = vadd.f32 %v1317, %v1507
      %v1586 = vadd.f32 %v1318, %v1510
      %v1587 = vadd.f32 %v1319, %v1515
      %v1588 = vadd.f32 %v1320, %v1518
      %v1589 = vadd.f32 %v1321, %v1523
      %v1590 = vadd.f32 %v1322, %v1526
      %v1591 = vadd.f32 %v1323, %v1531
      %v1592 = vadd.f32 %v1324, %v1534
      %v1593 = vadd.f32 %v1325, %v1539
      %v1594 = vadd.f32 %v1326, %v1542
      %v1595 = vadd.f32 %v1327, %v1547
      %v1596 = vadd.f32 %v1328, %v1550
      %v1597 = vadd.f32 %v1329, %v1555
      %v1598 = vadd.f32 %v1330, %v1558
      %v1599 = vadd.f32 %v1331, %v1563
      %v1600 = vadd.f32 %v1332, %v1566
      %s1601 = scalar_lea.vmem %s1, 144
      %v1602 = vld [vmem:[%s1601] sm:$0xf]
      %v1603 = vld [vmem:[%s1601 + $0x4] sm:$0xf]
      %v1604 = vld [vmem:[%s1601 + $0x8] sm:$0xf]
      %v1605 = vld [vmem:[%s1601 + $0xc] sm:$0xf]
      %v1606 = vld [vmem:[%s1601 + $0x10] sm:$0xf]
      %v1607 = vld [vmem:[%s1601 + $0x14] sm:$0xf]
      %v1608 = vld [vmem:[%s1601 + $0x18] sm:$0xf]
      %v1609 = vld [vmem:[%s1601 + $0x1c] sm:$0xf]
      %v1610 = vld [vmem:[%s1601 + $0x20] sm:$0xf]
      %v1611 = vld [vmem:[%s1601 + $0x24] sm:$0xf]
      %v1612 = vld [vmem:[%s1601 + $0x28] sm:$0xf]
      %v1613 = vld [vmem:[%s1601 + $0x2c] sm:$0xf]
      %v1614 = vld [vmem:[%s1601 + $0x30] sm:$0xf]
      %v1615 = vld [vmem:[%s1601 + $0x34] sm:$0xf]
      %v1616 = vld [vmem:[%s1601 + $0x38] sm:$0xf]
      %v1617 = vld [vmem:[%s1601 + $0x3c] sm:$0xf]
      %v1618 = vld [vmem:[%s1601 + $0x40] sm:$0xf]
      %v1619 = vld [vmem:[%s1601 + $0x44] sm:$0xf]
      %v1638 = vunpack.c.l.b16 %v1602
      %v1639 = vunpack.c.l.b16 %v1603
      %v1640 = vunpack.c.l.b16 %v1604
      %v1641 = vunpack.c.l.b16 %v1605
      %v1642 = vunpack.c.l.b16 %v1606
      %v1643 = vunpack.c.l.b16 %v1607
      %v1644 = vunpack.c.l.b16 %v1608
      %v1645 = vunpack.c.l.b16 %v1609
      %v1646 = vunpack.c.l.b16 %v1610
      %v1647 = vunpack.c.l.b16 %v1611
      %v1648 = vunpack.c.l.b16 %v1612
      %v1649 = vunpack.c.l.b16 %v1613
      %v1650 = vunpack.c.l.b16 %v1614
      %v1651 = vunpack.c.l.b16 %v1615
      %v1652 = vunpack.c.l.b16 %v1616
      %v1653 = vunpack.c.l.b16 %v1617
      %v1654 = vunpack.c.l.b16 %v1618
      %v1655 = vunpack.c.l.b16 %v1619
      %v1656 = vpack.c.b16 %v1639, %v1638
      %v1657 = vpack.c.b16 %v1641, %v1640
      %v1658 = vpack.c.b16 %v1643, %v1642
      %v1659 = vpack.c.b16 %v1645, %v1644
      %v1660 = vpack.c.b16 %v1647, %v1646
      %v1661 = vpack.c.b16 %v1649, %v1648
      %v1662 = vpack.c.b16 %v1651, %v1650
      %v1663 = vpack.c.b16 %v1653, %v1652
      %v1664 = vpack.c.b16 %v1655, %v1654
      %1674 = vmatprep.subr.bf16.mxu0 0
      %1675 = vmatpush1.bf16.msra.mxu0 %v1663
      %1676 = vmatprep.subr.bf16.mxu0 0
      %1677 = vmatpush1.bf16.msra.mxu0 %v1662
      %1678 = vmatprep.subr.bf16.mxu0 0
      %1679 = vmatpush1.bf16.msra.mxu0 %v1661
      %1680 = vmatprep.subr.bf16.mxu0 0
      %1681 = vmatpush1.bf16.msra.mxu0 %v1660
      %1682 = vmatprep.subr.bf16.mxu0 0
      %1683 = vmatpush1.bf16.msra.mxu0 %v1659
      %1684 = vmatprep.subr.bf16.mxu0 0
      %1685 = vmatpush1.bf16.msra.mxu0 %v1658
      %1686 = vmatprep.subr.bf16.mxu0 0
      %1687 = vmatpush1.bf16.msra.mxu0 %v1657
      %1688 = vmatprep.subr.bf16.mxu0 0
      %1689 = vmatpush1.bf16.msra.mxu0 %v1656
      %1690 = vmatprep.subr.bf16.mxu0 0
      %1691 = vmatpush2.bf16.msra.mxu0 0
      %1692 = vmatprep.subr.bf16.mxu0 0
      %1693 = vmatpush2.bf16.msra.mxu0 0
      %1694 = vmatprep.subr.bf16.mxu0 0
      %1695 = vmatpush2.bf16.msra.mxu0 0
      %1696 = vmatprep.subr.bf16.mxu0 0
      %1697 = vmatpush2.bf16.msra.mxu0 0
      %1698 = vmatprep.subr.bf16.mxu0 0
      %1699 = vmatpush2.bf16.msra.mxu0 0
      %1700 = vmatprep.subr.bf16.mxu0 0
      %1701 = vmatpush2.bf16.msra.mxu0 0
      %1702 = vmatprep.subr.bf16.mxu0 0
      %1703 = vmatpush2.bf16.msra.mxu0 0
      %1704 = vmatprep.subr.bf16.mxu0 0
      %1705 = vmatpush2.bf16.msra.mxu0 %v1664
      %1706 = vmatprep.mubr.bf16.mxu0 %v1112
      %1707 = vmatmul.mubr.bf16.gmra.mxu0 %v984
      %v1708 = vpop.f32.mrf.mxu0
      %v1709 = vadd.f32 0.0, %v1708
      %v1710 = vpop.f32.mrf.mxu0
      %v1711 = vpop.f32.mrf.mxu0
      %v1712 = vadd.f32 0.0, %v1711
      %v1713 = vpop.f32.mrf.mxu0
      %1714 = vmatprep.mubr.bf16.mxu0 %v1114
      %1715 = vmatmul.mubr.bf16.gmra.mxu0 %v987
      %v1716 = vpop.f32.mrf.mxu0
      %v1717 = vadd.f32 0.0, %v1716
      %v1718 = vpop.f32.mrf.mxu0
      %v1719 = vpop.f32.mrf.mxu0
      %v1720 = vadd.f32 0.0, %v1719
      %v1721 = vpop.f32.mrf.mxu0
      %1722 = vmatprep.mubr.bf16.mxu0 %v1116
      %1723 = vmatmul.mubr.bf16.gmra.mxu0 %v990
      %v1724 = vpop.f32.mrf.mxu0
      %v1725 = vadd.f32 0.0, %v1724
      %v1726 = vpop.f32.mrf.mxu0
      %v1727 = vpop.f32.mrf.mxu0
      %v1728 = vadd.f32 0.0, %v1727
      %v1729 = vpop.f32.mrf.mxu0
      %1730 = vmatprep.mubr.bf16.mxu0 %v1118
      %1731 = vmatmul.mubr.bf16.gmra.mxu0 %v993
      %v1732 = vpop.f32.mrf.mxu0
      %v1733 = vadd.f32 0.0, %v1732
      %v1734 = vpop.f32.mrf.mxu0
      %v1735 = vpop.f32.mrf.mxu0
      %v1736 = vadd.f32 0.0, %v1735
      %v1737 = vpop.f32.mrf.mxu0
      %1738 = vmatprep.mubr.bf16.mxu0 %v1120
      %1739 = vmatmul.mubr.bf16.gmra.mxu0 %v996
      %v1740 = vpop.f32.mrf.mxu0
      %v1741 = vadd.f32 0.0, %v1740
      %v1742 = vpop.f32.mrf.mxu0
      %v1743 = vpop.f32.mrf.mxu0
      %v1744 = vadd.f32 0.0, %v1743
      %v1745 = vpop.f32.mrf.mxu0
      %1746 = vmatprep.mubr.bf16.mxu0 %v1122
      %1747 = vmatmul.mubr.bf16.gmra.mxu0 %v999
      %v1748 = vpop.f32.mrf.mxu0
      %v1749 = vadd.f32 0.0, %v1748
      %v1750 = vpop.f32.mrf.mxu0
      %v1751 = vpop.f32.mrf.mxu0
      %v1752 = vadd.f32 0.0, %v1751
      %v1753 = vpop.f32.mrf.mxu0
      %1754 = vmatprep.mubr.bf16.mxu0 %v1124
      %1755 = vmatmul.mubr.bf16.gmra.mxu0 %v1002
      %v1756 = vpop.f32.mrf.mxu0
      %v1757 = vadd.f32 0.0, %v1756
      %v1758 = vpop.f32.mrf.mxu0
      %v1759 = vpop.f32.mrf.mxu0
      %v1760 = vadd.f32 0.0, %v1759
      %v1761 = vpop.f32.mrf.mxu0
      %1762 = vmatprep.mubr.bf16.mxu0 %v1126
      %1763 = vmatmul.mubr.bf16.gmra.mxu0 %v1005
      %v1764 = vpop.f32.mrf.mxu0
      %v1765 = vadd.f32 0.0, %v1764
      %v1766 = vpop.f32.mrf.mxu0
      %v1767 = vpop.f32.mrf.mxu0
      %v1768 = vadd.f32 0.0, %v1767
      %v1769 = vpop.f32.mrf.mxu0
      %1770 = vmatprep.mubr.bf16.mxu0 %v1128
      %1771 = vmatmul.mubr.bf16.gmra.mxu0 %v1008
      %v1772 = vpop.f32.mrf.mxu0
      %v1773 = vadd.f32 0.0, %v1772
      %v1774 = vpop.f32.mrf.mxu0
      %v1775 = vpop.f32.mrf.mxu0
      %v1776 = vadd.f32 0.0, %v1775
      %v1777 = vpop.f32.mrf.mxu0
      %1778 = vmatprep.mubr.bf16.mxu0 %v1130
      %1779 = vmatmul.mubr.bf16.gmra.mxu0 %v1011
      %v1780 = vpop.f32.mrf.mxu0
      %v1781 = vadd.f32 0.0, %v1780
      %v1782 = vpop.f32.mrf.mxu0
      %v1783 = vpop.f32.mrf.mxu0
      %v1784 = vadd.f32 0.0, %v1783
      %v1785 = vpop.f32.mrf.mxu0
      %1786 = vmatprep.mubr.bf16.mxu0 %v1132
      %1787 = vmatmul.mubr.bf16.gmra.mxu0 %v1014
      %v1788 = vpop.f32.mrf.mxu0
      %v1789 = vadd.f32 0.0, %v1788
      %v1790 = vpop.f32.mrf.mxu0
      %v1791 = vpop.f32.mrf.mxu0
      %v1792 = vadd.f32 0.0, %v1791
      %v1793 = vpop.f32.mrf.mxu0
      %1794 = vmatprep.mubr.bf16.mxu0 %v1134
      %1795 = vmatmul.mubr.bf16.gmra.mxu0 %v1017
      %v1796 = vpop.f32.mrf.mxu0
      %v1797 = vadd.f32 0.0, %v1796
      %v1798 = vpop.f32.mrf.mxu0
      %v1799 = vpop.f32.mrf.mxu0
      %v1800 = vadd.f32 0.0, %v1799
      %v1801 = vpop.f32.mrf.mxu0
      %1802 = vmatprep.mubr.bf16.mxu0 %v1136
      %1803 = vmatmul.mubr.bf16.gmra.mxu0 %v1020
      %v1804 = vpop.f32.mrf.mxu0
      %v1805 = vadd.f32 0.0, %v1804
      %v1806 = vpop.f32.mrf.mxu0
      %v1807 = vpop.f32.mrf.mxu0
      %v1808 = vadd.f32 0.0, %v1807
      %v1809 = vpop.f32.mrf.mxu0
      %1810 = vmatprep.mubr.bf16.mxu0 %v1138
      %1811 = vmatmul.mubr.bf16.gmra.mxu0 %v1023
      %v1812 = vpop.f32.mrf.mxu0
      %v1813 = vadd.f32 0.0, %v1812
      %v1814 = vpop.f32.mrf.mxu0
      %v1815 = vpop.f32.mrf.mxu0
      %v1816 = vadd.f32 0.0, %v1815
      %v1817 = vpop.f32.mrf.mxu0
      %1818 = vmatprep.mubr.bf16.mxu0 %v1406
      %1819 = vmatmul.mubr.bf16.gmra.mxu0 %v1026
      %v1820 = vpop.f32.mrf.mxu0
      %v1821 = vadd.f32 0.0, %v1820
      %v1822 = vpop.f32.mrf.mxu0
      %v1823 = vpop.f32.mrf.mxu0
      %v1824 = vadd.f32 0.0, %v1823
      %v1825 = vpop.f32.mrf.mxu0
      %1826 = vmatprep.mubr.bf16.mxu0 %v1108
      %1827 = vmatmul.mubr.bf16.gmra.mxu0 %v978
      %v1828 = vpop.f32.mrf.mxu0
      %v1829 = vadd.f32 0.0, %v1828
      %v1830 = vpop.f32.mrf.mxu0
      %v1831 = vpop.f32.mrf.mxu0
      %v1832 = vadd.f32 0.0, %v1831
      %v1833 = vpop.f32.mrf.mxu0
      %1834 = vdwg.mxu0
      %v1835 = vadd.f32 %v1569, %v1709
      %v1836 = vadd.f32 %v1570, %v1712
      %v1837 = vadd.f32 %v1571, %v1717
      %v1838 = vadd.f32 %v1572, %v1720
      %v1839 = vadd.f32 %v1573, %v1725
      %v1840 = vadd.f32 %v1574, %v1728
      %v1841 = vadd.f32 %v1575, %v1733
      %v1842 = vadd.f32 %v1576, %v1736
      %v1843 = vadd.f32 %v1577, %v1741
      %v1844 = vadd.f32 %v1578, %v1744
      %v1845 = vadd.f32 %v1579, %v1749
      %v1846 = vadd.f32 %v1580, %v1752
      %v1847 = vadd.f32 %v1581, %v1757
      %v1848 = vadd.f32 %v1582, %v1760
      %v1849 = vadd.f32 %v1583, %v1765
      %v1850 = vadd.f32 %v1584, %v1768
      %v1851 = vadd.f32 %v1585, %v1773
      %v1852 = vadd.f32 %v1586, %v1776
      %v1853 = vadd.f32 %v1587, %v1781
      %v1854 = vadd.f32 %v1588, %v1784
      %v1855 = vadd.f32 %v1589, %v1789
      %v1856 = vadd.f32 %v1590, %v1792
      %v1857 = vadd.f32 %v1591, %v1797
      %v1858 = vadd.f32 %v1592, %v1800
      %v1859 = vadd.f32 %v1593, %v1805
      %v1860 = vadd.f32 %v1594, %v1808
      %v1861 = vadd.f32 %v1595, %v1813
      %v1862 = vadd.f32 %v1596, %v1816
      %v1863 = vadd.f32 %v1597, %v1821
      %v1864 = vadd.f32 %v1598, %v1824
      %v1865 = vadd.f32 %v1599, %v1829
      %v1866 = vadd.f32 %v1600, %v1832
      %v1867 = vmul.f32 %v1835, 0.01
      %v1868 = vmul.f32 %v1836, 0.01
      %v1869 = vmul.f32 %v1837, 0.01
      %v1870 = vmul.f32 %v1838, 0.01
      %v1871 = vmul.f32 %v1839, 0.01
      %v1872 = vmul.f32 %v1840, 0.01
      %v1873 = vmul.f32 %v1841, 0.01
      %v1874 = vmul.f32 %v1842, 0.01
      %v1875 = vmul.f32 %v1843, 0.01
      %v1876 = vmul.f32 %v1844, 0.01
      %v1877 = vmul.f32 %v1845, 0.01
      %v1878 = vmul.f32 %v1846, 0.01
      %v1879 = vmul.f32 %v1847, 0.01
      %v1880 = vmul.f32 %v1848, 0.01
      %v1881 = vmul.f32 %v1849, 0.01
      %v1882 = vmul.f32 %v1850, 0.01
      %v1883 = vmul.f32 %v1851, 0.01
      %v1884 = vmul.f32 %v1852, 0.01
      %v1885 = vmul.f32 %v1853, 0.01
      %v1886 = vmul.f32 %v1854, 0.01
      %v1887 = vmul.f32 %v1855, 0.01
      %v1888 = vmul.f32 %v1856, 0.01
      %v1889 = vmul.f32 %v1857, 0.01
      %v1890 = vmul.f32 %v1858, 0.01
      %v1891 = vmul.f32 %v1859, 0.01
      %v1892 = vmul.f32 %v1860, 0.01
      %v1893 = vmul.f32 %v1861, 0.01
      %v1894 = vmul.f32 %v1862, 0.01
      %v1895 = vmul.f32 %v1863, 0.01
      %v1896 = vmul.f32 %v1864, 0.01
      %v1897 = vmul.f32 %v1865, 0.01
      %v1898 = vmul.f32 %v1866, 0.01
      %v1899 = vmax.f32 %v1835, %v1867
      %v1900 = vmax.f32 %v1836, %v1868
      %v1901 = vmax.f32 %v1837, %v1869
      %v1902 = vmax.f32 %v1838, %v1870
      %v1903 = vmax.f32 %v1839, %v1871
      %v1904 = vmax.f32 %v1840, %v1872
      %v1905 = vmax.f32 %v1841, %v1873
      %v1906 = vmax.f32 %v1842, %v1874
      %v1907 = vmax.f32 %v1843, %v1875
      %v1908 = vmax.f32 %v1844, %v1876
      %v1909 = vmax.f32 %v1845, %v1877
      %v1910 = vmax.f32 %v1846, %v1878
      %v1911 = vmax.f32 %v1847, %v1879
      %v1912 = vmax.f32 %v1848, %v1880
      %v1913 = vmax.f32 %v1849, %v1881
      %v1914 = vmax.f32 %v1850, %v1882
      %v1915 = vmax.f32 %v1851, %v1883
      %v1916 = vmax.f32 %v1852, %v1884
      %v1917 = vmax.f32 %v1853, %v1885
      %v1918 = vmax.f32 %v1854, %v1886
      %v1919 = vmax.f32 %v1855, %v1887
      %v1920 = vmax.f32 %v1856, %v1888
      %v1921 = vmax.f32 %v1857, %v1889
      %v1922 = vmax.f32 %v1858, %v1890
      %v1923 = vmax.f32 %v1859, %v1891
      %v1924 = vmax.f32 %v1860, %v1892
      %v1925 = vmax.f32 %v1861, %v1893
      %v1926 = vmax.f32 %v1862, %v1894
      %v1927 = vmax.f32 %v1863, %v1895
      %v1928 = vmax.f32 %v1864, %v1896
      %v1929 = vmax.f32 %v1865, %v1897
      %v1930 = vmax.f32 %v1866, %v1898
      %v1931 = vpack.c.bf16 %v1900, %v1899
      %v1932 = vpack.c.bf16 %v1902, %v1901
      %v1933 = vpack.c.bf16 %v1904, %v1903
      %v1934 = vpack.c.bf16 %v1906, %v1905
      %v1935 = vpack.c.bf16 %v1908, %v1907
      %v1936 = vpack.c.bf16 %v1910, %v1909
      %v1937 = vpack.c.bf16 %v1912, %v1911
      %v1938 = vpack.c.bf16 %v1914, %v1913
      %v1939 = vpack.c.bf16 %v1916, %v1915
      %v1940 = vpack.c.bf16 %v1918, %v1917
      %v1941 = vpack.c.bf16 %v1920, %v1919
      %v1942 = vpack.c.bf16 %v1922, %v1921
      %v1943 = vpack.c.bf16 %v1924, %v1923
      %v1944 = vpack.c.bf16 %v1926, %v1925
      %v1945 = vpack.c.bf16 %v1928, %v1927
      %v1946 = vpack.c.bf16 %v1930, %v1929
      %v1948 = vshrl.u32 %v1931, 16
      %v1950 = vrot.slane %v1948, 7
      %v1951 = vshll.u32 %v1931, 16
      %v1953 = vor.u32 %v1950, %v1951
      %v1955 = vshrl.u32 %v1932, 16
      %v1957 = vrot.slane %v1955, 7
      %v1958 = vshll.u32 %v1932, 16
      %v1960 = vor.u32 %v1957, %v1958
      %v1962 = vshrl.u32 %v1933, 16
      %v1964 = vrot.slane %v1962, 7
      %v1965 = vshll.u32 %v1933, 16
      %v1967 = vor.u32 %v1964, %v1965
      %v1969 = vshrl.u32 %v1934, 16
      %v1971 = vrot.slane %v1969, 7
      %v1972 = vshll.u32 %v1934, 16
      %v1974 = vor.u32 %v1971, %v1972
      %v1976 = vshrl.u32 %v1935, 16
      %v1978 = vrot.slane %v1976, 7
      %v1979 = vshll.u32 %v1935, 16
      %v1981 = vor.u32 %v1978, %v1979
      %v1983 = vshrl.u32 %v1936, 16
      %v1985 = vrot.slane %v1983, 7
      %v1986 = vshll.u32 %v1936, 16
      %v1988 = vor.u32 %v1985, %v1986
      %v1990 = vshrl.u32 %v1937, 16
      %v1992 = vrot.slane %v1990, 7
      %v1993 = vshll.u32 %v1937, 16
      %v1995 = vor.u32 %v1992, %v1993
      %v1997 = vshrl.u32 %v1938, 16
      %v1999 = vrot.slane %v1997, 7
      %v2000 = vshll.u32 %v1938, 16
      %v2002 = vor.u32 %v1999, %v2000
      %v2004 = vshrl.u32 %v1939, 16
      %v2006 = vrot.slane %v2004, 7
      %v2007 = vshll.u32 %v1939, 16
      %v2009 = vor.u32 %v2006, %v2007
      %v2011 = vshrl.u32 %v1940, 16
      %v2013 = vrot.slane %v2011, 7
      %v2014 = vshll.u32 %v1940, 16
      %v2016 = vor.u32 %v2013, %v2014
      %v2018 = vshrl.u32 %v1941, 16
      %v2020 = vrot.slane %v2018, 7
      %v2021 = vshll.u32 %v1941, 16
      %v2023 = vor.u32 %v2020, %v2021
      %v2025 = vshrl.u32 %v1942, 16
      %v2027 = vrot.slane %v2025, 7
      %v2028 = vshll.u32 %v1942, 16
      %v2030 = vor.u32 %v2027, %v2028
      %v2032 = vshrl.u32 %v1943, 16
      %v2034 = vrot.slane %v2032, 7
      %v2035 = vshll.u32 %v1943, 16
      %v2037 = vor.u32 %v2034, %v2035
      %v2039 = vshrl.u32 %v1944, 16
      %v2041 = vrot.slane %v2039, 7
      %v2042 = vshll.u32 %v1944, 16
      %v2044 = vor.u32 %v2041, %v2042
      %v2046 = vshrl.u32 %v1945, 16
      %v2048 = vrot.slane %v2046, 7
      %v2049 = vshll.u32 %v1945, 16
      %v2051 = vor.u32 %v2048, %v2049
      %v2053 = vshrl.u32 %v1946, 16
      %v2055 = vrot.slane %v2053, 7
      %v2056 = vshll.u32 %v1946, 16
      %v2058 = vor.u32 %v2055, %v2056
      %v2091 = vsel %vm547, 0, %v1953
      %v2092 = vsel %vm547, 0, %v1960
      %v2093 = vsel %vm547, 0, %v1967
      %v2094 = vsel %vm547, 0, %v1974
      %v2095 = vsel %vm547, 0, %v1981
      %v2096 = vsel %vm547, 0, %v1988
      %v2097 = vsel %vm547, 0, %v1995
      %v2098 = vsel %vm547, 0, %v2002
      %v2099 = vsel %vm547, 0, %v2009
      %v2100 = vsel %vm547, 0, %v2016
      %v2101 = vsel %vm547, 0, %v2023
      %v2102 = vsel %vm547, 0, %v2030
      %v2103 = vsel %vm547, 0, %v2037
      %v2104 = vsel %vm547, 0, %v2044
      %v2105 = vsel %vm547, 0, %v2051
      %v2106 = vsel %vm547, 0, %v2058
      %v2107 = vsel %vm547, %v1950, 0
      %v2108 = vsel %vm547, %v1957, 0
      %v2109 = vsel %vm547, %v1964, 0
      %v2110 = vsel %vm547, %v1971, 0
      %v2111 = vsel %vm547, %v1978, 0
      %v2112 = vsel %vm547, %v1985, 0
      %v2113 = vsel %vm547, %v1992, 0
      %v2114 = vsel %vm547, %v1999, 0
      %v2115 = vsel %vm547, %v2006, 0
      %v2116 = vsel %vm547, %v2013, 0
      %v2117 = vsel %vm547, %v2020, 0
      %v2118 = vsel %vm547, %v2027, 0
      %v2119 = vsel %vm547, %v2034, 0
      %v2120 = vsel %vm547, %v2041, 0
      %v2121 = vsel %vm547, %v2048, 0
      %v2122 = vsel %vm547, %v2055, 0
      %v2124 = vshrl.u32 %v2091, 16
      %v2126 = vshll.u32 %v2091, 16
      %v2128 = vrot.slane %v2126, 1
      %v2129 = vor.u32 %v2124, %v2128
      %v2131 = vshll.u32 %v2107, 16
      %v2133 = vrot.slane %v2131, 1
      %v2134 = vsel %vm582, %v2129, %v2133
      %v2136 = vshrl.u32 %v2092, 16
      %v2138 = vshll.u32 %v2092, 16
      %v2140 = vrot.slane %v2138, 1
      %v2141 = vor.u32 %v2136, %v2140
      %v2143 = vshll.u32 %v2108, 16
      %v2145 = vrot.slane %v2143, 1
      %v2146 = vsel %vm582, %v2141, %v2145
      %v2148 = vshrl.u32 %v2093, 16
      %v2150 = vshll.u32 %v2093, 16
      %v2152 = vrot.slane %v2150, 1
      %v2153 = vor.u32 %v2148, %v2152
      %v2155 = vshll.u32 %v2109, 16
      %v2157 = vrot.slane %v2155, 1
      %v2158 = vsel %vm582, %v2153, %v2157
      %v2160 = vshrl.u32 %v2094, 16
      %v2162 = vshll.u32 %v2094, 16
      %v2164 = vrot.slane %v2162, 1
      %v2165 = vor.u32 %v2160, %v2164
      %v2167 = vshll.u32 %v2110, 16
      %v2169 = vrot.slane %v2167, 1
      %v2170 = vsel %vm582, %v2165, %v2169
      %v2172 = vshrl.u32 %v2095, 16
      %v2174 = vshll.u32 %v2095, 16
      %v2176 = vrot.slane %v2174, 1
      %v2177 = vor.u32 %v2172, %v2176
      %v2179 = vshll.u32 %v2111, 16
      %v2181 = vrot.slane %v2179, 1
      %v2182 = vsel %vm582, %v2177, %v2181
      %v2184 = vshrl.u32 %v2096, 16
      %v2186 = vshll.u32 %v2096, 16
      %v2188 = vrot.slane %v2186, 1
      %v2189 = vor.u32 %v2184, %v2188
      %v2191 = vshll.u32 %v2112, 16
      %v2193 = vrot.slane %v2191, 1
      %v2194 = vsel %vm582, %v2189, %v2193
      %v2196 = vshrl.u32 %v2097, 16
      %v2198 = vshll.u32 %v2097, 16
      %v2200 = vrot.slane %v2198, 1
      %v2201 = vor.u32 %v2196, %v2200
      %v2203 = vshll.u32 %v2113, 16
      %v2205 = vrot.slane %v2203, 1
      %v2206 = vsel %vm582, %v2201, %v2205
      %v2208 = vshrl.u32 %v2098, 16
      %v2210 = vshll.u32 %v2098, 16
      %v2212 = vrot.slane %v2210, 1
      %v2213 = vor.u32 %v2208, %v2212
      %v2215 = vshll.u32 %v2114, 16
      %v2217 = vrot.slane %v2215, 1
      %v2218 = vsel %vm582, %v2213, %v2217
      %v2220 = vshrl.u32 %v2099, 16
      %v2222 = vshll.u32 %v2099, 16
      %v2224 = vrot.slane %v2222, 1
      %v2225 = vor.u32 %v2220, %v2224
      %v2227 = vshll.u32 %v2115, 16
      %v2229 = vrot.slane %v2227, 1
      %v2230 = vsel %vm582, %v2225, %v2229
      %v2232 = vshrl.u32 %v2100, 16
      %v2234 = vshll.u32 %v2100, 16
      %v2236 = vrot.slane %v2234, 1
      %v2237 = vor.u32 %v2232, %v2236
      %v2239 = vshll.u32 %v2116, 16
      %v2241 = vrot.slane %v2239, 1
      %v2242 = vsel %vm582, %v2237, %v2241
      %v2244 = vshrl.u32 %v2101, 16
      %v2246 = vshll.u32 %v2101, 16
      %v2248 = vrot.slane %v2246, 1
      %v2249 = vor.u32 %v2244, %v2248
      %v2251 = vshll.u32 %v2117, 16
      %v2253 = vrot.slane %v2251, 1
      %v2254 = vsel %vm582, %v2249, %v2253
      %v2256 = vshrl.u32 %v2102, 16
      %v2258 = vshll.u32 %v2102, 16
      %v2260 = vrot.slane %v2258, 1
      %v2261 = vor.u32 %v2256, %v2260
      %v2263 = vshll.u32 %v2118, 16
      %v2265 = vrot.slane %v2263, 1
      %v2266 = vsel %vm582, %v2261, %v2265
      %v2268 = vshrl.u32 %v2103, 16
      %v2270 = vshll.u32 %v2103, 16
      %v2272 = vrot.slane %v2270, 1
      %v2273 = vor.u32 %v2268, %v2272
      %v2275 = vshll.u32 %v2119, 16
      %v2277 = vrot.slane %v2275, 1
      %v2278 = vsel %vm582, %v2273, %v2277
      %v2280 = vshrl.u32 %v2104, 16
      %v2282 = vshll.u32 %v2104, 16
      %v2284 = vrot.slane %v2282, 1
      %v2285 = vor.u32 %v2280, %v2284
      %v2287 = vshll.u32 %v2120, 16
      %v2289 = vrot.slane %v2287, 1
      %v2290 = vsel %vm582, %v2285, %v2289
      %v2292 = vshrl.u32 %v2105, 16
      %v2294 = vshll.u32 %v2105, 16
      %v2296 = vrot.slane %v2294, 1
      %v2297 = vor.u32 %v2292, %v2296
      %v2299 = vshll.u32 %v2121, 16
      %v2301 = vrot.slane %v2299, 1
      %v2302 = vsel %vm582, %v2297, %v2301
      %v2304 = vshrl.u32 %v2106, 16
      %v2306 = vshll.u32 %v2106, 16
      %v2308 = vrot.slane %v2306, 1
      %v2309 = vor.u32 %v2304, %v2308
      %v2311 = vshll.u32 %v2122, 16
      %v2313 = vrot.slane %v2311, 1
      %v2314 = vsel %vm582, %v2309, %v2313
      %2315 = vrot.lane.b32.xlu0 %v2134, 48
      %v2316 = vpop.permute.xlu0 %2315
      %2317 = vrot.lane.b32.xlu0 %v2146, 48
      %v2318 = vpop.permute.xlu0 %2317
      %2319 = vrot.lane.b32.xlu0 %v2158, 48
      %v2320 = vpop.permute.xlu0 %2319
      %2321 = vrot.lane.b32.xlu0 %v2170, 48
      %v2322 = vpop.permute.xlu0 %2321
      %2323 = vrot.lane.b32.xlu0 %v2182, 48
      %v2324 = vpop.permute.xlu0 %2323
      %2325 = vrot.lane.b32.xlu0 %v2194, 48
      %v2326 = vpop.permute.xlu0 %2325
      %2327 = vrot.lane.b32.xlu0 %v2206, 48
      %v2328 = vpop.permute.xlu0 %2327
      %2329 = vrot.lane.b32.xlu0 %v2218, 48
      %v2330 = vpop.permute.xlu0 %2329
      %2331 = vrot.lane.b32.xlu0 %v2230, 48
      %v2332 = vpop.permute.xlu0 %2331
      %2333 = vrot.lane.b32.xlu0 %v2242, 48
      %v2334 = vpop.permute.xlu0 %2333
      %2335 = vrot.lane.b32.xlu0 %v2254, 48
      %v2336 = vpop.permute.xlu0 %2335
      %2337 = vrot.lane.b32.xlu0 %v2266, 48
      %v2338 = vpop.permute.xlu0 %2337
      %2339 = vrot.lane.b32.xlu0 %v2278, 48
      %v2340 = vpop.permute.xlu0 %2339
      %2341 = vrot.lane.b32.xlu0 %v2290, 48
      %v2342 = vpop.permute.xlu0 %2341
      %2343 = vrot.lane.b32.xlu0 %v2302, 48
      %v2344 = vpop.permute.xlu0 %2343
      %2345 = vrot.lane.b32.xlu0 %v2314, 48
      %v2346 = vpop.permute.xlu0 %2345
      %v2379 = vrot.slane %v2091, 1
      %v2380 = vrot.slane %v2107, 1
      %v2381 = vsel %vm855, %v2379, %v2380
      %v2382 = vrot.slane %v2092, 1
      %v2383 = vrot.slane %v2108, 1
      %v2384 = vsel %vm855, %v2382, %v2383
      %v2385 = vrot.slane %v2093, 1
      %v2386 = vrot.slane %v2109, 1
      %v2387 = vsel %vm855, %v2385, %v2386
      %v2388 = vrot.slane %v2094, 1
      %v2389 = vrot.slane %v2110, 1
      %v2390 = vsel %vm855, %v2388, %v2389
      %v2391 = vrot.slane %v2095, 1
      %v2392 = vrot.slane %v2111, 1
      %v2393 = vsel %vm855, %v2391, %v2392
      %v2394 = vrot.slane %v2096, 1
      %v2395 = vrot.slane %v2112, 1
      %v2396 = vsel %vm855, %v2394, %v2395
      %v2397 = vrot.slane %v2097, 1
      %v2398 = vrot.slane %v2113, 1
      %v2399 = vsel %vm855, %v2397, %v2398
      %v2400 = vrot.slane %v2098, 1
      %v2401 = vrot.slane %v2114, 1
      %v2402 = vsel %vm855, %v2400, %v2401
      %v2403 = vrot.slane %v2099, 1
      %v2404 = vrot.slane %v2115, 1
      %v2405 = vsel %vm855, %v2403, %v2404
      %v2406 = vrot.slane %v2100, 1
      %v2407 = vrot.slane %v2116, 1
      %v2408 = vsel %vm855, %v2406, %v2407
      %v2409 = vrot.slane %v2101, 1
      %v2410 = vrot.slane %v2117, 1
      %v2411 = vsel %vm855, %v2409, %v2410
      %v2412 = vrot.slane %v2102, 1
      %v2413 = vrot.slane %v2118, 1
      %v2414 = vsel %vm855, %v2412, %v2413
      %v2415 = vrot.slane %v2103, 1
      %v2416 = vrot.slane %v2119, 1
      %v2417 = vsel %vm855, %v2415, %v2416
      %v2418 = vrot.slane %v2104, 1
      %v2419 = vrot.slane %v2120, 1
      %v2420 = vsel %vm855, %v2418, %v2419
      %v2421 = vrot.slane %v2105, 1
      %v2422 = vrot.slane %v2121, 1
      %v2423 = vsel %vm855, %v2421, %v2422
      %v2424 = vrot.slane %v2106, 1
      %v2425 = vrot.slane %v2122, 1
      %v2426 = vsel %vm855, %v2424, %v2425
      %2427 = vrot.lane.b32.xlu0 %v2381, 96
      %v2428 = vpop.permute.xlu0 %2427
      %2429 = vrot.lane.b32.xlu0 %v2384, 96
      %v2430 = vpop.permute.xlu0 %2429
      %2431 = vrot.lane.b32.xlu0 %v2387, 96
      %v2432 = vpop.permute.xlu0 %2431
      %2433 = vrot.lane.b32.xlu0 %v2390, 96
      %v2434 = vpop.permute.xlu0 %2433
      %2435 = vrot.lane.b32.xlu0 %v2393, 96
      %v2436 = vpop.permute.xlu0 %2435
      %2437 = vrot.lane.b32.xlu0 %v2396, 96
      %v2438 = vpop.permute.xlu0 %2437
      %2439 = vrot.lane.b32.xlu0 %v2399, 96
      %v2440 = vpop.permute.xlu0 %2439
      %2441 = vrot.lane.b32.xlu0 %v2402, 96
      %v2442 = vpop.permute.xlu0 %2441
      %2443 = vrot.lane.b32.xlu0 %v2405, 96
      %v2444 = vpop.permute.xlu0 %2443
      %2445 = vrot.lane.b32.xlu0 %v2408, 96
      %v2446 = vpop.permute.xlu0 %2445
      %2447 = vrot.lane.b32.xlu0 %v2411, 96
      %v2448 = vpop.permute.xlu0 %2447
      %2449 = vrot.lane.b32.xlu0 %v2414, 96
      %v2450 = vpop.permute.xlu0 %2449
      %2451 = vrot.lane.b32.xlu0 %v2417, 96
      %v2452 = vpop.permute.xlu0 %2451
      %2453 = vrot.lane.b32.xlu0 %v2420, 96
      %v2454 = vpop.permute.xlu0 %2453
      %2455 = vrot.lane.b32.xlu0 %v2423, 96
      %v2456 = vpop.permute.xlu0 %2455
      %2457 = vrot.lane.b32.xlu0 %v2426, 96
      %v2458 = vpop.permute.xlu0 %2457
      %v2460 = vsel %vm941, %v2091, %v2316
      %v2462 = vsel %vm941, %v2092, %v2318
      %v2464 = vsel %vm941, %v2093, %v2320
      %v2466 = vsel %vm941, %v2094, %v2322
      %v2468 = vsel %vm941, %v2095, %v2324
      %v2470 = vsel %vm941, %v2096, %v2326
      %v2472 = vsel %vm941, %v2097, %v2328
      %v2474 = vsel %vm941, %v2098, %v2330
      %v2476 = vsel %vm941, %v2099, %v2332
      %v2478 = vsel %vm941, %v2100, %v2334
      %v2480 = vsel %vm941, %v2101, %v2336
      %v2482 = vsel %vm941, %v2102, %v2338
      %v2484 = vsel %vm941, %v2103, %v2340
      %v2486 = vsel %vm941, %v2104, %v2342
      %v2488 = vsel %vm941, %v2105, %v2344
      %v2490 = vsel %vm941, %v2106, %v2346
      %v2492 = vsel %vm976, %v2460, %v2428
      %v2495 = vsel %vm976, %v2462, %v2430
      %v2498 = vsel %vm976, %v2464, %v2432
      %v2501 = vsel %vm976, %v2466, %v2434
      %v2504 = vsel %vm976, %v2468, %v2436
      %v2507 = vsel %vm976, %v2470, %v2438
      %v2510 = vsel %vm976, %v2472, %v2440
      %v2513 = vsel %vm976, %v2474, %v2442
      %v2516 = vsel %vm976, %v2476, %v2444
      %v2519 = vsel %vm976, %v2478, %v2446
      %v2522 = vsel %vm976, %v2480, %v2448
      %v2525 = vsel %vm976, %v2482, %v2450
      %v2528 = vsel %vm976, %v2484, %v2452
      %v2531 = vsel %vm976, %v2486, %v2454
      %v2534 = vsel %vm976, %v2488, %v2456
      %v2537 = vsel %vm976, %v2490, %v2458
      %v2539 = vld [vmem:[%s4] sm:$0x1]
      %v2541 = vlaneseq
      %v2542 = vshrl.u32 %v2541, 7
      %v2543 = vsub.s32 0, %v2542
      %v2544 = vrot.slane %v2539, %v2543
      %v2546 = vld [vmem:[%s3] sm:$0xf]
      %v2547 = vld [vmem:[%s3 + $0x4] sm:$0xf]
      %v2548 = vld [vmem:[%s3 + $0x8] sm:$0xf]
      %v2549 = vld [vmem:[%s3 + $0xc] sm:$0xf]
      %v2550 = vld [vmem:[%s3 + $0x10] sm:$0xf]
      %v2551 = vld [vmem:[%s3 + $0x14] sm:$0xf]
      %v2552 = vld [vmem:[%s3 + $0x18] sm:$0xf]
      %v2553 = vld [vmem:[%s3 + $0x1c] sm:$0xf]
      %v2554 = vld [vmem:[%s3 + $0x20] sm:$0xf]
      %v2555 = vld [vmem:[%s3 + $0x24] sm:$0xf]
      %v2556 = vld [vmem:[%s3 + $0x28] sm:$0xf]
      %v2557 = vld [vmem:[%s3 + $0x2c] sm:$0xf]
      %v2558 = vld [vmem:[%s3 + $0x30] sm:$0xf]
      %v2559 = vld [vmem:[%s3 + $0x34] sm:$0xf]
      %v2560 = vld [vmem:[%s3 + $0x38] sm:$0xf]
      %v2561 = vld [vmem:[%s3 + $0x3c] sm:$0xf]
      %v2562 = vld [vmem:[%s3 + $0x40] sm:$0xf]
      %v2563 = vld [vmem:[%s3 + $0x44] sm:$0xf]
      %v2582 = vunpack.c.l.b16 %v2546
      %v2583 = vunpack.c.l.b16 %v2547
      %v2584 = vunpack.c.l.b16 %v2548
      %v2585 = vunpack.c.l.b16 %v2549
      %v2586 = vunpack.c.l.b16 %v2550
      %v2587 = vunpack.c.l.b16 %v2551
      %v2588 = vunpack.c.l.b16 %v2552
      %v2589 = vunpack.c.l.b16 %v2553
      %v2590 = vunpack.c.l.b16 %v2554
      %v2591 = vunpack.c.l.b16 %v2555
      %v2592 = vunpack.c.l.b16 %v2556
      %v2593 = vunpack.c.l.b16 %v2557
      %v2594 = vunpack.c.l.b16 %v2558
      %v2595 = vunpack.c.l.b16 %v2559
      %v2596 = vunpack.c.l.b16 %v2560
      %v2597 = vunpack.c.l.b16 %v2561
      %v2598 = vunpack.c.l.b16 %v2562
      %v2599 = vunpack.c.l.b16 %v2563
      %v2600 = vpack.c.b16 %v2583, %v2582
      %v2601 = vpack.c.b16 %v2585, %v2584
      %v2602 = vpack.c.b16 %v2587, %v2586
      %v2603 = vpack.c.b16 %v2589, %v2588
      %v2604 = vpack.c.b16 %v2591, %v2590
      %v2605 = vpack.c.b16 %v2593, %v2592
      %v2606 = vpack.c.b16 %v2595, %v2594
      %v2607 = vpack.c.b16 %v2597, %v2596
      %v2608 = vpack.c.b16 %v2599, %v2598
      %v2618 = vsel %vm1107, %v2428, 0
      %v2620 = vsel %vm1107, %v2430, 0
      %v2622 = vsel %vm1107, %v2432, 0
      %v2624 = vsel %vm1107, %v2434, 0
      %v2626 = vsel %vm1107, %v2436, 0
      %v2628 = vsel %vm1107, %v2438, 0
      %v2630 = vsel %vm1107, %v2440, 0
      %v2632 = vsel %vm1107, %v2442, 0
      %v2634 = vsel %vm1107, %v2444, 0
      %v2636 = vsel %vm1107, %v2446, 0
      %v2638 = vsel %vm1107, %v2448, 0
      %v2640 = vsel %vm1107, %v2450, 0
      %v2642 = vsel %vm1107, %v2452, 0
      %v2644 = vsel %vm1107, %v2454, 0
      %v2646 = vsel %vm1107, %v2456, 0
      %2648 = vmatprep.subr.bf16.mxu0 0
      %2649 = vmatpush1.bf16.msra.mxu0 %v2607
      %2650 = vmatprep.subr.bf16.mxu0 0
      %2651 = vmatpush1.bf16.msra.mxu0 %v2606
      %2652 = vmatprep.subr.bf16.mxu0 0
      %2653 = vmatpush1.bf16.msra.mxu0 %v2605
      %2654 = vmatprep.subr.bf16.mxu0 0
      %2655 = vmatpush1.bf16.msra.mxu0 %v2604
      %2656 = vmatprep.subr.bf16.mxu0 0
      %2657 = vmatpush1.bf16.msra.mxu0 %v2603
      %2658 = vmatprep.subr.bf16.mxu0 0
      %2659 = vmatpush1.bf16.msra.mxu0 %v2602
      %2660 = vmatprep.subr.bf16.mxu0 0
      %2661 = vmatpush1.bf16.msra.mxu0 %v2601
      %2662 = vmatprep.subr.bf16.mxu0 0
      %2663 = vmatpush1.bf16.msra.mxu0 %v2600
      %2664 = vmatprep.subr.bf16.mxu0 0
      %2665 = vmatpush2.bf16.msra.mxu0 0
      %2666 = vmatprep.subr.bf16.mxu0 0
      %2667 = vmatpush2.bf16.msra.mxu0 0
      %2668 = vmatprep.subr.bf16.mxu0 0
      %2669 = vmatpush2.bf16.msra.mxu0 0
      %2670 = vmatprep.subr.bf16.mxu0 0
      %2671 = vmatpush2.bf16.msra.mxu0 0
      %2672 = vmatprep.subr.bf16.mxu0 0
      %2673 = vmatpush2.bf16.msra.mxu0 0
      %2674 = vmatprep.subr.bf16.mxu0 0
      %2675 = vmatpush2.bf16.msra.mxu0 0
      %2676 = vmatprep.subr.bf16.mxu0 0
      %2677 = vmatpush2.bf16.msra.mxu0 0
      %2678 = vmatprep.subr.bf16.mxu0 0
      %2679 = vmatpush2.bf16.msra.mxu0 %v2608
      %2680 = vmatprep.mubr.bf16.mxu0 %v1108
      %2681 = vmatmul.mubr.bf16.gmra.mxu0 %v978
      %v2682 = vpop.f32.mrf.mxu0
      %v2683 = vadd.f32 0.0, %v2682
      %v2684 = vpop.f32.mrf.mxu0
      %v2685 = vpop.f32.mrf.mxu0
      %v2686 = vadd.f32 0.0, %v2685
      %v2687 = vpop.f32.mrf.mxu0
      %2688 = vmatprep.mubr.bf16.mxu0 %v2618
      %2689 = vmatmul.mubr.bf16.gmra.mxu0 %v2492
      %v2690 = vpop.f32.mrf.mxu0
      %v2691 = vadd.f32 0.0, %v2690
      %v2692 = vpop.f32.mrf.mxu0
      %v2693 = vpop.f32.mrf.mxu0
      %v2694 = vadd.f32 0.0, %v2693
      %v2695 = vpop.f32.mrf.mxu0
      %2696 = vmatprep.mubr.bf16.mxu0 %v2620
      %2697 = vmatmul.mubr.bf16.gmra.mxu0 %v2495
      %v2698 = vpop.f32.mrf.mxu0
      %v2699 = vadd.f32 0.0, %v2698
      %v2700 = vpop.f32.mrf.mxu0
      %v2701 = vpop.f32.mrf.mxu0
      %v2702 = vadd.f32 0.0, %v2701
      %v2703 = vpop.f32.mrf.mxu0
      %2704 = vmatprep.mubr.bf16.mxu0 %v2622
      %2705 = vmatmul.mubr.bf16.gmra.mxu0 %v2498
      %v2706 = vpop.f32.mrf.mxu0
      %v2707 = vadd.f32 0.0, %v2706
      %v2708 = vpop.f32.mrf.mxu0
      %v2709 = vpop.f32.mrf.mxu0
      %v2710 = vadd.f32 0.0, %v2709
      %v2711 = vpop.f32.mrf.mxu0
      %2712 = vmatprep.mubr.bf16.mxu0 %v2624
      %2713 = vmatmul.mubr.bf16.gmra.mxu0 %v2501
      %v2714 = vpop.f32.mrf.mxu0
      %v2715 = vadd.f32 0.0, %v2714
      %v2716 = vpop.f32.mrf.mxu0
      %v2717 = vpop.f32.mrf.mxu0
      %v2718 = vadd.f32 0.0, %v2717
      %v2719 = vpop.f32.mrf.mxu0
      %2720 = vmatprep.mubr.bf16.mxu0 %v2626
      %2721 = vmatmul.mubr.bf16.gmra.mxu0 %v2504
      %v2722 = vpop.f32.mrf.mxu0
      %v2723 = vadd.f32 0.0, %v2722
      %v2724 = vpop.f32.mrf.mxu0
      %v2725 = vpop.f32.mrf.mxu0
      %v2726 = vadd.f32 0.0, %v2725
      %v2727 = vpop.f32.mrf.mxu0
      %2728 = vmatprep.mubr.bf16.mxu0 %v2628
      %2729 = vmatmul.mubr.bf16.gmra.mxu0 %v2507
      %v2730 = vpop.f32.mrf.mxu0
      %v2731 = vadd.f32 0.0, %v2730
      %v2732 = vpop.f32.mrf.mxu0
      %v2733 = vpop.f32.mrf.mxu0
      %v2734 = vadd.f32 0.0, %v2733
      %v2735 = vpop.f32.mrf.mxu0
      %2736 = vmatprep.mubr.bf16.mxu0 %v2630
      %2737 = vmatmul.mubr.bf16.gmra.mxu0 %v2510
      %v2738 = vpop.f32.mrf.mxu0
      %v2739 = vadd.f32 0.0, %v2738
      %v2740 = vpop.f32.mrf.mxu0
      %v2741 = vpop.f32.mrf.mxu0
      %v2742 = vadd.f32 0.0, %v2741
      %v2743 = vpop.f32.mrf.mxu0
      %2744 = vmatprep.mubr.bf16.mxu0 %v2632
      %2745 = vmatmul.mubr.bf16.gmra.mxu0 %v2513
      %v2746 = vpop.f32.mrf.mxu0
      %v2747 = vadd.f32 0.0, %v2746
      %v2748 = vpop.f32.mrf.mxu0
      %v2749 = vpop.f32.mrf.mxu0
      %v2750 = vadd.f32 0.0, %v2749
      %v2751 = vpop.f32.mrf.mxu0
      %2752 = vmatprep.mubr.bf16.mxu0 %v2634
      %2753 = vmatmul.mubr.bf16.gmra.mxu0 %v2516
      %v2754 = vpop.f32.mrf.mxu0
      %v2755 = vadd.f32 0.0, %v2754
      %v2756 = vpop.f32.mrf.mxu0
      %v2757 = vpop.f32.mrf.mxu0
      %v2758 = vadd.f32 0.0, %v2757
      %v2759 = vpop.f32.mrf.mxu0
      %2760 = vmatprep.mubr.bf16.mxu0 %v2636
      %2761 = vmatmul.mubr.bf16.gmra.mxu0 %v2519
      %v2762 = vpop.f32.mrf.mxu0
      %v2763 = vadd.f32 0.0, %v2762
      %v2764 = vpop.f32.mrf.mxu0
      %v2765 = vpop.f32.mrf.mxu0
      %v2766 = vadd.f32 0.0, %v2765
      %v2767 = vpop.f32.mrf.mxu0
      %2768 = vmatprep.mubr.bf16.mxu0 %v2638
      %2769 = vmatmul.mubr.bf16.gmra.mxu0 %v2522
      %v2770 = vpop.f32.mrf.mxu0
      %v2771 = vadd.f32 0.0, %v2770
      %v2772 = vpop.f32.mrf.mxu0
      %v2773 = vpop.f32.mrf.mxu0
      %v2774 = vadd.f32 0.0, %v2773
      %v2775 = vpop.f32.mrf.mxu0
      %2776 = vmatprep.mubr.bf16.mxu0 %v2640
      %2777 = vmatmul.mubr.bf16.gmra.mxu0 %v2525
      %v2778 = vpop.f32.mrf.mxu0
      %v2779 = vadd.f32 0.0, %v2778
      %v2780 = vpop.f32.mrf.mxu0
      %v2781 = vpop.f32.mrf.mxu0
      %v2782 = vadd.f32 0.0, %v2781
      %v2783 = vpop.f32.mrf.mxu0
      %2784 = vmatprep.mubr.bf16.mxu0 %v2642
      %2785 = vmatmul.mubr.bf16.gmra.mxu0 %v2528
      %v2786 = vpop.f32.mrf.mxu0
      %v2787 = vadd.f32 0.0, %v2786
      %v2788 = vpop.f32.mrf.mxu0
      %v2789 = vpop.f32.mrf.mxu0
      %v2790 = vadd.f32 0.0, %v2789
      %v2791 = vpop.f32.mrf.mxu0
      %2792 = vmatprep.mubr.bf16.mxu0 %v2644
      %2793 = vmatmul.mubr.bf16.gmra.mxu0 %v2531
      %v2794 = vpop.f32.mrf.mxu0
      %v2795 = vadd.f32 0.0, %v2794
      %v2796 = vpop.f32.mrf.mxu0
      %v2797 = vpop.f32.mrf.mxu0
      %v2798 = vadd.f32 0.0, %v2797
      %v2799 = vpop.f32.mrf.mxu0
      %2800 = vmatprep.mubr.bf16.mxu0 %v2646
      %2801 = vmatmul.mubr.bf16.gmra.mxu0 %v2534
      %v2802 = vpop.f32.mrf.mxu0
      %v2803 = vadd.f32 0.0, %v2802
      %v2804 = vpop.f32.mrf.mxu0
      %v2805 = vpop.f32.mrf.mxu0
      %v2806 = vadd.f32 0.0, %v2805
      %v2807 = vpop.f32.mrf.mxu0
      %2808 = vdwg.mxu0
      %v2809 = vadd.f32 %v2544, %v2683
      %v2810 = vadd.f32 %v2544, %v2686
      %v2811 = vadd.f32 %v2544, %v2691
      %v2812 = vadd.f32 %v2544, %v2694
      %v2813 = vadd.f32 %v2544, %v2699
      %v2814 = vadd.f32 %v2544, %v2702
      %v2815 = vadd.f32 %v2544, %v2707
      %v2816 = vadd.f32 %v2544, %v2710
      %v2817 = vadd.f32 %v2544, %v2715
      %v2818 = vadd.f32 %v2544, %v2718
      %v2819 = vadd.f32 %v2544, %v2723
      %v2820 = vadd.f32 %v2544, %v2726
      %v2821 = vadd.f32 %v2544, %v2731
      %v2822 = vadd.f32 %v2544, %v2734
      %v2823 = vadd.f32 %v2544, %v2739
      %v2824 = vadd.f32 %v2544, %v2742
      %v2825 = vadd.f32 %v2544, %v2747
      %v2826 = vadd.f32 %v2544, %v2750
      %v2827 = vadd.f32 %v2544, %v2755
      %v2828 = vadd.f32 %v2544, %v2758
      %v2829 = vadd.f32 %v2544, %v2763
      %v2830 = vadd.f32 %v2544, %v2766
      %v2831 = vadd.f32 %v2544, %v2771
      %v2832 = vadd.f32 %v2544, %v2774
      %v2833 = vadd.f32 %v2544, %v2779
      %v2834 = vadd.f32 %v2544, %v2782
      %v2835 = vadd.f32 %v2544, %v2787
      %v2836 = vadd.f32 %v2544, %v2790
      %v2837 = vadd.f32 %v2544, %v2795
      %v2838 = vadd.f32 %v2544, %v2798
      %v2839 = vadd.f32 %v2544, %v2803
      %v2840 = vadd.f32 %v2544, %v2806
      %s2841 = scalar_lea.vmem %s3, 72
      %v2842 = vld [vmem:[%s2841] sm:$0xf]
      %v2843 = vld [vmem:[%s2841 + $0x4] sm:$0xf]
      %v2844 = vld [vmem:[%s2841 + $0x8] sm:$0xf]
      %v2845 = vld [vmem:[%s2841 + $0xc] sm:$0xf]
      %v2846 = vld [vmem:[%s2841 + $0x10] sm:$0xf]
      %v2847 = vld [vmem:[%s2841 + $0x14] sm:$0xf]
      %v2848 = vld [vmem:[%s2841 + $0x18] sm:$0xf]
      %v2849 = vld [vmem:[%s2841 + $0x1c] sm:$0xf]
      %v2850 = vld [vmem:[%s2841 + $0x20] sm:$0xf]
      %v2851 = vld [vmem:[%s2841 + $0x24] sm:$0xf]
      %v2852 = vld [vmem:[%s2841 + $0x28] sm:$0xf]
      %v2853 = vld [vmem:[%s2841 + $0x2c] sm:$0xf]
      %v2854 = vld [vmem:[%s2841 + $0x30] sm:$0xf]
      %v2855 = vld [vmem:[%s2841 + $0x34] sm:$0xf]
      %v2856 = vld [vmem:[%s2841 + $0x38] sm:$0xf]
      %v2857 = vld [vmem:[%s2841 + $0x3c] sm:$0xf]
      %v2858 = vld [vmem:[%s2841 + $0x40] sm:$0xf]
      %v2859 = vld [vmem:[%s2841 + $0x44] sm:$0xf]
      %v2878 = vunpack.c.l.b16 %v2842
      %v2879 = vunpack.c.l.b16 %v2843
      %v2880 = vunpack.c.l.b16 %v2844
      %v2881 = vunpack.c.l.b16 %v2845
      %v2882 = vunpack.c.l.b16 %v2846
      %v2883 = vunpack.c.l.b16 %v2847
      %v2884 = vunpack.c.l.b16 %v2848
      %v2885 = vunpack.c.l.b16 %v2849
      %v2886 = vunpack.c.l.b16 %v2850
      %v2887 = vunpack.c.l.b16 %v2851
      %v2888 = vunpack.c.l.b16 %v2852
      %v2889 = vunpack.c.l.b16 %v2853
      %v2890 = vunpack.c.l.b16 %v2854
      %v2891 = vunpack.c.l.b16 %v2855
      %v2892 = vunpack.c.l.b16 %v2856
      %v2893 = vunpack.c.l.b16 %v2857
      %v2894 = vunpack.c.l.b16 %v2858
      %v2895 = vunpack.c.l.b16 %v2859
      %v2896 = vpack.c.b16 %v2879, %v2878
      %v2897 = vpack.c.b16 %v2881, %v2880
      %v2898 = vpack.c.b16 %v2883, %v2882
      %v2899 = vpack.c.b16 %v2885, %v2884
      %v2900 = vpack.c.b16 %v2887, %v2886
      %v2901 = vpack.c.b16 %v2889, %v2888
      %v2902 = vpack.c.b16 %v2891, %v2890
      %v2903 = vpack.c.b16 %v2893, %v2892
      %v2904 = vpack.c.b16 %v2895, %v2894
      %v2914 = vsel %vm1107, %v2458, 0
      %2916 = vmatprep.subr.bf16.mxu0 0
      %2917 = vmatpush1.bf16.msra.mxu0 %v2903
      %2918 = vmatprep.subr.bf16.mxu0 0
      %2919 = vmatpush1.bf16.msra.mxu0 %v2902
      %2920 = vmatprep.subr.bf16.mxu0 0
      %2921 = vmatpush1.bf16.msra.mxu0 %v2901
      %2922 = vmatprep.subr.bf16.mxu0 0
      %2923 = vmatpush1.bf16.msra.mxu0 %v2900
      %2924 = vmatprep.subr.bf16.mxu0 0
      %2925 = vmatpush1.bf16.msra.mxu0 %v2899
      %2926 = vmatprep.subr.bf16.mxu0 0
      %2927 = vmatpush1.bf16.msra.mxu0 %v2898
      %2928 = vmatprep.subr.bf16.mxu0 0
      %2929 = vmatpush1.bf16.msra.mxu0 %v2897
      %2930 = vmatprep.subr.bf16.mxu0 0
      %2931 = vmatpush1.bf16.msra.mxu0 %v2896
      %2932 = vmatprep.subr.bf16.mxu0 0
      %2933 = vmatpush2.bf16.msra.mxu0 0
      %2934 = vmatprep.subr.bf16.mxu0 0
      %2935 = vmatpush2.bf16.msra.mxu0 0
      %2936 = vmatprep.subr.bf16.mxu0 0
      %2937 = vmatpush2.bf16.msra.mxu0 0
      %2938 = vmatprep.subr.bf16.mxu0 0
      %2939 = vmatpush2.bf16.msra.mxu0 0
      %2940 = vmatprep.subr.bf16.mxu0 0
      %2941 = vmatpush2.bf16.msra.mxu0 0
      %2942 = vmatprep.subr.bf16.mxu0 0
      %2943 = vmatpush2.bf16.msra.mxu0 0
      %2944 = vmatprep.subr.bf16.mxu0 0
      %2945 = vmatpush2.bf16.msra.mxu0 0
      %2946 = vmatprep.subr.bf16.mxu0 0
      %2947 = vmatpush2.bf16.msra.mxu0 %v2904
      %2948 = vmatprep.mubr.bf16.mxu0 %v2618
      %2949 = vmatmul.mubr.bf16.gmra.mxu0 %v2492
      %v2950 = vpop.f32.mrf.mxu0
      %v2951 = vadd.f32 0.0, %v2950
      %v2952 = vpop.f32.mrf.mxu0
      %v2953 = vpop.f32.mrf.mxu0
      %v2954 = vadd.f32 0.0, %v2953
      %v2955 = vpop.f32.mrf.mxu0
      %2956 = vmatprep.mubr.bf16.mxu0 %v2620
      %2957 = vmatmul.mubr.bf16.gmra.mxu0 %v2495
      %v2958 = vpop.f32.mrf.mxu0
      %v2959 = vadd.f32 0.0, %v2958
      %v2960 = vpop.f32.mrf.mxu0
      %v2961 = vpop.f32.mrf.mxu0
      %v2962 = vadd.f32 0.0, %v2961
      %v2963 = vpop.f32.mrf.mxu0
      %2964 = vmatprep.mubr.bf16.mxu0 %v2622
      %2965 = vmatmul.mubr.bf16.gmra.mxu0 %v2498
      %v2966 = vpop.f32.mrf.mxu0
      %v2967 = vadd.f32 0.0, %v2966
      %v2968 = vpop.f32.mrf.mxu0
      %v2969 = vpop.f32.mrf.mxu0
      %v2970 = vadd.f32 0.0, %v2969
      %v2971 = vpop.f32.mrf.mxu0
      %2972 = vmatprep.mubr.bf16.mxu0 %v2624
      %2973 = vmatmul.mubr.bf16.gmra.mxu0 %v2501
      %v2974 = vpop.f32.mrf.mxu0
      %v2975 = vadd.f32 0.0, %v2974
      %v2976 = vpop.f32.mrf.mxu0
      %v2977 = vpop.f32.mrf.mxu0
      %v2978 = vadd.f32 0.0, %v2977
      %v2979 = vpop.f32.mrf.mxu0
      %2980 = vmatprep.mubr.bf16.mxu0 %v2626
      %2981 = vmatmul.mubr.bf16.gmra.mxu0 %v2504
      %v2982 = vpop.f32.mrf.mxu0
      %v2983 = vadd.f32 0.0, %v2982
      %v2984 = vpop.f32.mrf.mxu0
      %v2985 = vpop.f32.mrf.mxu0
      %v2986 = vadd.f32 0.0, %v2985
      %v2987 = vpop.f32.mrf.mxu0
      %2988 = vmatprep.mubr.bf16.mxu0 %v2628
      %2989 = vmatmul.mubr.bf16.gmra.mxu0 %v2507
      %v2990 = vpop.f32.mrf.mxu0
      %v2991 = vadd.f32 0.0, %v2990
      %v2992 = vpop.f32.mrf.mxu0
      %v2993 = vpop.f32.mrf.mxu0
      %v2994 = vadd.f32 0.0, %v2993
      %v2995 = vpop.f32.mrf.mxu0
      %2996 = vmatprep.mubr.bf16.mxu0 %v2630
      %2997 = vmatmul.mubr.bf16.gmra.mxu0 %v2510
      %v2998 = vpop.f32.mrf.mxu0
      %v2999 = vadd.f32 0.0, %v2998
      %v3000 = vpop.f32.mrf.mxu0
      %v3001 = vpop.f32.mrf.mxu0
      %v3002 = vadd.f32 0.0, %v3001
      %v3003 = vpop.f32.mrf.mxu0
      %3004 = vmatprep.mubr.bf16.mxu0 %v2632
      %3005 = vmatmul.mubr.bf16.gmra.mxu0 %v2513
      %v3006 = vpop.f32.mrf.mxu0
      %v3007 = vadd.f32 0.0, %v3006
      %v3008 = vpop.f32.mrf.mxu0
      %v3009 = vpop.f32.mrf.mxu0
      %v3010 = vadd.f32 0.0, %v3009
      %v3011 = vpop.f32.mrf.mxu0
      %3012 = vmatprep.mubr.bf16.mxu0 %v2634
      %3013 = vmatmul.mubr.bf16.gmra.mxu0 %v2516
      %v3014 = vpop.f32.mrf.mxu0
      %v3015 = vadd.f32 0.0, %v3014
      %v3016 = vpop.f32.mrf.mxu0
      %v3017 = vpop.f32.mrf.mxu0
      %v3018 = vadd.f32 0.0, %v3017
      %v3019 = vpop.f32.mrf.mxu0
      %3020 = vmatprep.mubr.bf16.mxu0 %v2636
      %3021 = vmatmul.mubr.bf16.gmra.mxu0 %v2519
      %v3022 = vpop.f32.mrf.mxu0
      %v3023 = vadd.f32 0.0, %v3022
      %v3024 = vpop.f32.mrf.mxu0
      %v3025 = vpop.f32.mrf.mxu0
      %v3026 = vadd.f32 0.0, %v3025
      %v3027 = vpop.f32.mrf.mxu0
      %3028 = vmatprep.mubr.bf16.mxu0 %v2638
      %3029 = vmatmul.mubr.bf16.gmra.mxu0 %v2522
      %v3030 = vpop.f32.mrf.mxu0
      %v3031 = vadd.f32 0.0, %v3030
      %v3032 = vpop.f32.mrf.mxu0
      %v3033 = vpop.f32.mrf.mxu0
      %v3034 = vadd.f32 0.0, %v3033
      %v3035 = vpop.f32.mrf.mxu0
      %3036 = vmatprep.mubr.bf16.mxu0 %v2640
      %3037 = vmatmul.mubr.bf16.gmra.mxu0 %v2525
      %v3038 = vpop.f32.mrf.mxu0
      %v3039 = vadd.f32 0.0, %v3038
      %v3040 = vpop.f32.mrf.mxu0
      %v3041 = vpop.f32.mrf.mxu0
      %v3042 = vadd.f32 0.0, %v3041
      %v3043 = vpop.f32.mrf.mxu0
      %3044 = vmatprep.mubr.bf16.mxu0 %v2642
      %3045 = vmatmul.mubr.bf16.gmra.mxu0 %v2528
      %v3046 = vpop.f32.mrf.mxu0
      %v3047 = vadd.f32 0.0, %v3046
      %v3048 = vpop.f32.mrf.mxu0
      %v3049 = vpop.f32.mrf.mxu0
      %v3050 = vadd.f32 0.0, %v3049
      %v3051 = vpop.f32.mrf.mxu0
      %3052 = vmatprep.mubr.bf16.mxu0 %v2644
      %3053 = vmatmul.mubr.bf16.gmra.mxu0 %v2531
      %v3054 = vpop.f32.mrf.mxu0
      %v3055 = vadd.f32 0.0, %v3054
      %v3056 = vpop.f32.mrf.mxu0
      %v3057 = vpop.f32.mrf.mxu0
      %v3058 = vadd.f32 0.0, %v3057
      %v3059 = vpop.f32.mrf.mxu0
      %3060 = vmatprep.mubr.bf16.mxu0 %v2646
      %3061 = vmatmul.mubr.bf16.gmra.mxu0 %v2534
      %v3062 = vpop.f32.mrf.mxu0
      %v3063 = vadd.f32 0.0, %v3062
      %v3064 = vpop.f32.mrf.mxu0
      %v3065 = vpop.f32.mrf.mxu0
      %v3066 = vadd.f32 0.0, %v3065
      %v3067 = vpop.f32.mrf.mxu0
      %3068 = vmatprep.mubr.bf16.mxu0 %v2914
      %3069 = vmatmul.mubr.bf16.gmra.mxu0 %v2537
      %v3070 = vpop.f32.mrf.mxu0
      %v3071 = vadd.f32 0.0, %v3070
      %v3072 = vpop.f32.mrf.mxu0
      %v3073 = vpop.f32.mrf.mxu0
      %v3074 = vadd.f32 0.0, %v3073
      %v3075 = vpop.f32.mrf.mxu0
      %3076 = vdwg.mxu0
      %v3077 = vadd.f32 %v2809, %v2951
      %v3078 = vadd.f32 %v2810, %v2954
      %v3079 = vadd.f32 %v2811, %v2959
      %v3080 = vadd.f32 %v2812, %v2962
      %v3081 = vadd.f32 %v2813, %v2967
      %v3082 = vadd.f32 %v2814, %v2970
      %v3083 = vadd.f32 %v2815, %v2975
      %v3084 = vadd.f32 %v2816, %v2978
      %v3085 = vadd.f32 %v2817, %v2983
      %v3086 = vadd.f32 %v2818, %v2986
      %v3087 = vadd.f32 %v2819, %v2991
      %v3088 = vadd.f32 %v2820, %v2994
      %v3089 = vadd.f32 %v2821, %v2999
      %v3090 = vadd.f32 %v2822, %v3002
      %v3091 = vadd.f32 %v2823, %v3007
      %v3092 = vadd.f32 %v2824, %v3010
      %v3093 = vadd.f32 %v2825, %v3015
      %v3094 = vadd.f32 %v2826, %v3018
      %v3095 = vadd.f32 %v2827, %v3023
      %v3096 = vadd.f32 %v2828, %v3026
      %v3097 = vadd.f32 %v2829, %v3031
      %v3098 = vadd.f32 %v2830, %v3034
      %v3099 = vadd.f32 %v2831, %v3039
      %v3100 = vadd.f32 %v2832, %v3042
      %v3101 = vadd.f32 %v2833, %v3047
      %v3102 = vadd.f32 %v2834, %v3050
      %v3103 = vadd.f32 %v2835, %v3055
      %v3104 = vadd.f32 %v2836, %v3058
      %v3105 = vadd.f32 %v2837, %v3063
      %v3106 = vadd.f32 %v2838, %v3066
      %v3107 = vadd.f32 %v2839, %v3071
      %v3108 = vadd.f32 %v2840, %v3074
      %s3109 = scalar_lea.vmem %s3, 144
      %v3110 = vld [vmem:[%s3109] sm:$0xf]
      %v3111 = vld [vmem:[%s3109 + $0x4] sm:$0xf]
      %v3112 = vld [vmem:[%s3109 + $0x8] sm:$0xf]
      %v3113 = vld [vmem:[%s3109 + $0xc] sm:$0xf]
      %v3114 = vld [vmem:[%s3109 + $0x10] sm:$0xf]
      %v3115 = vld [vmem:[%s3109 + $0x14] sm:$0xf]
      %v3116 = vld [vmem:[%s3109 + $0x18] sm:$0xf]
      %v3117 = vld [vmem:[%s3109 + $0x1c] sm:$0xf]
      %v3118 = vld [vmem:[%s3109 + $0x20] sm:$0xf]
      %v3119 = vld [vmem:[%s3109 + $0x24] sm:$0xf]
      %v3120 = vld [vmem:[%s3109 + $0x28] sm:$0xf]
      %v3121 = vld [vmem:[%s3109 + $0x2c] sm:$0xf]
      %v3122 = vld [vmem:[%s3109 + $0x30] sm:$0xf]
      %v3123 = vld [vmem:[%s3109 + $0x34] sm:$0xf]
      %v3124 = vld [vmem:[%s3109 + $0x38] sm:$0xf]
      %v3125 = vld [vmem:[%s3109 + $0x3c] sm:$0xf]
      %v3126 = vld [vmem:[%s3109 + $0x40] sm:$0xf]
      %v3127 = vld [vmem:[%s3109 + $0x44] sm:$0xf]
      %v3146 = vunpack.c.l.b16 %v3110
      %v3147 = vunpack.c.l.b16 %v3111
      %v3148 = vunpack.c.l.b16 %v3112
      %v3149 = vunpack.c.l.b16 %v3113
      %v3150 = vunpack.c.l.b16 %v3114
      %v3151 = vunpack.c.l.b16 %v3115
      %v3152 = vunpack.c.l.b16 %v3116
      %v3153 = vunpack.c.l.b16 %v3117
      %v3154 = vunpack.c.l.b16 %v3118
      %v3155 = vunpack.c.l.b16 %v3119
      %v3156 = vunpack.c.l.b16 %v3120
      %v3157 = vunpack.c.l.b16 %v3121
      %v3158 = vunpack.c.l.b16 %v3122
      %v3159 = vunpack.c.l.b16 %v3123
      %v3160 = vunpack.c.l.b16 %v3124
      %v3161 = vunpack.c.l.b16 %v3125
      %v3162 = vunpack.c.l.b16 %v3126
      %v3163 = vunpack.c.l.b16 %v3127
      %v3164 = vpack.c.b16 %v3147, %v3146
      %v3165 = vpack.c.b16 %v3149, %v3148
      %v3166 = vpack.c.b16 %v3151, %v3150
      %v3167 = vpack.c.b16 %v3153, %v3152
      %v3168 = vpack.c.b16 %v3155, %v3154
      %v3169 = vpack.c.b16 %v3157, %v3156
      %v3170 = vpack.c.b16 %v3159, %v3158
      %v3171 = vpack.c.b16 %v3161, %v3160
      %v3172 = vpack.c.b16 %v3163, %v3162
      %3182 = vmatprep.subr.bf16.mxu0 0
      %3183 = vmatpush1.bf16.msra.mxu0 %v3171
      %3184 = vmatprep.subr.bf16.mxu0 0
      %3185 = vmatpush1.bf16.msra.mxu0 %v3170
      %3186 = vmatprep.subr.bf16.mxu0 0
      %3187 = vmatpush1.bf16.msra.mxu0 %v3169
      %3188 = vmatprep.subr.bf16.mxu0 0
      %3189 = vmatpush1.bf16.msra.mxu0 %v3168
      %3190 = vmatprep.subr.bf16.mxu0 0
      %3191 = vmatpush1.bf16.msra.mxu0 %v3167
      %3192 = vmatprep.subr.bf16.mxu0 0
      %3193 = vmatpush1.bf16.msra.mxu0 %v3166
      %3194 = vmatprep.subr.bf16.mxu0 0
      %3195 = vmatpush1.bf16.msra.mxu0 %v3165
      %3196 = vmatprep.subr.bf16.mxu0 0
      %3197 = vmatpush1.bf16.msra.mxu0 %v3164
      %3198 = vmatprep.subr.bf16.mxu0 0
      %3199 = vmatpush2.bf16.msra.mxu0 0
      %3200 = vmatprep.subr.bf16.mxu0 0
      %3201 = vmatpush2.bf16.msra.mxu0 0
      %3202 = vmatprep.subr.bf16.mxu0 0
      %3203 = vmatpush2.bf16.msra.mxu0 0
      %3204 = vmatprep.subr.bf16.mxu0 0
      %3205 = vmatpush2.bf16.msra.mxu0 0
      %3206 = vmatprep.subr.bf16.mxu0 0
      %3207 = vmatpush2.bf16.msra.mxu0 0
      %3208 = vmatprep.subr.bf16.mxu0 0
      %3209 = vmatpush2.bf16.msra.mxu0 0
      %3210 = vmatprep.subr.bf16.mxu0 0
      %3211 = vmatpush2.bf16.msra.mxu0 0
      %3212 = vmatprep.subr.bf16.mxu0 0
      %3213 = vmatpush2.bf16.msra.mxu0 %v3172
      %3214 = vmatprep.mubr.bf16.mxu0 %v2620
      %3215 = vmatmul.mubr.bf16.gmra.mxu0 %v2495
      %v3216 = vpop.f32.mrf.mxu0
      %v3217 = vadd.f32 0.0, %v3216
      %v3218 = vpop.f32.mrf.mxu0
      %v3219 = vpop.f32.mrf.mxu0
      %v3220 = vadd.f32 0.0, %v3219
      %v3221 = vpop.f32.mrf.mxu0
      %3222 = vmatprep.mubr.bf16.mxu0 %v2622
      %3223 = vmatmul.mubr.bf16.gmra.mxu0 %v2498
      %v3224 = vpop.f32.mrf.mxu0
      %v3225 = vadd.f32 0.0, %v3224
      %v3226 = vpop.f32.mrf.mxu0
      %v3227 = vpop.f32.mrf.mxu0
      %v3228 = vadd.f32 0.0, %v3227
      %v3229 = vpop.f32.mrf.mxu0
      %3230 = vmatprep.mubr.bf16.mxu0 %v2624
      %3231 = vmatmul.mubr.bf16.gmra.mxu0 %v2501
      %v3232 = vpop.f32.mrf.mxu0
      %v3233 = vadd.f32 0.0, %v3232
      %v3234 = vpop.f32.mrf.mxu0
      %v3235 = vpop.f32.mrf.mxu0
      %v3236 = vadd.f32 0.0, %v3235
      %v3237 = vpop.f32.mrf.mxu0
      %3238 = vmatprep.mubr.bf16.mxu0 %v2626
      %3239 = vmatmul.mubr.bf16.gmra.mxu0 %v2504
      %v3240 = vpop.f32.mrf.mxu0
      %v3241 = vadd.f32 0.0, %v3240
      %v3242 = vpop.f32.mrf.mxu0
      %v3243 = vpop.f32.mrf.mxu0
      %v3244 = vadd.f32 0.0, %v3243
      %v3245 = vpop.f32.mrf.mxu0
      %3246 = vmatprep.mubr.bf16.mxu0 %v2628
      %3247 = vmatmul.mubr.bf16.gmra.mxu0 %v2507
      %v3248 = vpop.f32.mrf.mxu0
      %v3249 = vadd.f32 0.0, %v3248
      %v3250 = vpop.f32.mrf.mxu0
      %v3251 = vpop.f32.mrf.mxu0
      %v3252 = vadd.f32 0.0, %v3251
      %v3253 = vpop.f32.mrf.mxu0
      %3254 = vmatprep.mubr.bf16.mxu0 %v2630
      %3255 = vmatmul.mubr.bf16.gmra.mxu0 %v2510
      %v3256 = vpop.f32.mrf.mxu0
      %v3257 = vadd.f32 0.0, %v3256
      %v3258 = vpop.f32.mrf.mxu0
      %v3259 = vpop.f32.mrf.mxu0
      %v3260 = vadd.f32 0.0, %v3259
      %v3261 = vpop.f32.mrf.mxu0
      %3262 = vmatprep.mubr.bf16.mxu0 %v2632
      %3263 = vmatmul.mubr.bf16.gmra.mxu0 %v2513
      %v3264 = vpop.f32.mrf.mxu0
      %v3265 = vadd.f32 0.0, %v3264
      %v3266 = vpop.f32.mrf.mxu0
      %v3267 = vpop.f32.mrf.mxu0
      %v3268 = vadd.f32 0.0, %v3267
      %v3269 = vpop.f32.mrf.mxu0
      %3270 = vmatprep.mubr.bf16.mxu0 %v2634
      %3271 = vmatmul.mubr.bf16.gmra.mxu0 %v2516
      %v3272 = vpop.f32.mrf.mxu0
      %v3273 = vadd.f32 0.0, %v3272
      %v3274 = vpop.f32.mrf.mxu0
      %v3275 = vpop.f32.mrf.mxu0
      %v3276 = vadd.f32 0.0, %v3275
      %v3277 = vpop.f32.mrf.mxu0
      %3278 = vmatprep.mubr.bf16.mxu0 %v2636
      %3279 = vmatmul.mubr.bf16.gmra.mxu0 %v2519
      %v3280 = vpop.f32.mrf.mxu0
      %v3281 = vadd.f32 0.0, %v3280
      %v3282 = vpop.f32.mrf.mxu0
      %v3283 = vpop.f32.mrf.mxu0
      %v3284 = vadd.f32 0.0, %v3283
      %v3285 = vpop.f32.mrf.mxu0
      %3286 = vmatprep.mubr.bf16.mxu0 %v2638
      %3287 = vmatmul.mubr.bf16.gmra.mxu0 %v2522
      %v3288 = vpop.f32.mrf.mxu0
      %v3289 = vadd.f32 0.0, %v3288
      %v3290 = vpop.f32.mrf.mxu0
      %v3291 = vpop.f32.mrf.mxu0
      %v3292 = vadd.f32 0.0, %v3291
      %v3293 = vpop.f32.mrf.mxu0
      %3294 = vmatprep.mubr.bf16.mxu0 %v2640
      %3295 = vmatmul.mubr.bf16.gmra.mxu0 %v2525
      %v3296 = vpop.f32.mrf.mxu0
      %v3297 = vadd.f32 0.0, %v3296
      %v3298 = vpop.f32.mrf.mxu0
      %v3299 = vpop.f32.mrf.mxu0
      %v3300 = vadd.f32 0.0, %v3299
      %v3301 = vpop.f32.mrf.mxu0
      %3302 = vmatprep.mubr.bf16.mxu0 %v2642
      %3303 = vmatmul.mubr.bf16.gmra.mxu0 %v2528
      %v3304 = vpop.f32.mrf.mxu0
      %v3305 = vadd.f32 0.0, %v3304
      %v3306 = vpop.f32.mrf.mxu0
      %v3307 = vpop.f32.mrf.mxu0
      %v3308 = vadd.f32 0.0, %v3307
      %v3309 = vpop.f32.mrf.mxu0
      %3310 = vmatprep.mubr.bf16.mxu0 %v2644
      %3311 = vmatmul.mubr.bf16.gmra.mxu0 %v2531
      %v3312 = vpop.f32.mrf.mxu0
      %v3313 = vadd.f32 0.0, %v3312
      %v3314 = vpop.f32.mrf.mxu0
      %v3315 = vpop.f32.mrf.mxu0
      %v3316 = vadd.f32 0.0, %v3315
      %v3317 = vpop.f32.mrf.mxu0
      %3318 = vmatprep.mubr.bf16.mxu0 %v2646
      %3319 = vmatmul.mubr.bf16.gmra.mxu0 %v2534
      %v3320 = vpop.f32.mrf.mxu0
      %v3321 = vadd.f32 0.0, %v3320
      %v3322 = vpop.f32.mrf.mxu0
      %v3323 = vpop.f32.mrf.mxu0
      %v3324 = vadd.f32 0.0, %v3323
      %v3325 = vpop.f32.mrf.mxu0
      %3326 = vmatprep.mubr.bf16.mxu0 %v2914
      %3327 = vmatmul.mubr.bf16.gmra.mxu0 %v2537
      %v3328 = vpop.f32.mrf.mxu0
      %v3329 = vadd.f32 0.0, %v3328
      %v3330 = vpop.f32.mrf.mxu0
      %v3331 = vpop.f32.mrf.mxu0
      %v3332 = vadd.f32 0.0, %v3331
      %v3333 = vpop.f32.mrf.mxu0
      %3334 = vmatprep.mubr.bf16.mxu0 %v1108
      %3335 = vmatmul.mubr.bf16.gmra.mxu0 %v978
      %v3336 = vpop.f32.mrf.mxu0
      %v3337 = vadd.f32 0.0, %v3336
      %v3338 = vpop.f32.mrf.mxu0
      %v3339 = vpop.f32.mrf.mxu0
      %v3340 = vadd.f32 0.0, %v3339
      %v3341 = vpop.f32.mrf.mxu0
      %3342 = vdwg.mxu0
      %v3343 = vadd.f32 %v3077, %v3217
      %v3344 = vadd.f32 %v3078, %v3220
      %v3345 = vadd.f32 %v3079, %v3225
      %v3346 = vadd.f32 %v3080, %v3228
      %v3347 = vadd.f32 %v3081, %v3233
      %v3348 = vadd.f32 %v3082, %v3236
      %v3349 = vadd.f32 %v3083, %v3241
      %v3350 = vadd.f32 %v3084, %v3244
      %v3351 = vadd.f32 %v3085, %v3249
      %v3352 = vadd.f32 %v3086, %v3252
      %v3353 = vadd.f32 %v3087, %v3257
      %v3354 = vadd.f32 %v3088, %v3260
      %v3355 = vadd.f32 %v3089, %v3265
      %v3356 = vadd.f32 %v3090, %v3268
      %v3357 = vadd.f32 %v3091, %v3273
      %v3358 = vadd.f32 %v3092, %v3276
      %v3359 = vadd.f32 %v3093, %v3281
      %v3360 = vadd.f32 %v3094, %v3284
      %v3361 = vadd.f32 %v3095, %v3289
      %v3362 = vadd.f32 %v3096, %v3292
      %v3363 = vadd.f32 %v3097, %v3297
      %v3364 = vadd.f32 %v3098, %v3300
      %v3365 = vadd.f32 %v3099, %v3305
      %v3366 = vadd.f32 %v3100, %v3308
      %v3367 = vadd.f32 %v3101, %v3313
      %v3368 = vadd.f32 %v3102, %v3316
      %v3369 = vadd.f32 %v3103, %v3321
      %v3370 = vadd.f32 %v3104, %v3324
      %v3371 = vadd.f32 %v3105, %v3329
      %v3372 = vadd.f32 %v3106, %v3332
      %v3373 = vadd.f32 %v3107, %v3337
      %v3374 = vadd.f32 %v3108, %v3340
      %v3375 = vmul.f32 %v3343, 0.01
      %v3376 = vmul.f32 %v3344, 0.01
      %v3377 = vmul.f32 %v3345, 0.01
      %v3378 = vmul.f32 %v3346, 0.01
      %v3379 = vmul.f32 %v3347, 0.01
      %v3380 = vmul.f32 %v3348, 0.01
      %v3381 = vmul.f32 %v3349, 0.01
      %v3382 = vmul.f32 %v3350, 0.01
      %v3383 = vmul.f32 %v3351, 0.01
      %v3384 = vmul.f32 %v3352, 0.01
      %v3385 = vmul.f32 %v3353, 0.01
      %v3386 = vmul.f32 %v3354, 0.01
      %v3387 = vmul.f32 %v3355, 0.01
      %v3388 = vmul.f32 %v3356, 0.01
      %v3389 = vmul.f32 %v3357, 0.01
      %v3390 = vmul.f32 %v3358, 0.01
      %v3391 = vmul.f32 %v3359, 0.01
      %v3392 = vmul.f32 %v3360, 0.01
      %v3393 = vmul.f32 %v3361, 0.01
      %v3394 = vmul.f32 %v3362, 0.01
      %v3395 = vmul.f32 %v3363, 0.01
      %v3396 = vmul.f32 %v3364, 0.01
      %v3397 = vmul.f32 %v3365, 0.01
      %v3398 = vmul.f32 %v3366, 0.01
      %v3399 = vmul.f32 %v3367, 0.01
      %v3400 = vmul.f32 %v3368, 0.01
      %v3401 = vmul.f32 %v3369, 0.01
      %v3402 = vmul.f32 %v3370, 0.01
      %v3403 = vmul.f32 %v3371, 0.01
      %v3404 = vmul.f32 %v3372, 0.01
      %v3405 = vmul.f32 %v3373, 0.01
      %v3406 = vmul.f32 %v3374, 0.01
      %v3407 = vmax.f32 %v3343, %v3375
      %v3408 = vmax.f32 %v3344, %v3376
      %v3409 = vmax.f32 %v3345, %v3377
      %v3410 = vmax.f32 %v3346, %v3378
      %v3411 = vmax.f32 %v3347, %v3379
      %v3412 = vmax.f32 %v3348, %v3380
      %v3413 = vmax.f32 %v3349, %v3381
      %v3414 = vmax.f32 %v3350, %v3382
      %v3415 = vmax.f32 %v3351, %v3383
      %v3416 = vmax.f32 %v3352, %v3384
      %v3417 = vmax.f32 %v3353, %v3385
      %v3418 = vmax.f32 %v3354, %v3386
      %v3419 = vmax.f32 %v3355, %v3387
      %v3420 = vmax.f32 %v3356, %v3388
      %v3421 = vmax.f32 %v3357, %v3389
      %v3422 = vmax.f32 %v3358, %v3390
      %v3423 = vmax.f32 %v3359, %v3391
      %v3424 = vmax.f32 %v3360, %v3392
      %v3425 = vmax.f32 %v3361, %v3393
      %v3426 = vmax.f32 %v3362, %v3394
      %v3427 = vmax.f32 %v3363, %v3395
      %v3428 = vmax.f32 %v3364, %v3396
      %v3429 = vmax.f32 %v3365, %v3397
      %v3430 = vmax.f32 %v3366, %v3398
      %v3431 = vmax.f32 %v3367, %v3399
      %v3432 = vmax.f32 %v3368, %v3400
      %v3433 = vmax.f32 %v3369, %v3401
      %v3434 = vmax.f32 %v3370, %v3402
      %v3435 = vmax.f32 %v3371, %v3403
      %v3436 = vmax.f32 %v3372, %v3404
      %v3437 = vmax.f32 %v3373, %v3405
      %v3438 = vmax.f32 %v3374, %v3406
      %v3439 = vpack.c.bf16 %v3408, %v3407
      %v3440 = vpack.c.bf16 %v3410, %v3409
      %v3441 = vpack.c.bf16 %v3412, %v3411
      %v3442 = vpack.c.bf16 %v3414, %v3413
      %v3443 = vpack.c.bf16 %v3416, %v3415
      %v3444 = vpack.c.bf16 %v3418, %v3417
      %v3445 = vpack.c.bf16 %v3420, %v3419
      %v3446 = vpack.c.bf16 %v3422, %v3421
      %v3447 = vpack.c.bf16 %v3424, %v3423
      %v3448 = vpack.c.bf16 %v3426, %v3425
      %v3449 = vpack.c.bf16 %v3428, %v3427
      %v3450 = vpack.c.bf16 %v3430, %v3429
      %v3451 = vpack.c.bf16 %v3432, %v3431
      %v3452 = vpack.c.bf16 %v3434, %v3433
      %v3453 = vpack.c.bf16 %v3436, %v3435
      %v3454 = vpack.c.bf16 %v3438, %v3437
      %v3456 = vshrl.u32 %v3439, 16
      %v3458 = vrot.slane %v3456, 7
      %v3459 = vshll.u32 %v3439, 16
      %v3461 = vor.u32 %v3458, %v3459
      %v3463 = vshrl.u32 %v3440, 16
      %v3465 = vrot.slane %v3463, 7
      %v3466 = vshll.u32 %v3440, 16
      %v3468 = vor.u32 %v3465, %v3466
      %v3470 = vshrl.u32 %v3441, 16
      %v3472 = vrot.slane %v3470, 7
      %v3473 = vshll.u32 %v3441, 16
      %v3475 = vor.u32 %v3472, %v3473
      %v3477 = vshrl.u32 %v3442, 16
      %v3479 = vrot.slane %v3477, 7
      %v3480 = vshll.u32 %v3442, 16
      %v3482 = vor.u32 %v3479, %v3480
      %v3484 = vshrl.u32 %v3443, 16
      %v3486 = vrot.slane %v3484, 7
      %v3487 = vshll.u32 %v3443, 16
      %v3489 = vor.u32 %v3486, %v3487
      %v3491 = vshrl.u32 %v3444, 16
      %v3493 = vrot.slane %v3491, 7
      %v3494 = vshll.u32 %v3444, 16
      %v3496 = vor.u32 %v3493, %v3494
      %v3498 = vshrl.u32 %v3445, 16
      %v3500 = vrot.slane %v3498, 7
      %v3501 = vshll.u32 %v3445, 16
      %v3503 = vor.u32 %v3500, %v3501
      %v3505 = vshrl.u32 %v3446, 16
      %v3507 = vrot.slane %v3505, 7
      %v3508 = vshll.u32 %v3446, 16
      %v3510 = vor.u32 %v3507, %v3508
      %v3512 = vshrl.u32 %v3447, 16
      %v3514 = vrot.slane %v3512, 7
      %v3515 = vshll.u32 %v3447, 16
      %v3517 = vor.u32 %v3514, %v3515
      %v3519 = vshrl.u32 %v3448, 16
      %v3521 = vrot.slane %v3519, 7
      %v3522 = vshll.u32 %v3448, 16
      %v3524 = vor.u32 %v3521, %v3522
      %v3526 = vshrl.u32 %v3449, 16
      %v3528 = vrot.slane %v3526, 7
      %v3529 = vshll.u32 %v3449, 16
      %v3531 = vor.u32 %v3528, %v3529
      %v3533 = vshrl.u32 %v3450, 16
      %v3535 = vrot.slane %v3533, 7
      %v3536 = vshll.u32 %v3450, 16
      %v3538 = vor.u32 %v3535, %v3536
      %v3540 = vshrl.u32 %v3451, 16
      %v3542 = vrot.slane %v3540, 7
      %v3543 = vshll.u32 %v3451, 16
      %v3545 = vor.u32 %v3542, %v3543
      %v3547 = vshrl.u32 %v3452, 16
      %v3549 = vrot.slane %v3547, 7
      %v3550 = vshll.u32 %v3452, 16
      %v3552 = vor.u32 %v3549, %v3550
      %v3554 = vshrl.u32 %v3453, 16
      %v3556 = vrot.slane %v3554, 7
      %v3557 = vshll.u32 %v3453, 16
      %v3559 = vor.u32 %v3556, %v3557
      %v3561 = vshrl.u32 %v3454, 16
      %v3563 = vrot.slane %v3561, 7
      %v3564 = vshll.u32 %v3454, 16
      %v3566 = vor.u32 %v3563, %v3564
      %v3599 = vsel %vm547, 0, %v3461
      %v3600 = vsel %vm547, 0, %v3468
      %v3601 = vsel %vm547, 0, %v3475
      %v3602 = vsel %vm547, 0, %v3482
      %v3603 = vsel %vm547, 0, %v3489
      %v3604 = vsel %vm547, 0, %v3496
      %v3605 = vsel %vm547, 0, %v3503
      %v3606 = vsel %vm547, 0, %v3510
      %v3607 = vsel %vm547, 0, %v3517
      %v3608 = vsel %vm547, 0, %v3524
      %v3609 = vsel %vm547, 0, %v3531
      %v3610 = vsel %vm547, 0, %v3538
      %v3611 = vsel %vm547, 0, %v3545
      %v3612 = vsel %vm547, 0, %v3552
      %v3613 = vsel %vm547, 0, %v3559
      %v3614 = vsel %vm547, 0, %v3566
      %v3615 = vsel %vm547, %v3458, 0
      %v3616 = vsel %vm547, %v3465, 0
      %v3617 = vsel %vm547, %v3472, 0
      %v3618 = vsel %vm547, %v3479, 0
      %v3619 = vsel %vm547, %v3486, 0
      %v3620 = vsel %vm547, %v3493, 0
      %v3621 = vsel %vm547, %v3500, 0
      %v3622 = vsel %vm547, %v3507, 0
      %v3623 = vsel %vm547, %v3514, 0
      %v3624 = vsel %vm547, %v3521, 0
      %v3625 = vsel %vm547, %v3528, 0
      %v3626 = vsel %vm547, %v3535, 0
      %v3627 = vsel %vm547, %v3542, 0
      %v3628 = vsel %vm547, %v3549, 0
      %v3629 = vsel %vm547, %v3556, 0
      %v3630 = vsel %vm547, %v3563, 0
      %v3632 = vshrl.u32 %v3599, 16
      %v3634 = vshll.u32 %v3599, 16
      %v3636 = vrot.slane %v3634, 1
      %v3637 = vor.u32 %v3632, %v3636
      %v3639 = vshll.u32 %v3615, 16
      %v3641 = vrot.slane %v3639, 1
      %v3642 = vsel %vm582, %v3637, %v3641
      %v3644 = vshrl.u32 %v3600, 16
      %v3646 = vshll.u32 %v3600, 16
      %v3648 = vrot.slane %v3646, 1
      %v3649 = vor.u32 %v3644, %v3648
      %v3651 = vshll.u32 %v3616, 16
      %v3653 = vrot.slane %v3651, 1
      %v3654 = vsel %vm582, %v3649, %v3653
      %v3656 = vshrl.u32 %v3601, 16
      %v3658 = vshll.u32 %v3601, 16
      %v3660 = vrot.slane %v3658, 1
      %v3661 = vor.u32 %v3656, %v3660
      %v3663 = vshll.u32 %v3617, 16
      %v3665 = vrot.slane %v3663, 1
      %v3666 = vsel %vm582, %v3661, %v3665
      %v3668 = vshrl.u32 %v3602, 16
      %v3670 = vshll.u32 %v3602, 16
      %v3672 = vrot.slane %v3670, 1
      %v3673 = vor.u32 %v3668, %v3672
      %v3675 = vshll.u32 %v3618, 16
      %v3677 = vrot.slane %v3675, 1
      %v3678 = vsel %vm582, %v3673, %v3677
      %v3680 = vshrl.u32 %v3603, 16
      %v3682 = vshll.u32 %v3603, 16
      %v3684 = vrot.slane %v3682, 1
      %v3685 = vor.u32 %v3680, %v3684
      %v3687 = vshll.u32 %v3619, 16
      %v3689 = vrot.slane %v3687, 1
      %v3690 = vsel %vm582, %v3685, %v3689
      %v3692 = vshrl.u32 %v3604, 16
      %v3694 = vshll.u32 %v3604, 16
      %v3696 = vrot.slane %v3694, 1
      %v3697 = vor.u32 %v3692, %v3696
      %v3699 = vshll.u32 %v3620, 16
      %v3701 = vrot.slane %v3699, 1
      %v3702 = vsel %vm582, %v3697, %v3701
      %v3704 = vshrl.u32 %v3605, 16
      %v3706 = vshll.u32 %v3605, 16
      %v3708 = vrot.slane %v3706, 1
      %v3709 = vor.u32 %v3704, %v3708
      %v3711 = vshll.u32 %v3621, 16
      %v3713 = vrot.slane %v3711, 1
      %v3714 = vsel %vm582, %v3709, %v3713
      %v3716 = vshrl.u32 %v3606, 16
      %v3718 = vshll.u32 %v3606, 16
      %v3720 = vrot.slane %v3718, 1
      %v3721 = vor.u32 %v3716, %v3720
      %v3723 = vshll.u32 %v3622, 16
      %v3725 = vrot.slane %v3723, 1
      %v3726 = vsel %vm582, %v3721, %v3725
      %v3728 = vshrl.u32 %v3607, 16
      %v3730 = vshll.u32 %v3607, 16
      %v3732 = vrot.slane %v3730, 1
      %v3733 = vor.u32 %v3728, %v3732
      %v3735 = vshll.u32 %v3623, 16
      %v3737 = vrot.slane %v3735, 1
      %v3738 = vsel %vm582, %v3733, %v3737
      %v3740 = vshrl.u32 %v3608, 16
      %v3742 = vshll.u32 %v3608, 16
      %v3744 = vrot.slane %v3742, 1
      %v3745 = vor.u32 %v3740, %v3744
      %v3747 = vshll.u32 %v3624, 16
      %v3749 = vrot.slane %v3747, 1
      %v3750 = vsel %vm582, %v3745, %v3749
      %v3752 = vshrl.u32 %v3609, 16
      %v3754 = vshll.u32 %v3609, 16
      %v3756 = vrot.slane %v3754, 1
      %v3757 = vor.u32 %v3752, %v3756
      %v3759 = vshll.u32 %v3625, 16
      %v3761 = vrot.slane %v3759, 1
      %v3762 = vsel %vm582, %v3757, %v3761
      %v3764 = vshrl.u32 %v3610, 16
      %v3766 = vshll.u32 %v3610, 16
      %v3768 = vrot.slane %v3766, 1
      %v3769 = vor.u32 %v3764, %v3768
      %v3771 = vshll.u32 %v3626, 16
      %v3773 = vrot.slane %v3771, 1
      %v3774 = vsel %vm582, %v3769, %v3773
      %v3776 = vshrl.u32 %v3611, 16
      %v3778 = vshll.u32 %v3611, 16
      %v3780 = vrot.slane %v3778, 1
      %v3781 = vor.u32 %v3776, %v3780
      %v3783 = vshll.u32 %v3627, 16
      %v3785 = vrot.slane %v3783, 1
      %v3786 = vsel %vm582, %v3781, %v3785
      %v3788 = vshrl.u32 %v3612, 16
      %v3790 = vshll.u32 %v3612, 16
      %v3792 = vrot.slane %v3790, 1
      %v3793 = vor.u32 %v3788, %v3792
      %v3795 = vshll.u32 %v3628, 16
      %v3797 = vrot.slane %v3795, 1
      %v3798 = vsel %vm582, %v3793, %v3797
      %v3800 = vshrl.u32 %v3613, 16
      %v3802 = vshll.u32 %v3613, 16
      %v3804 = vrot.slane %v3802, 1
      %v3805 = vor.u32 %v3800, %v3804
      %v3807 = vshll.u32 %v3629, 16
      %v3809 = vrot.slane %v3807, 1
      %v3810 = vsel %vm582, %v3805, %v3809
      %v3812 = vshrl.u32 %v3614, 16
      %v3814 = vshll.u32 %v3614, 16
      %v3816 = vrot.slane %v3814, 1
      %v3817 = vor.u32 %v3812, %v3816
      %v3819 = vshll.u32 %v3630, 16
      %v3821 = vrot.slane %v3819, 1
      %v3822 = vsel %vm582, %v3817, %v3821
      %3823 = vrot.lane.b32.xlu0 %v3642, 48
      %v3824 = vpop.permute.xlu0 %3823
      %3825 = vrot.lane.b32.xlu0 %v3654, 48
      %v3826 = vpop.permute.xlu0 %3825
      %3827 = vrot.lane.b32.xlu0 %v3666, 48
      %v3828 = vpop.permute.xlu0 %3827
      %3829 = vrot.lane.b32.xlu0 %v3678, 48
      %v3830 = vpop.permute.xlu0 %3829
      %3831 = vrot.lane.b32.xlu0 %v3690, 48
      %v3832 = vpop.permute.xlu0 %3831
      %3833 = vrot.lane.b32.xlu0 %v3702, 48
      %v3834 = vpop.permute.xlu0 %3833
      %3835 = vrot.lane.b32.xlu0 %v3714, 48
      %v3836 = vpop.permute.xlu0 %3835
      %3837 = vrot.lane.b32.xlu0 %v3726, 48
      %v3838 = vpop.permute.xlu0 %3837
      %3839 = vrot.lane.b32.xlu0 %v3738, 48
      %v3840 = vpop.permute.xlu0 %3839
      %3841 = vrot.lane.b32.xlu0 %v3750, 48
      %v3842 = vpop.permute.xlu0 %3841
      %3843 = vrot.lane.b32.xlu0 %v3762, 48
      %v3844 = vpop.permute.xlu0 %3843
      %3845 = vrot.lane.b32.xlu0 %v3774, 48
      %v3846 = vpop.permute.xlu0 %3845
      %3847 = vrot.lane.b32.xlu0 %v3786, 48
      %v3848 = vpop.permute.xlu0 %3847
      %3849 = vrot.lane.b32.xlu0 %v3798, 48
      %v3850 = vpop.permute.xlu0 %3849
      %3851 = vrot.lane.b32.xlu0 %v3810, 48
      %v3852 = vpop.permute.xlu0 %3851
      %3853 = vrot.lane.b32.xlu0 %v3822, 48
      %v3854 = vpop.permute.xlu0 %3853
      %v3887 = vrot.slane %v3599, 1
      %v3888 = vrot.slane %v3615, 1
      %v3889 = vsel %vm855, %v3887, %v3888
      %v3890 = vrot.slane %v3600, 1
      %v3891 = vrot.slane %v3616, 1
      %v3892 = vsel %vm855, %v3890, %v3891
      %v3893 = vrot.slane %v3601, 1
      %v3894 = vrot.slane %v3617, 1
      %v3895 = vsel %vm855, %v3893, %v3894
      %v3896 = vrot.slane %v3602, 1
      %v3897 = vrot.slane %v3618, 1
      %v3898 = vsel %vm855, %v3896, %v3897
      %v3899 = vrot.slane %v3603, 1
      %v3900 = vrot.slane %v3619, 1
      %v3901 = vsel %vm855, %v3899, %v3900
      %v3902 = vrot.slane %v3604, 1
      %v3903 = vrot.slane %v3620, 1
      %v3904 = vsel %vm855, %v3902, %v3903
      %v3905 = vrot.slane %v3605, 1
      %v3906 = vrot.slane %v3621, 1
      %v3907 = vsel %vm855, %v3905, %v3906
      %v3908 = vrot.slane %v3606, 1
      %v3909 = vrot.slane %v3622, 1
      %v3910 = vsel %vm855, %v3908, %v3909
      %v3911 = vrot.slane %v3607, 1
      %v3912 = vrot.slane %v3623, 1
      %v3913 = vsel %vm855, %v3911, %v3912
      %v3914 = vrot.slane %v3608, 1
      %v3915 = vrot.slane %v3624, 1
      %v3916 = vsel %vm855, %v3914, %v3915
      %v3917 = vrot.slane %v3609, 1
      %v3918 = vrot.slane %v3625, 1
      %v3919 = vsel %vm855, %v3917, %v3918
      %v3920 = vrot.slane %v3610, 1
      %v3921 = vrot.slane %v3626, 1
      %v3922 = vsel %vm855, %v3920, %v3921
      %v3923 = vrot.slane %v3611, 1
      %v3924 = vrot.slane %v3627, 1
      %v3925 = vsel %vm855, %v3923, %v3924
      %v3926 = vrot.slane %v3612, 1
      %v3927 = vrot.slane %v3628, 1
      %v3928 = vsel %vm855, %v3926, %v3927
      %v3929 = vrot.slane %v3613, 1
      %v3930 = vrot.slane %v3629, 1
      %v3931 = vsel %vm855, %v3929, %v3930
      %v3932 = vrot.slane %v3614, 1
      %v3933 = vrot.slane %v3630, 1
      %v3934 = vsel %vm855, %v3932, %v3933
      %3935 = vrot.lane.b32.xlu0 %v3889, 96
      %v3936 = vpop.permute.xlu0 %3935
      %3937 = vrot.lane.b32.xlu0 %v3892, 96
      %v3938 = vpop.permute.xlu0 %3937
      %3939 = vrot.lane.b32.xlu0 %v3895, 96
      %v3940 = vpop.permute.xlu0 %3939
      %3941 = vrot.lane.b32.xlu0 %v3898, 96
      %v3942 = vpop.permute.xlu0 %3941
      %3943 = vrot.lane.b32.xlu0 %v3901, 96
      %v3944 = vpop.permute.xlu0 %3943
      %3945 = vrot.lane.b32.xlu0 %v3904, 96
      %v3946 = vpop.permute.xlu0 %3945
      %3947 = vrot.lane.b32.xlu0 %v3907, 96
      %v3948 = vpop.permute.xlu0 %3947
      %3949 = vrot.lane.b32.xlu0 %v3910, 96
      %v3950 = vpop.permute.xlu0 %3949
      %3951 = vrot.lane.b32.xlu0 %v3913, 96
      %v3952 = vpop.permute.xlu0 %3951
      %3953 = vrot.lane.b32.xlu0 %v3916, 96
      %v3954 = vpop.permute.xlu0 %3953
      %3955 = vrot.lane.b32.xlu0 %v3919, 96
      %v3956 = vpop.permute.xlu0 %3955
      %3957 = vrot.lane.b32.xlu0 %v3922, 96
      %v3958 = vpop.permute.xlu0 %3957
      %3959 = vrot.lane.b32.xlu0 %v3925, 96
      %v3960 = vpop.permute.xlu0 %3959
      %3961 = vrot.lane.b32.xlu0 %v3928, 96
      %v3962 = vpop.permute.xlu0 %3961
      %3963 = vrot.lane.b32.xlu0 %v3931, 96
      %v3964 = vpop.permute.xlu0 %3963
      %3965 = vrot.lane.b32.xlu0 %v3934, 96
      %v3966 = vpop.permute.xlu0 %3965
      %v3968 = vsel %vm941, %v3599, %v3824
      %v3970 = vsel %vm941, %v3600, %v3826
      %v3972 = vsel %vm941, %v3601, %v3828
      %v3974 = vsel %vm941, %v3602, %v3830
      %v3976 = vsel %vm941, %v3603, %v3832
      %v3978 = vsel %vm941, %v3604, %v3834
      %v3980 = vsel %vm941, %v3605, %v3836
      %v3982 = vsel %vm941, %v3606, %v3838
      %v3984 = vsel %vm941, %v3607, %v3840
      %v3986 = vsel %vm941, %v3608, %v3842
      %v3988 = vsel %vm941, %v3609, %v3844
      %v3990 = vsel %vm941, %v3610, %v3846
      %v3992 = vsel %vm941, %v3611, %v3848
      %v3994 = vsel %vm941, %v3612, %v3850
      %v3996 = vsel %vm941, %v3613, %v3852
      %v3998 = vsel %vm941, %v3614, %v3854
      %v4000 = vsel %vm976, %v3968, %v3936
      %v4003 = vsel %vm976, %v3970, %v3938
      %v4006 = vsel %vm976, %v3972, %v3940
      %v4009 = vsel %vm976, %v3974, %v3942
      %v4012 = vsel %vm976, %v3976, %v3944
      %v4015 = vsel %vm976, %v3978, %v3946
      %v4018 = vsel %vm976, %v3980, %v3948
      %v4021 = vsel %vm976, %v3982, %v3950
      %v4024 = vsel %vm976, %v3984, %v3952
      %v4027 = vsel %vm976, %v3986, %v3954
      %v4030 = vsel %vm976, %v3988, %v3956
      %v4033 = vsel %vm976, %v3990, %v3958
      %v4036 = vsel %vm976, %v3992, %v3960
      %v4039 = vsel %vm976, %v3994, %v3962
      %v4042 = vsel %vm976, %v3996, %v3964
      %v4045 = vsel %vm976, %v3998, %v3966
      %v4047 = vld [vmem:[%s6] sm:$0x1]
      %v4049 = vlaneseq
      %v4050 = vshrl.u32 %v4049, 7
      %v4051 = vsub.s32 0, %v4050
      %v4052 = vrot.slane %v4047, %v4051
      %v4054 = vld [vmem:[%s5] sm:$0xf]
      %v4055 = vld [vmem:[%s5 + $0x4] sm:$0xf]
      %v4056 = vld [vmem:[%s5 + $0x8] sm:$0xf]
      %v4057 = vld [vmem:[%s5 + $0xc] sm:$0xf]
      %v4058 = vld [vmem:[%s5 + $0x10] sm:$0xf]
      %v4059 = vld [vmem:[%s5 + $0x14] sm:$0xf]
      %v4060 = vld [vmem:[%s5 + $0x18] sm:$0xf]
      %v4061 = vld [vmem:[%s5 + $0x1c] sm:$0xf]
      %v4062 = vld [vmem:[%s5 + $0x20] sm:$0xf]
      %v4063 = vld [vmem:[%s5 + $0x24] sm:$0xf]
      %v4064 = vld [vmem:[%s5 + $0x28] sm:$0xf]
      %v4065 = vld [vmem:[%s5 + $0x2c] sm:$0xf]
      %v4066 = vld [vmem:[%s5 + $0x30] sm:$0xf]
      %v4067 = vld [vmem:[%s5 + $0x34] sm:$0xf]
      %v4068 = vld [vmem:[%s5 + $0x38] sm:$0xf]
      %v4069 = vld [vmem:[%s5 + $0x3c] sm:$0xf]
      %v4070 = vld [vmem:[%s5 + $0x40] sm:$0xf]
      %v4071 = vld [vmem:[%s5 + $0x44] sm:$0xf]
      %v4090 = vunpack.c.l.b16 %v4054
      %v4091 = vunpack.c.l.b16 %v4055
      %v4092 = vunpack.c.l.b16 %v4056
      %v4093 = vunpack.c.l.b16 %v4057
      %v4094 = vunpack.c.l.b16 %v4058
      %v4095 = vunpack.c.l.b16 %v4059
      %v4096 = vunpack.c.l.b16 %v4060
      %v4097 = vunpack.c.l.b16 %v4061
      %v4098 = vunpack.c.l.b16 %v4062
      %v4099 = vunpack.c.l.b16 %v4063
      %v4100 = vunpack.c.l.b16 %v4064
      %v4101 = vunpack.c.l.b16 %v4065
      %v4102 = vunpack.c.l.b16 %v4066
      %v4103 = vunpack.c.l.b16 %v4067
      %v4104 = vunpack.c.l.b16 %v4068
      %v4105 = vunpack.c.l.b16 %v4069
      %v4106 = vunpack.c.l.b16 %v4070
      %v4107 = vunpack.c.l.b16 %v4071
      %v4108 = vpack.c.b16 %v4091, %v4090
      %v4109 = vpack.c.b16 %v4093, %v4092
      %v4110 = vpack.c.b16 %v4095, %v4094
      %v4111 = vpack.c.b16 %v4097, %v4096
      %v4112 = vpack.c.b16 %v4099, %v4098
      %v4113 = vpack.c.b16 %v4101, %v4100
      %v4114 = vpack.c.b16 %v4103, %v4102
      %v4115 = vpack.c.b16 %v4105, %v4104
      %v4116 = vpack.c.b16 %v4107, %v4106
      %v4126 = vsel %vm1107, %v3936, 0
      %v4128 = vsel %vm1107, %v3938, 0
      %v4130 = vsel %vm1107, %v3940, 0
      %v4132 = vsel %vm1107, %v3942, 0
      %v4134 = vsel %vm1107, %v3944, 0
      %v4136 = vsel %vm1107, %v3946, 0
      %v4138 = vsel %vm1107, %v3948, 0
      %v4140 = vsel %vm1107, %v3950, 0
      %v4142 = vsel %vm1107, %v3952, 0
      %v4144 = vsel %vm1107, %v3954, 0
      %v4146 = vsel %vm1107, %v3956, 0
      %v4148 = vsel %vm1107, %v3958, 0
      %v4150 = vsel %vm1107, %v3960, 0
      %v4152 = vsel %vm1107, %v3962, 0
      %v4154 = vsel %vm1107, %v3964, 0
      %4156 = vmatprep.subr.bf16.mxu0 0
      %4157 = vmatpush1.bf16.msra.mxu0 %v4115
      %4158 = vmatprep.subr.bf16.mxu0 0
      %4159 = vmatpush1.bf16.msra.mxu0 %v4114
      %4160 = vmatprep.subr.bf16.mxu0 0
      %4161 = vmatpush1.bf16.msra.mxu0 %v4113
      %4162 = vmatprep.subr.bf16.mxu0 0
      %4163 = vmatpush1.bf16.msra.mxu0 %v4112
      %4164 = vmatprep.subr.bf16.mxu0 0
      %4165 = vmatpush1.bf16.msra.mxu0 %v4111
      %4166 = vmatprep.subr.bf16.mxu0 0
      %4167 = vmatpush1.bf16.msra.mxu0 %v4110
      %4168 = vmatprep.subr.bf16.mxu0 0
      %4169 = vmatpush1.bf16.msra.mxu0 %v4109
      %4170 = vmatprep.subr.bf16.mxu0 0
      %4171 = vmatpush1.bf16.msra.mxu0 %v4108
      %4172 = vmatprep.subr.bf16.mxu0 0
      %4173 = vmatpush2.bf16.msra.mxu0 0
      %4174 = vmatprep.subr.bf16.mxu0 0
      %4175 = vmatpush2.bf16.msra.mxu0 0
      %4176 = vmatprep.subr.bf16.mxu0 0
      %4177 = vmatpush2.bf16.msra.mxu0 0
      %4178 = vmatprep.subr.bf16.mxu0 0
      %4179 = vmatpush2.bf16.msra.mxu0 0
      %4180 = vmatprep.subr.bf16.mxu0 0
      %4181 = vmatpush2.bf16.msra.mxu0 0
      %4182 = vmatprep.subr.bf16.mxu0 0
      %4183 = vmatpush2.bf16.msra.mxu0 0
      %4184 = vmatprep.subr.bf16.mxu0 0
      %4185 = vmatpush2.bf16.msra.mxu0 0
      %4186 = vmatprep.subr.bf16.mxu0 0
      %4187 = vmatpush2.bf16.msra.mxu0 %v4116
      %4188 = vmatprep.mubr.bf16.mxu0 %v1108
      %4189 = vmatmul.mubr.bf16.gmra.mxu0 %v978
      %v4190 = vpop.f32.mrf.mxu0
      %v4191 = vadd.f32 0.0, %v4190
      %v4192 = vpop.f32.mrf.mxu0
      %v4193 = vpop.f32.mrf.mxu0
      %v4194 = vadd.f32 0.0, %v4193
      %v4195 = vpop.f32.mrf.mxu0
      %4196 = vmatprep.mubr.bf16.mxu0 %v4126
      %4197 = vmatmul.mubr.bf16.gmra.mxu0 %v4000
      %v4198 = vpop.f32.mrf.mxu0
      %v4199 = vadd.f32 0.0, %v4198
      %v4200 = vpop.f32.mrf.mxu0
      %v4201 = vpop.f32.mrf.mxu0
      %v4202 = vadd.f32 0.0, %v4201
      %v4203 = vpop.f32.mrf.mxu0
      %4204 = vmatprep.mubr.bf16.mxu0 %v4128
      %4205 = vmatmul.mubr.bf16.gmra.mxu0 %v4003
      %v4206 = vpop.f32.mrf.mxu0
      %v4207 = vadd.f32 0.0, %v4206
      %v4208 = vpop.f32.mrf.mxu0
      %v4209 = vpop.f32.mrf.mxu0
      %v4210 = vadd.f32 0.0, %v4209
      %v4211 = vpop.f32.mrf.mxu0
      %4212 = vmatprep.mubr.bf16.mxu0 %v4130
      %4213 = vmatmul.mubr.bf16.gmra.mxu0 %v4006
      %v4214 = vpop.f32.mrf.mxu0
      %v4215 = vadd.f32 0.0, %v4214
      %v4216 = vpop.f32.mrf.mxu0
      %v4217 = vpop.f32.mrf.mxu0
      %v4218 = vadd.f32 0.0, %v4217
      %v4219 = vpop.f32.mrf.mxu0
      %4220 = vmatprep.mubr.bf16.mxu0 %v4132
      %4221 = vmatmul.mubr.bf16.gmra.mxu0 %v4009
      %v4222 = vpop.f32.mrf.mxu0
      %v4223 = vadd.f32 0.0, %v4222
      %v4224 = vpop.f32.mrf.mxu0
      %v4225 = vpop.f32.mrf.mxu0
      %v4226 = vadd.f32 0.0, %v4225
      %v4227 = vpop.f32.mrf.mxu0
      %4228 = vmatprep.mubr.bf16.mxu0 %v4134
      %4229 = vmatmul.mubr.bf16.gmra.mxu0 %v4012
      %v4230 = vpop.f32.mrf.mxu0
      %v4231 = vadd.f32 0.0, %v4230
      %v4232 = vpop.f32.mrf.mxu0
      %v4233 = vpop.f32.mrf.mxu0
      %v4234 = vadd.f32 0.0, %v4233
      %v4235 = vpop.f32.mrf.mxu0
      %4236 = vmatprep.mubr.bf16.mxu0 %v4136
      %4237 = vmatmul.mubr.bf16.gmra.mxu0 %v4015
      %v4238 = vpop.f32.mrf.mxu0
      %v4239 = vadd.f32 0.0, %v4238
      %v4240 = vpop.f32.mrf.mxu0
      %v4241 = vpop.f32.mrf.mxu0
      %v4242 = vadd.f32 0.0, %v4241
      %v4243 = vpop.f32.mrf.mxu0
      %4244 = vmatprep.mubr.bf16.mxu0 %v4138
      %4245 = vmatmul.mubr.bf16.gmra.mxu0 %v4018
      %v4246 = vpop.f32.mrf.mxu0
      %v4247 = vadd.f32 0.0, %v4246
      %v4248 = vpop.f32.mrf.mxu0
      %v4249 = vpop.f32.mrf.mxu0
      %v4250 = vadd.f32 0.0, %v4249
      %v4251 = vpop.f32.mrf.mxu0
      %4252 = vmatprep.mubr.bf16.mxu0 %v4140
      %4253 = vmatmul.mubr.bf16.gmra.mxu0 %v4021
      %v4254 = vpop.f32.mrf.mxu0
      %v4255 = vadd.f32 0.0, %v4254
      %v4256 = vpop.f32.mrf.mxu0
      %v4257 = vpop.f32.mrf.mxu0
      %v4258 = vadd.f32 0.0, %v4257
      %v4259 = vpop.f32.mrf.mxu0
      %4260 = vmatprep.mubr.bf16.mxu0 %v4142
      %4261 = vmatmul.mubr.bf16.gmra.mxu0 %v4024
      %v4262 = vpop.f32.mrf.mxu0
      %v4263 = vadd.f32 0.0, %v4262
      %v4264 = vpop.f32.mrf.mxu0
      %v4265 = vpop.f32.mrf.mxu0
      %v4266 = vadd.f32 0.0, %v4265
      %v4267 = vpop.f32.mrf.mxu0
      %4268 = vmatprep.mubr.bf16.mxu0 %v4144
      %4269 = vmatmul.mubr.bf16.gmra.mxu0 %v4027
      %v4270 = vpop.f32.mrf.mxu0
      %v4271 = vadd.f32 0.0, %v4270
      %v4272 = vpop.f32.mrf.mxu0
      %v4273 = vpop.f32.mrf.mxu0
      %v4274 = vadd.f32 0.0, %v4273
      %v4275 = vpop.f32.mrf.mxu0
      %4276 = vmatprep.mubr.bf16.mxu0 %v4146
      %4277 = vmatmul.mubr.bf16.gmra.mxu0 %v4030
      %v4278 = vpop.f32.mrf.mxu0
      %v4279 = vadd.f32 0.0, %v4278
      %v4280 = vpop.f32.mrf.mxu0
      %v4281 = vpop.f32.mrf.mxu0
      %v4282 = vadd.f32 0.0, %v4281
      %v4283 = vpop.f32.mrf.mxu0
      %4284 = vmatprep.mubr.bf16.mxu0 %v4148
      %4285 = vmatmul.mubr.bf16.gmra.mxu0 %v4033
      %v4286 = vpop.f32.mrf.mxu0
      %v4287 = vadd.f32 0.0, %v4286
      %v4288 = vpop.f32.mrf.mxu0
      %v4289 = vpop.f32.mrf.mxu0
      %v4290 = vadd.f32 0.0, %v4289
      %v4291 = vpop.f32.mrf.mxu0
      %4292 = vmatprep.mubr.bf16.mxu0 %v4150
      %4293 = vmatmul.mubr.bf16.gmra.mxu0 %v4036
      %v4294 = vpop.f32.mrf.mxu0
      %v4295 = vadd.f32 0.0, %v4294
      %v4296 = vpop.f32.mrf.mxu0
      %v4297 = vpop.f32.mrf.mxu0
      %v4298 = vadd.f32 0.0, %v4297
      %v4299 = vpop.f32.mrf.mxu0
      %4300 = vmatprep.mubr.bf16.mxu0 %v4152
      %4301 = vmatmul.mubr.bf16.gmra.mxu0 %v4039
      %v4302 = vpop.f32.mrf.mxu0
      %v4303 = vadd.f32 0.0, %v4302
      %v4304 = vpop.f32.mrf.mxu0
      %v4305 = vpop.f32.mrf.mxu0
      %v4306 = vadd.f32 0.0, %v4305
      %v4307 = vpop.f32.mrf.mxu0
      %4308 = vmatprep.mubr.bf16.mxu0 %v4154
      %4309 = vmatmul.mubr.bf16.gmra.mxu0 %v4042
      %v4310 = vpop.f32.mrf.mxu0
      %v4311 = vadd.f32 0.0, %v4310
      %v4312 = vpop.f32.mrf.mxu0
      %v4313 = vpop.f32.mrf.mxu0
      %v4314 = vadd.f32 0.0, %v4313
      %v4315 = vpop.f32.mrf.mxu0
      %4316 = vdwg.mxu0
      %v4317 = vadd.f32 %v4052, %v4191
      %v4318 = vadd.f32 %v4052, %v4194
      %v4319 = vadd.f32 %v4052, %v4199
      %v4320 = vadd.f32 %v4052, %v4202
      %v4321 = vadd.f32 %v4052, %v4207
      %v4322 = vadd.f32 %v4052, %v4210
      %v4323 = vadd.f32 %v4052, %v4215
      %v4324 = vadd.f32 %v4052, %v4218
      %v4325 = vadd.f32 %v4052, %v4223
      %v4326 = vadd.f32 %v4052, %v4226
      %v4327 = vadd.f32 %v4052, %v4231
      %v4328 = vadd.f32 %v4052, %v4234
      %v4329 = vadd.f32 %v4052, %v4239
      %v4330 = vadd.f32 %v4052, %v4242
      %v4331 = vadd.f32 %v4052, %v4247
      %v4332 = vadd.f32 %v4052, %v4250
      %v4333 = vadd.f32 %v4052, %v4255
      %v4334 = vadd.f32 %v4052, %v4258
      %v4335 = vadd.f32 %v4052, %v4263
      %v4336 = vadd.f32 %v4052, %v4266
      %v4337 = vadd.f32 %v4052, %v4271
      %v4338 = vadd.f32 %v4052, %v4274
      %v4339 = vadd.f32 %v4052, %v4279
      %v4340 = vadd.f32 %v4052, %v4282
      %v4341 = vadd.f32 %v4052, %v4287
      %v4342 = vadd.f32 %v4052, %v4290
      %v4343 = vadd.f32 %v4052, %v4295
      %v4344 = vadd.f32 %v4052, %v4298
      %v4345 = vadd.f32 %v4052, %v4303
      %v4346 = vadd.f32 %v4052, %v4306
      %v4347 = vadd.f32 %v4052, %v4311
      %v4348 = vadd.f32 %v4052, %v4314
      %s4349 = scalar_lea.vmem %s5, 72
      %v4350 = vld [vmem:[%s4349] sm:$0xf]
      %v4351 = vld [vmem:[%s4349 + $0x4] sm:$0xf]
      %v4352 = vld [vmem:[%s4349 + $0x8] sm:$0xf]
      %v4353 = vld [vmem:[%s4349 + $0xc] sm:$0xf]
      %v4354 = vld [vmem:[%s4349 + $0x10] sm:$0xf]
      %v4355 = vld [vmem:[%s4349 + $0x14] sm:$0xf]
      %v4356 = vld [vmem:[%s4349 + $0x18] sm:$0xf]
      %v4357 = vld [vmem:[%s4349 + $0x1c] sm:$0xf]
      %v4358 = vld [vmem:[%s4349 + $0x20] sm:$0xf]
      %v4359 = vld [vmem:[%s4349 + $0x24] sm:$0xf]
      %v4360 = vld [vmem:[%s4349 + $0x28] sm:$0xf]
      %v4361 = vld [vmem:[%s4349 + $0x2c] sm:$0xf]
      %v4362 = vld [vmem:[%s4349 + $0x30] sm:$0xf]
      %v4363 = vld [vmem:[%s4349 + $0x34] sm:$0xf]
      %v4364 = vld [vmem:[%s4349 + $0x38] sm:$0xf]
      %v4365 = vld [vmem:[%s4349 + $0x3c] sm:$0xf]
      %v4366 = vld [vmem:[%s4349 + $0x40] sm:$0xf]
      %v4367 = vld [vmem:[%s4349 + $0x44] sm:$0xf]
      %v4386 = vunpack.c.l.b16 %v4350
      %v4387 = vunpack.c.l.b16 %v4351
      %v4388 = vunpack.c.l.b16 %v4352
      %v4389 = vunpack.c.l.b16 %v4353
      %v4390 = vunpack.c.l.b16 %v4354
      %v4391 = vunpack.c.l.b16 %v4355
      %v4392 = vunpack.c.l.b16 %v4356
      %v4393 = vunpack.c.l.b16 %v4357
      %v4394 = vunpack.c.l.b16 %v4358
      %v4395 = vunpack.c.l.b16 %v4359
      %v4396 = vunpack.c.l.b16 %v4360
      %v4397 = vunpack.c.l.b16 %v4361
      %v4398 = vunpack.c.l.b16 %v4362
      %v4399 = vunpack.c.l.b16 %v4363
      %v4400 = vunpack.c.l.b16 %v4364
      %v4401 = vunpack.c.l.b16 %v4365
      %v4402 = vunpack.c.l.b16 %v4366
      %v4403 = vunpack.c.l.b16 %v4367
      %v4404 = vpack.c.b16 %v4387, %v4386
      %v4405 = vpack.c.b16 %v4389, %v4388
      %v4406 = vpack.c.b16 %v4391, %v4390
      %v4407 = vpack.c.b16 %v4393, %v4392
      %v4408 = vpack.c.b16 %v4395, %v4394
      %v4409 = vpack.c.b16 %v4397, %v4396
      %v4410 = vpack.c.b16 %v4399, %v4398
      %v4411 = vpack.c.b16 %v4401, %v4400
      %v4412 = vpack.c.b16 %v4403, %v4402
      %v4422 = vsel %vm1107, %v3966, 0
      %4424 = vmatprep.subr.bf16.mxu0 0
      %4425 = vmatpush1.bf16.msra.mxu0 %v4411
      %4426 = vmatprep.subr.bf16.mxu0 0
      %4427 = vmatpush1.bf16.msra.mxu0 %v4410
      %4428 = vmatprep.subr.bf16.mxu0 0
      %4429 = vmatpush1.bf16.msra.mxu0 %v4409
      %4430 = vmatprep.subr.bf16.mxu0 0
      %4431 = vmatpush1.bf16.msra.mxu0 %v4408
      %4432 = vmatprep.subr.bf16.mxu0 0
      %4433 = vmatpush1.bf16.msra.mxu0 %v4407
      %4434 = vmatprep.subr.bf16.mxu0 0
      %4435 = vmatpush1.bf16.msra.mxu0 %v4406
      %4436 = vmatprep.subr.bf16.mxu0 0
      %4437 = vmatpush1.bf16.msra.mxu0 %v4405
      %4438 = vmatprep.subr.bf16.mxu0 0
      %4439 = vmatpush1.bf16.msra.mxu0 %v4404
      %4440 = vmatprep.subr.bf16.mxu0 0
      %4441 = vmatpush2.bf16.msra.mxu0 0
      %4442 = vmatprep.subr.bf16.mxu0 0
      %4443 = vmatpush2.bf16.msra.mxu0 0
      %4444 = vmatprep.subr.bf16.mxu0 0
      %4445 = vmatpush2.bf16.msra.mxu0 0
      %4446 = vmatprep.subr.bf16.mxu0 0
      %4447 = vmatpush2.bf16.msra.mxu0 0
      %4448 = vmatprep.subr.bf16.mxu0 0
      %4449 = vmatpush2.bf16.msra.mxu0 0
      %4450 = vmatprep.subr.bf16.mxu0 0
      %4451 = vmatpush2.bf16.msra.mxu0 0
      %4452 = vmatprep.subr.bf16.mxu0 0
      %4453 = vmatpush2.bf16.msra.mxu0 0
      %4454 = vmatprep.subr.bf16.mxu0 0
      %4455 = vmatpush2.bf16.msra.mxu0 %v4412
      %4456 = vmatprep.mubr.bf16.mxu0 %v4126
      %4457 = vmatmul.mubr.bf16.gmra.mxu0 %v4000
      %v4458 = vpop.f32.mrf.mxu0
      %v4459 = vadd.f32 0.0, %v4458
      %v4460 = vpop.f32.mrf.mxu0
      %v4461 = vpop.f32.mrf.mxu0
      %v4462 = vadd.f32 0.0, %v4461
      %v4463 = vpop.f32.mrf.mxu0
      %4464 = vmatprep.mubr.bf16.mxu0 %v4128
      %4465 = vmatmul.mubr.bf16.gmra.mxu0 %v4003
      %v4466 = vpop.f32.mrf.mxu0
      %v4467 = vadd.f32 0.0, %v4466
      %v4468 = vpop.f32.mrf.mxu0
      %v4469 = vpop.f32.mrf.mxu0
      %v4470 = vadd.f32 0.0, %v4469
      %v4471 = vpop.f32.mrf.mxu0
      %4472 = vmatprep.mubr.bf16.mxu0 %v4130
      %4473 = vmatmul.mubr.bf16.gmra.mxu0 %v4006
      %v4474 = vpop.f32.mrf.mxu0
      %v4475 = vadd.f32 0.0, %v4474
      %v4476 = vpop.f32.mrf.mxu0
      %v4477 = vpop.f32.mrf.mxu0
      %v4478 = vadd.f32 0.0, %v4477
      %v4479 = vpop.f32.mrf.mxu0
      %4480 = vmatprep.mubr.bf16.mxu0 %v4132
      %4481 = vmatmul.mubr.bf16.gmra.mxu0 %v4009
      %v4482 = vpop.f32.mrf.mxu0
      %v4483 = vadd.f32 0.0, %v4482
      %v4484 = vpop.f32.mrf.mxu0
      %v4485 = vpop.f32.mrf.mxu0
      %v4486 = vadd.f32 0.0, %v4485
      %v4487 = vpop.f32.mrf.mxu0
      %4488 = vmatprep.mubr.bf16.mxu0 %v4134
      %4489 = vmatmul.mubr.bf16.gmra.mxu0 %v4012
      %v4490 = vpop.f32.mrf.mxu0
      %v4491 = vadd.f32 0.0, %v4490
      %v4492 = vpop.f32.mrf.mxu0
      %v4493 = vpop.f32.mrf.mxu0
      %v4494 = vadd.f32 0.0, %v4493
      %v4495 = vpop.f32.mrf.mxu0
      %4496 = vmatprep.mubr.bf16.mxu0 %v4136
      %4497 = vmatmul.mubr.bf16.gmra.mxu0 %v4015
      %v4498 = vpop.f32.mrf.mxu0
      %v4499 = vadd.f32 0.0, %v4498
      %v4500 = vpop.f32.mrf.mxu0
      %v4501 = vpop.f32.mrf.mxu0
      %v4502 = vadd.f32 0.0, %v4501
      %v4503 = vpop.f32.mrf.mxu0
      %4504 = vmatprep.mubr.bf16.mxu0 %v4138
      %4505 = vmatmul.mubr.bf16.gmra.mxu0 %v4018
      %v4506 = vpop.f32.mrf.mxu0
      %v4507 = vadd.f32 0.0, %v4506
      %v4508 = vpop.f32.mrf.mxu0
      %v4509 = vpop.f32.mrf.mxu0
      %v4510 = vadd.f32 0.0, %v4509
      %v4511 = vpop.f32.mrf.mxu0
      %4512 = vmatprep.mubr.bf16.mxu0 %v4140
      %4513 = vmatmul.mubr.bf16.gmra.mxu0 %v4021
      %v4514 = vpop.f32.mrf.mxu0
      %v4515 = vadd.f32 0.0, %v4514
      %v4516 = vpop.f32.mrf.mxu0
      %v4517 = vpop.f32.mrf.mxu0
      %v4518 = vadd.f32 0.0, %v4517
      %v4519 = vpop.f32.mrf.mxu0
      %4520 = vmatprep.mubr.bf16.mxu0 %v4142
      %4521 = vmatmul.mubr.bf16.gmra.mxu0 %v4024
      %v4522 = vpop.f32.mrf.mxu0
      %v4523 = vadd.f32 0.0, %v4522
      %v4524 = vpop.f32.mrf.mxu0
      %v4525 = vpop.f32.mrf.mxu0
      %v4526 = vadd.f32 0.0, %v4525
      %v4527 = vpop.f32.mrf.mxu0
      %4528 = vmatprep.mubr.bf16.mxu0 %v4144
      %4529 = vmatmul.mubr.bf16.gmra.mxu0 %v4027
      %v4530 = vpop.f32.mrf.mxu0
      %v4531 = vadd.f32 0.0, %v4530
      %v4532 = vpop.f32.mrf.mxu0
      %v4533 = vpop.f32.mrf.mxu0
      %v4534 = vadd.f32 0.0, %v4533
      %v4535 = vpop.f32.mrf.mxu0
      %4536 = vmatprep.mubr.bf16.mxu0 %v4146
      %4537 = vmatmul.mubr.bf16.gmra.mxu0 %v4030
      %v4538 = vpop.f32.mrf.mxu0
      %v4539 = vadd.f32 0.0, %v4538
      %v4540 = vpop.f32.mrf.mxu0
      %v4541 = vpop.f32.mrf.mxu0
      %v4542 = vadd.f32 0.0, %v4541
      %v4543 = vpop.f32.mrf.mxu0
      %4544 = vmatprep.mubr.bf16.mxu0 %v4148
      %4545 = vmatmul.mubr.bf16.gmra.mxu0 %v4033
      %v4546 = vpop.f32.mrf.mxu0
      %v4547 = vadd.f32 0.0, %v4546
      %v4548 = vpop.f32.mrf.mxu0
      %v4549 = vpop.f32.mrf.mxu0
      %v4550 = vadd.f32 0.0, %v4549
      %v4551 = vpop.f32.mrf.mxu0
      %4552 = vmatprep.mubr.bf16.mxu0 %v4150
      %4553 = vmatmul.mubr.bf16.gmra.mxu0 %v4036
      %v4554 = vpop.f32.mrf.mxu0
      %v4555 = vadd.f32 0.0, %v4554
      %v4556 = vpop.f32.mrf.mxu0
      %v4557 = vpop.f32.mrf.mxu0
      %v4558 = vadd.f32 0.0, %v4557
      %v4559 = vpop.f32.mrf.mxu0
      %4560 = vmatprep.mubr.bf16.mxu0 %v4152
      %4561 = vmatmul.mubr.bf16.gmra.mxu0 %v4039
      %v4562 = vpop.f32.mrf.mxu0
      %v4563 = vadd.f32 0.0, %v4562
      %v4564 = vpop.f32.mrf.mxu0
      %v4565 = vpop.f32.mrf.mxu0
      %v4566 = vadd.f32 0.0, %v4565
      %v4567 = vpop.f32.mrf.mxu0
      %4568 = vmatprep.mubr.bf16.mxu0 %v4154
      %4569 = vmatmul.mubr.bf16.gmra.mxu0 %v4042
      %v4570 = vpop.f32.mrf.mxu0
      %v4571 = vadd.f32 0.0, %v4570
      %v4572 = vpop.f32.mrf.mxu0
      %v4573 = vpop.f32.mrf.mxu0
      %v4574 = vadd.f32 0.0, %v4573
      %v4575 = vpop.f32.mrf.mxu0
      %4576 = vmatprep.mubr.bf16.mxu0 %v4422
      %4577 = vmatmul.mubr.bf16.gmra.mxu0 %v4045
      %v4578 = vpop.f32.mrf.mxu0
      %v4579 = vadd.f32 0.0, %v4578
      %v4580 = vpop.f32.mrf.mxu0
      %v4581 = vpop.f32.mrf.mxu0
      %v4582 = vadd.f32 0.0, %v4581
      %v4583 = vpop.f32.mrf.mxu0
      %4584 = vdwg.mxu0
      %v4585 = vadd.f32 %v4317, %v4459
      %v4586 = vadd.f32 %v4318, %v4462
      %v4587 = vadd.f32 %v4319, %v4467
      %v4588 = vadd.f32 %v4320, %v4470
      %v4589 = vadd.f32 %v4321, %v4475
      %v4590 = vadd.f32 %v4322, %v4478
      %v4591 = vadd.f32 %v4323, %v4483
      %v4592 = vadd.f32 %v4324, %v4486
      %v4593 = vadd.f32 %v4325, %v4491
      %v4594 = vadd.f32 %v4326, %v4494
      %v4595 = vadd.f32 %v4327, %v4499
      %v4596 = vadd.f32 %v4328, %v4502
      %v4597 = vadd.f32 %v4329, %v4507
      %v4598 = vadd.f32 %v4330, %v4510
      %v4599 = vadd.f32 %v4331, %v4515
      %v4600 = vadd.f32 %v4332, %v4518
      %v4601 = vadd.f32 %v4333, %v4523
      %v4602 = vadd.f32 %v4334, %v4526
      %v4603 = vadd.f32 %v4335, %v4531
      %v4604 = vadd.f32 %v4336, %v4534
      %v4605 = vadd.f32 %v4337, %v4539
      %v4606 = vadd.f32 %v4338, %v4542
      %v4607 = vadd.f32 %v4339, %v4547
      %v4608 = vadd.f32 %v4340, %v4550
      %v4609 = vadd.f32 %v4341, %v4555
      %v4610 = vadd.f32 %v4342, %v4558
      %v4611 = vadd.f32 %v4343, %v4563
      %v4612 = vadd.f32 %v4344, %v4566
      %v4613 = vadd.f32 %v4345, %v4571
      %v4614 = vadd.f32 %v4346, %v4574
      %v4615 = vadd.f32 %v4347, %v4579
      %v4616 = vadd.f32 %v4348, %v4582
      %s4617 = scalar_lea.vmem %s5, 144
      %v4618 = vld [vmem:[%s4617] sm:$0xf]
      %v4619 = vld [vmem:[%s4617 + $0x4] sm:$0xf]
      %v4620 = vld [vmem:[%s4617 + $0x8] sm:$0xf]
      %v4621 = vld [vmem:[%s4617 + $0xc] sm:$0xf]
      %v4622 = vld [vmem:[%s4617 + $0x10] sm:$0xf]
      %v4623 = vld [vmem:[%s4617 + $0x14] sm:$0xf]
      %v4624 = vld [vmem:[%s4617 + $0x18] sm:$0xf]
      %v4625 = vld [vmem:[%s4617 + $0x1c] sm:$0xf]
      %v4626 = vld [vmem:[%s4617 + $0x20] sm:$0xf]
      %v4627 = vld [vmem:[%s4617 + $0x24] sm:$0xf]
      %v4628 = vld [vmem:[%s4617 + $0x28] sm:$0xf]
      %v4629 = vld [vmem:[%s4617 + $0x2c] sm:$0xf]
      %v4630 = vld [vmem:[%s4617 + $0x30] sm:$0xf]
      %v4631 = vld [vmem:[%s4617 + $0x34] sm:$0xf]
      %v4632 = vld [vmem:[%s4617 + $0x38] sm:$0xf]
      %v4633 = vld [vmem:[%s4617 + $0x3c] sm:$0xf]
      %v4634 = vld [vmem:[%s4617 + $0x40] sm:$0xf]
      %v4635 = vld [vmem:[%s4617 + $0x44] sm:$0xf]
      %v4654 = vunpack.c.l.b16 %v4618
      %v4655 = vunpack.c.l.b16 %v4619
      %v4656 = vunpack.c.l.b16 %v4620
      %v4657 = vunpack.c.l.b16 %v4621
      %v4658 = vunpack.c.l.b16 %v4622
      %v4659 = vunpack.c.l.b16 %v4623
      %v4660 = vunpack.c.l.b16 %v4624
      %v4661 = vunpack.c.l.b16 %v4625
      %v4662 = vunpack.c.l.b16 %v4626
      %v4663 = vunpack.c.l.b16 %v4627
      %v4664 = vunpack.c.l.b16 %v4628
      %v4665 = vunpack.c.l.b16 %v4629
      %v4666 = vunpack.c.l.b16 %v4630
      %v4667 = vunpack.c.l.b16 %v4631
      %v4668 = vunpack.c.l.b16 %v4632
      %v4669 = vunpack.c.l.b16 %v4633
      %v4670 = vunpack.c.l.b16 %v4634
      %v4671 = vunpack.c.l.b16 %v4635
      %v4672 = vpack.c.b16 %v4655, %v4654
      %v4673 = vpack.c.b16 %v4657, %v4656
      %v4674 = vpack.c.b16 %v4659, %v4658
      %v4675 = vpack.c.b16 %v4661, %v4660
      %v4676 = vpack.c.b16 %v4663, %v4662
      %v4677 = vpack.c.b16 %v4665, %v4664
      %v4678 = vpack.c.b16 %v4667, %v4666
      %v4679 = vpack.c.b16 %v4669, %v4668
      %v4680 = vpack.c.b16 %v4671, %v4670
      %4690 = vmatprep.subr.bf16.mxu0 0
      %4691 = vmatpush1.bf16.msra.mxu0 %v4679
      %4692 = vmatprep.subr.bf16.mxu0 0
      %4693 = vmatpush1.bf16.msra.mxu0 %v4678
      %4694 = vmatprep.subr.bf16.mxu0 0
      %4695 = vmatpush1.bf16.msra.mxu0 %v4677
      %4696 = vmatprep.subr.bf16.mxu0 0
      %4697 = vmatpush1.bf16.msra.mxu0 %v4676
      %4698 = vmatprep.subr.bf16.mxu0 0
      %4699 = vmatpush1.bf16.msra.mxu0 %v4675
      %4700 = vmatprep.subr.bf16.mxu0 0
      %4701 = vmatpush1.bf16.msra.mxu0 %v4674
      %4702 = vmatprep.subr.bf16.mxu0 0
      %4703 = vmatpush1.bf16.msra.mxu0 %v4673
      %4704 = vmatprep.subr.bf16.mxu0 0
      %4705 = vmatpush1.bf16.msra.mxu0 %v4672
      %4706 = vmatprep.subr.bf16.mxu0 0
      %4707 = vmatpush2.bf16.msra.mxu0 0
      %4708 = vmatprep.subr.bf16.mxu0 0
      %4709 = vmatpush2.bf16.msra.mxu0 0
      %4710 = vmatprep.subr.bf16.mxu0 0
      %4711 = vmatpush2.bf16.msra.mxu0 0
      %4712 = vmatprep.subr.bf16.mxu0 0
      %4713 = vmatpush2.bf16.msra.mxu0 0
      %4714 = vmatprep.subr.bf16.mxu0 0
      %4715 = vmatpush2.bf16.msra.mxu0 0
      %4716 = vmatprep.subr.bf16.mxu0 0
      %4717 = vmatpush2.bf16.msra.mxu0 0
      %4718 = vmatprep.subr.bf16.mxu0 0
      %4719 = vmatpush2.bf16.msra.mxu0 0
      %4720 = vmatprep.subr.bf16.mxu0 0
      %4721 = vmatpush2.bf16.msra.mxu0 %v4680
      %4722 = vmatprep.mubr.bf16.mxu0 %v4128
      %4723 = vmatmul.mubr.bf16.gmra.mxu0 %v4003
      %v4724 = vpop.f32.mrf.mxu0
      %v4725 = vadd.f32 0.0, %v4724
      %v4726 = vpop.f32.mrf.mxu0
      %v4727 = vpop.f32.mrf.mxu0
      %v4728 = vadd.f32 0.0, %v4727
      %v4729 = vpop.f32.mrf.mxu0
      %4730 = vmatprep.mubr.bf16.mxu0 %v4130
      %4731 = vmatmul.mubr.bf16.gmra.mxu0 %v4006
      %v4732 = vpop.f32.mrf.mxu0
      %v4733 = vadd.f32 0.0, %v4732
      %v4734 = vpop.f32.mrf.mxu0
      %v4735 = vpop.f32.mrf.mxu0
      %v4736 = vadd.f32 0.0, %v4735
      %v4737 = vpop.f32.mrf.mxu0
      %4738 = vmatprep.mubr.bf16.mxu0 %v4132
      %4739 = vmatmul.mubr.bf16.gmra.mxu0 %v4009
      %v4740 = vpop.f32.mrf.mxu0
      %v4741 = vadd.f32 0.0, %v4740
      %v4742 = vpop.f32.mrf.mxu0
      %v4743 = vpop.f32.mrf.mxu0
      %v4744 = vadd.f32 0.0, %v4743
      %v4745 = vpop.f32.mrf.mxu0
      %4746 = vmatprep.mubr.bf16.mxu0 %v4134
      %4747 = vmatmul.mubr.bf16.gmra.mxu0 %v4012
      %v4748 = vpop.f32.mrf.mxu0
      %v4749 = vadd.f32 0.0, %v4748
      %v4750 = vpop.f32.mrf.mxu0
      %v4751 = vpop.f32.mrf.mxu0
      %v4752 = vadd.f32 0.0, %v4751
      %v4753 = vpop.f32.mrf.mxu0
      %4754 = vmatprep.mubr.bf16.mxu0 %v4136
      %4755 = vmatmul.mubr.bf16.gmra.mxu0 %v4015
      %v4756 = vpop.f32.mrf.mxu0
      %v4757 = vadd.f32 0.0, %v4756
      %v4758 = vpop.f32.mrf.mxu0
      %v4759 = vpop.f32.mrf.mxu0
      %v4760 = vadd.f32 0.0, %v4759
      %v4761 = vpop.f32.mrf.mxu0
      %4762 = vmatprep.mubr.bf16.mxu0 %v4138
      %4763 = vmatmul.mubr.bf16.gmra.mxu0 %v4018
      %v4764 = vpop.f32.mrf.mxu0
      %v4765 = vadd.f32 0.0, %v4764
      %v4766 = vpop.f32.mrf.mxu0
      %v4767 = vpop.f32.mrf.mxu0
      %v4768 = vadd.f32 0.0, %v4767
      %v4769 = vpop.f32.mrf.mxu0
      %4770 = vmatprep.mubr.bf16.mxu0 %v4140
      %4771 = vmatmul.mubr.bf16.gmra.mxu0 %v4021
      %v4772 = vpop.f32.mrf.mxu0
      %v4773 = vadd.f32 0.0, %v4772
      %v4774 = vpop.f32.mrf.mxu0
      %v4775 = vpop.f32.mrf.mxu0
      %v4776 = vadd.f32 0.0, %v4775
      %v4777 = vpop.f32.mrf.mxu0
      %4778 = vmatprep.mubr.bf16.mxu0 %v4142
      %4779 = vmatmul.mubr.bf16.gmra.mxu0 %v4024
      %v4780 = vpop.f32.mrf.mxu0
      %v4781 = vadd.f32 0.0, %v4780
      %v4782 = vpop.f32.mrf.mxu0
      %v4783 = vpop.f32.mrf.mxu0
      %v4784 = vadd.f32 0.0, %v4783
      %v4785 = vpop.f32.mrf.mxu0
      %4786 = vmatprep.mubr.bf16.mxu0 %v4144
      %4787 = vmatmul.mubr.bf16.gmra.mxu0 %v4027
      %v4788 = vpop.f32.mrf.mxu0
      %v4789 = vadd.f32 0.0, %v4788
      %v4790 = vpop.f32.mrf.mxu0
      %v4791 = vpop.f32.mrf.mxu0
      %v4792 = vadd.f32 0.0, %v4791
      %v4793 = vpop.f32.mrf.mxu0
      %4794 = vmatprep.mubr.bf16.mxu0 %v4146
      %4795 = vmatmul.mubr.bf16.gmra.mxu0 %v4030
      %v4796 = vpop.f32.mrf.mxu0
      %v4797 = vadd.f32 0.0, %v4796
      %v4798 = vpop.f32.mrf.mxu0
      %v4799 = vpop.f32.mrf.mxu0
      %v4800 = vadd.f32 0.0, %v4799
      %v4801 = vpop.f32.mrf.mxu0
      %4802 = vmatprep.mubr.bf16.mxu0 %v4148
      %4803 = vmatmul.mubr.bf16.gmra.mxu0 %v4033
      %v4804 = vpop.f32.mrf.mxu0
      %v4805 = vadd.f32 0.0, %v4804
      %v4806 = vpop.f32.mrf.mxu0
      %v4807 = vpop.f32.mrf.mxu0
      %v4808 = vadd.f32 0.0, %v4807
      %v4809 = vpop.f32.mrf.mxu0
      %4810 = vmatprep.mubr.bf16.mxu0 %v4150
      %4811 = vmatmul.mubr.bf16.gmra.mxu0 %v4036
      %v4812 = vpop.f32.mrf.mxu0
      %v4813 = vadd.f32 0.0, %v4812
      %v4814 = vpop.f32.mrf.mxu0
      %v4815 = vpop.f32.mrf.mxu0
      %v4816 = vadd.f32 0.0, %v4815
      %v4817 = vpop.f32.mrf.mxu0
      %4818 = vmatprep.mubr.bf16.mxu0 %v4152
      %4819 = vmatmul.mubr.bf16.gmra.mxu0 %v4039
      %v4820 = vpop.f32.mrf.mxu0
      %v4821 = vadd.f32 0.0, %v4820
      %v4822 = vpop.f32.mrf.mxu0
      %v4823 = vpop.f32.mrf.mxu0
      %v4824 = vadd.f32 0.0, %v4823
      %v4825 = vpop.f32.mrf.mxu0
      %4826 = vmatprep.mubr.bf16.mxu0 %v4154
      %4827 = vmatmul.mubr.bf16.gmra.mxu0 %v4042
      %v4828 = vpop.f32.mrf.mxu0
      %v4829 = vadd.f32 0.0, %v4828
      %v4830 = vpop.f32.mrf.mxu0
      %v4831 = vpop.f32.mrf.mxu0
      %v4832 = vadd.f32 0.0, %v4831
      %v4833 = vpop.f32.mrf.mxu0
      %4834 = vmatprep.mubr.bf16.mxu0 %v4422
      %4835 = vmatmul.mubr.bf16.gmra.mxu0 %v4045
      %v4836 = vpop.f32.mrf.mxu0
      %v4837 = vadd.f32 0.0, %v4836
      %v4838 = vpop.f32.mrf.mxu0
      %v4839 = vpop.f32.mrf.mxu0
      %v4840 = vadd.f32 0.0, %v4839
      %v4841 = vpop.f32.mrf.mxu0
      %4842 = vmatprep.mubr.bf16.mxu0 %v1108
      %4843 = vmatmul.mubr.bf16.gmra.mxu0 %v978
      %v4844 = vpop.f32.mrf.mxu0
      %v4845 = vadd.f32 0.0, %v4844
      %v4846 = vpop.f32.mrf.mxu0
      %v4847 = vpop.f32.mrf.mxu0
      %v4848 = vadd.f32 0.0, %v4847
      %v4849 = vpop.f32.mrf.mxu0
      %4850 = vdwg.mxu0
      %v4851 = vadd.f32 %v4585, %v4725
      %v4852 = vadd.f32 %v4586, %v4728
      %v4853 = vadd.f32 %v4587, %v4733
      %v4854 = vadd.f32 %v4588, %v4736
      %v4855 = vadd.f32 %v4589, %v4741
      %v4856 = vadd.f32 %v4590, %v4744
      %v4857 = vadd.f32 %v4591, %v4749
      %v4858 = vadd.f32 %v4592, %v4752
      %v4859 = vadd.f32 %v4593, %v4757
      %v4860 = vadd.f32 %v4594, %v4760
      %v4861 = vadd.f32 %v4595, %v4765
      %v4862 = vadd.f32 %v4596, %v4768
      %v4863 = vadd.f32 %v4597, %v4773
      %v4864 = vadd.f32 %v4598, %v4776
      %v4865 = vadd.f32 %v4599, %v4781
      %v4866 = vadd.f32 %v4600, %v4784
      %v4867 = vadd.f32 %v4601, %v4789
      %v4868 = vadd.f32 %v4602, %v4792
      %v4869 = vadd.f32 %v4603, %v4797
      %v4870 = vadd.f32 %v4604, %v4800
      %v4871 = vadd.f32 %v4605, %v4805
      %v4872 = vadd.f32 %v4606, %v4808
      %v4873 = vadd.f32 %v4607, %v4813
      %v4874 = vadd.f32 %v4608, %v4816
      %v4875 = vadd.f32 %v4609, %v4821
      %v4876 = vadd.f32 %v4610, %v4824
      %v4877 = vadd.f32 %v4611, %v4829
      %v4878 = vadd.f32 %v4612, %v4832
      %v4879 = vadd.f32 %v4613, %v4837
      %v4880 = vadd.f32 %v4614, %v4840
      %v4881 = vadd.f32 %v4615, %v4845
      %v4882 = vadd.f32 %v4616, %v4848
      %v4883 = vadd.f32 %v4851, %v1835
      %v4884 = vadd.f32 %v4852, %v1836
      %v4885 = vadd.f32 %v4853, %v1837
      %v4886 = vadd.f32 %v4854, %v1838
      %v4887 = vadd.f32 %v4855, %v1839
      %v4888 = vadd.f32 %v4856, %v1840
      %v4889 = vadd.f32 %v4857, %v1841
      %v4890 = vadd.f32 %v4858, %v1842
      %v4891 = vadd.f32 %v4859, %v1843
      %v4892 = vadd.f32 %v4860, %v1844
      %v4893 = vadd.f32 %v4861, %v1845
      %v4894 = vadd.f32 %v4862, %v1846
      %v4895 = vadd.f32 %v4863, %v1847
      %v4896 = vadd.f32 %v4864, %v1848
      %v4897 = vadd.f32 %v4865, %v1849
      %v4898 = vadd.f32 %v4866, %v1850
      %v4899 = vadd.f32 %v4867, %v1851
      %v4900 = vadd.f32 %v4868, %v1852
      %v4901 = vadd.f32 %v4869, %v1853
      %v4902 = vadd.f32 %v4870, %v1854
      %v4903 = vadd.f32 %v4871, %v1855
      %v4904 = vadd.f32 %v4872, %v1856
      %v4905 = vadd.f32 %v4873, %v1857
      %v4906 = vadd.f32 %v4874, %v1858
      %v4907 = vadd.f32 %v4875, %v1859
      %v4908 = vadd.f32 %v4876, %v1860
      %v4909 = vadd.f32 %v4877, %v1861
      %v4910 = vadd.f32 %v4878, %v1862
      %v4911 = vadd.f32 %v4879, %v1863
      %v4912 = vadd.f32 %v4880, %v1864
      %v4913 = vadd.f32 %v4881, %v1865
      %v4914 = vadd.f32 %v4882, %v1866
      %v4915 = vpack.c.bf16 %v4884, %v4883
      %v4916 = vpack.c.bf16 %v4886, %v4885
      %v4917 = vpack.c.bf16 %v4888, %v4887
      %v4918 = vpack.c.bf16 %v4890, %v4889
      %v4919 = vpack.c.bf16 %v4892, %v4891
      %v4920 = vpack.c.bf16 %v4894, %v4893
      %v4921 = vpack.c.bf16 %v4896, %v4895
      %v4922 = vpack.c.bf16 %v4898, %v4897
      %v4923 = vpack.c.bf16 %v4900, %v4899
      %v4924 = vpack.c.bf16 %v4902, %v4901
      %v4925 = vpack.c.bf16 %v4904, %v4903
      %v4926 = vpack.c.bf16 %v4906, %v4905
      %v4927 = vpack.c.bf16 %v4908, %v4907
      %v4928 = vpack.c.bf16 %v4910, %v4909
      %v4929 = vpack.c.bf16 %v4912, %v4911
      %v4930 = vpack.c.bf16 %v4914, %v4913
      %v4947 = vunpack.c.l.b16 %v4915
      %v4948 = vunpack.c.h.b16 %v4915
      %v4949 = vunpack.c.l.b16 %v4916
      %v4950 = vunpack.c.h.b16 %v4916
      %v4951 = vunpack.c.l.b16 %v4917
      %v4952 = vunpack.c.h.b16 %v4917
      %v4953 = vunpack.c.l.b16 %v4918
      %v4954 = vunpack.c.h.b16 %v4918
      %v4955 = vunpack.c.l.b16 %v4919
      %v4956 = vunpack.c.h.b16 %v4919
      %v4957 = vunpack.c.l.b16 %v4920
      %v4958 = vunpack.c.h.b16 %v4920
      %v4959 = vunpack.c.l.b16 %v4921
      %v4960 = vunpack.c.h.b16 %v4921
      %v4961 = vunpack.c.l.b16 %v4922
      %v4962 = vunpack.c.h.b16 %v4922
      %v4963 = vunpack.c.l.b16 %v4923
      %v4964 = vunpack.c.h.b16 %v4923
      %v4965 = vunpack.c.l.b16 %v4924
      %v4966 = vunpack.c.h.b16 %v4924
      %v4967 = vunpack.c.l.b16 %v4925
      %v4968 = vunpack.c.h.b16 %v4925
      %v4969 = vunpack.c.l.b16 %v4926
      %v4970 = vunpack.c.h.b16 %v4926
      %v4971 = vunpack.c.l.b16 %v4927
      %v4972 = vunpack.c.h.b16 %v4927
      %v4973 = vunpack.c.l.b16 %v4928
      %v4974 = vunpack.c.h.b16 %v4928
      %v4975 = vunpack.c.l.b16 %v4929
      %v4976 = vunpack.c.h.b16 %v4929
      %v4977 = vunpack.c.l.b16 %v4930
      %v4978 = vunpack.c.h.b16 %v4930
      %v4979 = vpack.c.b16 %v4947, %v4947
      %v4980 = vpack.c.b16 %v4948, %v4948
      %v4981 = vpack.c.b16 %v4949, %v4949
      %v4982 = vpack.c.b16 %v4950, %v4950
      %v4983 = vpack.c.b16 %v4951, %v4951
      %v4984 = vpack.c.b16 %v4952, %v4952
      %v4985 = vpack.c.b16 %v4953, %v4953
      %v4986 = vpack.c.b16 %v4954, %v4954
      %v4987 = vpack.c.b16 %v4955, %v4955
      %v4988 = vpack.c.b16 %v4956, %v4956
      %v4989 = vpack.c.b16 %v4957, %v4957
      %v4990 = vpack.c.b16 %v4958, %v4958
      %v4991 = vpack.c.b16 %v4959, %v4959
      %v4992 = vpack.c.b16 %v4960, %v4960
      %v4993 = vpack.c.b16 %v4961, %v4961
      %v4994 = vpack.c.b16 %v4962, %v4962
      %v4995 = vpack.c.b16 %v4963, %v4963
      %v4996 = vpack.c.b16 %v4964, %v4964
      %v4997 = vpack.c.b16 %v4965, %v4965
      %v4998 = vpack.c.b16 %v4966, %v4966
      %v4999 = vpack.c.b16 %v4967, %v4967
      %v5000 = vpack.c.b16 %v4968, %v4968
      %v5001 = vpack.c.b16 %v4969, %v4969
      %v5002 = vpack.c.b16 %v4970, %v4970
      %v5003 = vpack.c.b16 %v4971, %v4971
      %v5004 = vpack.c.b16 %v4972, %v4972
      %v5005 = vpack.c.b16 %v4973, %v4973
      %v5006 = vpack.c.b16 %v4974, %v4974
      %v5007 = vpack.c.b16 %v4975, %v4975
      %v5008 = vpack.c.b16 %v4976, %v4976
      %v5009 = vpack.c.b16 %v4977, %v4977
      %v5010 = vpack.c.b16 %v4978, %v4978
      %vm5043 = vcmask 388096
      %5044 = vst.msk [vmem:[%s278] sm:$0xf] %vm5043, %v4979
      %5045 = vst.msk [vmem:[%s278 + $0x4] sm:$0xf] %vm5043, %v4980
      %5046 = vst.msk [vmem:[%s278 + $0x8] sm:$0xf] %vm5043, %v4981
      %5047 = vst.msk [vmem:[%s278 + $0xc] sm:$0xf] %vm5043, %v4982
      %5048 = vst.msk [vmem:[%s278 + $0x10] sm:$0xf] %vm5043, %v4983
      %5049 = vst.msk [vmem:[%s278 + $0x14] sm:$0xf] %vm5043, %v4984
      %5050 = vst.msk [vmem:[%s278 + $0x18] sm:$0xf] %vm5043, %v4985
      %5051 = vst.msk [vmem:[%s278 + $0x1c] sm:$0xf] %vm5043, %v4986
      %5052 = vst.msk [vmem:[%s278 + $0x20] sm:$0xf] %vm5043, %v4987
      %5053 = vst.msk [vmem:[%s278 + $0x24] sm:$0xf] %vm5043, %v4988
      %5054 = vst.msk [vmem:[%s278 + $0x28] sm:$0xf] %vm5043, %v4989
      %5055 = vst.msk [vmem:[%s278 + $0x2c] sm:$0xf] %vm5043, %v4990
      %5056 = vst.msk [vmem:[%s278 + $0x30] sm:$0xf] %vm5043, %v4991
      %5057 = vst.msk [vmem:[%s278 + $0x34] sm:$0xf] %vm5043, %v4992
      %5058 = vst.msk [vmem:[%s278 + $0x38] sm:$0xf] %vm5043, %v4993
      %5059 = vst.msk [vmem:[%s278 + $0x3c] sm:$0xf] %vm5043, %v4994
      %5060 = vst.msk [vmem:[%s278 + $0x40] sm:$0xf] %vm5043, %v4995
      %5061 = vst.msk [vmem:[%s278 + $0x44] sm:$0xf] %vm5043, %v4996
      %5062 = vst.msk [vmem:[%s278 + $0x48] sm:$0xf] %vm5043, %v4997
      %5063 = vst.msk [vmem:[%s278 + $0x4c] sm:$0xf] %vm5043, %v4998
      %5064 = vst.msk [vmem:[%s278 + $0x50] sm:$0xf] %vm5043, %v4999
      %5065 = vst.msk [vmem:[%s278 + $0x54] sm:$0xf] %vm5043, %v5000
      %5066 = vst.msk [vmem:[%s278 + $0x58] sm:$0xf] %vm5043, %v5001
      %5067 = vst.msk [vmem:[%s278 + $0x5c] sm:$0xf] %vm5043, %v5002
      %5068 = vst.msk [vmem:[%s278 + $0x60] sm:$0xf] %vm5043, %v5003
      %5069 = vst.msk [vmem:[%s278 + $0x64] sm:$0xf] %vm5043, %v5004
      %5070 = vst.msk [vmem:[%s278 + $0x68] sm:$0xf] %vm5043, %v5005
      %5071 = vst.msk [vmem:[%s278 + $0x6c] sm:$0xf] %vm5043, %v5006
      %5072 = vst.msk [vmem:[%s278 + $0x70] sm:$0xf] %vm5043, %v5007
      %5073 = vst.msk [vmem:[%s278 + $0x74] sm:$0xf] %vm5043, %v5008
      %5074 = vst.msk [vmem:[%s278 + $0x78] sm:$0xf] %vm5043, %v5009
      %5075 = vst.msk [vmem:[%s278 + $0x7c] sm:$0xf] %vm5043, %v5010
      %p5076 = scmp.lt.s32.totalorder %s18, 1
      %s5077 = scalar_select %p5076, %s18, 1
      %s5078 = smul.addr %s5077, 32
      %s5079 = smul.addr %s5078, 4
      %s5080 = scalar_lea.vmem %s7, %s5079
      // Predicated region
      $region49: #{feature_extractor.3} parent=47 // pred_check
        %p5081 = pneg %p188
      $region50: #{feature_extractor.3} parent=47 // pred_check_branch
        %5083 = sbr.rel (%p5081) target = $region52
      $region51: #{feature_extractor.3} parent=47 // pred_region
        _
      $region52: #{feature_extractor.3} parent=47 // pred_fallthru
        _
    $region48: #{feature_extractor.3} parent=5 // pred_fallthru
      _
    %p5084 = scmp.le.s32.totalorder 2, %s13
    // Predicated region
    $region53: #{feature_extractor.3} parent=5 // pred_check
      %p5085 = pneg %p5084
    $region54: #{feature_extractor.3} parent=5 // pred_check_branch
      %5087 = sbr.rel (%p5085) target = $region56
    $region55: #{feature_extractor.3} parent=5 // pred_region
      %s5088 = ssub.s32 %s13, 2
      // Predicated region
      $region57: #{feature_extractor.3} parent=55 // pred_check
        %p5089 = pneg %p194
      $region58: #{feature_extractor.3} parent=55 // pred_check_branch
        %5091 = sbr.rel (%p5089) target = $region60
      $region59: #{feature_extractor.3} parent=55 // pred_region
        %p5092 = scmp.lt.s32.totalorder %s19, 1
        %s5093 = scalar_select %p5092, %s19, 1
        %s5094 = smul.addr %s5093, 32
        %s5095 = smul.addr %s5094, 4
        %s5096 = scalar_lea.vmem %s7, %s5095
      $region60: #{feature_extractor.3} parent=55 // pred_fallthru
        _
    $region56: #{feature_extractor.3} parent=5 // pred_fallthru
      _
  $region6: #{feature_extractor.3} parent=0 // loop_footer
    %s17 = sadd.s32 1, %s13
  $region7: #{feature_extractor.3} parent=0 // loop_footer_branch
    %12 = sbr.rel target = $region3
  $region8: #{feature_extractor.3} parent=0 // loop_exit
    _

// kernel: feature_extractor.4
$region0: #{feature_extractor.4}
  #allocation0 [shape = 'u32[]', space=smem, size = 0x4, offset = 0x4, fixed_abs, tag = 'smem constant byte address 0x4 - core index']
  #allocation1 [shape = 'u32[144,128]{1,0:T(1,128)}', space=vmem, size = 0x12000, scoped, tag = 'internal scratch']
  %s0 = inlined_call_operand.vmem [shape: bf16[2,4,9,9,48], index: 0, kind: input, shape index: {}]
  %s1 = inlined_call_operand.vmem [shape: bf16[3,144,64], index: 1, kind: input, shape index: {}]
  %s2 = inlined_call_operand.vmem [shape: f32[1,64], index: 2, kind: input, shape index: {}]
  %s3 = inlined_call_operand.vmem [shape: bf16[3,192,64], index: 3, kind: input, shape index: {}]
  %s4 = inlined_call_operand.vmem [shape: f32[1,64], index: 4, kind: input, shape index: {}]
  %s5 = inlined_call_operand.vmem [shape: bf16[3,192,64], index: 5, kind: input, shape index: {}]
  %s6 = inlined_call_operand.vmem [shape: f32[1,64], index: 6, kind: input, shape index: {}]
  %s7 = inlined_call_operand.vmem [shape: bf16[2,8,8,64], index: 7, kind: output, shape index: {}]
  %s8 = sld [smem:[#allocation0]]
  $region61: #{feature_extractor.4} parent=0
    _
  %s10 = ssub.s32 1, %s8
  %s11 = scalar_select 0, %s10, %s8
  loop: start=0, step=1, limit=4
  $region2: #{feature_extractor.4} parent=0 // loop_pre_header
    _
  $region3: #{feature_extractor.4} parent=0 // loop_header
    %s13 = sphi 0, %s17
    %p14 = scmp.ge.s32.totalorder %s13, 4
    %s23 = sphi 0, %s25
    %s26 = sphi 0, %s23
    %s27 = sphi 0, %s26
    %s43 = sphi 0, %s27
    %s47 = sphi 0, %s47
    %s49 = sphi 0, %s47
    %s50 = sphi 0, %s49
    %s64 = sphi 0, %s50
    %s68 = sphi 0, %s68
    %s70 = sphi 0, %s68
    %s71 = sphi 0, %s70
    %s85 = sphi 0, %s71
    %s89 = sphi 0, %s89
    %s91 = sphi 0, %s89
    %s92 = sphi 0, %s91
    %s106 = sphi 0, %s92
    %s110 = sphi 0, %s110
    %s112 = sphi 0, %s110
    %s113 = sphi 0, %s112
    %s127 = sphi 0, %s113
    %s131 = sphi 0, %s131
    %s133 = sphi 0, %s131
    %s134 = sphi 0, %s133
    %s148 = sphi 0, %s134
    %s152 = sphi 0, %s152
    %s154 = sphi 0, %s152
    %s155 = sphi 0, %s154
    %s169 = sphi 0, %s155
    %s175 = sphi 0, %s177
    %s178 = sphi 0, %s175
    %s179 = sphi 0, %s178
    %s195 = sphi 0, %s179
  $region4: #{feature_extractor.4} parent=0 // loop_header_branch
    %16 = sbr.rel (%p14) target = $region8
  $region5: #{feature_extractor.4} parent=0 // loop_body
    %s18 = ssub.s32 %s13, 1
    %s19 = ssub.s32 %s13, 2
    %s20 = sadd.s32 %s13, 1
    %s21 = ssub.s32 %s13, %s20
    %p22 = scmp.eq.s32.totalorder %s21, 0
    %s24 = sadd.s32 %s23, 1
    %s25 = scalar_select %p22, %s23, %s24
    %p28 = pneg %p22
    %p29 = scmp.eq.s32.totalorder %s13, 1
    %p30 = por %p28, %p29
    %p31 = scmp.ne.s32.totalorder %s23, %s26
    %p32 = scmp.eq.s32.totalorder %s13, 0
    %p33 = por %p31, %p32
    %p34 = scmp.ne.s32.totalorder %s23, %s26
    %p35 = scmp.eq.s32.totalorder %s18, 1
    %p36 = por %p34, %p35
    %p37 = scmp.ne.s32.totalorder %s26, %s27
    %p38 = scmp.eq.s32.totalorder %s18, 0
    %p39 = por %p37, %p38
    %p40 = scmp.ne.s32.totalorder %s26, %s27
    %p41 = scmp.eq.s32.totalorder %s19, 1
    %p42 = por %p40, %p41
    %p44 = scmp.ne.s32.totalorder %s27, %s43
    %p45 = scmp.eq.s32.totalorder %s19, 0
    %p46 = por %p44, %p45
    %s48 = sadd.s32 %s47, 1
    %p51 = scmp.eq.s32.totalorder %s13, 1
    %p52 = scmp.ne.s32.totalorder %s47, %s49
    %p53 = scmp.eq.s32.totalorder %s13, 0
    %p54 = por %p52, %p53
    %p55 = scmp.ne.s32.totalorder %s47, %s49
    %p56 = scmp.eq.s32.totalorder %s18, 1
    %p57 = por %p55, %p56
    %p58 = scmp.ne.s32.totalorder %s49, %s50
    %p59 = scmp.eq.s32.totalorder %s18, 0
    %p60 = por %p58, %p59
    %p61 = scmp.ne.s32.totalorder %s49, %s50
    %p62 = scmp.eq.s32.totalorder %s19, 1
    %p63 = por %p61, %p62
    %p65 = scmp.ne.s32.totalorder %s50, %s64
    %p66 = scmp.eq.s32.totalorder %s19, 0
    %p67 = por %p65, %p66
    %s69 = sadd.s32 %s68, 1
    %p72 = scmp.eq.s32.totalorder %s13, 1
    %p73 = scmp.ne.s32.totalorder %s68, %s70
    %p74 = scmp.eq.s32.totalorder %s13, 0
    %p75 = por %p73, %p74
    %p76 = scmp.ne.s32.totalorder %s68, %s70
    %p77 = scmp.eq.s32.totalorder %s18, 1
    %p78 = por %p76, %p77
    %p79 = scmp.ne.s32.totalorder %s70, %s71
    %p80 = scmp.eq.s32.totalorder %s18, 0
    %p81 = por %p79, %p80
    %p82 = scmp.ne.s32.totalorder %s70, %s71
    %p83 = scmp.eq.s32.totalorder %s19, 1
    %p84 = por %p82, %p83
    %p86 = scmp.ne.s32.totalorder %s71, %s85
    %p87 = scmp.eq.s32.totalorder %s19, 0
    %p88 = por %p86, %p87
    %s90 = sadd.s32 %s89, 1
    %p93 = scmp.eq.s32.totalorder %s13, 1
    %p94 = scmp.ne.s32.totalorder %s89, %s91
    %p95 = scmp.eq.s32.totalorder %s13, 0
    %p96 = por %p94, %p95
    %p97 = scmp.ne.s32.totalorder %s89, %s91
    %p98 = scmp.eq.s32.totalorder %s18, 1
    %p99 = por %p97, %p98
    %p100 = scmp.ne.s32.totalorder %s91, %s92
    %p101 = scmp.eq.s32.totalorder %s18, 0
    %p102 = por %p100, %p101
    %p103 = scmp.ne.s32.totalorder %s91, %s92
    %p104 = scmp.eq.s32.totalorder %s19, 1
    %p105 = por %p103, %p104
    %p107 = scmp.ne.s32.totalorder %s92, %s106
    %p108 = scmp.eq.s32.totalorder %s19, 0
    %p109 = por %p107, %p108
    %s111 = sadd.s32 %s110, 1
    %p114 = scmp.eq.s32.totalorder %s13, 1
    %p115 = scmp.ne.s32.totalorder %s110, %s112
    %p116 = scmp.eq.s32.totalorder %s13, 0
    %p117 = por %p115, %p116
    %p118 = scmp.ne.s32.totalorder %s110, %s112
    %p119 = scmp.eq.s32.totalorder %s18, 1
    %p120 = por %p118, %p119
    %p121 = scmp.ne.s32.totalorder %s112, %s113
    %p122 = scmp.eq.s32.totalorder %s18, 0
    %p123 = por %p121, %p122
    %p124 = scmp.ne.s32.totalorder %s112, %s113
    %p125 = scmp.eq.s32.totalorder %s19, 1
    %p126 = por %p124, %p125
    %p128 = scmp.ne.s32.totalorder %s113, %s127
    %p129 = scmp.eq.s32.totalorder %s19, 0
    %p130 = por %p128, %p129
    %s132 = sadd.s32 %s131, 1
    %p135 = scmp.eq.s32.totalorder %s13, 1
    %p136 = scmp.ne.s32.totalorder %s131, %s133
    %p137 = scmp.eq.s32.totalorder %s13, 0
    %p138 = por %p136, %p137
    %p139 = scmp.ne.s32.totalorder %s131, %s133
    %p140 = scmp.eq.s32.totalorder %s18, 1
    %p141 = por %p139, %p140
    %p142 = scmp.ne.s32.totalorder %s133, %s134
    %p143 = scmp.eq.s32.totalorder %s18, 0
    %p144 = por %p142, %p143
    %p145 = scmp.ne.s32.totalorder %s133, %s134
    %p146 = scmp.eq.s32.totalorder %s19, 1
    %p147 = por %p145, %p146
    %p149 = scmp.ne.s32.totalorder %s134, %s148
    %p150 = scmp.eq.s32.totalorder %s19, 0
    %p151 = por %p149, %p150
    %s153 = sadd.s32 %s152, 1
    %p156 = scmp.eq.s32.totalorder %s13, 1
    %p157 = scmp.ne.s32.totalorder %s152, %s154
    %p158 = scmp.eq.s32.totalorder %s13, 0
    %p159 = por %p157, %p158
    %p160 = scmp.ne.s32.totalorder %s152, %s154
    %p161 = scmp.eq.s32.totalorder %s18, 1
    %p162 = por %p160, %p161
    %p163 = scmp.ne.s32.totalorder %s154, %s155
    %p164 = scmp.eq.s32.totalorder %s18, 0
    %p165 = por %p163, %p164
    %p166 = scmp.ne.s32.totalorder %s154, %s155
    %p167 = scmp.eq.s32.totalorder %s19, 1
    %p168 = por %p166, %p167
    %p170 = scmp.ne.s32.totalorder %s155, %s169
    %p171 = scmp.eq.s32.totalorder %s19, 0
    %p172 = por %p170, %p171
    %s173 = ssub.s32 %s13, %s20
    %p174 = scmp.eq.s32.totalorder %s173, 0
    %s176 = sadd.s32 %s175, 1
    %s177 = scalar_select %p174, %s175, %s176
    %p180 = pneg %p174
    %p181 = scmp.eq.s32.totalorder %s13, 1
    %p182 = por %p180, %p181
    %p183 = scmp.ne.s32.totalorder %s175, %s178
    %p184 = scmp.eq.s32.totalorder %s13, 0
    %p185 = por %p183, %p184
    %p186 = scmp.ne.s32.totalorder %s175, %s178
    %p187 = scmp.eq.s32.totalorder %s18, 1
    %p188 = por %p186, %p187
    %p189 = scmp.ne.s32.totalorder %s178, %s179
    %p190 = scmp.eq.s32.totalorder %s18, 0
    %p191 = por %p189, %p190
    %p192 = scmp.ne.s32.totalorder %s178, %s179
    %p193 = scmp.eq.s32.totalorder %s19, 1
    %p194 = por %p192, %p193
    %p196 = scmp.ne.s32.totalorder %s179, %s195
    %p197 = scmp.eq.s32.totalorder %s19, 0
    %p198 = por %p196, %p197
    %p199 = scmp.le.s32.totalorder 1, %s13
    %p200 = scmp.lt.s32.totalorder %s13, 3
    %p201 = pnand %p199, %p200
    %p202 = pneg %p201
    // Predicated region
    $region9: #{feature_extractor.4} parent=5 // pred_check
      _
    $region10: #{feature_extractor.4} parent=5 // pred_check_branch
      %204 = sbr.rel (%p201) target = $region12
    $region11: #{feature_extractor.4} parent=5 // pred_region
      %s205 = ssub.s32 %s13, 1
      // Predicated region
      $region13: #{feature_extractor.4} parent=11 // pred_check
        %p206 = pneg %p60
      $region14: #{feature_extractor.4} parent=11 // pred_check_branch
        %208 = sbr.rel (%p206) target = $region16
      $region15: #{feature_extractor.4} parent=11 // pred_region
        _
      $region16: #{feature_extractor.4} parent=11 // pred_fallthru
        _
      // Predicated region
      $region17: #{feature_extractor.4} parent=11 // pred_check
        %p209 = pneg %p81
      $region18: #{feature_extractor.4} parent=11 // pred_check_branch
        %211 = sbr.rel (%p209) target = $region20
      $region19: #{feature_extractor.4} parent=11 // pred_region
        _
      $region20: #{feature_extractor.4} parent=11 // pred_fallthru
        _
      // Predicated region
      $region21: #{feature_extractor.4} parent=11 // pred_check
        %p212 = pneg %p102
      $region22: #{feature_extractor.4} parent=11 // pred_check_branch
        %214 = sbr.rel (%p212) target = $region24
      $region23: #{feature_extractor.4} parent=11 // pred_region
        _
      $region24: #{feature_extractor.4} parent=11 // pred_fallthru
        _
      // Predicated region
      $region25: #{feature_extractor.4} parent=11 // pred_check
        %p215 = pneg %p123
      $region26: #{feature_extractor.4} parent=11 // pred_check_branch
        %217 = sbr.rel (%p215) target = $region28
      $region27: #{feature_extractor.4} parent=11 // pred_region
        _
      $region28: #{feature_extractor.4} parent=11 // pred_fallthru
        _
      // Predicated region
      $region29: #{feature_extractor.4} parent=11 // pred_check
        %p218 = pneg %p144
      $region30: #{feature_extractor.4} parent=11 // pred_check_branch
        %220 = sbr.rel (%p218) target = $region32
      $region31: #{feature_extractor.4} parent=11 // pred_region
        _
      $region32: #{feature_extractor.4} parent=11 // pred_fallthru
        _
      // Predicated region
      $region33: #{feature_extractor.4} parent=11 // pred_check
        %p221 = pneg %p165
      $region34: #{feature_extractor.4} parent=11 // pred_check_branch
        %223 = sbr.rel (%p221) target = $region36
      $region35: #{feature_extractor.4} parent=11 // pred_region
        _
      $region36: #{feature_extractor.4} parent=11 // pred_fallthru
        _
    $region12: #{feature_extractor.4} parent=5 // pred_fallthru
      _
    %p224 = scmp.lt.s32.totalorder %s13, 2
    // Predicated region
    $region37: #{feature_extractor.4} parent=5 // pred_check
      %p225 = pneg %p224
    $region38: #{feature_extractor.4} parent=5 // pred_check_branch
      %227 = sbr.rel (%p225) target = $region40
    $region39: #{feature_extractor.4} parent=5 // pred_region
      // Predicated region
      $region41: #{feature_extractor.4} parent=39 // pred_check
        %p228 = pneg %p33
      $region42: #{feature_extractor.4} parent=39 // pred_check_branch
        %230 = sbr.rel (%p228) target = $region44
      $region43: #{feature_extractor.4} parent=39 // pred_region
        %p231 = scmp.lt.s32.totalorder %s13, 1
        %s232 = scalar_select %p231, %s13, 1
        %s233 = smul.addr %s232, 72
        %s234 = smul.addr %s233, 4
        %s235 = scalar_lea.vmem %s0, %s234
      $region44: #{feature_extractor.4} parent=39 // pred_fallthru
        _
    $region40: #{feature_extractor.4} parent=5 // pred_fallthru
      _
    %p236 = scmp.le.s32.totalorder 1, %s13
    %p237 = scmp.lt.s32.totalorder %s13, 3
    %p238 = pnand %p236, %p237
    %p239 = pneg %p238
    // Predicated region
    $region45: #{feature_extractor.4} parent=5 // pred_check
      _
    $region46: #{feature_extractor.4} parent=5 // pred_check_branch
      %241 = sbr.rel (%p238) target = $region48
    $region47: #{feature_extractor.4} parent=5 // pred_region
      %s242 = ssub.s32 %s13, 1
      %p243 = scmp.lt.s32.totalorder %s18, 1
      %s244 = scalar_select %p243, %s18, 1
      %s245 = smul.addr %s244, 72
      %s246 = smul.addr %s245, 4
      %s247 = scalar_lea.vmem %s0, %s246
      %p248 = pneg %p39
      %p249 = pneg %p36
      %p250 = pneg %p60
      %p251 = pneg %p57
      %p252 = pneg %p81
      %p253 = pneg %p78
      %p254 = pneg %p102
      %p255 = pneg %p99
      %p256 = pneg %p123
      %p257 = pneg %p120
      %p258 = pneg %p144
      %p259 = pneg %p141
      %p260 = pneg %p165
      %p261 = pneg %p162
      %p262 = pneg %p191
      %p263 = pneg %p188
      %p264 = scmp.lt.s32.totalorder %s18, 1
      %s265 = scalar_select %p264, %s18, 1
      %s266 = smul.addr %s265, 8
      %s267 = smul.addr %s266, 4
      %s268 = scalar_lea.vmem %s7, %s267
      %p269 = scmp.lt.s32.totalorder %s18, 1
      %s270 = scalar_select %p269, %s18, 1
      %s271 = smul.addr %s270, 72
      %s272 = smul.addr %s271, 4
      %s273 = scalar_lea.vmem %s0, %s272
      %p274 = scmp.lt.s32.totalorder %s18, 1
      %s275 = scalar_select %p274, %s18, 1
      %s276 = smul.addr %s275, 8
      %s277 = smul.addr %s276, 4
      %s278 = scalar_lea.vmem %s7, %s277
      %v280 = vld [vmem:[%s273] sm:$0xf]
      %v281 = vld [vmem:[%s273 + $0x4] sm:$0x1]
      %v282 = vld [vmem:[%s273 + $0x8] sm:$0xf]
      %v283 = vld [vmem:[%s273 + $0xc] sm:$0x1]
      %v284 = vld [vmem:[%s273 + $0x10] sm:$0xf]
      %v285 = vld [vmem:[%s273 + $0x14] sm:$0x1]
      %v286 = vld [vmem:[%s273 + $0x18] sm:$0xf]
      %v287 = vld [vmem:[%s273 + $0x1c] sm:$0x1]
      %v288 = vld [vmem:[%s273 + $0x20] sm:$0xf]
      %v289 = vld [vmem:[%s273 + $0x24] sm:$0x1]
      %v290 = vld [vmem:[%s273 + $0x28] sm:$0xf]
      %v291 = vld [vmem:[%s273 + $0x2c] sm:$0x1]
      %v292 = vld [vmem:[%s273 + $0x30] sm:$0xf]
      %v293 = vld [vmem:[%s273 + $0x34] sm:$0x1]
      %v294 = vld [vmem:[%s273 + $0x38] sm:$0xf]
      %v295 = vld [vmem:[%s273 + $0x3c] sm:$0x1]
      %v296 = vld [vmem:[%s273 + $0x40] sm:$0xf]
      %v297 = vld [vmem:[%s273 + $0x44] sm:$0x1]
      %v298 = vld [vmem:[%s273 + $0x48] sm:$0xf]
      %v299 = vld [vmem:[%s273 + $0x50] sm:$0xf]
      %v300 = vld [vmem:[%s273 + $0x58] sm:$0xf]
      %v301 = vld [vmem:[%s273 + $0x60] sm:$0xf]
      %v302 = vld [vmem:[%s273 + $0x68] sm:$0xf]
      %v303 = vld [vmem:[%s273 + $0x70] sm:$0xf]
      %v304 = vld [vmem:[%s273 + $0x78] sm:$0xf]
      %v305 = vld [vmem:[%s273 + $0x80] sm:$0xf]
      %v306 = vld [vmem:[%s273 + $0x88] sm:$0xf]
      %v307 = vld [vmem:[%s273 + $0x90] sm:$0xf]
      %v308 = vld [vmem:[%s273 + $0x94] sm:$0x1]
      %v309 = vld [vmem:[%s273 + $0x98] sm:$0xf]
      %v310 = vld [vmem:[%s273 + $0x9c] sm:$0x1]
      %v311 = vld [vmem:[%s273 + $0xa0] sm:$0xf]
      %v312 = vld [vmem:[%s273 + $0xa4] sm:$0x1]
      %v313 = vld [vmem:[%s273 + $0xa8] sm:$0xf]
      %v314 = vld [vmem:[%s273 + $0xac] sm:$0x1]
      %v315 = vld [vmem:[%s273 + $0xb0] sm:$0xf]
      %v316 = vld [vmem:[%s273 + $0xb4] sm:$0x1]
      %v317 = vld [vmem:[%s273 + $0xb8] sm:$0xf]
      %v318 = vld [vmem:[%s273 + $0xbc] sm:$0x1]
      %v319 = vld [vmem:[%s273 + $0xc0] sm:$0xf]
      %v320 = vld [vmem:[%s273 + $0xc4] sm:$0x1]
      %v321 = vld [vmem:[%s273 + $0xc8] sm:$0xf]
      %v322 = vld [vmem:[%s273 + $0xcc] sm:$0x1]
      %v323 = vld [vmem:[%s273 + $0xd8] sm:$0xf]
      %v324 = vld [vmem:[%s273 + $0xe0] sm:$0xf]
      %v325 = vld [vmem:[%s273 + $0xe8] sm:$0xf]
      %v326 = vld [vmem:[%s273 + $0xf0] sm:$0xf]
      %v327 = vld [vmem:[%s273 + $0xf8] sm:$0xf]
      %v328 = vld [vmem:[%s273 + $0x100] sm:$0xf]
      %v329 = vld [vmem:[%s273 + $0x108] sm:$0xf]
      %v330 = vld [vmem:[%s273 + $0x110] sm:$0xf]
      %v331 = vld [vmem:[%s2] sm:$0x1]
      %v333 = vlaneseq
      %v334 = vshrl.u32 %v333, 7
      %v335 = vsub.s32 0, %v334
      %v336 = vrot.slane %v331, %v335
      %v346 = vunpack.c.l.b16 %v298
      %v347 = vunpack.c.l.b16 %v299
      %v348 = vunpack.c.l.b16 %v300
      %v349 = vunpack.c.l.b16 %v301
      %v350 = vunpack.c.l.b16 %v302
      %v351 = vunpack.c.l.b16 %v303
      %v352 = vunpack.c.l.b16 %v304
      %v353 = vunpack.c.l.b16 %v305
      %v354 = vpack.c.b16 %v346, %v346
      %v355 = vpack.c.b16 %v347, %v347
      %v356 = vpack.c.b16 %v348, %v348
      %v357 = vpack.c.b16 %v349, %v349
      %v358 = vpack.c.b16 %v350, %v350
      %v359 = vpack.c.b16 %v351, %v351
      %v360 = vpack.c.b16 %v352, %v352
      %v361 = vpack.c.b16 %v353, %v353
      %362 = vrot.lane.b32.xlu0 %v354, 48
      %v363 = vpop.permute.xlu0 %362
      %364 = vrot.lane.b32.xlu0 %v355, 48
      %v365 = vpop.permute.xlu0 %364
      %366 = vrot.lane.b32.xlu0 %v356, 48
      %v367 = vpop.permute.xlu0 %366
      %368 = vrot.lane.b32.xlu0 %v357, 48
      %v369 = vpop.permute.xlu0 %368
      %370 = vrot.lane.b32.xlu0 %v358, 48
      %v371 = vpop.permute.xlu0 %370
      %372 = vrot.lane.b32.xlu0 %v359, 48
      %v373 = vpop.permute.xlu0 %372
      %374 = vrot.lane.b32.xlu0 %v360, 48
      %v375 = vpop.permute.xlu0 %374
      %376 = vrot.lane.b32.xlu0 %v361, 48
      %v377 = vpop.permute.xlu0 %376
      %v394 = vunpack.c.l.b16 %v280
      %v395 = vunpack.c.l.b16 %v281
      %v396 = vunpack.c.l.b16 %v282
      %v397 = vunpack.c.l.b16 %v283
      %v398 = vunpack.c.l.b16 %v284
      %v399 = vunpack.c.l.b16 %v285
      %v400 = vunpack.c.l.b16 %v286
      %v401 = vunpack.c.l.b16 %v287
      %v402 = vunpack.c.l.b16 %v288
      %v403 = vunpack.c.l.b16 %v289
      %v404 = vunpack.c.l.b16 %v290
      %v405 = vunpack.c.l.b16 %v291
      %v406 = vunpack.c.l.b16 %v292
      %v407 = vunpack.c.l.b16 %v293
      %v408 = vunpack.c.l.b16 %v294
      %v409 = vunpack.c.l.b16 %v295
      %v410 = vpack.c.b16 %v395, %v394
      %v411 = vpack.c.b16 %v397, %v396
      %v412 = vpack.c.b16 %v399, %v398
      %v413 = vpack.c.b16 %v401, %v400
      %v414 = vpack.c.b16 %v403, %v402
      %v415 = vpack.c.b16 %v405, %v404
      %v416 = vpack.c.b16 %v407, %v406
      %v417 = vpack.c.b16 %v409, %v408
      %v419 = vshrl.u32 %v410, 16
      %v421 = vshll.u32 %v410, 16
      %v423 = vrot.slane %v421, 1
      %v424 = vor.u32 %v419, %v423
      %v426 = vshrl.u32 %v411, 16
      %v428 = vshll.u32 %v411, 16
      %v430 = vrot.slane %v428, 1
      %v431 = vor.u32 %v426, %v430
      %v433 = vshrl.u32 %v412, 16
      %v435 = vshll.u32 %v412, 16
      %v437 = vrot.slane %v435, 1
      %v438 = vor.u32 %v433, %v437
      %v440 = vshrl.u32 %v413, 16
      %v442 = vshll.u32 %v413, 16
      %v444 = vrot.slane %v442, 1
      %v445 = vor.u32 %v440, %v444
      %v447 = vshrl.u32 %v414, 16
      %v449 = vshll.u32 %v414, 16
      %v451 = vrot.slane %v449, 1
      %v452 = vor.u32 %v447, %v451
      %v454 = vshrl.u32 %v415, 16
      %v456 = vshll.u32 %v415, 16
      %v458 = vrot.slane %v456, 1
      %v459 = vor.u32 %v454, %v458
      %v461 = vshrl.u32 %v416, 16
      %v463 = vshll.u32 %v416, 16
      %v465 = vrot.slane %v463, 1
      %v466 = vor.u32 %v461, %v465
      %v468 = vshrl.u32 %v417, 16
      %v470 = vshll.u32 %v417, 16
      %v472 = vrot.slane %v470, 1
      %v473 = vor.u32 %v468, %v472
      %474 = vrot.lane.b32.xlu0 %v424, 96
      %v475 = vpop.permute.xlu0 %474
      %476 = vrot.lane.b32.xlu0 %v431, 96
      %v477 = vpop.permute.xlu0 %476
      %478 = vrot.lane.b32.xlu0 %v438, 96
      %v479 = vpop.permute.xlu0 %478
      %480 = vrot.lane.b32.xlu0 %v445, 96
      %v481 = vpop.permute.xlu0 %480
      %482 = vrot.lane.b32.xlu0 %v452, 96
      %v483 = vpop.permute.xlu0 %482
      %484 = vrot.lane.b32.xlu0 %v459, 96
      %v485 = vpop.permute.xlu0 %484
      %486 = vrot.lane.b32.xlu0 %v466, 96
      %v487 = vpop.permute.xlu0 %486
      %488 = vrot.lane.b32.xlu0 %v473, 96
      %v489 = vpop.permute.xlu0 %488
      %vm490 = vcmask 392192
      %v493 = vsel %vm490, %v280, %v363
      %v496 = vsel %vm490, %v282, %v365
      %v499 = vsel %vm490, %v284, %v367
      %v502 = vsel %vm490, %v286, %v369
      %v505 = vsel %vm490, %v288, %v371
      %v508 = vsel %vm490, %v290, %v373
      %v511 = vsel %vm490, %v292, %v375
      %v514 = vsel %vm490, %v294, %v377
      %vm515 = vcmask 785408
      %v517 = vsel %vm515, %v493, %v475
      %v519 = vsel %vm515, %v496, %v477
      %v521 = vsel %vm515, %v499, %v479
      %v523 = vsel %vm515, %v502, %v481
      %v525 = vsel %vm515, %v505, %v483
      %v527 = vsel %vm515, %v508, %v485
      %v529 = vsel %vm515, %v511, %v487
      %v531 = vsel %vm515, %v514, %v489
      %v540 = vunpack.c.l.b16 %v517
      %v541 = vunpack.c.l.b16 %v475
      %v542 = vunpack.c.l.b16 %v519
      %v543 = vunpack.c.l.b16 %v477
      %v544 = vunpack.c.l.b16 %v521
      %v545 = vunpack.c.l.b16 %v479
      %v546 = vunpack.c.l.b16 %v523
      %v547 = vunpack.c.l.b16 %v481
      %v548 = vunpack.c.l.b16 %v525
      %v549 = vunpack.c.l.b16 %v483
      %v550 = vunpack.c.l.b16 %v527
      %v551 = vunpack.c.l.b16 %v485
      %v552 = vunpack.c.l.b16 %v529
      %v553 = vunpack.c.l.b16 %v487
      %v554 = vunpack.c.l.b16 %v531
      %v555 = vunpack.c.l.b16 %v489
      %v556 = vld [vmem:[%s1] sm:$0xf]
      %v557 = vld [vmem:[%s1 + $0x4] sm:$0xf]
      %v558 = vld [vmem:[%s1 + $0x8] sm:$0xf]
      %v559 = vld [vmem:[%s1 + $0xc] sm:$0xf]
      %v560 = vld [vmem:[%s1 + $0x10] sm:$0xf]
      %v561 = vld [vmem:[%s1 + $0x14] sm:$0xf]
      %v562 = vld [vmem:[%s1 + $0x18] sm:$0xf]
      %v563 = vld [vmem:[%s1 + $0x1c] sm:$0xf]
      %v564 = vld [vmem:[%s1 + $0x20] sm:$0xf]
      %v565 = vld [vmem:[%s1 + $0x24] sm:$0xf]
      %v566 = vld [vmem:[%s1 + $0x28] sm:$0xf]
      %v567 = vld [vmem:[%s1 + $0x2c] sm:$0xf]
      %v568 = vld [vmem:[%s1 + $0x30] sm:$0xf]
      %v569 = vld [vmem:[%s1 + $0x34] sm:$0xf]
      %v570 = vld [vmem:[%s1 + $0x38] sm:$0xf]
      %v571 = vld [vmem:[%s1 + $0x3c] sm:$0xf]
      %v572 = vld [vmem:[%s1 + $0x40] sm:$0xf]
      %v573 = vld [vmem:[%s1 + $0x44] sm:$0xf]
      %v574 = vpack.c.b16 %v542, %v540
      %v575 = vpack.c.b16 %v543, %v541
      %v576 = vpack.c.b16 %v546, %v544
      %v577 = vpack.c.b16 %v547, %v545
      %v578 = vpack.c.b16 %v550, %v548
      %v579 = vpack.c.b16 %v551, %v549
      %v580 = vpack.c.b16 %v554, %v552
      %v581 = vpack.c.b16 %v555, %v553
      %v604 = vunpack.c.l.b16 %v556
      %v605 = vunpack.c.l.b16 %v557
      %v606 = vunpack.c.l.b16 %v558
      %v607 = vunpack.c.l.b16 %v559
      %v608 = vunpack.c.l.b16 %v560
      %v609 = vunpack.c.l.b16 %v561
      %v610 = vunpack.c.l.b16 %v562
      %v611 = vunpack.c.l.b16 %v563
      %v612 = vunpack.c.l.b16 %v564
      %v613 = vunpack.c.l.b16 %v565
      %v614 = vunpack.c.l.b16 %v566
      %v615 = vunpack.c.l.b16 %v567
      %v616 = vunpack.c.l.b16 %v568
      %v617 = vunpack.c.l.b16 %v569
      %v618 = vunpack.c.l.b16 %v570
      %v619 = vunpack.c.l.b16 %v571
      %v620 = vunpack.c.l.b16 %v572
      %v621 = vunpack.c.l.b16 %v573
      %v622 = vpack.c.b16 %v605, %v604
      %v623 = vpack.c.b16 %v607, %v606
      %v624 = vpack.c.b16 %v609, %v608
      %v625 = vpack.c.b16 %v611, %v610
      %v626 = vpack.c.b16 %v613, %v612
      %v627 = vpack.c.b16 %v615, %v614
      %v628 = vpack.c.b16 %v617, %v616
      %v629 = vpack.c.b16 %v619, %v618
      %v630 = vpack.c.b16 %v621, %v620
      %vm640 = vcmask 130048
      %v642 = vsel %vm640, %v575, 0
      %v645 = vsel %vm640, %v577, 0
      %v648 = vsel %vm640, %v579, 0
      %v651 = vsel %vm640, %v581, 0
      %653 = vmatprep.subr.bf16.mxu0 0
      %654 = vmatpush1.bf16.msra.mxu0 %v629
      %655 = vmatprep.subr.bf16.mxu0 0
      %656 = vmatpush1.bf16.msra.mxu0 %v628
      %657 = vmatprep.subr.bf16.mxu0 0
      %658 = vmatpush1.bf16.msra.mxu0 %v627
      %659 = vmatprep.subr.bf16.mxu0 0
      %660 = vmatpush1.bf16.msra.mxu0 %v626
      %661 = vmatprep.subr.bf16.mxu0 0
      %662 = vmatpush1.bf16.msra.mxu0 %v625
      %663 = vmatprep.subr.bf16.mxu0 0
      %664 = vmatpush1.bf16.msra.mxu0 %v624
      %665 = vmatprep.subr.bf16.mxu0 0
      %666 = vmatpush1.bf16.msra.mxu0 %v623
      %667 = vmatprep.subr.bf16.mxu0 0
      %668 = vmatpush1.bf16.msra.mxu0 %v622
      %669 = vmatprep.subr.bf16.mxu0 0
      %670 = vmatpush2.bf16.msra.mxu0 0
      %671 = vmatprep.subr.bf16.mxu0 0
      %672 = vmatpush2.bf16.msra.mxu0 0
      %673 = vmatprep.subr.bf16.mxu0 0
      %674 = vmatpush2.bf16.msra.mxu0 0
      %675 = vmatprep.subr.bf16.mxu0 0
      %676 = vmatpush2.bf16.msra.mxu0 0
      %677 = vmatprep.subr.bf16.mxu0 0
      %678 = vmatpush2.bf16.msra.mxu0 0
      %679 = vmatprep.subr.bf16.mxu0 0
      %680 = vmatpush2.bf16.msra.mxu0 0
      %681 = vmatprep.subr.bf16.mxu0 0
      %682 = vmatpush2.bf16.msra.mxu0 0
      %683 = vmatprep.subr.bf16.mxu0 0
      %684 = vmatpush2.bf16.msra.mxu0 %v630
      %685 = vmatprep.mubr.bf16.mxu0 %v642
      %686 = vmatmul.mubr.bf16.gmra.mxu0 %v574
      %v687 = vpop.f32.mrf.mxu0
      %v688 = vadd.f32 0.0, %v687
      %v689 = vpop.f32.mrf.mxu0
      %v690 = vpop.f32.mrf.mxu0
      %v691 = vadd.f32 0.0, %v690
      %v692 = vpop.f32.mrf.mxu0
      %693 = vmatprep.mubr.bf16.mxu0 %v645
      %694 = vmatmul.mubr.bf16.gmra.mxu0 %v576
      %v695 = vpop.f32.mrf.mxu0
      %v696 = vadd.f32 0.0, %v695
      %v697 = vpop.f32.mrf.mxu0
      %v698 = vpop.f32.mrf.mxu0
      %v699 = vadd.f32 0.0, %v698
      %v700 = vpop.f32.mrf.mxu0
      %701 = vmatprep.mubr.bf16.mxu0 %v648
      %702 = vmatmul.mubr.bf16.gmra.mxu0 %v578
      %v703 = vpop.f32.mrf.mxu0
      %v704 = vadd.f32 0.0, %v703
      %v705 = vpop.f32.mrf.mxu0
      %v706 = vpop.f32.mrf.mxu0
      %v707 = vadd.f32 0.0, %v706
      %v708 = vpop.f32.mrf.mxu0
      %709 = vmatprep.mubr.bf16.mxu0 %v651
      %710 = vmatmul.mubr.bf16.gmra.mxu0 %v580
      %v711 = vpop.f32.mrf.mxu0
      %v712 = vadd.f32 0.0, %v711
      %v713 = vpop.f32.mrf.mxu0
      %v714 = vpop.f32.mrf.mxu0
      %v715 = vadd.f32 0.0, %v714
      %v716 = vpop.f32.mrf.mxu0
      %717 = vdwg.mxu0
      %v718 = vadd.f32 %v336, %v688
      %v719 = vadd.f32 %v336, %v691
      %v720 = vadd.f32 %v336, %v696
      %v721 = vadd.f32 %v336, %v699
      %v722 = vadd.f32 %v336, %v704
      %v723 = vadd.f32 %v336, %v707
      %v724 = vadd.f32 %v336, %v712
      %v725 = vadd.f32 %v336, %v715
      %v734 = vunpack.c.l.b16 %v323
      %v735 = vunpack.c.l.b16 %v324
      %v736 = vunpack.c.l.b16 %v325
      %v737 = vunpack.c.l.b16 %v326
      %v738 = vunpack.c.l.b16 %v327
      %v739 = vunpack.c.l.b16 %v328
      %v740 = vunpack.c.l.b16 %v329
      %v741 = vunpack.c.l.b16 %v330
      %v742 = vpack.c.b16 %v734, %v734
      %v743 = vpack.c.b16 %v735, %v735
      %v744 = vpack.c.b16 %v736, %v736
      %v745 = vpack.c.b16 %v737, %v737
      %v746 = vpack.c.b16 %v738, %v738
      %v747 = vpack.c.b16 %v739, %v739
      %v748 = vpack.c.b16 %v740, %v740
      %v749 = vpack.c.b16 %v741, %v741
      %750 = vrot.lane.b32.xlu0 %v742, 48
      %v751 = vpop.permute.xlu0 %750
      %752 = vrot.lane.b32.xlu0 %v743, 48
      %v753 = vpop.permute.xlu0 %752
      %754 = vrot.lane.b32.xlu0 %v744, 48
      %v755 = vpop.permute.xlu0 %754
      %756 = vrot.lane.b32.xlu0 %v745, 48
      %v757 = vpop.permute.xlu0 %756
      %758 = vrot.lane.b32.xlu0 %v746, 48
      %v759 = vpop.permute.xlu0 %758
      %760 = vrot.lane.b32.xlu0 %v747, 48
      %v761 = vpop.permute.xlu0 %760
      %762 = vrot.lane.b32.xlu0 %v748, 48
      %v763 = vpop.permute.xlu0 %762
      %764 = vrot.lane.b32.xlu0 %v749, 48
      %v765 = vpop.permute.xlu0 %764
      %v782 = vunpack.c.l.b16 %v307
      %v783 = vunpack.c.l.b16 %v308
      %v784 = vunpack.c.l.b16 %v309
      %v785 = vunpack.c.l.b16 %v310
      %v786 = vunpack.c.l.b16 %v311
      %v787 = vunpack.c.l.b16 %v312
      %v788 = vunpack.c.l.b16 %v313
      %v789 = vunpack.c.l.b16 %v314
      %v790 = vunpack.c.l.b16 %v315
      %v791 = vunpack.c.l.b16 %v316
      %v792 = vunpack.c.l.b16 %v317
      %v793 = vunpack.c.l.b16 %v318
      %v794 = vunpack.c.l.b16 %v319
      %v795 = vunpack.c.l.b16 %v320
      %v796 = vunpack.c.l.b16 %v321
      %v797 = vunpack.c.l.b16 %v322
      %v798 = vpack.c.b16 %v783, %v782
      %v799 = vpack.c.b16 %v785, %v784
      %v800 = vpack.c.b16 %v787, %v786
      %v801 = vpack.c.b16 %v789, %v788
      %v802 = vpack.c.b16 %v791, %v790
      %v803 = vpack.c.b16 %v793, %v792
      %v804 = vpack.c.b16 %v795, %v794
      %v805 = vpack.c.b16 %v797, %v796
      %v807 = vshrl.u32 %v798, 16
      %v809 = vshll.u32 %v798, 16
      %v811 = vrot.slane %v809, 1
      %v812 = vor.u32 %v807, %v811
      %v814 = vshrl.u32 %v799, 16
      %v816 = vshll.u32 %v799, 16
      %v818 = vrot.slane %v816, 1
      %v819 = vor.u32 %v814, %v818
      %v821 = vshrl.u32 %v800, 16
      %v823 = vshll.u32 %v800, 16
      %v825 = vrot.slane %v823, 1
      %v826 = vor.u32 %v821, %v825
      %v828 = vshrl.u32 %v801, 16
      %v830 = vshll.u32 %v801, 16
      %v832 = vrot.slane %v830, 1
      %v833 = vor.u32 %v828, %v832
      %v835 = vshrl.u32 %v802, 16
      %v837 = vshll.u32 %v802, 16
      %v839 = vrot.slane %v837, 1
      %v840 = vor.u32 %v835, %v839
      %v842 = vshrl.u32 %v803, 16
      %v844 = vshll.u32 %v803, 16
      %v846 = vrot.slane %v844, 1
      %v847 = vor.u32 %v842, %v846
      %v849 = vshrl.u32 %v804, 16
      %v851 = vshll.u32 %v804, 16
      %v853 = vrot.slane %v851, 1
      %v854 = vor.u32 %v849, %v853
      %v856 = vshrl.u32 %v805, 16
      %v858 = vshll.u32 %v805, 16
      %v860 = vrot.slane %v858, 1
      %v861 = vor.u32 %v856, %v860
      %862 = vrot.lane.b32.xlu0 %v812, 96
      %v863 = vpop.permute.xlu0 %862
      %864 = vrot.lane.b32.xlu0 %v819, 96
      %v865 = vpop.permute.xlu0 %864
      %866 = vrot.lane.b32.xlu0 %v826, 96
      %v867 = vpop.permute.xlu0 %866
      %868 = vrot.lane.b32.xlu0 %v833, 96
      %v869 = vpop.permute.xlu0 %868
      %870 = vrot.lane.b32.xlu0 %v840, 96
      %v871 = vpop.permute.xlu0 %870
      %872 = vrot.lane.b32.xlu0 %v847, 96
      %v873 = vpop.permute.xlu0 %872
      %874 = vrot.lane.b32.xlu0 %v854, 96
      %v875 = vpop.permute.xlu0 %874
      %876 = vrot.lane.b32.xlu0 %v861, 96
      %v877 = vpop.permute.xlu0 %876
      %v880 = vsel %vm490, %v307, %v751
      %v883 = vsel %vm490, %v309, %v753
      %v886 = vsel %vm490, %v311, %v755
      %v889 = vsel %vm490, %v313, %v757
      %v892 = vsel %vm490, %v315, %v759
      %v895 = vsel %vm490, %v317, %v761
      %v898 = vsel %vm490, %v319, %v763
      %v901 = vsel %vm490, %v321, %v765
      %v903 = vsel %vm515, %v880, %v863
      %v905 = vsel %vm515, %v883, %v865
      %v907 = vsel %vm515, %v886, %v867
      %v909 = vsel %vm515, %v889, %v869
      %v911 = vsel %vm515, %v892, %v871
      %v913 = vsel %vm515, %v895, %v873
      %v915 = vsel %vm515, %v898, %v875
      %v917 = vsel %vm515, %v901, %v877
      %v926 = vunpack.c.l.b16 %v903
      %v927 = vunpack.c.l.b16 %v863
      %v928 = vunpack.c.l.b16 %v905
      %v929 = vunpack.c.l.b16 %v865
      %v930 = vunpack.c.l.b16 %v907
      %v931 = vunpack.c.l.b16 %v867
      %v932 = vunpack.c.l.b16 %v909
      %v933 = vunpack.c.l.b16 %v869
      %v934 = vunpack.c.l.b16 %v911
      %v935 = vunpack.c.l.b16 %v871
      %v936 = vunpack.c.l.b16 %v913
      %v937 = vunpack.c.l.b16 %v873
      %v938 = vunpack.c.l.b16 %v915
      %v939 = vunpack.c.l.b16 %v875
      %v940 = vunpack.c.l.b16 %v917
      %v941 = vunpack.c.l.b16 %v877
      %s942 = scalar_lea.vmem %s1, 72
      %v943 = vld [vmem:[%s942] sm:$0xf]
      %v944 = vld [vmem:[%s942 + $0x4] sm:$0xf]
      %v945 = vld [vmem:[%s942 + $0x8] sm:$0xf]
      %v946 = vld [vmem:[%s942 + $0xc] sm:$0xf]
      %v947 = vld [vmem:[%s942 + $0x10] sm:$0xf]
      %v948 = vld [vmem:[%s942 + $0x14] sm:$0xf]
      %v949 = vld [vmem:[%s942 + $0x18] sm:$0xf]
      %v950 = vld [vmem:[%s942 + $0x1c] sm:$0xf]
      %v951 = vld [vmem:[%s942 + $0x20] sm:$0xf]
      %v952 = vld [vmem:[%s942 + $0x24] sm:$0xf]
      %v953 = vld [vmem:[%s942 + $0x28] sm:$0xf]
      %v954 = vld [vmem:[%s942 + $0x2c] sm:$0xf]
      %v955 = vld [vmem:[%s942 + $0x30] sm:$0xf]
      %v956 = vld [vmem:[%s942 + $0x34] sm:$0xf]
      %v957 = vld [vmem:[%s942 + $0x38] sm:$0xf]
      %v958 = vld [vmem:[%s942 + $0x3c] sm:$0xf]
      %v959 = vld [vmem:[%s942 + $0x40] sm:$0xf]
      %v960 = vld [vmem:[%s942 + $0x44] sm:$0xf]
      %v961 = vpack.c.b16 %v928, %v926
      %v962 = vpack.c.b16 %v929, %v927
      %v963 = vpack.c.b16 %v932, %v930
      %v964 = vpack.c.b16 %v933, %v931
      %v965 = vpack.c.b16 %v936, %v934
      %v966 = vpack.c.b16 %v937, %v935
      %v967 = vpack.c.b16 %v940, %v938
      %v968 = vpack.c.b16 %v941, %v939
      %v991 = vunpack.c.l.b16 %v943
      %v992 = vunpack.c.l.b16 %v944
      %v993 = vunpack.c.l.b16 %v945
      %v994 = vunpack.c.l.b16 %v946
      %v995 = vunpack.c.l.b16 %v947
      %v996 = vunpack.c.l.b16 %v948
      %v997 = vunpack.c.l.b16 %v949
      %v998 = vunpack.c.l.b16 %v950
      %v999 = vunpack.c.l.b16 %v951
      %v1000 = vunpack.c.l.b16 %v952
      %v1001 = vunpack.c.l.b16 %v953
      %v1002 = vunpack.c.l.b16 %v954
      %v1003 = vunpack.c.l.b16 %v955
      %v1004 = vunpack.c.l.b16 %v956
      %v1005 = vunpack.c.l.b16 %v957
      %v1006 = vunpack.c.l.b16 %v958
      %v1007 = vunpack.c.l.b16 %v959
      %v1008 = vunpack.c.l.b16 %v960
      %v1009 = vpack.c.b16 %v992, %v991
      %v1010 = vpack.c.b16 %v994, %v993
      %v1011 = vpack.c.b16 %v996, %v995
      %v1012 = vpack.c.b16 %v998, %v997
      %v1013 = vpack.c.b16 %v1000, %v999
      %v1014 = vpack.c.b16 %v1002, %v1001
      %v1015 = vpack.c.b16 %v1004, %v1003
      %v1016 = vpack.c.b16 %v1006, %v1005
      %v1017 = vpack.c.b16 %v1008, %v1007
      %v1028 = vsel %vm640, %v962, 0
      %v1031 = vsel %vm640, %v964, 0
      %v1034 = vsel %vm640, %v966, 0
      %v1037 = vsel %vm640, %v968, 0
      %1039 = vmatprep.subr.bf16.mxu0 0
      %1040 = vmatpush1.bf16.msra.mxu0 %v1016
      %1041 = vmatprep.subr.bf16.mxu0 0
      %1042 = vmatpush1.bf16.msra.mxu0 %v1015
      %1043 = vmatprep.subr.bf16.mxu0 0
      %1044 = vmatpush1.bf16.msra.mxu0 %v1014
      %1045 = vmatprep.subr.bf16.mxu0 0
      %1046 = vmatpush1.bf16.msra.mxu0 %v1013
      %1047 = vmatprep.subr.bf16.mxu0 0
      %1048 = vmatpush1.bf16.msra.mxu0 %v1012
      %1049 = vmatprep.subr.bf16.mxu0 0
      %1050 = vmatpush1.bf16.msra.mxu0 %v1011
      %1051 = vmatprep.subr.bf16.mxu0 0
      %1052 = vmatpush1.bf16.msra.mxu0 %v1010
      %1053 = vmatprep.subr.bf16.mxu0 0
      %1054 = vmatpush1.bf16.msra.mxu0 %v1009
      %1055 = vmatprep.subr.bf16.mxu0 0
      %1056 = vmatpush2.bf16.msra.mxu0 0
      %1057 = vmatprep.subr.bf16.mxu0 0
      %1058 = vmatpush2.bf16.msra.mxu0 0
      %1059 = vmatprep.subr.bf16.mxu0 0
      %1060 = vmatpush2.bf16.msra.mxu0 0
      %1061 = vmatprep.subr.bf16.mxu0 0
      %1062 = vmatpush2.bf16.msra.mxu0 0
      %1063 = vmatprep.subr.bf16.mxu0 0
      %1064 = vmatpush2.bf16.msra.mxu0 0
      %1065 = vmatprep.subr.bf16.mxu0 0
      %1066 = vmatpush2.bf16.msra.mxu0 0
      %1067 = vmatprep.subr.bf16.mxu0 0
      %1068 = vmatpush2.bf16.msra.mxu0 0
      %1069 = vmatprep.subr.bf16.mxu0 0
      %1070 = vmatpush2.bf16.msra.mxu0 %v1017
      %1071 = vmatprep.mubr.bf16.mxu0 %v1028
      %1072 = vmatmul.mubr.bf16.gmra.mxu0 %v961
      %v1073 = vpop.f32.mrf.mxu0
      %v1074 = vadd.f32 0.0, %v1073
      %v1075 = vpop.f32.mrf.mxu0
      %v1076 = vpop.f32.mrf.mxu0
      %v1077 = vadd.f32 0.0, %v1076
      %v1078 = vpop.f32.mrf.mxu0
      %1079 = vmatprep.mubr.bf16.mxu0 %v1031
      %1080 = vmatmul.mubr.bf16.gmra.mxu0 %v963
      %v1081 = vpop.f32.mrf.mxu0
      %v1082 = vadd.f32 0.0, %v1081
      %v1083 = vpop.f32.mrf.mxu0
      %v1084 = vpop.f32.mrf.mxu0
      %v1085 = vadd.f32 0.0, %v1084
      %v1086 = vpop.f32.mrf.mxu0
      %1087 = vmatprep.mubr.bf16.mxu0 %v1034
      %1088 = vmatmul.mubr.bf16.gmra.mxu0 %v965
      %v1089 = vpop.f32.mrf.mxu0
      %v1090 = vadd.f32 0.0, %v1089
      %v1091 = vpop.f32.mrf.mxu0
      %v1092 = vpop.f32.mrf.mxu0
      %v1093 = vadd.f32 0.0, %v1092
      %v1094 = vpop.f32.mrf.mxu0
      %1095 = vmatprep.mubr.bf16.mxu0 %v1037
      %1096 = vmatmul.mubr.bf16.gmra.mxu0 %v967
      %v1097 = vpop.f32.mrf.mxu0
      %v1098 = vadd.f32 0.0, %v1097
      %v1099 = vpop.f32.mrf.mxu0
      %v1100 = vpop.f32.mrf.mxu0
      %v1101 = vadd.f32 0.0, %v1100
      %v1102 = vpop.f32.mrf.mxu0
      %1103 = vdwg.mxu0
      %v1104 = vadd.f32 %v718, %v1074
      %v1105 = vadd.f32 %v719, %v1077
      %v1106 = vadd.f32 %v720, %v1082
      %v1107 = vadd.f32 %v721, %v1085
      %v1108 = vadd.f32 %v722, %v1090
      %v1109 = vadd.f32 %v723, %v1093
      %v1110 = vadd.f32 %v724, %v1098
      %v1111 = vadd.f32 %v725, %v1101
      %v1113 = vunpack.c.l.b16 %v306
      %v1114 = vpack.c.b16 %v1113, %v1113
      %1115 = vrot.lane.b32.xlu0 %v1114, 48
      %v1116 = vpop.permute.xlu0 %1115
      %v1119 = vunpack.c.l.b16 %v296
      %v1120 = vunpack.c.l.b16 %v297
      %v1121 = vpack.c.b16 %v1120, %v1119
      %v1123 = vshrl.u32 %v1121, 16
      %v1125 = vshll.u32 %v1121, 16
      %v1127 = vrot.slane %v1125, 1
      %v1128 = vor.u32 %v1123, %v1127
      %1129 = vrot.lane.b32.xlu0 %v1128, 96
      %v1130 = vpop.permute.xlu0 %1129
      %v1133 = vsel %vm490, %v296, %v1116
      %v1135 = vsel %vm515, %v1133, %v1130
      %v1137 = vunpack.c.l.b16 %v1135
      %v1138 = vunpack.c.l.b16 %v1130
      %s1139 = scalar_lea.vmem %s1, 144
      %v1140 = vld [vmem:[%s1139] sm:$0xf]
      %v1141 = vld [vmem:[%s1139 + $0x4] sm:$0xf]
      %v1142 = vld [vmem:[%s1139 + $0x8] sm:$0xf]
      %v1143 = vld [vmem:[%s1139 + $0xc] sm:$0xf]
      %v1144 = vld [vmem:[%s1139 + $0x10] sm:$0xf]
      %v1145 = vld [vmem:[%s1139 + $0x14] sm:$0xf]
      %v1146 = vld [vmem:[%s1139 + $0x18] sm:$0xf]
      %v1147 = vld [vmem:[%s1139 + $0x1c] sm:$0xf]
      %v1148 = vld [vmem:[%s1139 + $0x20] sm:$0xf]
      %v1149 = vld [vmem:[%s1139 + $0x24] sm:$0xf]
      %v1150 = vld [vmem:[%s1139 + $0x28] sm:$0xf]
      %v1151 = vld [vmem:[%s1139 + $0x2c] sm:$0xf]
      %v1152 = vld [vmem:[%s1139 + $0x30] sm:$0xf]
      %v1153 = vld [vmem:[%s1139 + $0x34] sm:$0xf]
      %v1154 = vld [vmem:[%s1139 + $0x38] sm:$0xf]
      %v1155 = vld [vmem:[%s1139 + $0x3c] sm:$0xf]
      %v1156 = vld [vmem:[%s1139 + $0x40] sm:$0xf]
      %v1157 = vld [vmem:[%s1139 + $0x44] sm:$0xf]
      %v1158 = vpack.c.b16 %v544, %v542
      %v1159 = vpack.c.b16 %v545, %v543
      %v1160 = vpack.c.b16 %v548, %v546
      %v1161 = vpack.c.b16 %v549, %v547
      %v1162 = vpack.c.b16 %v552, %v550
      %v1163 = vpack.c.b16 %v553, %v551
      %v1164 = vpack.c.b16 %v1137, %v554
      %v1165 = vpack.c.b16 %v1138, %v555
      %v1188 = vunpack.c.l.b16 %v1140
      %v1189 = vunpack.c.l.b16 %v1141
      %v1190 = vunpack.c.l.b16 %v1142
      %v1191 = vunpack.c.l.b16 %v1143
      %v1192 = vunpack.c.l.b16 %v1144
      %v1193 = vunpack.c.l.b16 %v1145
      %v1194 = vunpack.c.l.b16 %v1146
      %v1195 = vunpack.c.l.b16 %v1147
      %v1196 = vunpack.c.l.b16 %v1148
      %v1197 = vunpack.c.l.b16 %v1149
      %v1198 = vunpack.c.l.b16 %v1150
      %v1199 = vunpack.c.l.b16 %v1151
      %v1200 = vunpack.c.l.b16 %v1152
      %v1201 = vunpack.c.l.b16 %v1153
      %v1202 = vunpack.c.l.b16 %v1154
      %v1203 = vunpack.c.l.b16 %v1155
      %v1204 = vunpack.c.l.b16 %v1156
      %v1205 = vunpack.c.l.b16 %v1157
      %v1206 = vpack.c.b16 %v1189, %v1188
      %v1207 = vpack.c.b16 %v1191, %v1190
      %v1208 = vpack.c.b16 %v1193, %v1192
      %v1209 = vpack.c.b16 %v1195, %v1194
      %v1210 = vpack.c.b16 %v1197, %v1196
      %v1211 = vpack.c.b16 %v1199, %v1198
      %v1212 = vpack.c.b16 %v1201, %v1200
      %v1213 = vpack.c.b16 %v1203, %v1202
      %v1214 = vpack.c.b16 %v1205, %v1204
      %v1225 = vsel %vm640, %v1159, 0
      %v1228 = vsel %vm640, %v1161, 0
      %v1231 = vsel %vm640, %v1163, 0
      %v1234 = vsel %vm640, %v1165, 0
      %1236 = vmatprep.subr.bf16.mxu0 0
      %1237 = vmatpush1.bf16.msra.mxu0 %v1213
      %1238 = vmatprep.subr.bf16.mxu0 0
      %1239 = vmatpush1.bf16.msra.mxu0 %v1212
      %1240 = vmatprep.subr.bf16.mxu0 0
      %1241 = vmatpush1.bf16.msra.mxu0 %v1211
      %1242 = vmatprep.subr.bf16.mxu0 0
      %1243 = vmatpush1.bf16.msra.mxu0 %v1210
      %1244 = vmatprep.subr.bf16.mxu0 0
      %1245 = vmatpush1.bf16.msra.mxu0 %v1209
      %1246 = vmatprep.subr.bf16.mxu0 0
      %1247 = vmatpush1.bf16.msra.mxu0 %v1208
      %1248 = vmatprep.subr.bf16.mxu0 0
      %1249 = vmatpush1.bf16.msra.mxu0 %v1207
      %1250 = vmatprep.subr.bf16.mxu0 0
      %1251 = vmatpush1.bf16.msra.mxu0 %v1206
      %1252 = vmatprep.subr.bf16.mxu0 0
      %1253 = vmatpush2.bf16.msra.mxu0 0
      %1254 = vmatprep.subr.bf16.mxu0 0
      %1255 = vmatpush2.bf16.msra.mxu0 0
      %1256 = vmatprep.subr.bf16.mxu0 0
      %1257 = vmatpush2.bf16.msra.mxu0 0
      %1258 = vmatprep.subr.bf16.mxu0 0
      %1259 = vmatpush2.bf16.msra.mxu0 0
      %1260 = vmatprep.subr.bf16.mxu0 0
      %1261 = vmatpush2.bf16.msra.mxu0 0
      %1262 = vmatprep.subr.bf16.mxu0 0
      %1263 = vmatpush2.bf16.msra.mxu0 0
      %1264 = vmatprep.subr.bf16.mxu0 0
      %1265 = vmatpush2.bf16.msra.mxu0 0
      %1266 = vmatprep.subr.bf16.mxu0 0
      %1267 = vmatpush2.bf16.msra.mxu0 %v1214
      %1268 = vmatprep.mubr.bf16.mxu0 %v1225
      %1269 = vmatmul.mubr.bf16.gmra.mxu0 %v1158
      %v1270 = vpop.f32.mrf.mxu0
      %v1271 = vadd.f32 0.0, %v1270
      %v1272 = vpop.f32.mrf.mxu0
      %v1273 = vpop.f32.mrf.mxu0
      %v1274 = vadd.f32 0.0, %v1273
      %v1275 = vpop.f32.mrf.mxu0
      %1276 = vmatprep.mubr.bf16.mxu0 %v1228
      %1277 = vmatmul.mubr.bf16.gmra.mxu0 %v1160
      %v1278 = vpop.f32.mrf.mxu0
      %v1279 = vadd.f32 0.0, %v1278
      %v1280 = vpop.f32.mrf.mxu0
      %v1281 = vpop.f32.mrf.mxu0
      %v1282 = vadd.f32 0.0, %v1281
      %v1283 = vpop.f32.mrf.mxu0
      %1284 = vmatprep.mubr.bf16.mxu0 %v1231
      %1285 = vmatmul.mubr.bf16.gmra.mxu0 %v1162
      %v1286 = vpop.f32.mrf.mxu0
      %v1287 = vadd.f32 0.0, %v1286
      %v1288 = vpop.f32.mrf.mxu0
      %v1289 = vpop.f32.mrf.mxu0
      %v1290 = vadd.f32 0.0, %v1289
      %v1291 = vpop.f32.mrf.mxu0
      %1292 = vmatprep.mubr.bf16.mxu0 %v1234
      %1293 = vmatmul.mubr.bf16.gmra.mxu0 %v1164
      %v1294 = vpop.f32.mrf.mxu0
      %v1295 = vadd.f32 0.0, %v1294
      %v1296 = vpop.f32.mrf.mxu0
      %v1297 = vpop.f32.mrf.mxu0
      %v1298 = vadd.f32 0.0, %v1297
      %v1299 = vpop.f32.mrf.mxu0
      %1300 = vdwg.mxu0
      %v1301 = vadd.f32 %v1104, %v1271
      %v1302 = vadd.f32 %v1105, %v1274
      %v1303 = vadd.f32 %v1106, %v1279
      %v1304 = vadd.f32 %v1107, %v1282
      %v1305 = vadd.f32 %v1108, %v1287
      %v1306 = vadd.f32 %v1109, %v1290
      %v1307 = vadd.f32 %v1110, %v1295
      %v1308 = vadd.f32 %v1111, %v1298
      %v1309 = vmul.f32 %v1301, 0.01
      %v1310 = vmul.f32 %v1302, 0.01
      %v1311 = vmul.f32 %v1303, 0.01
      %v1312 = vmul.f32 %v1304, 0.01
      %v1313 = vmul.f32 %v1305, 0.01
      %v1314 = vmul.f32 %v1306, 0.01
      %v1315 = vmul.f32 %v1307, 0.01
      %v1316 = vmul.f32 %v1308, 0.01
      %v1317 = vmax.f32 %v1301, %v1309
      %v1318 = vmax.f32 %v1302, %v1310
      %v1319 = vmax.f32 %v1303, %v1311
      %v1320 = vmax.f32 %v1304, %v1312
      %v1321 = vmax.f32 %v1305, %v1313
      %v1322 = vmax.f32 %v1306, %v1314
      %v1323 = vmax.f32 %v1307, %v1315
      %v1324 = vmax.f32 %v1308, %v1316
      %v1325 = vpack.c.bf16 %v1317, %v1317
      %v1326 = vpack.c.bf16 %v1318, %v1318
      %v1327 = vpack.c.bf16 %v1319, %v1319
      %v1328 = vpack.c.bf16 %v1320, %v1320
      %v1329 = vpack.c.bf16 %v1321, %v1321
      %v1330 = vpack.c.bf16 %v1322, %v1322
      %v1331 = vpack.c.bf16 %v1323, %v1323
      %v1332 = vpack.c.bf16 %v1324, %v1324
      %v1334 = vshrl.u32 0, 16
      %v1336 = vrot.slane %v1334, 7
      %v1337 = vshll.u32 0, 16
      %v1339 = vor.u32 %v1336, %v1337
      %v1341 = vshrl.u32 %v1325, 16
      %v1343 = vrot.slane %v1341, 7
      %v1344 = vshll.u32 %v1325, 16
      %v1346 = vor.u32 %v1343, %v1344
      %v1348 = vshrl.u32 %v1326, 16
      %v1350 = vrot.slane %v1348, 7
      %v1351 = vshll.u32 %v1326, 16
      %v1353 = vor.u32 %v1350, %v1351
      %v1355 = vshrl.u32 %v1327, 16
      %v1357 = vrot.slane %v1355, 7
      %v1358 = vshll.u32 %v1327, 16
      %v1360 = vor.u32 %v1357, %v1358
      %v1362 = vshrl.u32 %v1328, 16
      %v1364 = vrot.slane %v1362, 7
      %v1365 = vshll.u32 %v1328, 16
      %v1367 = vor.u32 %v1364, %v1365
      %v1369 = vshrl.u32 %v1329, 16
      %v1371 = vrot.slane %v1369, 7
      %v1372 = vshll.u32 %v1329, 16
      %v1374 = vor.u32 %v1371, %v1372
      %v1376 = vshrl.u32 %v1330, 16
      %v1378 = vrot.slane %v1376, 7
      %v1379 = vshll.u32 %v1330, 16
      %v1381 = vor.u32 %v1378, %v1379
      %v1383 = vshrl.u32 %v1331, 16
      %v1385 = vrot.slane %v1383, 7
      %v1386 = vshll.u32 %v1331, 16
      %v1388 = vor.u32 %v1385, %v1386
      %v1390 = vshrl.u32 %v1332, 16
      %v1392 = vrot.slane %v1390, 7
      %v1393 = vshll.u32 %v1332, 16
      %v1395 = vor.u32 %v1392, %v1393
      %vm1405 = vcmask 1040384
      %vm1406 = vsmask.f32 256
      %vm1407 = vmand %vm1405, %vm1406
      %v1408 = vsel %vm1407, 0, %v1339
      %v1409 = vsel %vm1407, 0, %v1346
      %v1410 = vsel %vm1407, 0, %v1353
      %v1411 = vsel %vm1407, 0, %v1360
      %v1412 = vsel %vm1407, 0, %v1367
      %v1413 = vsel %vm1407, 0, %v1374
      %v1414 = vsel %vm1407, 0, %v1381
      %v1415 = vsel %vm1407, 0, %v1388
      %v1416 = vsel %vm1407, 0, %v1395
      %vm1417 = vcmask 1044480
      %vm1418 = vsmask.f32 4352
      %vm1419 = vmand %vm1417, %vm1418
      %v1420 = vsel %vm1419, %v1408, 0
      %v1421 = vsel %vm1419, %v1409, 0
      %v1422 = vsel %vm1419, %v1410, 0
      %v1423 = vsel %vm1419, %v1411, 0
      %v1424 = vsel %vm1419, %v1412, 0
      %v1425 = vsel %vm1419, %v1413, 0
      %v1426 = vsel %vm1419, %v1414, 0
      %v1427 = vsel %vm1419, %v1415, 0
      %v1428 = vsel %vm1419, %v1416, 0
      %v1430 = vshrl.u32 %v1420, 16
      %v1432 = vshll.u32 %v1420, 16
      %v1434 = vrot.slane %v1432, 1
      %v1435 = vor.u32 %v1430, %v1434
      %v1437 = vshrl.u32 %v1421, 16
      %v1439 = vshll.u32 %v1421, 16
      %v1441 = vrot.slane %v1439, 1
      %v1442 = vor.u32 %v1437, %v1441
      %v1444 = vshrl.u32 %v1422, 16
      %v1446 = vshll.u32 %v1422, 16
      %v1448 = vrot.slane %v1446, 1
      %v1449 = vor.u32 %v1444, %v1448
      %v1451 = vshrl.u32 %v1423, 16
      %v1453 = vshll.u32 %v1423, 16
      %v1455 = vrot.slane %v1453, 1
      %v1456 = vor.u32 %v1451, %v1455
      %v1458 = vshrl.u32 %v1424, 16
      %v1460 = vshll.u32 %v1424, 16
      %v1462 = vrot.slane %v1460, 1
      %v1463 = vor.u32 %v1458, %v1462
      %v1465 = vshrl.u32 %v1425, 16
      %v1467 = vshll.u32 %v1425, 16
      %v1469 = vrot.slane %v1467, 1
      %v1470 = vor.u32 %v1465, %v1469
      %v1472 = vshrl.u32 %v1426, 16
      %v1474 = vshll.u32 %v1426, 16
      %v1476 = vrot.slane %v1474, 1
      %v1477 = vor.u32 %v1472, %v1476
      %v1479 = vshrl.u32 %v1427, 16
      %v1481 = vshll.u32 %v1427, 16
      %v1483 = vrot.slane %v1481, 1
      %v1484 = vor.u32 %v1479, %v1483
      %v1486 = vshrl.u32 %v1428, 16
      %v1488 = vshll.u32 %v1428, 16
      %v1490 = vrot.slane %v1488, 1
      %v1491 = vor.u32 %v1486, %v1490
      %1492 = vrot.lane.b32.xlu0 %v1435, 64
      %v1493 = vpop.permute.xlu0 %1492
      %1494 = vrot.lane.b32.xlu0 %v1442, 64
      %v1495 = vpop.permute.xlu0 %1494
      %1496 = vrot.lane.b32.xlu0 %v1449, 64
      %v1497 = vpop.permute.xlu0 %1496
      %1498 = vrot.lane.b32.xlu0 %v1456, 64
      %v1499 = vpop.permute.xlu0 %1498
      %1500 = vrot.lane.b32.xlu0 %v1463, 64
      %v1501 = vpop.permute.xlu0 %1500
      %1502 = vrot.lane.b32.xlu0 %v1470, 64
      %v1503 = vpop.permute.xlu0 %1502
      %1504 = vrot.lane.b32.xlu0 %v1477, 64
      %v1505 = vpop.permute.xlu0 %1504
      %1506 = vrot.lane.b32.xlu0 %v1484, 64
      %v1507 = vpop.permute.xlu0 %1506
      %1508 = vrot.lane.b32.xlu0 %v1491, 64
      %v1509 = vpop.permute.xlu0 %1508
      %v1519 = vrot.slane %v1420, 1
      %v1520 = vrot.slane %v1421, 1
      %v1521 = vrot.slane %v1422, 1
      %v1522 = vrot.slane %v1423, 1
      %v1523 = vrot.slane %v1424, 1
      %v1524 = vrot.slane %v1425, 1
      %v1525 = vrot.slane %v1426, 1
      %v1526 = vrot.slane %v1427, 1
      %v1527 = vrot.slane %v1428, 1
      %vm1528 = vcmask 523264
      %v1530 = vsel %vm1528, %v1420, %v1493
      %v1532 = vsel %vm1528, %v1421, %v1495
      %v1534 = vsel %vm1528, %v1422, %v1497
      %v1536 = vsel %vm1528, %v1423, %v1499
      %v1538 = vsel %vm1528, %v1424, %v1501
      %v1540 = vsel %vm1528, %v1425, %v1503
      %v1542 = vsel %vm1528, %v1426, %v1505
      %v1544 = vsel %vm1528, %v1427, %v1507
      %v1546 = vsel %vm1528, %v1428, %v1509
      %v1547 = vld [vmem:[%s4] sm:$0x1]
      %v1549 = vlaneseq
      %v1550 = vshrl.u32 %v1549, 7
      %v1551 = vsub.s32 0, %v1550
      %v1552 = vrot.slane %v1547, %v1551
      %v1562 = vunpack.c.l.b16 %v1530
      %v1563 = vunpack.c.l.b16 %v1519
      %v1564 = vunpack.c.l.b16 %v1532
      %v1565 = vunpack.c.l.b16 %v1520
      %v1566 = vunpack.c.l.b16 %v1534
      %v1567 = vunpack.c.l.b16 %v1521
      %v1568 = vunpack.c.l.b16 %v1536
      %v1569 = vunpack.c.l.b16 %v1522
      %v1570 = vunpack.c.l.b16 %v1538
      %v1571 = vunpack.c.l.b16 %v1523
      %v1572 = vunpack.c.l.b16 %v1540
      %v1573 = vunpack.c.l.b16 %v1524
      %v1574 = vunpack.c.l.b16 %v1542
      %v1575 = vunpack.c.l.b16 %v1525
      %v1576 = vunpack.c.l.b16 %v1544
      %v1577 = vunpack.c.l.b16 %v1526
      %v1578 = vld [vmem:[%s3] sm:$0xf]
      %v1579 = vld [vmem:[%s3 + $0x4] sm:$0xf]
      %v1580 = vld [vmem:[%s3 + $0x8] sm:$0xf]
      %v1581 = vld [vmem:[%s3 + $0xc] sm:$0xf]
      %v1582 = vld [vmem:[%s3 + $0x10] sm:$0xf]
      %v1583 = vld [vmem:[%s3 + $0x14] sm:$0xf]
      %v1584 = vld [vmem:[%s3 + $0x18] sm:$0xf]
      %v1585 = vld [vmem:[%s3 + $0x1c] sm:$0xf]
      %v1586 = vld [vmem:[%s3 + $0x20] sm:$0xf]
      %v1587 = vld [vmem:[%s3 + $0x24] sm:$0xf]
      %v1588 = vld [vmem:[%s3 + $0x28] sm:$0xf]
      %v1589 = vld [vmem:[%s3 + $0x2c] sm:$0xf]
      %v1590 = vld [vmem:[%s3 + $0x30] sm:$0xf]
      %v1591 = vld [vmem:[%s3 + $0x34] sm:$0xf]
      %v1592 = vld [vmem:[%s3 + $0x38] sm:$0xf]
      %v1593 = vld [vmem:[%s3 + $0x3c] sm:$0xf]
      %v1594 = vld [vmem:[%s3 + $0x40] sm:$0xf]
      %v1595 = vld [vmem:[%s3 + $0x44] sm:$0xf]
      %v1596 = vld [vmem:[%s3 + $0x48] sm:$0xf]
      %v1597 = vld [vmem:[%s3 + $0x4c] sm:$0xf]
      %v1598 = vld [vmem:[%s3 + $0x50] sm:$0xf]
      %v1599 = vld [vmem:[%s3 + $0x54] sm:$0xf]
      %v1600 = vld [vmem:[%s3 + $0x58] sm:$0xf]
      %v1601 = vld [vmem:[%s3 + $0x5c] sm:$0xf]
      %v1602 = vpack.c.b16 %v1564, %v1562
      %v1603 = vpack.c.b16 %v1565, %v1563
      %v1604 = vpack.c.b16 %v1568, %v1566
      %v1605 = vpack.c.b16 %v1569, %v1567
      %v1606 = vpack.c.b16 %v1572, %v1570
      %v1607 = vpack.c.b16 %v1573, %v1571
      %v1608 = vpack.c.b16 %v1576, %v1574
      %v1609 = vpack.c.b16 %v1577, %v1575
      %v1638 = vunpack.c.l.b16 %v1578
      %v1639 = vunpack.c.l.b16 %v1579
      %v1640 = vunpack.c.l.b16 %v1580
      %v1641 = vunpack.c.l.b16 %v1581
      %v1642 = vunpack.c.l.b16 %v1582
      %v1643 = vunpack.c.l.b16 %v1583
      %v1644 = vunpack.c.l.b16 %v1584
      %v1645 = vunpack.c.l.b16 %v1585
      %v1646 = vunpack.c.l.b16 %v1586
      %v1647 = vunpack.c.l.b16 %v1587
      %v1648 = vunpack.c.l.b16 %v1588
      %v1649 = vunpack.c.l.b16 %v1589
      %v1650 = vunpack.c.l.b16 %v1590
      %v1651 = vunpack.c.l.b16 %v1591
      %v1652 = vunpack.c.l.b16 %v1592
      %v1653 = vunpack.c.l.b16 %v1593
      %v1654 = vunpack.c.l.b16 %v1594
      %v1655 = vunpack.c.l.b16 %v1595
      %v1656 = vunpack.c.l.b16 %v1596
      %v1657 = vunpack.c.l.b16 %v1597
      %v1658 = vunpack.c.l.b16 %v1598
      %v1659 = vunpack.c.l.b16 %v1599
      %v1660 = vunpack.c.l.b16 %v1600
      %v1661 = vunpack.c.l.b16 %v1601
      %v1662 = vpack.c.b16 %v1639, %v1638
      %v1663 = vpack.c.b16 %v1641, %v1640
      %v1664 = vpack.c.b16 %v1643, %v1642
      %v1665 = vpack.c.b16 %v1645, %v1644
      %v1666 = vpack.c.b16 %v1647, %v1646
      %v1667 = vpack.c.b16 %v1649, %v1648
      %v1668 = vpack.c.b16 %v1651, %v1650
      %v1669 = vpack.c.b16 %v1653, %v1652
      %v1670 = vpack.c.b16 %v1655, %v1654
      %v1671 = vpack.c.b16 %v1657, %v1656
      %v1672 = vpack.c.b16 %v1659, %v1658
      %v1673 = vpack.c.b16 %v1661, %v1660
      %v1687 = vsel %vm1528, %v1603, 0
      %v1690 = vsel %vm1528, %v1605, 0
      %v1693 = vsel %vm1528, %v1607, 0
      %v1696 = vsel %vm1528, %v1609, 0
      %1698 = vmatprep.subr.bf16.mxu0 0
      %1699 = vmatpush1.bf16.msra.mxu0 %v1669
      %1700 = vmatprep.subr.bf16.mxu0 0
      %1701 = vmatpush1.bf16.msra.mxu0 %v1668
      %1702 = vmatprep.subr.bf16.mxu0 0
      %1703 = vmatpush1.bf16.msra.mxu0 %v1667
      %1704 = vmatprep.subr.bf16.mxu0 0
      %1705 = vmatpush1.bf16.msra.mxu0 %v1666
      %1706 = vmatprep.subr.bf16.mxu0 0
      %1707 = vmatpush1.bf16.msra.mxu0 %v1665
      %1708 = vmatprep.subr.bf16.mxu0 0
      %1709 = vmatpush1.bf16.msra.mxu0 %v1664
      %1710 = vmatprep.subr.bf16.mxu0 0
      %1711 = vmatpush1.bf16.msra.mxu0 %v1663
      %1712 = vmatprep.subr.bf16.mxu0 0
      %1713 = vmatpush1.bf16.msra.mxu0 %v1662
      %1714 = vmatprep.subr.bf16.mxu0 0
      %1715 = vmatpush2.bf16.msra.mxu0 0
      %1716 = vmatprep.subr.bf16.mxu0 0
      %1717 = vmatpush2.bf16.msra.mxu0 0
      %1718 = vmatprep.subr.bf16.mxu0 0
      %1719 = vmatpush2.bf16.msra.mxu0 0
      %1720 = vmatprep.subr.bf16.mxu0 0
      %1721 = vmatpush2.bf16.msra.mxu0 0
      %1722 = vmatprep.subr.bf16.mxu0 0
      %1723 = vmatpush2.bf16.msra.mxu0 %v1673
      %1724 = vmatprep.subr.bf16.mxu0 0
      %1725 = vmatpush2.bf16.msra.mxu0 %v1672
      %1726 = vmatprep.subr.bf16.mxu0 0
      %1727 = vmatpush2.bf16.msra.mxu0 %v1671
      %1728 = vmatprep.subr.bf16.mxu0 0
      %1729 = vmatpush2.bf16.msra.mxu0 %v1670
      %1730 = vmatprep.mubr.bf16.mxu0 %v1687
      %1731 = vmatmul.mubr.bf16.gmra.mxu0 %v1602
      %v1732 = vpop.f32.mrf.mxu0
      %v1733 = vadd.f32 0.0, %v1732
      %v1734 = vpop.f32.mrf.mxu0
      %v1735 = vpop.f32.mrf.mxu0
      %v1736 = vadd.f32 0.0, %v1735
      %v1737 = vpop.f32.mrf.mxu0
      %1738 = vmatprep.mubr.bf16.mxu0 %v1690
      %1739 = vmatmul.mubr.bf16.gmra.mxu0 %v1604
      %v1740 = vpop.f32.mrf.mxu0
      %v1741 = vadd.f32 0.0, %v1740
      %v1742 = vpop.f32.mrf.mxu0
      %v1743 = vpop.f32.mrf.mxu0
      %v1744 = vadd.f32 0.0, %v1743
      %v1745 = vpop.f32.mrf.mxu0
      %1746 = vmatprep.mubr.bf16.mxu0 %v1693
      %1747 = vmatmul.mubr.bf16.gmra.mxu0 %v1606
      %v1748 = vpop.f32.mrf.mxu0
      %v1749 = vadd.f32 0.0, %v1748
      %v1750 = vpop.f32.mrf.mxu0
      %v1751 = vpop.f32.mrf.mxu0
      %v1752 = vadd.f32 0.0, %v1751
      %v1753 = vpop.f32.mrf.mxu0
      %1754 = vmatprep.mubr.bf16.mxu0 %v1696
      %1755 = vmatmul.mubr.bf16.gmra.mxu0 %v1608
      %v1756 = vpop.f32.mrf.mxu0
      %v1757 = vadd.f32 0.0, %v1756
      %v1758 = vpop.f32.mrf.mxu0
      %v1759 = vpop.f32.mrf.mxu0
      %v1760 = vadd.f32 0.0, %v1759
      %v1761 = vpop.f32.mrf.mxu0
      %1762 = vdwg.mxu0
      %v1763 = vadd.f32 %v1552, %v1733
      %v1764 = vadd.f32 %v1552, %v1736
      %v1765 = vadd.f32 %v1552, %v1741
      %v1766 = vadd.f32 %v1552, %v1744
      %v1767 = vadd.f32 %v1552, %v1749
      %v1768 = vadd.f32 %v1552, %v1752
      %v1769 = vadd.f32 %v1552, %v1757
      %v1770 = vadd.f32 %v1552, %v1760
      %v1772 = vunpack.c.l.b16 %v1546
      %v1773 = vunpack.c.l.b16 %v1527
      %s1774 = scalar_lea.vmem %s3, 96
      %v1775 = vld [vmem:[%s1774] sm:$0xf]
      %v1776 = vld [vmem:[%s1774 + $0x4] sm:$0xf]
      %v1777 = vld [vmem:[%s1774 + $0x8] sm:$0xf]
      %v1778 = vld [vmem:[%s1774 + $0xc] sm:$0xf]
      %v1779 = vld [vmem:[%s1774 + $0x10] sm:$0xf]
      %v1780 = vld [vmem:[%s1774 + $0x14] sm:$0xf]
      %v1781 = vld [vmem:[%s1774 + $0x18] sm:$0xf]
      %v1782 = vld [vmem:[%s1774 + $0x1c] sm:$0xf]
      %v1783 = vld [vmem:[%s1774 + $0x20] sm:$0xf]
      %v1784 = vld [vmem:[%s1774 + $0x24] sm:$0xf]
      %v1785 = vld [vmem:[%s1774 + $0x28] sm:$0xf]
      %v1786 = vld [vmem:[%s1774 + $0x2c] sm:$0xf]
      %v1787 = vld [vmem:[%s1774 + $0x30] sm:$0xf]
      %v1788 = vld [vmem:[%s1774 + $0x34] sm:$0xf]
      %v1789 = vld [vmem:[%s1774 + $0x38] sm:$0xf]
      %v1790 = vld [vmem:[%s1774 + $0x3c] sm:$0xf]
      %v1791 = vld [vmem:[%s1774 + $0x40] sm:$0xf]
      %v1792 = vld [vmem:[%s1774 + $0x44] sm:$0xf]
      %v1793 = vld [vmem:[%s1774 + $0x48] sm:$0xf]
      %v1794 = vld [vmem:[%s1774 + $0x4c] sm:$0xf]
      %v1795 = vld [vmem:[%s1774 + $0x50] sm:$0xf]
      %v1796 = vld [vmem:[%s1774 + $0x54] sm:$0xf]
      %v1797 = vld [vmem:[%s1774 + $0x58] sm:$0xf]
      %v1798 = vld [vmem:[%s1774 + $0x5c] sm:$0xf]
      %v1799 = vpack.c.b16 %v1566, %v1564
      %v1800 = vpack.c.b16 %v1567, %v1565
      %v1801 = vpack.c.b16 %v1570, %v1568
      %v1802 = vpack.c.b16 %v1571, %v1569
      %v1803 = vpack.c.b16 %v1574, %v1572
      %v1804 = vpack.c.b16 %v1575, %v1573
      %v1805 = vpack.c.b16 %v1772, %v1576
      %v1806 = vpack.c.b16 %v1773, %v1577
      %v1835 = vunpack.c.l.b16 %v1775
      %v1836 = vunpack.c.l.b16 %v1776
      %v1837 = vunpack.c.l.b16 %v1777
      %v1838 = vunpack.c.l.b16 %v1778
      %v1839 = vunpack.c.l.b16 %v1779
      %v1840 = vunpack.c.l.b16 %v1780
      %v1841 = vunpack.c.l.b16 %v1781
      %v1842 = vunpack.c.l.b16 %v1782
      %v1843 = vunpack.c.l.b16 %v1783
      %v1844 = vunpack.c.l.b16 %v1784
      %v1845 = vunpack.c.l.b16 %v1785
      %v1846 = vunpack.c.l.b16 %v1786
      %v1847 = vunpack.c.l.b16 %v1787
      %v1848 = vunpack.c.l.b16 %v1788
      %v1849 = vunpack.c.l.b16 %v1789
      %v1850 = vunpack.c.l.b16 %v1790
      %v1851 = vunpack.c.l.b16 %v1791
      %v1852 = vunpack.c.l.b16 %v1792
      %v1853 = vunpack.c.l.b16 %v1793
      %v1854 = vunpack.c.l.b16 %v1794
      %v1855 = vunpack.c.l.b16 %v1795
      %v1856 = vunpack.c.l.b16 %v1796
      %v1857 = vunpack.c.l.b16 %v1797
      %v1858 = vunpack.c.l.b16 %v1798
      %v1859 = vpack.c.b16 %v1836, %v1835
      %v1860 = vpack.c.b16 %v1838, %v1837
      %v1861 = vpack.c.b16 %v1840, %v1839
      %v1862 = vpack.c.b16 %v1842, %v1841
      %v1863 = vpack.c.b16 %v1844, %v1843
      %v1864 = vpack.c.b16 %v1846, %v1845
      %v1865 = vpack.c.b16 %v1848, %v1847
      %v1866 = vpack.c.b16 %v1850, %v1849
      %v1867 = vpack.c.b16 %v1852, %v1851
      %v1868 = vpack.c.b16 %v1854, %v1853
      %v1869 = vpack.c.b16 %v1856, %v1855
      %v1870 = vpack.c.b16 %v1858, %v1857
      %v1884 = vsel %vm1528, %v1800, 0
      %v1887 = vsel %vm1528, %v1802, 0
      %v1890 = vsel %vm1528, %v1804, 0
      %v1893 = vsel %vm1528, %v1806, 0
      %1895 = vmatprep.subr.bf16.mxu0 0
      %1896 = vmatpush1.bf16.msra.mxu0 %v1866
      %1897 = vmatprep.subr.bf16.mxu0 0
      %1898 = vmatpush1.bf16.msra.mxu0 %v1865
      %1899 = vmatprep.subr.bf16.mxu0 0
      %1900 = vmatpush1.bf16.msra.mxu0 %v1864
      %1901 = vmatprep.subr.bf16.mxu0 0
      %1902 = vmatpush1.bf16.msra.mxu0 %v1863
      %1903 = vmatprep.subr.bf16.mxu0 0
      %1904 = vmatpush1.bf16.msra.mxu0 %v1862
      %1905 = vmatprep.subr.bf16.mxu0 0
      %1906 = vmatpush1.bf16.msra.mxu0 %v1861
      %1907 = vmatprep.subr.bf16.mxu0 0
      %1908 = vmatpush1.bf16.msra.mxu0 %v1860
      %1909 = vmatprep.subr.bf16.mxu0 0
      %1910 = vmatpush1.bf16.msra.mxu0 %v1859
      %1911 = vmatprep.subr.bf16.mxu0 0
      %1912 = vmatpush2.bf16.msra.mxu0 0
      %1913 = vmatprep.subr.bf16.mxu0 0
      %1914 = vmatpush2.bf16.msra.mxu0 0
      %1915 = vmatprep.subr.bf16.mxu0 0
      %1916 = vmatpush2.bf16.msra.mxu0 0
      %1917 = vmatprep.subr.bf16.mxu0 0
      %1918 = vmatpush2.bf16.msra.mxu0 0
      %1919 = vmatprep.subr.bf16.mxu0 0
      %1920 = vmatpush2.bf16.msra.mxu0 %v1870
      %1921 = vmatprep.subr.bf16.mxu0 0
      %1922 = vmatpush2.bf16.msra.mxu0 %v1869
      %1923 = vmatprep.subr.bf16.mxu0 0
      %1924 = vmatpush2.bf16.msra.mxu0 %v1868
      %1925 = vmatprep.subr.bf16.mxu0 0
      %1926 = vmatpush2.bf16.msra.mxu0 %v1867
      %1927 = vmatprep.mubr.bf16.mxu0 %v1884
      %1928 = vmatmul.mubr.bf16.gmra.mxu0 %v1799
      %v1929 = vpop.f32.mrf.mxu0
      %v1930 = vadd.f32 0.0, %v1929
      %v1931 = vpop.f32.mrf.mxu0
      %v1932 = vpop.f32.mrf.mxu0
      %v1933 = vadd.f32 0.0, %v1932
      %v1934 = vpop.f32.mrf.mxu0
      %1935 = vmatprep.mubr.bf16.mxu0 %v1887
      %1936 = vmatmul.mubr.bf16.gmra.mxu0 %v1801
      %v1937 = vpop.f32.mrf.mxu0
      %v1938 = vadd.f32 0.0, %v1937
      %v1939 = vpop.f32.mrf.mxu0
      %v1940 = vpop.f32.mrf.mxu0
      %v1941 = vadd.f32 0.0, %v1940
      %v1942 = vpop.f32.mrf.mxu0
      %1943 = vmatprep.mubr.bf16.mxu0 %v1890
      %1944 = vmatmul.mubr.bf16.gmra.mxu0 %v1803
      %v1945 = vpop.f32.mrf.mxu0
      %v1946 = vadd.f32 0.0, %v1945
      %v1947 = vpop.f32.mrf.mxu0
      %v1948 = vpop.f32.mrf.mxu0
      %v1949 = vadd.f32 0.0, %v1948
      %v1950 = vpop.f32.mrf.mxu0
      %1951 = vmatprep.mubr.bf16.mxu0 %v1893
      %1952 = vmatmul.mubr.bf16.gmra.mxu0 %v1805
      %v1953 = vpop.f32.mrf.mxu0
      %v1954 = vadd.f32 0.0, %v1953
      %v1955 = vpop.f32.mrf.mxu0
      %v1956 = vpop.f32.mrf.mxu0
      %v1957 = vadd.f32 0.0, %v1956
      %v1958 = vpop.f32.mrf.mxu0
      %1959 = vdwg.mxu0
      %v1960 = vadd.f32 %v1763, %v1930
      %v1961 = vadd.f32 %v1764, %v1933
      %v1962 = vadd.f32 %v1765, %v1938
      %v1963 = vadd.f32 %v1766, %v1941
      %v1964 = vadd.f32 %v1767, %v1946
      %v1965 = vadd.f32 %v1768, %v1949
      %v1966 = vadd.f32 %v1769, %v1954
      %v1967 = vadd.f32 %v1770, %v1957
      %s1968 = scalar_lea.vmem %s3, 192
      %v1969 = vld [vmem:[%s1968] sm:$0xf]
      %v1970 = vld [vmem:[%s1968 + $0x4] sm:$0xf]
      %v1971 = vld [vmem:[%s1968 + $0x8] sm:$0xf]
      %v1972 = vld [vmem:[%s1968 + $0xc] sm:$0xf]
      %v1973 = vld [vmem:[%s1968 + $0x10] sm:$0xf]
      %v1974 = vld [vmem:[%s1968 + $0x14] sm:$0xf]
      %v1975 = vld [vmem:[%s1968 + $0x18] sm:$0xf]
      %v1976 = vld [vmem:[%s1968 + $0x1c] sm:$0xf]
      %v1977 = vld [vmem:[%s1968 + $0x20] sm:$0xf]
      %v1978 = vld [vmem:[%s1968 + $0x24] sm:$0xf]
      %v1979 = vld [vmem:[%s1968 + $0x28] sm:$0xf]
      %v1980 = vld [vmem:[%s1968 + $0x2c] sm:$0xf]
      %v1981 = vld [vmem:[%s1968 + $0x30] sm:$0xf]
      %v1982 = vld [vmem:[%s1968 + $0x34] sm:$0xf]
      %v1983 = vld [vmem:[%s1968 + $0x38] sm:$0xf]
      %v1984 = vld [vmem:[%s1968 + $0x3c] sm:$0xf]
      %v1985 = vld [vmem:[%s1968 + $0x40] sm:$0xf]
      %v1986 = vld [vmem:[%s1968 + $0x44] sm:$0xf]
      %v1987 = vld [vmem:[%s1968 + $0x48] sm:$0xf]
      %v1988 = vld [vmem:[%s1968 + $0x4c] sm:$0xf]
      %v1989 = vld [vmem:[%s1968 + $0x50] sm:$0xf]
      %v1990 = vld [vmem:[%s1968 + $0x54] sm:$0xf]
      %v1991 = vld [vmem:[%s1968 + $0x58] sm:$0xf]
      %v1992 = vld [vmem:[%s1968 + $0x5c] sm:$0xf]
      %v1993 = vpack.c.b16 %v1562, %v1772
      %v1994 = vpack.c.b16 %v1563, %v1773
      %v2020 = vunpack.c.l.b16 %v1969
      %v2021 = vunpack.c.l.b16 %v1970
      %v2022 = vunpack.c.l.b16 %v1971
      %v2023 = vunpack.c.l.b16 %v1972
      %v2024 = vunpack.c.l.b16 %v1973
      %v2025 = vunpack.c.l.b16 %v1974
      %v2026 = vunpack.c.l.b16 %v1975
      %v2027 = vunpack.c.l.b16 %v1976
      %v2028 = vunpack.c.l.b16 %v1977
      %v2029 = vunpack.c.l.b16 %v1978
      %v2030 = vunpack.c.l.b16 %v1979
      %v2031 = vunpack.c.l.b16 %v1980
      %v2032 = vunpack.c.l.b16 %v1981
      %v2033 = vunpack.c.l.b16 %v1982
      %v2034 = vunpack.c.l.b16 %v1983
      %v2035 = vunpack.c.l.b16 %v1984
      %v2036 = vunpack.c.l.b16 %v1985
      %v2037 = vunpack.c.l.b16 %v1986
      %v2038 = vunpack.c.l.b16 %v1987
      %v2039 = vunpack.c.l.b16 %v1988
      %v2040 = vunpack.c.l.b16 %v1989
      %v2041 = vunpack.c.l.b16 %v1990
      %v2042 = vunpack.c.l.b16 %v1991
      %v2043 = vunpack.c.l.b16 %v1992
      %v2044 = vpack.c.b16 %v2021, %v2020
      %v2045 = vpack.c.b16 %v2023, %v2022
      %v2046 = vpack.c.b16 %v2025, %v2024
      %v2047 = vpack.c.b16 %v2027, %v2026
      %v2048 = vpack.c.b16 %v2029, %v2028
      %v2049 = vpack.c.b16 %v2031, %v2030
      %v2050 = vpack.c.b16 %v2033, %v2032
      %v2051 = vpack.c.b16 %v2035, %v2034
      %v2052 = vpack.c.b16 %v2037, %v2036
      %v2053 = vpack.c.b16 %v2039, %v2038
      %v2054 = vpack.c.b16 %v2041, %v2040
      %v2055 = vpack.c.b16 %v2043, %v2042
      %v2069 = vsel %vm1528, %v1994, 0
      %2071 = vmatprep.subr.bf16.mxu0 0
      %2072 = vmatpush1.bf16.msra.mxu0 %v2051
      %2073 = vmatprep.subr.bf16.mxu0 0
      %2074 = vmatpush1.bf16.msra.mxu0 %v2050
      %2075 = vmatprep.subr.bf16.mxu0 0
      %2076 = vmatpush1.bf16.msra.mxu0 %v2049
      %2077 = vmatprep.subr.bf16.mxu0 0
      %2078 = vmatpush1.bf16.msra.mxu0 %v2048
      %2079 = vmatprep.subr.bf16.mxu0 0
      %2080 = vmatpush1.bf16.msra.mxu0 %v2047
      %2081 = vmatprep.subr.bf16.mxu0 0
      %2082 = vmatpush1.bf16.msra.mxu0 %v2046
      %2083 = vmatprep.subr.bf16.mxu0 0
      %2084 = vmatpush1.bf16.msra.mxu0 %v2045
      %2085 = vmatprep.subr.bf16.mxu0 0
      %2086 = vmatpush1.bf16.msra.mxu0 %v2044
      %2087 = vmatprep.subr.bf16.mxu0 0
      %2088 = vmatpush2.bf16.msra.mxu0 0
      %2089 = vmatprep.subr.bf16.mxu0 0
      %2090 = vmatpush2.bf16.msra.mxu0 0
      %2091 = vmatprep.subr.bf16.mxu0 0
      %2092 = vmatpush2.bf16.msra.mxu0 0
      %2093 = vmatprep.subr.bf16.mxu0 0
      %2094 = vmatpush2.bf16.msra.mxu0 0
      %2095 = vmatprep.subr.bf16.mxu0 0
      %2096 = vmatpush2.bf16.msra.mxu0 %v2055
      %2097 = vmatprep.subr.bf16.mxu0 0
      %2098 = vmatpush2.bf16.msra.mxu0 %v2054
      %2099 = vmatprep.subr.bf16.mxu0 0
      %2100 = vmatpush2.bf16.msra.mxu0 %v2053
      %2101 = vmatprep.subr.bf16.mxu0 0
      %2102 = vmatpush2.bf16.msra.mxu0 %v2052
      %2103 = vmatprep.mubr.bf16.mxu0 %v1690
      %2104 = vmatmul.mubr.bf16.gmra.mxu0 %v1604
      %v2105 = vpop.f32.mrf.mxu0
      %v2106 = vadd.f32 0.0, %v2105
      %v2107 = vpop.f32.mrf.mxu0
      %v2108 = vpop.f32.mrf.mxu0
      %v2109 = vadd.f32 0.0, %v2108
      %v2110 = vpop.f32.mrf.mxu0
      %2111 = vmatprep.mubr.bf16.mxu0 %v1693
      %2112 = vmatmul.mubr.bf16.gmra.mxu0 %v1606
      %v2113 = vpop.f32.mrf.mxu0
      %v2114 = vadd.f32 0.0, %v2113
      %v2115 = vpop.f32.mrf.mxu0
      %v2116 = vpop.f32.mrf.mxu0
      %v2117 = vadd.f32 0.0, %v2116
      %v2118 = vpop.f32.mrf.mxu0
      %2119 = vmatprep.mubr.bf16.mxu0 %v1696
      %2120 = vmatmul.mubr.bf16.gmra.mxu0 %v1608
      %v2121 = vpop.f32.mrf.mxu0
      %v2122 = vadd.f32 0.0, %v2121
      %v2123 = vpop.f32.mrf.mxu0
      %v2124 = vpop.f32.mrf.mxu0
      %v2125 = vadd.f32 0.0, %v2124
      %v2126 = vpop.f32.mrf.mxu0
      %2127 = vmatprep.mubr.bf16.mxu0 %v2069
      %2128 = vmatmul.mubr.bf16.gmra.mxu0 %v1993
      %v2129 = vpop.f32.mrf.mxu0
      %v2130 = vadd.f32 0.0, %v2129
      %v2131 = vpop.f32.mrf.mxu0
      %v2132 = vpop.f32.mrf.mxu0
      %v2133 = vadd.f32 0.0, %v2132
      %v2134 = vpop.f32.mrf.mxu0
      %2135 = vdwg.mxu0
      %v2136 = vadd.f32 %v1960, %v2106
      %v2137 = vadd.f32 %v1961, %v2109
      %v2138 = vadd.f32 %v1962, %v2114
      %v2139 = vadd.f32 %v1963, %v2117
      %v2140 = vadd.f32 %v1964, %v2122
      %v2141 = vadd.f32 %v1965, %v2125
      %v2142 = vadd.f32 %v1966, %v2130
      %v2143 = vadd.f32 %v1967, %v2133
      %v2144 = vmul.f32 %v2136, 0.01
      %v2145 = vmul.f32 %v2137, 0.01
      %v2146 = vmul.f32 %v2138, 0.01
      %v2147 = vmul.f32 %v2139, 0.01
      %v2148 = vmul.f32 %v2140, 0.01
      %v2149 = vmul.f32 %v2141, 0.01
      %v2150 = vmul.f32 %v2142, 0.01
      %v2151 = vmul.f32 %v2143, 0.01
      %v2152 = vmax.f32 %v2136, %v2144
      %v2153 = vmax.f32 %v2137, %v2145
      %v2154 = vmax.f32 %v2138, %v2146
      %v2155 = vmax.f32 %v2139, %v2147
      %v2156 = vmax.f32 %v2140, %v2148
      %v2157 = vmax.f32 %v2141, %v2149
      %v2158 = vmax.f32 %v2142, %v2150
      %v2159 = vmax.f32 %v2143, %v2151
      %v2160 = vpack.c.bf16 %v2152, %v2152
      %v2161 = vpack.c.bf16 %v2153, %v2153
      %v2162 = vpack.c.bf16 %v2154, %v2154
      %v2163 = vpack.c.bf16 %v2155, %v2155
      %v2164 = vpack.c.bf16 %v2156, %v2156
      %v2165 = vpack.c.bf16 %v2157, %v2157
      %v2166 = vpack.c.bf16 %v2158, %v2158
      %v2167 = vpack.c.bf16 %v2159, %v2159
      %v2169 = vshrl.u32 %v2160, 16
      %v2171 = vrot.slane %v2169, 7
      %v2172 = vshll.u32 %v2160, 16
      %v2174 = vor.u32 %v2171, %v2172
      %v2176 = vshrl.u32 %v2161, 16
      %v2178 = vrot.slane %v2176, 7
      %v2179 = vshll.u32 %v2161, 16
      %v2181 = vor.u32 %v2178, %v2179
      %v2183 = vshrl.u32 %v2162, 16
      %v2185 = vrot.slane %v2183, 7
      %v2186 = vshll.u32 %v2162, 16
      %v2188 = vor.u32 %v2185, %v2186
      %v2190 = vshrl.u32 %v2163, 16
      %v2192 = vrot.slane %v2190, 7
      %v2193 = vshll.u32 %v2163, 16
      %v2195 = vor.u32 %v2192, %v2193
      %v2197 = vshrl.u32 %v2164, 16
      %v2199 = vrot.slane %v2197, 7
      %v2200 = vshll.u32 %v2164, 16
      %v2202 = vor.u32 %v2199, %v2200
      %v2204 = vshrl.u32 %v2165, 16
      %v2206 = vrot.slane %v2204, 7
      %v2207 = vshll.u32 %v2165, 16
      %v2209 = vor.u32 %v2206, %v2207
      %v2211 = vshrl.u32 %v2166, 16
      %v2213 = vrot.slane %v2211, 7
      %v2214 = vshll.u32 %v2166, 16
      %v2216 = vor.u32 %v2213, %v2214
      %v2218 = vshrl.u32 %v2167, 16
      %v2220 = vrot.slane %v2218, 7
      %v2221 = vshll.u32 %v2167, 16
      %v2223 = vor.u32 %v2220, %v2221
      %v2232 = vsel %vm1407, 0, %v2174
      %v2233 = vsel %vm1407, 0, %v2181
      %v2234 = vsel %vm1407, 0, %v2188
      %v2235 = vsel %vm1407, 0, %v2195
      %v2236 = vsel %vm1407, 0, %v2202
      %v2237 = vsel %vm1407, 0, %v2209
      %v2238 = vsel %vm1407, 0, %v2216
      %v2239 = vsel %vm1407, 0, %v2223
      %v2240 = vsel %vm1419, %v2232, 0
      %v2241 = vsel %vm1419, %v2233, 0
      %v2242 = vsel %vm1419, %v2234, 0
      %v2243 = vsel %vm1419, %v2235, 0
      %v2244 = vsel %vm1419, %v2236, 0
      %v2245 = vsel %vm1419, %v2237, 0
      %v2246 = vsel %vm1419, %v2238, 0
      %v2247 = vsel %vm1419, %v2239, 0
      %v2249 = vshrl.u32 %v2240, 16
      %v2251 = vshll.u32 %v2240, 16
      %v2253 = vrot.slane %v2251, 1
      %v2254 = vor.u32 %v2249, %v2253
      %v2256 = vshrl.u32 %v2241, 16
      %v2258 = vshll.u32 %v2241, 16
      %v2260 = vrot.slane %v2258, 1
      %v2261 = vor.u32 %v2256, %v2260
      %v2263 = vshrl.u32 %v2242, 16
      %v2265 = vshll.u32 %v2242, 16
      %v2267 = vrot.slane %v2265, 1
      %v2268 = vor.u32 %v2263, %v2267
      %v2270 = vshrl.u32 %v2243, 16
      %v2272 = vshll.u32 %v2243, 16
      %v2274 = vrot.slane %v2272, 1
      %v2275 = vor.u32 %v2270, %v2274
      %v2277 = vshrl.u32 %v2244, 16
      %v2279 = vshll.u32 %v2244, 16
      %v2281 = vrot.slane %v2279, 1
      %v2282 = vor.u32 %v2277, %v2281
      %v2284 = vshrl.u32 %v2245, 16
      %v2286 = vshll.u32 %v2245, 16
      %v2288 = vrot.slane %v2286, 1
      %v2289 = vor.u32 %v2284, %v2288
      %v2291 = vshrl.u32 %v2246, 16
      %v2293 = vshll.u32 %v2246, 16
      %v2295 = vrot.slane %v2293, 1
      %v2296 = vor.u32 %v2291, %v2295
      %v2298 = vshrl.u32 %v2247, 16
      %v2300 = vshll.u32 %v2247, 16
      %v2302 = vrot.slane %v2300, 1
      %v2303 = vor.u32 %v2298, %v2302
      %2304 = vrot.lane.b32.xlu0 %v2254, 64
      %v2305 = vpop.permute.xlu0 %2304
      %2306 = vrot.lane.b32.xlu0 %v2261, 64
      %v2307 = vpop.permute.xlu0 %2306
      %2308 = vrot.lane.b32.xlu0 %v2268, 64
      %v2309 = vpop.permute.xlu0 %2308
      %2310 = vrot.lane.b32.xlu0 %v2275, 64
      %v2311 = vpop.permute.xlu0 %2310
      %2312 = vrot.lane.b32.xlu0 %v2282, 64
      %v2313 = vpop.permute.xlu0 %2312
      %2314 = vrot.lane.b32.xlu0 %v2289, 64
      %v2315 = vpop.permute.xlu0 %2314
      %2316 = vrot.lane.b32.xlu0 %v2296, 64
      %v2317 = vpop.permute.xlu0 %2316
      %2318 = vrot.lane.b32.xlu0 %v2303, 64
      %v2319 = vpop.permute.xlu0 %2318
      %v2328 = vrot.slane %v2240, 1
      %v2329 = vrot.slane %v2241, 1
      %v2330 = vrot.slane %v2242, 1
      %v2331 = vrot.slane %v2243, 1
      %v2332 = vrot.slane %v2244, 1
      %v2333 = vrot.slane %v2245, 1
      %v2334 = vrot.slane %v2246, 1
      %v2335 = vrot.slane %v2247, 1
      %v2337 = vsel %vm1528, %v2240, %v2305
      %v2339 = vsel %vm1528, %v2241, %v2307
      %v2341 = vsel %vm1528, %v2242, %v2309
      %v2343 = vsel %vm1528, %v2243, %v2311
      %v2345 = vsel %vm1528, %v2244, %v2313
      %v2347 = vsel %vm1528, %v2245, %v2315
      %v2349 = vsel %vm1528, %v2246, %v2317
      %v2351 = vsel %vm1528, %v2247, %v2319
      %v2352 = vld [vmem:[%s6] sm:$0x1]
      %v2354 = vlaneseq
      %v2355 = vshrl.u32 %v2354, 7
      %v2356 = vsub.s32 0, %v2355
      %v2357 = vrot.slane %v2352, %v2356
      %v2366 = vunpack.c.l.b16 %v2337
      %v2367 = vunpack.c.l.b16 %v2328
      %v2368 = vunpack.c.l.b16 %v2339
      %v2369 = vunpack.c.l.b16 %v2329
      %v2370 = vunpack.c.l.b16 %v2341
      %v2371 = vunpack.c.l.b16 %v2330
      %v2372 = vunpack.c.l.b16 %v2343
      %v2373 = vunpack.c.l.b16 %v2331
      %v2374 = vunpack.c.l.b16 %v2345
      %v2375 = vunpack.c.l.b16 %v2332
      %v2376 = vunpack.c.l.b16 %v2347
      %v2377 = vunpack.c.l.b16 %v2333
      %v2378 = vunpack.c.l.b16 %v2349
      %v2379 = vunpack.c.l.b16 %v2334
      %v2380 = vld [vmem:[%s5] sm:$0xf]
      %v2381 = vld [vmem:[%s5 + $0x4] sm:$0xf]
      %v2382 = vld [vmem:[%s5 + $0x8] sm:$0xf]
      %v2383 = vld [vmem:[%s5 + $0xc] sm:$0xf]
      %v2384 = vld [vmem:[%s5 + $0x10] sm:$0xf]
      %v2385 = vld [vmem:[%s5 + $0x14] sm:$0xf]
      %v2386 = vld [vmem:[%s5 + $0x18] sm:$0xf]
      %v2387 = vld [vmem:[%s5 + $0x1c] sm:$0xf]
      %v2388 = vld [vmem:[%s5 + $0x20] sm:$0xf]
      %v2389 = vld [vmem:[%s5 + $0x24] sm:$0xf]
      %v2390 = vld [vmem:[%s5 + $0x28] sm:$0xf]
      %v2391 = vld [vmem:[%s5 + $0x2c] sm:$0xf]
      %v2392 = vld [vmem:[%s5 + $0x30] sm:$0xf]
      %v2393 = vld [vmem:[%s5 + $0x34] sm:$0xf]
      %v2394 = vld [vmem:[%s5 + $0x38] sm:$0xf]
      %v2395 = vld [vmem:[%s5 + $0x3c] sm:$0xf]
      %v2396 = vld [vmem:[%s5 + $0x40] sm:$0xf]
      %v2397 = vld [vmem:[%s5 + $0x44] sm:$0xf]
      %v2398 = vld [vmem:[%s5 + $0x48] sm:$0xf]
      %v2399 = vld [vmem:[%s5 + $0x4c] sm:$0xf]
      %v2400 = vld [vmem:[%s5 + $0x50] sm:$0xf]
      %v2401 = vld [vmem:[%s5 + $0x54] sm:$0xf]
      %v2402 = vld [vmem:[%s5 + $0x58] sm:$0xf]
      %v2403 = vld [vmem:[%s5 + $0x5c] sm:$0xf]
      %v2404 = vpack.c.b16 %v2366, %v1562
      %v2405 = vpack.c.b16 %v2367, %v1563
      %v2406 = vpack.c.b16 %v2370, %v2368
      %v2407 = vpack.c.b16 %v2371, %v2369
      %v2408 = vpack.c.b16 %v2374, %v2372
      %v2409 = vpack.c.b16 %v2375, %v2373
      %v2410 = vpack.c.b16 %v2378, %v2376
      %v2411 = vpack.c.b16 %v2379, %v2377
      %v2440 = vunpack.c.l.b16 %v2380
      %v2441 = vunpack.c.l.b16 %v2381
      %v2442 = vunpack.c.l.b16 %v2382
      %v2443 = vunpack.c.l.b16 %v2383
      %v2444 = vunpack.c.l.b16 %v2384
      %v2445 = vunpack.c.l.b16 %v2385
      %v2446 = vunpack.c.l.b16 %v2386
      %v2447 = vunpack.c.l.b16 %v2387
      %v2448 = vunpack.c.l.b16 %v2388
      %v2449 = vunpack.c.l.b16 %v2389
      %v2450 = vunpack.c.l.b16 %v2390
      %v2451 = vunpack.c.l.b16 %v2391
      %v2452 = vunpack.c.l.b16 %v2392
      %v2453 = vunpack.c.l.b16 %v2393
      %v2454 = vunpack.c.l.b16 %v2394
      %v2455 = vunpack.c.l.b16 %v2395
      %v2456 = vunpack.c.l.b16 %v2396
      %v2457 = vunpack.c.l.b16 %v2397
      %v2458 = vunpack.c.l.b16 %v2398
      %v2459 = vunpack.c.l.b16 %v2399
      %v2460 = vunpack.c.l.b16 %v2400
      %v2461 = vunpack.c.l.b16 %v2401
      %v2462 = vunpack.c.l.b16 %v2402
      %v2463 = vunpack.c.l.b16 %v2403
      %v2464 = vpack.c.b16 %v2441, %v2440
      %v2465 = vpack.c.b16 %v2443, %v2442
      %v2466 = vpack.c.b16 %v2445, %v2444
      %v2467 = vpack.c.b16 %v2447, %v2446
      %v2468 = vpack.c.b16 %v2449, %v2448
      %v2469 = vpack.c.b16 %v2451, %v2450
      %v2470 = vpack.c.b16 %v2453, %v2452
      %v2471 = vpack.c.b16 %v2455, %v2454
      %v2472 = vpack.c.b16 %v2457, %v2456
      %v2473 = vpack.c.b16 %v2459, %v2458
      %v2474 = vpack.c.b16 %v2461, %v2460
      %v2475 = vpack.c.b16 %v2463, %v2462
      %v2489 = vsel %vm1528, %v2405, 0
      %v2492 = vsel %vm1528, %v2407, 0
      %v2495 = vsel %vm1528, %v2409, 0
      %v2498 = vsel %vm1528, %v2411, 0
      %2500 = vmatprep.subr.bf16.mxu0 0
      %2501 = vmatpush1.bf16.msra.mxu0 %v2471
      %2502 = vmatprep.subr.bf16.mxu0 0
      %2503 = vmatpush1.bf16.msra.mxu0 %v2470
      %2504 = vmatprep.subr.bf16.mxu0 0
      %2505 = vmatpush1.bf16.msra.mxu0 %v2469
      %2506 = vmatprep.subr.bf16.mxu0 0
      %2507 = vmatpush1.bf16.msra.mxu0 %v2468
      %2508 = vmatprep.subr.bf16.mxu0 0
      %2509 = vmatpush1.bf16.msra.mxu0 %v2467
      %2510 = vmatprep.subr.bf16.mxu0 0
      %2511 = vmatpush1.bf16.msra.mxu0 %v2466
      %2512 = vmatprep.subr.bf16.mxu0 0
      %2513 = vmatpush1.bf16.msra.mxu0 %v2465
      %2514 = vmatprep.subr.bf16.mxu0 0
      %2515 = vmatpush1.bf16.msra.mxu0 %v2464
      %2516 = vmatprep.subr.bf16.mxu0 0
      %2517 = vmatpush2.bf16.msra.mxu0 0
      %2518 = vmatprep.subr.bf16.mxu0 0
      %2519 = vmatpush2.bf16.msra.mxu0 0
      %2520 = vmatprep.subr.bf16.mxu0 0
      %2521 = vmatpush2.bf16.msra.mxu0 0
      %2522 = vmatprep.subr.bf16.mxu0 0
      %2523 = vmatpush2.bf16.msra.mxu0 0
      %2524 = vmatprep.subr.bf16.mxu0 0
      %2525 = vmatpush2.bf16.msra.mxu0 %v2475
      %2526 = vmatprep.subr.bf16.mxu0 0
      %2527 = vmatpush2.bf16.msra.mxu0 %v2474
      %2528 = vmatprep.subr.bf16.mxu0 0
      %2529 = vmatpush2.bf16.msra.mxu0 %v2473
      %2530 = vmatprep.subr.bf16.mxu0 0
      %2531 = vmatpush2.bf16.msra.mxu0 %v2472
      %2532 = vmatprep.mubr.bf16.mxu0 %v2489
      %2533 = vmatmul.mubr.bf16.gmra.mxu0 %v2404
      %v2534 = vpop.f32.mrf.mxu0
      %v2535 = vadd.f32 0.0, %v2534
      %v2536 = vpop.f32.mrf.mxu0
      %v2537 = vpop.f32.mrf.mxu0
      %v2538 = vadd.f32 0.0, %v2537
      %v2539 = vpop.f32.mrf.mxu0
      %2540 = vmatprep.mubr.bf16.mxu0 %v2492
      %2541 = vmatmul.mubr.bf16.gmra.mxu0 %v2406
      %v2542 = vpop.f32.mrf.mxu0
      %v2543 = vadd.f32 0.0, %v2542
      %v2544 = vpop.f32.mrf.mxu0
      %v2545 = vpop.f32.mrf.mxu0
      %v2546 = vadd.f32 0.0, %v2545
      %v2547 = vpop.f32.mrf.mxu0
      %2548 = vmatprep.mubr.bf16.mxu0 %v2495
      %2549 = vmatmul.mubr.bf16.gmra.mxu0 %v2408
      %v2550 = vpop.f32.mrf.mxu0
      %v2551 = vadd.f32 0.0, %v2550
      %v2552 = vpop.f32.mrf.mxu0
      %v2553 = vpop.f32.mrf.mxu0
      %v2554 = vadd.f32 0.0, %v2553
      %v2555 = vpop.f32.mrf.mxu0
      %2556 = vmatprep.mubr.bf16.mxu0 %v2498
      %2557 = vmatmul.mubr.bf16.gmra.mxu0 %v2410
      %v2558 = vpop.f32.mrf.mxu0
      %v2559 = vadd.f32 0.0, %v2558
      %v2560 = vpop.f32.mrf.mxu0
      %v2561 = vpop.f32.mrf.mxu0
      %v2562 = vadd.f32 0.0, %v2561
      %v2563 = vpop.f32.mrf.mxu0
      %2564 = vdwg.mxu0
      %v2565 = vadd.f32 %v2357, %v2535
      %v2566 = vadd.f32 %v2357, %v2538
      %v2567 = vadd.f32 %v2357, %v2543
      %v2568 = vadd.f32 %v2357, %v2546
      %v2569 = vadd.f32 %v2357, %v2551
      %v2570 = vadd.f32 %v2357, %v2554
      %v2571 = vadd.f32 %v2357, %v2559
      %v2572 = vadd.f32 %v2357, %v2562
      %v2574 = vunpack.c.l.b16 %v2351
      %v2575 = vunpack.c.l.b16 %v2335
      %s2576 = scalar_lea.vmem %s5, 96
      %v2577 = vld [vmem:[%s2576] sm:$0xf]
      %v2578 = vld [vmem:[%s2576 + $0x4] sm:$0xf]
      %v2579 = vld [vmem:[%s2576 + $0x8] sm:$0xf]
      %v2580 = vld [vmem:[%s2576 + $0xc] sm:$0xf]
      %v2581 = vld [vmem:[%s2576 + $0x10] sm:$0xf]
      %v2582 = vld [vmem:[%s2576 + $0x14] sm:$0xf]
      %v2583 = vld [vmem:[%s2576 + $0x18] sm:$0xf]
      %v2584 = vld [vmem:[%s2576 + $0x1c] sm:$0xf]
      %v2585 = vld [vmem:[%s2576 + $0x20] sm:$0xf]
      %v2586 = vld [vmem:[%s2576 + $0x24] sm:$0xf]
      %v2587 = vld [vmem:[%s2576 + $0x28] sm:$0xf]
      %v2588 = vld [vmem:[%s2576 + $0x2c] sm:$0xf]
      %v2589 = vld [vmem:[%s2576 + $0x30] sm:$0xf]
      %v2590 = vld [vmem:[%s2576 + $0x34] sm:$0xf]
      %v2591 = vld [vmem:[%s2576 + $0x38] sm:$0xf]
      %v2592 = vld [vmem:[%s2576 + $0x3c] sm:$0xf]
      %v2593 = vld [vmem:[%s2576 + $0x40] sm:$0xf]
      %v2594 = vld [vmem:[%s2576 + $0x44] sm:$0xf]
      %v2595 = vld [vmem:[%s2576 + $0x48] sm:$0xf]
      %v2596 = vld [vmem:[%s2576 + $0x4c] sm:$0xf]
      %v2597 = vld [vmem:[%s2576 + $0x50] sm:$0xf]
      %v2598 = vld [vmem:[%s2576 + $0x54] sm:$0xf]
      %v2599 = vld [vmem:[%s2576 + $0x58] sm:$0xf]
      %v2600 = vld [vmem:[%s2576 + $0x5c] sm:$0xf]
      %v2601 = vpack.c.b16 %v2368, %v2366
      %v2602 = vpack.c.b16 %v2369, %v2367
      %v2603 = vpack.c.b16 %v2372, %v2370
      %v2604 = vpack.c.b16 %v2373, %v2371
      %v2605 = vpack.c.b16 %v2376, %v2374
      %v2606 = vpack.c.b16 %v2377, %v2375
      %v2607 = vpack.c.b16 %v2574, %v2378
      %v2608 = vpack.c.b16 %v2575, %v2379
      %v2637 = vunpack.c.l.b16 %v2577
      %v2638 = vunpack.c.l.b16 %v2578
      %v2639 = vunpack.c.l.b16 %v2579
      %v2640 = vunpack.c.l.b16 %v2580
      %v2641 = vunpack.c.l.b16 %v2581
      %v2642 = vunpack.c.l.b16 %v2582
      %v2643 = vunpack.c.l.b16 %v2583
      %v2644 = vunpack.c.l.b16 %v2584
      %v2645 = vunpack.c.l.b16 %v2585
      %v2646 = vunpack.c.l.b16 %v2586
      %v2647 = vunpack.c.l.b16 %v2587
      %v2648 = vunpack.c.l.b16 %v2588
      %v2649 = vunpack.c.l.b16 %v2589
      %v2650 = vunpack.c.l.b16 %v2590
      %v2651 = vunpack.c.l.b16 %v2591
      %v2652 = vunpack.c.l.b16 %v2592
      %v2653 = vunpack.c.l.b16 %v2593
      %v2654 = vunpack.c.l.b16 %v2594
      %v2655 = vunpack.c.l.b16 %v2595
      %v2656 = vunpack.c.l.b16 %v2596
      %v2657 = vunpack.c.l.b16 %v2597
      %v2658 = vunpack.c.l.b16 %v2598
      %v2659 = vunpack.c.l.b16 %v2599
      %v2660 = vunpack.c.l.b16 %v2600
      %v2661 = vpack.c.b16 %v2638, %v2637
      %v2662 = vpack.c.b16 %v2640, %v2639
      %v2663 = vpack.c.b16 %v2642, %v2641
      %v2664 = vpack.c.b16 %v2644, %v2643
      %v2665 = vpack.c.b16 %v2646, %v2645
      %v2666 = vpack.c.b16 %v2648, %v2647
      %v2667 = vpack.c.b16 %v2650, %v2649
      %v2668 = vpack.c.b16 %v2652, %v2651
      %v2669 = vpack.c.b16 %v2654, %v2653
      %v2670 = vpack.c.b16 %v2656, %v2655
      %v2671 = vpack.c.b16 %v2658, %v2657
      %v2672 = vpack.c.b16 %v2660, %v2659
      %v2686 = vsel %vm1528, %v2602, 0
      %v2689 = vsel %vm1528, %v2604, 0
      %v2692 = vsel %vm1528, %v2606, 0
      %v2695 = vsel %vm1528, %v2608, 0
      %2697 = vmatprep.subr.bf16.mxu0 0
      %2698 = vmatpush1.bf16.msra.mxu0 %v2668
      %2699 = vmatprep.subr.bf16.mxu0 0
      %2700 = vmatpush1.bf16.msra.mxu0 %v2667
      %2701 = vmatprep.subr.bf16.mxu0 0
      %2702 = vmatpush1.bf16.msra.mxu0 %v2666
      %2703 = vmatprep.subr.bf16.mxu0 0
      %2704 = vmatpush1.bf16.msra.mxu0 %v2665
      %2705 = vmatprep.subr.bf16.mxu0 0
      %2706 = vmatpush1.bf16.msra.mxu0 %v2664
      %2707 = vmatprep.subr.bf16.mxu0 0
      %2708 = vmatpush1.bf16.msra.mxu0 %v2663
      %2709 = vmatprep.subr.bf16.mxu0 0
      %2710 = vmatpush1.bf16.msra.mxu0 %v2662
      %2711 = vmatprep.subr.bf16.mxu0 0
      %2712 = vmatpush1.bf16.msra.mxu0 %v2661
      %2713 = vmatprep.subr.bf16.mxu0 0
      %2714 = vmatpush2.bf16.msra.mxu0 0
      %2715 = vmatprep.subr.bf16.mxu0 0
      %2716 = vmatpush2.bf16.msra.mxu0 0
      %2717 = vmatprep.subr.bf16.mxu0 0
      %2718 = vmatpush2.bf16.msra.mxu0 0
      %2719 = vmatprep.subr.bf16.mxu0 0
      %2720 = vmatpush2.bf16.msra.mxu0 0
      %2721 = vmatprep.subr.bf16.mxu0 0
      %2722 = vmatpush2.bf16.msra.mxu0 %v2672
      %2723 = vmatprep.subr.bf16.mxu0 0
      %2724 = vmatpush2.bf16.msra.mxu0 %v2671
      %2725 = vmatprep.subr.bf16.mxu0 0
      %2726 = vmatpush2.bf16.msra.mxu0 %v2670
      %2727 = vmatprep.subr.bf16.mxu0 0
      %2728 = vmatpush2.bf16.msra.mxu0 %v2669
      %2729 = vmatprep.mubr.bf16.mxu0 %v2686
      %2730 = vmatmul.mubr.bf16.gmra.mxu0 %v2601
      %v2731 = vpop.f32.mrf.mxu0
      %v2732 = vadd.f32 0.0, %v2731
      %v2733 = vpop.f32.mrf.mxu0
      %v2734 = vpop.f32.mrf.mxu0
      %v2735 = vadd.f32 0.0, %v2734
      %v2736 = vpop.f32.mrf.mxu0
      %2737 = vmatprep.mubr.bf16.mxu0 %v2689
      %2738 = vmatmul.mubr.bf16.gmra.mxu0 %v2603
      %v2739 = vpop.f32.mrf.mxu0
      %v2740 = vadd.f32 0.0, %v2739
      %v2741 = vpop.f32.mrf.mxu0
      %v2742 = vpop.f32.mrf.mxu0
      %v2743 = vadd.f32 0.0, %v2742
      %v2744 = vpop.f32.mrf.mxu0
      %2745 = vmatprep.mubr.bf16.mxu0 %v2692
      %2746 = vmatmul.mubr.bf16.gmra.mxu0 %v2605
      %v2747 = vpop.f32.mrf.mxu0
      %v2748 = vadd.f32 0.0, %v2747
      %v2749 = vpop.f32.mrf.mxu0
      %v2750 = vpop.f32.mrf.mxu0
      %v2751 = vadd.f32 0.0, %v2750
      %v2752 = vpop.f32.mrf.mxu0
      %2753 = vmatprep.mubr.bf16.mxu0 %v2695
      %2754 = vmatmul.mubr.bf16.gmra.mxu0 %v2607
      %v2755 = vpop.f32.mrf.mxu0
      %v2756 = vadd.f32 0.0, %v2755
      %v2757 = vpop.f32.mrf.mxu0
      %v2758 = vpop.f32.mrf.mxu0
      %v2759 = vadd.f32 0.0, %v2758
      %v2760 = vpop.f32.mrf.mxu0
      %2761 = vdwg.mxu0
      %v2762 = vadd.f32 %v2565, %v2732
      %v2763 = vadd.f32 %v2566, %v2735
      %v2764 = vadd.f32 %v2567, %v2740
      %v2765 = vadd.f32 %v2568, %v2743
      %v2766 = vadd.f32 %v2569, %v2748
      %v2767 = vadd.f32 %v2570, %v2751
      %v2768 = vadd.f32 %v2571, %v2756
      %v2769 = vadd.f32 %v2572, %v2759
      %s2770 = scalar_lea.vmem %s5, 192
      %v2771 = vld [vmem:[%s2770] sm:$0xf]
      %v2772 = vld [vmem:[%s2770 + $0x4] sm:$0xf]
      %v2773 = vld [vmem:[%s2770 + $0x8] sm:$0xf]
      %v2774 = vld [vmem:[%s2770 + $0xc] sm:$0xf]
      %v2775 = vld [vmem:[%s2770 + $0x10] sm:$0xf]
      %v2776 = vld [vmem:[%s2770 + $0x14] sm:$0xf]
      %v2777 = vld [vmem:[%s2770 + $0x18] sm:$0xf]
      %v2778 = vld [vmem:[%s2770 + $0x1c] sm:$0xf]
      %v2779 = vld [vmem:[%s2770 + $0x20] sm:$0xf]
      %v2780 = vld [vmem:[%s2770 + $0x24] sm:$0xf]
      %v2781 = vld [vmem:[%s2770 + $0x28] sm:$0xf]
      %v2782 = vld [vmem:[%s2770 + $0x2c] sm:$0xf]
      %v2783 = vld [vmem:[%s2770 + $0x30] sm:$0xf]
      %v2784 = vld [vmem:[%s2770 + $0x34] sm:$0xf]
      %v2785 = vld [vmem:[%s2770 + $0x38] sm:$0xf]
      %v2786 = vld [vmem:[%s2770 + $0x3c] sm:$0xf]
      %v2787 = vld [vmem:[%s2770 + $0x40] sm:$0xf]
      %v2788 = vld [vmem:[%s2770 + $0x44] sm:$0xf]
      %v2789 = vld [vmem:[%s2770 + $0x48] sm:$0xf]
      %v2790 = vld [vmem:[%s2770 + $0x4c] sm:$0xf]
      %v2791 = vld [vmem:[%s2770 + $0x50] sm:$0xf]
      %v2792 = vld [vmem:[%s2770 + $0x54] sm:$0xf]
      %v2793 = vld [vmem:[%s2770 + $0x58] sm:$0xf]
      %v2794 = vld [vmem:[%s2770 + $0x5c] sm:$0xf]
      %v2795 = vpack.c.b16 %v1562, %v2574
      %v2796 = vpack.c.b16 %v1563, %v2575
      %v2822 = vunpack.c.l.b16 %v2771
      %v2823 = vunpack.c.l.b16 %v2772
      %v2824 = vunpack.c.l.b16 %v2773
      %v2825 = vunpack.c.l.b16 %v2774
      %v2826 = vunpack.c.l.b16 %v2775
      %v2827 = vunpack.c.l.b16 %v2776
      %v2828 = vunpack.c.l.b16 %v2777
      %v2829 = vunpack.c.l.b16 %v2778
      %v2830 = vunpack.c.l.b16 %v2779
      %v2831 = vunpack.c.l.b16 %v2780
      %v2832 = vunpack.c.l.b16 %v2781
      %v2833 = vunpack.c.l.b16 %v2782
      %v2834 = vunpack.c.l.b16 %v2783
      %v2835 = vunpack.c.l.b16 %v2784
      %v2836 = vunpack.c.l.b16 %v2785
      %v2837 = vunpack.c.l.b16 %v2786
      %v2838 = vunpack.c.l.b16 %v2787
      %v2839 = vunpack.c.l.b16 %v2788
      %v2840 = vunpack.c.l.b16 %v2789
      %v2841 = vunpack.c.l.b16 %v2790
      %v2842 = vunpack.c.l.b16 %v2791
      %v2843 = vunpack.c.l.b16 %v2792
      %v2844 = vunpack.c.l.b16 %v2793
      %v2845 = vunpack.c.l.b16 %v2794
      %v2846 = vpack.c.b16 %v2823, %v2822
      %v2847 = vpack.c.b16 %v2825, %v2824
      %v2848 = vpack.c.b16 %v2827, %v2826
      %v2849 = vpack.c.b16 %v2829, %v2828
      %v2850 = vpack.c.b16 %v2831, %v2830
      %v2851 = vpack.c.b16 %v2833, %v2832
      %v2852 = vpack.c.b16 %v2835, %v2834
      %v2853 = vpack.c.b16 %v2837, %v2836
      %v2854 = vpack.c.b16 %v2839, %v2838
      %v2855 = vpack.c.b16 %v2841, %v2840
      %v2856 = vpack.c.b16 %v2843, %v2842
      %v2857 = vpack.c.b16 %v2845, %v2844
      %v2871 = vsel %vm1528, %v2796, 0
      %2873 = vmatprep.subr.bf16.mxu0 0
      %2874 = vmatpush1.bf16.msra.mxu0 %v2853
      %2875 = vmatprep.subr.bf16.mxu0 0
      %2876 = vmatpush1.bf16.msra.mxu0 %v2852
      %2877 = vmatprep.subr.bf16.mxu0 0
      %2878 = vmatpush1.bf16.msra.mxu0 %v2851
      %2879 = vmatprep.subr.bf16.mxu0 0
      %2880 = vmatpush1.bf16.msra.mxu0 %v2850
      %2881 = vmatprep.subr.bf16.mxu0 0
      %2882 = vmatpush1.bf16.msra.mxu0 %v2849
      %2883 = vmatprep.subr.bf16.mxu0 0
      %2884 = vmatpush1.bf16.msra.mxu0 %v2848
      %2885 = vmatprep.subr.bf16.mxu0 0
      %2886 = vmatpush1.bf16.msra.mxu0 %v2847
      %2887 = vmatprep.subr.bf16.mxu0 0
      %2888 = vmatpush1.bf16.msra.mxu0 %v2846
      %2889 = vmatprep.subr.bf16.mxu0 0
      %2890 = vmatpush2.bf16.msra.mxu0 0
      %2891 = vmatprep.subr.bf16.mxu0 0
      %2892 = vmatpush2.bf16.msra.mxu0 0
      %2893 = vmatprep.subr.bf16.mxu0 0
      %2894 = vmatpush2.bf16.msra.mxu0 0
      %2895 = vmatprep.subr.bf16.mxu0 0
      %2896 = vmatpush2.bf16.msra.mxu0 0
      %2897 = vmatprep.subr.bf16.mxu0 0
      %2898 = vmatpush2.bf16.msra.mxu0 %v2857
      %2899 = vmatprep.subr.bf16.mxu0 0
      %2900 = vmatpush2.bf16.msra.mxu0 %v2856
      %2901 = vmatprep.subr.bf16.mxu0 0
      %2902 = vmatpush2.bf16.msra.mxu0 %v2855
      %2903 = vmatprep.subr.bf16.mxu0 0
      %2904 = vmatpush2.bf16.msra.mxu0 %v2854
      %2905 = vmatprep.mubr.bf16.mxu0 %v2492
      %2906 = vmatmul.mubr.bf16.gmra.mxu0 %v2406
      %v2907 = vpop.f32.mrf.mxu0
      %v2908 = vadd.f32 0.0, %v2907
      %v2909 = vpop.f32.mrf.mxu0
      %v2910 = vpop.f32.mrf.mxu0
      %v2911 = vadd.f32 0.0, %v2910
      %v2912 = vpop.f32.mrf.mxu0
      %2913 = vmatprep.mubr.bf16.mxu0 %v2495
      %2914 = vmatmul.mubr.bf16.gmra.mxu0 %v2408
      %v2915 = vpop.f32.mrf.mxu0
      %v2916 = vadd.f32 0.0, %v2915
      %v2917 = vpop.f32.mrf.mxu0
      %v2918 = vpop.f32.mrf.mxu0
      %v2919 = vadd.f32 0.0, %v2918
      %v2920 = vpop.f32.mrf.mxu0
      %2921 = vmatprep.mubr.bf16.mxu0 %v2498
      %2922 = vmatmul.mubr.bf16.gmra.mxu0 %v2410
      %v2923 = vpop.f32.mrf.mxu0
      %v2924 = vadd.f32 0.0, %v2923
      %v2925 = vpop.f32.mrf.mxu0
      %v2926 = vpop.f32.mrf.mxu0
      %v2927 = vadd.f32 0.0, %v2926
      %v2928 = vpop.f32.mrf.mxu0
      %2929 = vmatprep.mubr.bf16.mxu0 %v2871
      %2930 = vmatmul.mubr.bf16.gmra.mxu0 %v2795
      %v2931 = vpop.f32.mrf.mxu0
      %v2932 = vadd.f32 0.0, %v2931
      %v2933 = vpop.f32.mrf.mxu0
      %v2934 = vpop.f32.mrf.mxu0
      %v2935 = vadd.f32 0.0, %v2934
      %v2936 = vpop.f32.mrf.mxu0
      %2937 = vdwg.mxu0
      %v2938 = vadd.f32 %v2762, %v2908
      %v2939 = vadd.f32 %v2763, %v2911
      %v2940 = vadd.f32 %v2764, %v2916
      %v2941 = vadd.f32 %v2765, %v2919
      %v2942 = vadd.f32 %v2766, %v2924
      %v2943 = vadd.f32 %v2767, %v2927
      %v2944 = vadd.f32 %v2768, %v2932
      %v2945 = vadd.f32 %v2769, %v2935
      %v2946 = vadd.f32 %v2938, %v1301
      %v2947 = vadd.f32 %v2939, %v1302
      %v2948 = vadd.f32 %v2940, %v1303
      %v2949 = vadd.f32 %v2941, %v1304
      %v2950 = vadd.f32 %v2942, %v1305
      %v2951 = vadd.f32 %v2943, %v1306
      %v2952 = vadd.f32 %v2944, %v1307
      %v2953 = vadd.f32 %v2945, %v1308
      %v2954 = vpack.c.bf16 %v2946, %v2946
      %v2955 = vpack.c.bf16 %v2947, %v2947
      %v2956 = vpack.c.bf16 %v2948, %v2948
      %v2957 = vpack.c.bf16 %v2949, %v2949
      %v2958 = vpack.c.bf16 %v2950, %v2950
      %v2959 = vpack.c.bf16 %v2951, %v2951
      %v2960 = vpack.c.bf16 %v2952, %v2952
      %v2961 = vpack.c.bf16 %v2953, %v2953
      %vm2962 = vcmask 519168
      %2963 = vst.msk [vmem:[%s278] sm:$0xf] %vm2962, %v2954
      %2964 = vst.msk [vmem:[%s278 + $0x4] sm:$0xf] %vm2962, %v2955
      %2965 = vst.msk [vmem:[%s278 + $0x8] sm:$0xf] %vm2962, %v2956
      %2966 = vst.msk [vmem:[%s278 + $0xc] sm:$0xf] %vm2962, %v2957
      %2967 = vst.msk [vmem:[%s278 + $0x10] sm:$0xf] %vm2962, %v2958
      %2968 = vst.msk [vmem:[%s278 + $0x14] sm:$0xf] %vm2962, %v2959
      %2969 = vst.msk [vmem:[%s278 + $0x18] sm:$0xf] %vm2962, %v2960
      %2970 = vst.msk [vmem:[%s278 + $0x1c] sm:$0xf] %vm2962, %v2961
      %p2971 = scmp.lt.s32.totalorder %s18, 1
      %s2972 = scalar_select %p2971, %s18, 1
      %s2973 = smul.addr %s2972, 8
      %s2974 = smul.addr %s2973, 4
      %s2975 = scalar_lea.vmem %s7, %s2974
      // Predicated region
      $region49: #{feature_extractor.4} parent=47 // pred_check
        %p2976 = pneg %p188
      $region50: #{feature_extractor.4} parent=47 // pred_check_branch
        %2978 = sbr.rel (%p2976) target = $region52
      $region51: #{feature_extractor.4} parent=47 // pred_region
        _
      $region52: #{feature_extractor.4} parent=47 // pred_fallthru
        _
    $region48: #{feature_extractor.4} parent=5 // pred_fallthru
      _
    %p2979 = scmp.le.s32.totalorder 2, %s13
    // Predicated region
    $region53: #{feature_extractor.4} parent=5 // pred_check
      %p2980 = pneg %p2979
    $region54: #{feature_extractor.4} parent=5 // pred_check_branch
      %2982 = sbr.rel (%p2980) target = $region56
    $region55: #{feature_extractor.4} parent=5 // pred_region
      %s2983 = ssub.s32 %s13, 2
      // Predicated region
      $region57: #{feature_extractor.4} parent=55 // pred_check
        %p2984 = pneg %p194
      $region58: #{feature_extractor.4} parent=55 // pred_check_branch
        %2986 = sbr.rel (%p2984) target = $region60
      $region59: #{feature_extractor.4} parent=55 // pred_region
        %p2987 = scmp.lt.s32.totalorder %s19, 1
        %s2988 = scalar_select %p2987, %s19, 1
        %s2989 = smul.addr %s2988, 8
        %s2990 = smul.addr %s2989, 4
        %s2991 = scalar_lea.vmem %s7, %s2990
      $region60: #{feature_extractor.4} parent=55 // pred_fallthru
        _
    $region56: #{feature_extractor.4} parent=5 // pred_fallthru
      _
  $region6: #{feature_extractor.4} parent=0 // loop_footer
    %s17 = sadd.s32 1, %s13
  $region7: #{feature_extractor.4} parent=0 // loop_footer_branch
    %12 = sbr.rel target = $region3
  $region8: #{feature_extractor.4} parent=0 // loop_exit
    _

// kernel: feature_extractor.5
$region0: #{feature_extractor.5}
  #allocation0 [shape = 'u32[]', space=smem, size = 0x4, offset = 0x4, fixed_abs, tag = 'smem constant byte address 0x4 - core index']
  #allocation1 [shape = 'u32[144,128]{1,0:T(1,128)}', space=vmem, size = 0x12000, scoped, tag = 'internal scratch']
  %s0 = inlined_call_operand.vmem [shape: bf16[2,4,5,5,64], index: 0, kind: input, shape index: {}]
  %s1 = inlined_call_operand.vmem [shape: bf16[3,192,96], index: 1, kind: input, shape index: {}]
  %s2 = inlined_call_operand.vmem [shape: f32[1,96], index: 2, kind: input, shape index: {}]
  %s3 = inlined_call_operand.vmem [shape: bf16[3,288,96], index: 3, kind: input, shape index: {}]
  %s4 = inlined_call_operand.vmem [shape: f32[1,96], index: 4, kind: input, shape index: {}]
  %s5 = inlined_call_operand.vmem [shape: bf16[3,288,96], index: 5, kind: input, shape index: {}]
  %s6 = inlined_call_operand.vmem [shape: f32[1,96], index: 6, kind: input, shape index: {}]
  %s7 = inlined_call_operand.vmem [shape: bf16[2,4,4,96], index: 7, kind: output, shape index: {}]
  %s8 = sld [smem:[#allocation0]]
  $region61: #{feature_extractor.5} parent=0
    _
  %s10 = ssub.s32 1, %s8
  %s11 = scalar_select 0, %s10, %s8
  loop: start=0, step=1, limit=4
  $region2: #{feature_extractor.5} parent=0 // loop_pre_header
    _
  $region3: #{feature_extractor.5} parent=0 // loop_header
    %s13 = sphi 0, %s17
    %p14 = scmp.ge.s32.totalorder %s13, 4
    %s23 = sphi 0, %s25
    %s26 = sphi 0, %s23
    %s27 = sphi 0, %s26
    %s43 = sphi 0, %s27
    %s47 = sphi 0, %s47
    %s49 = sphi 0, %s47
    %s50 = sphi 0, %s49
    %s64 = sphi 0, %s50
    %s68 = sphi 0, %s68
    %s70 = sphi 0, %s68
    %s71 = sphi 0, %s70
    %s85 = sphi 0, %s71
    %s89 = sphi 0, %s89
    %s91 = sphi 0, %s89
    %s92 = sphi 0, %s91
    %s106 = sphi 0, %s92
    %s110 = sphi 0, %s110
    %s112 = sphi 0, %s110
    %s113 = sphi 0, %s112
    %s127 = sphi 0, %s113
    %s131 = sphi 0, %s131
    %s133 = sphi 0, %s131
    %s134 = sphi 0, %s133
    %s148 = sphi 0, %s134
    %s152 = sphi 0, %s152
    %s154 = sphi 0, %s152
    %s155 = sphi 0, %s154
    %s169 = sphi 0, %s155
    %s175 = sphi 0, %s177
    %s178 = sphi 0, %s175
    %s179 = sphi 0, %s178
    %s195 = sphi 0, %s179
  $region4: #{feature_extractor.5} parent=0 // loop_header_branch
    %16 = sbr.rel (%p14) target = $region8
  $region5: #{feature_extractor.5} parent=0 // loop_body
    %s18 = ssub.s32 %s13, 1
    %s19 = ssub.s32 %s13, 2
    %s20 = sadd.s32 %s13, 1
    %s21 = ssub.s32 %s13, %s20
    %p22 = scmp.eq.s32.totalorder %s21, 0
    %s24 = sadd.s32 %s23, 1
    %s25 = scalar_select %p22, %s23, %s24
    %p28 = pneg %p22
    %p29 = scmp.eq.s32.totalorder %s13, 1
    %p30 = por %p28, %p29
    %p31 = scmp.ne.s32.totalorder %s23, %s26
    %p32 = scmp.eq.s32.totalorder %s13, 0
    %p33 = por %p31, %p32
    %p34 = scmp.ne.s32.totalorder %s23, %s26
    %p35 = scmp.eq.s32.totalorder %s18, 1
    %p36 = por %p34, %p35
    %p37 = scmp.ne.s32.totalorder %s26, %s27
    %p38 = scmp.eq.s32.totalorder %s18, 0
    %p39 = por %p37, %p38
    %p40 = scmp.ne.s32.totalorder %s26, %s27
    %p41 = scmp.eq.s32.totalorder %s19, 1
    %p42 = por %p40, %p41
    %p44 = scmp.ne.s32.totalorder %s27, %s43
    %p45 = scmp.eq.s32.totalorder %s19, 0
    %p46 = por %p44, %p45
    %s48 = sadd.s32 %s47, 1
    %p51 = scmp.eq.s32.totalorder %s13, 1
    %p52 = scmp.ne.s32.totalorder %s47, %s49
    %p53 = scmp.eq.s32.totalorder %s13, 0
    %p54 = por %p52, %p53
    %p55 = scmp.ne.s32.totalorder %s47, %s49
    %p56 = scmp.eq.s32.totalorder %s18, 1
    %p57 = por %p55, %p56
    %p58 = scmp.ne.s32.totalorder %s49, %s50
    %p59 = scmp.eq.s32.totalorder %s18, 0
    %p60 = por %p58, %p59
    %p61 = scmp.ne.s32.totalorder %s49, %s50
    %p62 = scmp.eq.s32.totalorder %s19, 1
    %p63 = por %p61, %p62
    %p65 = scmp.ne.s32.totalorder %s50, %s64
    %p66 = scmp.eq.s32.totalorder %s19, 0
    %p67 = por %p65, %p66
    %s69 = sadd.s32 %s68, 1
    %p72 = scmp.eq.s32.totalorder %s13, 1
    %p73 = scmp.ne.s32.totalorder %s68, %s70
    %p74 = scmp.eq.s32.totalorder %s13, 0
    %p75 = por %p73, %p74
    %p76 = scmp.ne.s32.totalorder %s68, %s70
    %p77 = scmp.eq.s32.totalorder %s18, 1
    %p78 = por %p76, %p77
    %p79 = scmp.ne.s32.totalorder %s70, %s71
    %p80 = scmp.eq.s32.totalorder %s18, 0
    %p81 = por %p79, %p80
    %p82 = scmp.ne.s32.totalorder %s70, %s71
    %p83 = scmp.eq.s32.totalorder %s19, 1
    %p84 = por %p82, %p83
    %p86 = scmp.ne.s32.totalorder %s71, %s85
    %p87 = scmp.eq.s32.totalorder %s19, 0
    %p88 = por %p86, %p87
    %s90 = sadd.s32 %s89, 1
    %p93 = scmp.eq.s32.totalorder %s13, 1
    %p94 = scmp.ne.s32.totalorder %s89, %s91
    %p95 = scmp.eq.s32.totalorder %s13, 0
    %p96 = por %p94, %p95
    %p97 = scmp.ne.s32.totalorder %s89, %s91
    %p98 = scmp.eq.s32.totalorder %s18, 1
    %p99 = por %p97, %p98
    %p100 = scmp.ne.s32.totalorder %s91, %s92
    %p101 = scmp.eq.s32.totalorder %s18, 0
    %p102 = por %p100, %p101
    %p103 = scmp.ne.s32.totalorder %s91, %s92
    %p104 = scmp.eq.s32.totalorder %s19, 1
    %p105 = por %p103, %p104
    %p107 = scmp.ne.s32.totalorder %s92, %s106
    %p108 = scmp.eq.s32.totalorder %s19, 0
    %p109 = por %p107, %p108
    %s111 = sadd.s32 %s110, 1
    %p114 = scmp.eq.s32.totalorder %s13, 1
    %p115 = scmp.ne.s32.totalorder %s110, %s112
    %p116 = scmp.eq.s32.totalorder %s13, 0
    %p117 = por %p115, %p116
    %p118 = scmp.ne.s32.totalorder %s110, %s112
    %p119 = scmp.eq.s32.totalorder %s18, 1
    %p120 = por %p118, %p119
    %p121 = scmp.ne.s32.totalorder %s112, %s113
    %p122 = scmp.eq.s32.totalorder %s18, 0
    %p123 = por %p121, %p122
    %p124 = scmp.ne.s32.totalorder %s112, %s113
    %p125 = scmp.eq.s32.totalorder %s19, 1
    %p126 = por %p124, %p125
    %p128 = scmp.ne.s32.totalorder %s113, %s127
    %p129 = scmp.eq.s32.totalorder %s19, 0
    %p130 = por %p128, %p129
    %s132 = sadd.s32 %s131, 1
    %p135 = scmp.eq.s32.totalorder %s13, 1
    %p136 = scmp.ne.s32.totalorder %s131, %s133
    %p137 = scmp.eq.s32.totalorder %s13, 0
    %p138 = por %p136, %p137
    %p139 = scmp.ne.s32.totalorder %s131, %s133
    %p140 = scmp.eq.s32.totalorder %s18, 1
    %p141 = por %p139, %p140
    %p142 = scmp.ne.s32.totalorder %s133, %s134
    %p143 = scmp.eq.s32.totalorder %s18, 0
    %p144 = por %p142, %p143
    %p145 = scmp.ne.s32.totalorder %s133, %s134
    %p146 = scmp.eq.s32.totalorder %s19, 1
    %p147 = por %p145, %p146
    %p149 = scmp.ne.s32.totalorder %s134, %s148
    %p150 = scmp.eq.s32.totalorder %s19, 0
    %p151 = por %p149, %p150
    %s153 = sadd.s32 %s152, 1
    %p156 = scmp.eq.s32.totalorder %s13, 1
    %p157 = scmp.ne.s32.totalorder %s152, %s154
    %p158 = scmp.eq.s32.totalorder %s13, 0
    %p159 = por %p157, %p158
    %p160 = scmp.ne.s32.totalorder %s152, %s154
    %p161 = scmp.eq.s32.totalorder %s18, 1
    %p162 = por %p160, %p161
    %p163 = scmp.ne.s32.totalorder %s154, %s155
    %p164 = scmp.eq.s32.totalorder %s18, 0
    %p165 = por %p163, %p164
    %p166 = scmp.ne.s32.totalorder %s154, %s155
    %p167 = scmp.eq.s32.totalorder %s19, 1
    %p168 = por %p166, %p167
    %p170 = scmp.ne.s32.totalorder %s155, %s169
    %p171 = scmp.eq.s32.totalorder %s19, 0
    %p172 = por %p170, %p171
    %s173 = ssub.s32 %s13, %s20
    %p174 = scmp.eq.s32.totalorder %s173, 0
    %s176 = sadd.s32 %s175, 1
    %s177 = scalar_select %p174, %s175, %s176
    %p180 = pneg %p174
    %p181 = scmp.eq.s32.totalorder %s13, 1
    %p182 = por %p180, %p181
    %p183 = scmp.ne.s32.totalorder %s175, %s178
    %p184 = scmp.eq.s32.totalorder %s13, 0
    %p185 = por %p183, %p184
    %p186 = scmp.ne.s32.totalorder %s175, %s178
    %p187 = scmp.eq.s32.totalorder %s18, 1
    %p188 = por %p186, %p187
    %p189 = scmp.ne.s32.totalorder %s178, %s179
    %p190 = scmp.eq.s32.totalorder %s18, 0
    %p191 = por %p189, %p190
    %p192 = scmp.ne.s32.totalorder %s178, %s179
    %p193 = scmp.eq.s32.totalorder %s19, 1
    %p194 = por %p192, %p193
    %p196 = scmp.ne.s32.totalorder %s179, %s195
    %p197 = scmp.eq.s32.totalorder %s19, 0
    %p198 = por %p196, %p197
    %p199 = scmp.le.s32.totalorder 1, %s13
    %p200 = scmp.lt.s32.totalorder %s13, 3
    %p201 = pnand %p199, %p200
    %p202 = pneg %p201
    // Predicated region
    $region9: #{feature_extractor.5} parent=5 // pred_check
      _
    $region10: #{feature_extractor.5} parent=5 // pred_check_branch
      %204 = sbr.rel (%p201) target = $region12
    $region11: #{feature_extractor.5} parent=5 // pred_region
      %s205 = ssub.s32 %s13, 1
      // Predicated region
      $region13: #{feature_extractor.5} parent=11 // pred_check
        %p206 = pneg %p60
      $region14: #{feature_extractor.5} parent=11 // pred_check_branch
        %208 = sbr.rel (%p206) target = $region16
      $region15: #{feature_extractor.5} parent=11 // pred_region
        _
      $region16: #{feature_extractor.5} parent=11 // pred_fallthru
        _
      // Predicated region
      $region17: #{feature_extractor.5} parent=11 // pred_check
        %p209 = pneg %p81
      $region18: #{feature_extractor.5} parent=11 // pred_check_branch
        %211 = sbr.rel (%p209) target = $region20
      $region19: #{feature_extractor.5} parent=11 // pred_region
        _
      $region20: #{feature_extractor.5} parent=11 // pred_fallthru
        _
      // Predicated region
      $region21: #{feature_extractor.5} parent=11 // pred_check
        %p212 = pneg %p102
      $region22: #{feature_extractor.5} parent=11 // pred_check_branch
        %214 = sbr.rel (%p212) target = $region24
      $region23: #{feature_extractor.5} parent=11 // pred_region
        _
      $region24: #{feature_extractor.5} parent=11 // pred_fallthru
        _
      // Predicated region
      $region25: #{feature_extractor.5} parent=11 // pred_check
        %p215 = pneg %p123
      $region26: #{feature_extractor.5} parent=11 // pred_check_branch
        %217 = sbr.rel (%p215) target = $region28
      $region27: #{feature_extractor.5} parent=11 // pred_region
        _
      $region28: #{feature_extractor.5} parent=11 // pred_fallthru
        _
      // Predicated region
      $region29: #{feature_extractor.5} parent=11 // pred_check
        %p218 = pneg %p144
      $region30: #{feature_extractor.5} parent=11 // pred_check_branch
        %220 = sbr.rel (%p218) target = $region32
      $region31: #{feature_extractor.5} parent=11 // pred_region
        _
      $region32: #{feature_extractor.5} parent=11 // pred_fallthru
        _
      // Predicated region
      $region33: #{feature_extractor.5} parent=11 // pred_check
        %p221 = pneg %p165
      $region34: #{feature_extractor.5} parent=11 // pred_check_branch
        %223 = sbr.rel (%p221) target = $region36
      $region35: #{feature_extractor.5} parent=11 // pred_region
        _
      $region36: #{feature_extractor.5} parent=11 // pred_fallthru
        _
    $region12: #{feature_extractor.5} parent=5 // pred_fallthru
      _
    %p224 = scmp.lt.s32.totalorder %s13, 2
    // Predicated region
    $region37: #{feature_extractor.5} parent=5 // pred_check
      %p225 = pneg %p224
    $region38: #{feature_extractor.5} parent=5 // pred_check_branch
      %227 = sbr.rel (%p225) target = $region40
    $region39: #{feature_extractor.5} parent=5 // pred_region
      // Predicated region
      $region41: #{feature_extractor.5} parent=39 // pred_check
        %p228 = pneg %p33
      $region42: #{feature_extractor.5} parent=39 // pred_check_branch
        %230 = sbr.rel (%p228) target = $region44
      $region43: #{feature_extractor.5} parent=39 // pred_region
        %p231 = scmp.lt.s32.totalorder %s13, 1
        %s232 = scalar_select %p231, %s13, 1
        %s233 = smul.addr %s232, 20
        %s234 = smul.addr %s233, 4
        %s235 = scalar_lea.vmem %s0, %s234
      $region44: #{feature_extractor.5} parent=39 // pred_fallthru
        _
    $region40: #{feature_extractor.5} parent=5 // pred_fallthru
      _
    %p236 = scmp.le.s32.totalorder 1, %s13
    %p237 = scmp.lt.s32.totalorder %s13, 3
    %p238 = pnand %p236, %p237
    %p239 = pneg %p238
    // Predicated region
    $region45: #{feature_extractor.5} parent=5 // pred_check
      _
    $region46: #{feature_extractor.5} parent=5 // pred_check_branch
      %241 = sbr.rel (%p238) target = $region48
    $region47: #{feature_extractor.5} parent=5 // pred_region
      %s242 = ssub.s32 %s13, 1
      %p243 = scmp.lt.s32.totalorder %s18, 1
      %s244 = scalar_select %p243, %s18, 1
      %s245 = smul.addr %s244, 20
      %s246 = smul.addr %s245, 4
      %s247 = scalar_lea.vmem %s0, %s246
      %p248 = pneg %p39
      %p249 = pneg %p36
      %p250 = pneg %p60
      %p251 = pneg %p57
      %p252 = pneg %p81
      %p253 = pneg %p78
      %p254 = pneg %p102
      %p255 = pneg %p99
      %p256 = pneg %p123
      %p257 = pneg %p120
      %p258 = pneg %p144
      %p259 = pneg %p141
      %p260 = pneg %p165
      %p261 = pneg %p162
      %p262 = pneg %p191
      %p263 = pneg %p188
      %p264 = scmp.lt.s32.totalorder %s18, 1
      %s265 = scalar_select %p264, %s18, 1
      %s266 = smul.addr %s265, 4
      %s267 = smul.addr %s266, 2
      %s268 = scalar_lea.vmem %s7, %s267
      %p269 = scmp.lt.s32.totalorder %s18, 1
      %s270 = scalar_select %p269, %s18, 1
      %s271 = smul.addr %s270, 20
      %s272 = smul.addr %s271, 4
      %s273 = scalar_lea.vmem %s0, %s272
      %p274 = scmp.lt.s32.totalorder %s18, 1
      %s275 = scalar_select %p274, %s18, 1
      %s276 = smul.addr %s275, 4
      %s277 = smul.addr %s276, 2
      %s278 = scalar_lea.vmem %s7, %s277
      %v280 = vld [vmem:[%s273] sm:$0x7]
      %v281 = vld [vmem:[%s273 + $0x4] sm:$0x7]
      %v282 = vld [vmem:[%s273 + $0x8] sm:$0x7]
      %v283 = vld [vmem:[%s273 + $0xc] sm:$0x7]
      %v284 = vld [vmem:[%s273 + $0x10] sm:$0x7]
      %v285 = vld [vmem:[%s273 + $0x14] sm:$0x7]
      %v286 = vld [vmem:[%s273 + $0x18] sm:$0x7]
      %v287 = vld [vmem:[%s273 + $0x1c] sm:$0x7]
      %v288 = vld [vmem:[%s273 + $0x20] sm:$0x7]
      %v289 = vld [vmem:[%s273 + $0x24] sm:$0x7]
      %v290 = vld [vmem:[%s273 + $0x28] sm:$0x7]
      %v291 = vld [vmem:[%s273 + $0x2c] sm:$0x7]
      %v292 = vld [vmem:[%s273 + $0x30] sm:$0x7]
      %v293 = vld [vmem:[%s273 + $0x34] sm:$0x7]
      %v294 = vld [vmem:[%s273 + $0x3c] sm:$0x7]
      %v295 = vld [vmem:[%s273 + $0x40] sm:$0x7]
      %v296 = vld [vmem:[%s273 + $0x44] sm:$0x7]
      %v297 = vld [vmem:[%s273 + $0x48] sm:$0x7]
      %v298 = vld [vmem:[%s2] sm:$0x1]
      %v300 = vlaneseq
      %v301 = vshrl.u32 %v300, 7
      %v302 = vsub.s32 0, %v301
      %v303 = vrot.slane %v298, %v302
      %v309 = vunpack.c.l.b16 %v285
      %v310 = vunpack.c.l.b16 %v286
      %v311 = vunpack.c.l.b16 %v287
      %v312 = vunpack.c.l.b16 %v288
      %v313 = vpack.c.b16 %v309, %v309
      %v314 = vpack.c.b16 %v310, %v310
      %v315 = vpack.c.b16 %v311, %v311
      %v316 = vpack.c.b16 %v312, %v312
      %317 = vrot.lane.b32.xlu0 %v313, 64
      %v318 = vpop.permute.xlu0 %317
      %319 = vrot.lane.b32.xlu0 %v314, 64
      %v320 = vpop.permute.xlu0 %319
      %321 = vrot.lane.b32.xlu0 %v315, 64
      %v322 = vpop.permute.xlu0 %321
      %323 = vrot.lane.b32.xlu0 %v316, 64
      %v324 = vpop.permute.xlu0 %323
      %v329 = vunpack.c.l.b16 %v280
      %v330 = vunpack.c.l.b16 %v281
      %v331 = vunpack.c.l.b16 %v282
      %v332 = vunpack.c.l.b16 %v283
      %v333 = vpack.c.b16 %v329, %v329
      %v334 = vpack.c.b16 %v330, %v330
      %v335 = vpack.c.b16 %v331, %v331
      %v336 = vpack.c.b16 %v332, %v332
      %v338 = vshrl.u32 %v333, 16
      %v340 = vshll.u32 %v333, 16
      %v342 = vrot.slane %v340, 1
      %v343 = vor.u32 %v338, %v342
      %v345 = vshrl.u32 %v334, 16
      %v347 = vshll.u32 %v334, 16
      %v349 = vrot.slane %v347, 1
      %v350 = vor.u32 %v345, %v349
      %v352 = vshrl.u32 %v335, 16
      %v354 = vshll.u32 %v335, 16
      %v356 = vrot.slane %v354, 1
      %v357 = vor.u32 %v352, %v356
      %v359 = vshrl.u32 %v336, 16
      %v361 = vshll.u32 %v336, 16
      %v363 = vrot.slane %v361, 1
      %v364 = vor.u32 %v359, %v363
      %vm365 = vcmask 523264
      %v368 = vsel %vm365, %v280, %v318
      %v371 = vsel %vm365, %v281, %v320
      %v374 = vsel %vm365, %v282, %v322
      %v377 = vsel %vm365, %v283, %v324
      %v382 = vcombine.low %v368, %v343
      %v384 = vunpack.c.l.s4 1983009808
      %v385 = vunpack.c.0.s8 %v384
      %v386 = vlaneseq
      %v387 = vshrl.u32 %v386, 7
      %v388 = vsub.s32 %v385, %v387
      %v389 = vrot.slane %v382, %v388
      %v390 = vcombine.low %v371, %v350
      %v392 = vunpack.c.l.s4 1983009808
      %v393 = vunpack.c.0.s8 %v392
      %v394 = vlaneseq
      %v395 = vshrl.u32 %v394, 7
      %v396 = vsub.s32 %v393, %v395
      %v397 = vrot.slane %v390, %v396
      %v398 = vcombine.low %v374, %v357
      %v400 = vunpack.c.l.s4 1983009808
      %v401 = vunpack.c.0.s8 %v400
      %v402 = vlaneseq
      %v403 = vshrl.u32 %v402, 7
      %v404 = vsub.s32 %v401, %v403
      %v405 = vrot.slane %v398, %v404
      %v406 = vcombine.low %v377, %v364
      %v408 = vunpack.c.l.s4 1983009808
      %v409 = vunpack.c.0.s8 %v408
      %v410 = vlaneseq
      %v411 = vshrl.u32 %v410, 7
      %v412 = vsub.s32 %v409, %v411
      %v413 = vrot.slane %v406, %v412
      %v414 = vld [vmem:[%s1] sm:$0xf]
      %v415 = vld [vmem:[%s1 + $0x4] sm:$0xf]
      %v416 = vld [vmem:[%s1 + $0x8] sm:$0xf]
      %v417 = vld [vmem:[%s1 + $0xc] sm:$0xf]
      %v418 = vld [vmem:[%s1 + $0x10] sm:$0xf]
      %v419 = vld [vmem:[%s1 + $0x14] sm:$0xf]
      %v420 = vld [vmem:[%s1 + $0x18] sm:$0xf]
      %v421 = vld [vmem:[%s1 + $0x1c] sm:$0xf]
      %v422 = vld [vmem:[%s1 + $0x20] sm:$0xf]
      %v423 = vld [vmem:[%s1 + $0x24] sm:$0xf]
      %v424 = vld [vmem:[%s1 + $0x28] sm:$0xf]
      %v425 = vld [vmem:[%s1 + $0x2c] sm:$0xf]
      %v426 = vld [vmem:[%s1 + $0x30] sm:$0xf]
      %v427 = vld [vmem:[%s1 + $0x34] sm:$0xf]
      %v428 = vld [vmem:[%s1 + $0x38] sm:$0xf]
      %v429 = vld [vmem:[%s1 + $0x3c] sm:$0xf]
      %v430 = vld [vmem:[%s1 + $0x40] sm:$0xf]
      %v431 = vld [vmem:[%s1 + $0x44] sm:$0xf]
      %v432 = vld [vmem:[%s1 + $0x48] sm:$0xf]
      %v433 = vld [vmem:[%s1 + $0x4c] sm:$0xf]
      %v434 = vld [vmem:[%s1 + $0x50] sm:$0xf]
      %v435 = vld [vmem:[%s1 + $0x54] sm:$0xf]
      %v436 = vld [vmem:[%s1 + $0x58] sm:$0xf]
      %v437 = vld [vmem:[%s1 + $0x5c] sm:$0xf]
      %v438 = vcombine.low %v389, %v397
      %v439 = vcombine.low %v405, %v413
      %v441 = vunpack.c.l.s4 1983009808
      %v442 = vunpack.c.0.s8 %v441
      %v443 = vlaneseq
      %v444 = vshrl.u32 %v443, 7
      %v445 = vsub.s32 %v442, %v444
      %v446 = vrot.slane %v438, %v445
      %v448 = vunpack.c.l.s4 1983009808
      %v449 = vunpack.c.0.s8 %v448
      %v450 = vlaneseq
      %v451 = vshrl.u32 %v450, 7
      %v452 = vsub.s32 %v449, %v451
      %v453 = vrot.slane %v439, %v452
      %v454 = vcombine.low %v446, %v453
      %v455 = vcombine.high %v446, %v453
      %v481 = vunpack.c.l.b16 %v414
      %v482 = vunpack.c.l.b16 %v415
      %v483 = vunpack.c.l.b16 %v416
      %v484 = vunpack.c.l.b16 %v417
      %v485 = vunpack.c.l.b16 %v418
      %v486 = vunpack.c.l.b16 %v419
      %v487 = vunpack.c.l.b16 %v420
      %v488 = vunpack.c.l.b16 %v421
      %v489 = vunpack.c.l.b16 %v422
      %v490 = vunpack.c.l.b16 %v423
      %v491 = vunpack.c.l.b16 %v424
      %v492 = vunpack.c.l.b16 %v425
      %v493 = vunpack.c.l.b16 %v426
      %v494 = vunpack.c.l.b16 %v427
      %v495 = vunpack.c.l.b16 %v428
      %v496 = vunpack.c.l.b16 %v429
      %v497 = vunpack.c.l.b16 %v430
      %v498 = vunpack.c.l.b16 %v431
      %v499 = vunpack.c.l.b16 %v432
      %v500 = vunpack.c.l.b16 %v433
      %v501 = vunpack.c.l.b16 %v434
      %v502 = vunpack.c.l.b16 %v435
      %v503 = vunpack.c.l.b16 %v436
      %v504 = vunpack.c.l.b16 %v437
      %v505 = vpack.c.b16 %v482, %v481
      %v506 = vpack.c.b16 %v484, %v483
      %v507 = vpack.c.b16 %v486, %v485
      %v508 = vpack.c.b16 %v488, %v487
      %v509 = vpack.c.b16 %v490, %v489
      %v510 = vpack.c.b16 %v492, %v491
      %v511 = vpack.c.b16 %v494, %v493
      %v512 = vpack.c.b16 %v496, %v495
      %v513 = vpack.c.b16 %v498, %v497
      %v514 = vpack.c.b16 %v500, %v499
      %v515 = vpack.c.b16 %v502, %v501
      %v516 = vpack.c.b16 %v504, %v503
      %v530 = vsel %vm365, %v455, 0
      %532 = vmatprep.subr.bf16.mxu0 0
      %533 = vmatpush1.bf16.msra.mxu0 %v512
      %534 = vmatprep.subr.bf16.mxu0 0
      %535 = vmatpush1.bf16.msra.mxu0 %v511
      %536 = vmatprep.subr.bf16.mxu0 0
      %537 = vmatpush1.bf16.msra.mxu0 %v510
      %538 = vmatprep.subr.bf16.mxu0 0
      %539 = vmatpush1.bf16.msra.mxu0 %v509
      %540 = vmatprep.subr.bf16.mxu0 0
      %541 = vmatpush1.bf16.msra.mxu0 %v508
      %542 = vmatprep.subr.bf16.mxu0 0
      %543 = vmatpush1.bf16.msra.mxu0 %v507
      %544 = vmatprep.subr.bf16.mxu0 0
      %545 = vmatpush1.bf16.msra.mxu0 %v506
      %546 = vmatprep.subr.bf16.mxu0 0
      %547 = vmatpush1.bf16.msra.mxu0 %v505
      %548 = vmatprep.subr.bf16.mxu0 0
      %549 = vmatpush2.bf16.msra.mxu0 0
      %550 = vmatprep.subr.bf16.mxu0 0
      %551 = vmatpush2.bf16.msra.mxu0 0
      %552 = vmatprep.subr.bf16.mxu0 0
      %553 = vmatpush2.bf16.msra.mxu0 0
      %554 = vmatprep.subr.bf16.mxu0 0
      %555 = vmatpush2.bf16.msra.mxu0 0
      %556 = vmatprep.subr.bf16.mxu0 0
      %557 = vmatpush2.bf16.msra.mxu0 %v516
      %558 = vmatprep.subr.bf16.mxu0 0
      %559 = vmatpush2.bf16.msra.mxu0 %v515
      %560 = vmatprep.subr.bf16.mxu0 0
      %561 = vmatpush2.bf16.msra.mxu0 %v514
      %562 = vmatprep.subr.bf16.mxu0 0
      %563 = vmatpush2.bf16.msra.mxu0 %v513
      %564 = vmatprep.mubr.bf16.mxu0 %v530
      %565 = vmatmul.mubr.bf16.gmra.mxu0 %v454
      %v566 = vpop.f32.mrf.mxu0
      %v567 = vadd.f32 0.0, %v566
      %v568 = vpop.f32.mrf.mxu0
      %v569 = vpop.f32.mrf.mxu0
      %v570 = vadd.f32 0.0, %v569
      %v571 = vpop.f32.mrf.mxu0
      %572 = vdwg.mxu0
      %v573 = vadd.f32 %v303, %v567
      %v574 = vadd.f32 %v303, %v570
      %v579 = vunpack.c.l.b16 %v294
      %v580 = vunpack.c.l.b16 %v295
      %v581 = vunpack.c.l.b16 %v296
      %v582 = vunpack.c.l.b16 %v297
      %v583 = vpack.c.b16 %v579, %v579
      %v584 = vpack.c.b16 %v580, %v580
      %v585 = vpack.c.b16 %v581, %v581
      %v586 = vpack.c.b16 %v582, %v582
      %587 = vrot.lane.b32.xlu0 %v583, 64
      %v588 = vpop.permute.xlu0 %587
      %589 = vrot.lane.b32.xlu0 %v584, 64
      %v590 = vpop.permute.xlu0 %589
      %591 = vrot.lane.b32.xlu0 %v585, 64
      %v592 = vpop.permute.xlu0 %591
      %593 = vrot.lane.b32.xlu0 %v586, 64
      %v594 = vpop.permute.xlu0 %593
      %v599 = vunpack.c.l.b16 %v290
      %v600 = vunpack.c.l.b16 %v291
      %v601 = vunpack.c.l.b16 %v292
      %v602 = vunpack.c.l.b16 %v293
      %v603 = vpack.c.b16 %v599, %v599
      %v604 = vpack.c.b16 %v600, %v600
      %v605 = vpack.c.b16 %v601, %v601
      %v606 = vpack.c.b16 %v602, %v602
      %v608 = vshrl.u32 %v603, 16
      %v610 = vshll.u32 %v603, 16
      %v612 = vrot.slane %v610, 1
      %v613 = vor.u32 %v608, %v612
      %v615 = vshrl.u32 %v604, 16
      %v617 = vshll.u32 %v604, 16
      %v619 = vrot.slane %v617, 1
      %v620 = vor.u32 %v615, %v619
      %v622 = vshrl.u32 %v605, 16
      %v624 = vshll.u32 %v605, 16
      %v626 = vrot.slane %v624, 1
      %v627 = vor.u32 %v622, %v626
      %v629 = vshrl.u32 %v606, 16
      %v631 = vshll.u32 %v606, 16
      %v633 = vrot.slane %v631, 1
      %v634 = vor.u32 %v629, %v633
      %v637 = vsel %vm365, %v290, %v588
      %v640 = vsel %vm365, %v291, %v590
      %v643 = vsel %vm365, %v292, %v592
      %v646 = vsel %vm365, %v293, %v594
      %v651 = vcombine.low %v637, %v613
      %v653 = vunpack.c.l.s4 1983009808
      %v654 = vunpack.c.0.s8 %v653
      %v655 = vlaneseq
      %v656 = vshrl.u32 %v655, 7
      %v657 = vsub.s32 %v654, %v656
      %v658 = vrot.slane %v651, %v657
      %v659 = vcombine.low %v640, %v620
      %v661 = vunpack.c.l.s4 1983009808
      %v662 = vunpack.c.0.s8 %v661
      %v663 = vlaneseq
      %v664 = vshrl.u32 %v663, 7
      %v665 = vsub.s32 %v662, %v664
      %v666 = vrot.slane %v659, %v665
      %v667 = vcombine.low %v643, %v627
      %v669 = vunpack.c.l.s4 1983009808
      %v670 = vunpack.c.0.s8 %v669
      %v671 = vlaneseq
      %v672 = vshrl.u32 %v671, 7
      %v673 = vsub.s32 %v670, %v672
      %v674 = vrot.slane %v667, %v673
      %v675 = vcombine.low %v646, %v634
      %v677 = vunpack.c.l.s4 1983009808
      %v678 = vunpack.c.0.s8 %v677
      %v679 = vlaneseq
      %v680 = vshrl.u32 %v679, 7
      %v681 = vsub.s32 %v678, %v680
      %v682 = vrot.slane %v675, %v681
      %s683 = scalar_lea.vmem %s1, 96
      %v684 = vld [vmem:[%s683] sm:$0xf]
      %v685 = vld [vmem:[%s683 + $0x4] sm:$0xf]
      %v686 = vld [vmem:[%s683 + $0x8] sm:$0xf]
      %v687 = vld [vmem:[%s683 + $0xc] sm:$0xf]
      %v688 = vld [vmem:[%s683 + $0x10] sm:$0xf]
      %v689 = vld [vmem:[%s683 + $0x14] sm:$0xf]
      %v690 = vld [vmem:[%s683 + $0x18] sm:$0xf]
      %v691 = vld [vmem:[%s683 + $0x1c] sm:$0xf]
      %v692 = vld [vmem:[%s683 + $0x20] sm:$0xf]
      %v693 = vld [vmem:[%s683 + $0x24] sm:$0xf]
      %v694 = vld [vmem:[%s683 + $0x28] sm:$0xf]
      %v695 = vld [vmem:[%s683 + $0x2c] sm:$0xf]
      %v696 = vld [vmem:[%s683 + $0x30] sm:$0xf]
      %v697 = vld [vmem:[%s683 + $0x34] sm:$0xf]
      %v698 = vld [vmem:[%s683 + $0x38] sm:$0xf]
      %v699 = vld [vmem:[%s683 + $0x3c] sm:$0xf]
      %v700 = vld [vmem:[%s683 + $0x40] sm:$0xf]
      %v701 = vld [vmem:[%s683 + $0x44] sm:$0xf]
      %v702 = vld [vmem:[%s683 + $0x48] sm:$0xf]
      %v703 = vld [vmem:[%s683 + $0x4c] sm:$0xf]
      %v704 = vld [vmem:[%s683 + $0x50] sm:$0xf]
      %v705 = vld [vmem:[%s683 + $0x54] sm:$0xf]
      %v706 = vld [vmem:[%s683 + $0x58] sm:$0xf]
      %v707 = vld [vmem:[%s683 + $0x5c] sm:$0xf]
      %v708 = vcombine.low %v658, %v666
      %v709 = vcombine.low %v674, %v682
      %v711 = vunpack.c.l.s4 1983009808
      %v712 = vunpack.c.0.s8 %v711
      %v713 = vlaneseq
      %v714 = vshrl.u32 %v713, 7
      %v715 = vsub.s32 %v712, %v714
      %v716 = vrot.slane %v708, %v715
      %v718 = vunpack.c.l.s4 1983009808
      %v719 = vunpack.c.0.s8 %v718
      %v720 = vlaneseq
      %v721 = vshrl.u32 %v720, 7
      %v722 = vsub.s32 %v719, %v721
      %v723 = vrot.slane %v709, %v722
      %v724 = vcombine.low %v716, %v723
      %v725 = vcombine.high %v716, %v723
      %v751 = vunpack.c.l.b16 %v684
      %v752 = vunpack.c.l.b16 %v685
      %v753 = vunpack.c.l.b16 %v686
      %v754 = vunpack.c.l.b16 %v687
      %v755 = vunpack.c.l.b16 %v688
      %v756 = vunpack.c.l.b16 %v689
      %v757 = vunpack.c.l.b16 %v690
      %v758 = vunpack.c.l.b16 %v691
      %v759 = vunpack.c.l.b16 %v692
      %v760 = vunpack.c.l.b16 %v693
      %v761 = vunpack.c.l.b16 %v694
      %v762 = vunpack.c.l.b16 %v695
      %v763 = vunpack.c.l.b16 %v696
      %v764 = vunpack.c.l.b16 %v697
      %v765 = vunpack.c.l.b16 %v698
      %v766 = vunpack.c.l.b16 %v699
      %v767 = vunpack.c.l.b16 %v700
      %v768 = vunpack.c.l.b16 %v701
      %v769 = vunpack.c.l.b16 %v702
      %v770 = vunpack.c.l.b16 %v703
      %v771 = vunpack.c.l.b16 %v704
      %v772 = vunpack.c.l.b16 %v705
      %v773 = vunpack.c.l.b16 %v706
      %v774 = vunpack.c.l.b16 %v707
      %v775 = vpack.c.b16 %v752, %v751
      %v776 = vpack.c.b16 %v754, %v753
      %v777 = vpack.c.b16 %v756, %v755
      %v778 = vpack.c.b16 %v758, %v757
      %v779 = vpack.c.b16 %v760, %v759
      %v780 = vpack.c.b16 %v762, %v761
      %v781 = vpack.c.b16 %v764, %v763
      %v782 = vpack.c.b16 %v766, %v765
      %v783 = vpack.c.b16 %v768, %v767
      %v784 = vpack.c.b16 %v770, %v769
      %v785 = vpack.c.b16 %v772, %v771
      %v786 = vpack.c.b16 %v774, %v773
      %v800 = vsel %vm365, %v725, 0
      %802 = vmatprep.subr.bf16.mxu0 0
      %803 = vmatpush1.bf16.msra.mxu0 %v782
      %804 = vmatprep.subr.bf16.mxu0 0
      %805 = vmatpush1.bf16.msra.mxu0 %v781
      %806 = vmatprep.subr.bf16.mxu0 0
      %807 = vmatpush1.bf16.msra.mxu0 %v780
      %808 = vmatprep.subr.bf16.mxu0 0
      %809 = vmatpush1.bf16.msra.mxu0 %v779
      %810 = vmatprep.subr.bf16.mxu0 0
      %811 = vmatpush1.bf16.msra.mxu0 %v778
      %812 = vmatprep.subr.bf16.mxu0 0
      %813 = vmatpush1.bf16.msra.mxu0 %v777
      %814 = vmatprep.subr.bf16.mxu0 0
      %815 = vmatpush1.bf16.msra.mxu0 %v776
      %816 = vmatprep.subr.bf16.mxu0 0
      %817 = vmatpush1.bf16.msra.mxu0 %v775
      %818 = vmatprep.subr.bf16.mxu0 0
      %819 = vmatpush2.bf16.msra.mxu0 0
      %820 = vmatprep.subr.bf16.mxu0 0
      %821 = vmatpush2.bf16.msra.mxu0 0
      %822 = vmatprep.subr.bf16.mxu0 0
      %823 = vmatpush2.bf16.msra.mxu0 0
      %824 = vmatprep.subr.bf16.mxu0 0
      %825 = vmatpush2.bf16.msra.mxu0 0
      %826 = vmatprep.subr.bf16.mxu0 0
      %827 = vmatpush2.bf16.msra.mxu0 %v786
      %828 = vmatprep.subr.bf16.mxu0 0
      %829 = vmatpush2.bf16.msra.mxu0 %v785
      %830 = vmatprep.subr.bf16.mxu0 0
      %831 = vmatpush2.bf16.msra.mxu0 %v784
      %832 = vmatprep.subr.bf16.mxu0 0
      %833 = vmatpush2.bf16.msra.mxu0 %v783
      %834 = vmatprep.mubr.bf16.mxu0 %v800
      %835 = vmatmul.mubr.bf16.gmra.mxu0 %v724
      %v836 = vpop.f32.mrf.mxu0
      %v837 = vadd.f32 0.0, %v836
      %v838 = vpop.f32.mrf.mxu0
      %v839 = vpop.f32.mrf.mxu0
      %v840 = vadd.f32 0.0, %v839
      %v841 = vpop.f32.mrf.mxu0
      %842 = vdwg.mxu0
      %v843 = vadd.f32 %v573, %v837
      %v844 = vadd.f32 %v574, %v840
      %v846 = vunpack.c.l.b16 %v289
      %v847 = vpack.c.b16 %v846, %v846
      %848 = vrot.lane.b32.xlu0 %v847, 64
      %v849 = vpop.permute.xlu0 %848
      %v851 = vunpack.c.l.b16 %v284
      %v852 = vpack.c.b16 %v851, %v851
      %v854 = vshrl.u32 %v852, 16
      %v856 = vshll.u32 %v852, 16
      %v858 = vrot.slane %v856, 1
      %v859 = vor.u32 %v854, %v858
      %v862 = vsel %vm365, %v284, %v849
      %v864 = vcombine.low %v862, %v859
      %v866 = vunpack.c.l.s4 1983009808
      %v867 = vunpack.c.0.s8 %v866
      %v868 = vlaneseq
      %v869 = vshrl.u32 %v868, 7
      %v870 = vsub.s32 %v867, %v869
      %v871 = vrot.slane %v864, %v870
      %s872 = scalar_lea.vmem %s1, 192
      %v873 = vld [vmem:[%s872] sm:$0xf]
      %v874 = vld [vmem:[%s872 + $0x4] sm:$0xf]
      %v875 = vld [vmem:[%s872 + $0x8] sm:$0xf]
      %v876 = vld [vmem:[%s872 + $0xc] sm:$0xf]
      %v877 = vld [vmem:[%s872 + $0x10] sm:$0xf]
      %v878 = vld [vmem:[%s872 + $0x14] sm:$0xf]
      %v879 = vld [vmem:[%s872 + $0x18] sm:$0xf]
      %v880 = vld [vmem:[%s872 + $0x1c] sm:$0xf]
      %v881 = vld [vmem:[%s872 + $0x20] sm:$0xf]
      %v882 = vld [vmem:[%s872 + $0x24] sm:$0xf]
      %v883 = vld [vmem:[%s872 + $0x28] sm:$0xf]
      %v884 = vld [vmem:[%s872 + $0x2c] sm:$0xf]
      %v885 = vld [vmem:[%s872 + $0x30] sm:$0xf]
      %v886 = vld [vmem:[%s872 + $0x34] sm:$0xf]
      %v887 = vld [vmem:[%s872 + $0x38] sm:$0xf]
      %v888 = vld [vmem:[%s872 + $0x3c] sm:$0xf]
      %v889 = vld [vmem:[%s872 + $0x40] sm:$0xf]
      %v890 = vld [vmem:[%s872 + $0x44] sm:$0xf]
      %v891 = vld [vmem:[%s872 + $0x48] sm:$0xf]
      %v892 = vld [vmem:[%s872 + $0x4c] sm:$0xf]
      %v893 = vld [vmem:[%s872 + $0x50] sm:$0xf]
      %v894 = vld [vmem:[%s872 + $0x54] sm:$0xf]
      %v895 = vld [vmem:[%s872 + $0x58] sm:$0xf]
      %v896 = vld [vmem:[%s872 + $0x5c] sm:$0xf]
      %v897 = vcombine.low %v397, %v405
      %v898 = vcombine.low %v413, %v871
      %v900 = vunpack.c.l.s4 1983009808
      %v901 = vunpack.c.0.s8 %v900
      %v902 = vlaneseq
      %v903 = vshrl.u32 %v902, 7
      %v904 = vsub.s32 %v901, %v903
      %v905 = vrot.slane %v897, %v904
      %v907 = vunpack.c.l.s4 1983009808
      %v908 = vunpack.c.0.s8 %v907
      %v909 = vlaneseq
      %v910 = vshrl.u32 %v909, 7
      %v911 = vsub.s32 %v908, %v910
      %v912 = vrot.slane %v898, %v911
      %v913 = vcombine.low %v905, %v912
      %v914 = vcombine.high %v905, %v912
      %v940 = vunpack.c.l.b16 %v873
      %v941 = vunpack.c.l.b16 %v874
      %v942 = vunpack.c.l.b16 %v875
      %v943 = vunpack.c.l.b16 %v876
      %v944 = vunpack.c.l.b16 %v877
      %v945 = vunpack.c.l.b16 %v878
      %v946 = vunpack.c.l.b16 %v879
      %v947 = vunpack.c.l.b16 %v880
      %v948 = vunpack.c.l.b16 %v881
      %v949 = vunpack.c.l.b16 %v882
      %v950 = vunpack.c.l.b16 %v883
      %v951 = vunpack.c.l.b16 %v884
      %v952 = vunpack.c.l.b16 %v885
      %v953 = vunpack.c.l.b16 %v886
      %v954 = vunpack.c.l.b16 %v887
      %v955 = vunpack.c.l.b16 %v888
      %v956 = vunpack.c.l.b16 %v889
      %v957 = vunpack.c.l.b16 %v890
      %v958 = vunpack.c.l.b16 %v891
      %v959 = vunpack.c.l.b16 %v892
      %v960 = vunpack.c.l.b16 %v893
      %v961 = vunpack.c.l.b16 %v894
      %v962 = vunpack.c.l.b16 %v895
      %v963 = vunpack.c.l.b16 %v896
      %v964 = vpack.c.b16 %v941, %v940
      %v965 = vpack.c.b16 %v943, %v942
      %v966 = vpack.c.b16 %v945, %v944
      %v967 = vpack.c.b16 %v947, %v946
      %v968 = vpack.c.b16 %v949, %v948
      %v969 = vpack.c.b16 %v951, %v950
      %v970 = vpack.c.b16 %v953, %v952
      %v971 = vpack.c.b16 %v955, %v954
      %v972 = vpack.c.b16 %v957, %v956
      %v973 = vpack.c.b16 %v959, %v958
      %v974 = vpack.c.b16 %v961, %v960
      %v975 = vpack.c.b16 %v963, %v962
      %v989 = vsel %vm365, %v914, 0
      %991 = vmatprep.subr.bf16.mxu0 0
      %992 = vmatpush1.bf16.msra.mxu0 %v971
      %993 = vmatprep.subr.bf16.mxu0 0
      %994 = vmatpush1.bf16.msra.mxu0 %v970
      %995 = vmatprep.subr.bf16.mxu0 0
      %996 = vmatpush1.bf16.msra.mxu0 %v969
      %997 = vmatprep.subr.bf16.mxu0 0
      %998 = vmatpush1.bf16.msra.mxu0 %v968
      %999 = vmatprep.subr.bf16.mxu0 0
      %1000 = vmatpush1.bf16.msra.mxu0 %v967
      %1001 = vmatprep.subr.bf16.mxu0 0
      %1002 = vmatpush1.bf16.msra.mxu0 %v966
      %1003 = vmatprep.subr.bf16.mxu0 0
      %1004 = vmatpush1.bf16.msra.mxu0 %v965
      %1005 = vmatprep.subr.bf16.mxu0 0
      %1006 = vmatpush1.bf16.msra.mxu0 %v964
      %1007 = vmatprep.subr.bf16.mxu0 0
      %1008 = vmatpush2.bf16.msra.mxu0 0
      %1009 = vmatprep.subr.bf16.mxu0 0
      %1010 = vmatpush2.bf16.msra.mxu0 0
      %1011 = vmatprep.subr.bf16.mxu0 0
      %1012 = vmatpush2.bf16.msra.mxu0 0
      %1013 = vmatprep.subr.bf16.mxu0 0
      %1014 = vmatpush2.bf16.msra.mxu0 0
      %1015 = vmatprep.subr.bf16.mxu0 0
      %1016 = vmatpush2.bf16.msra.mxu0 %v975
      %1017 = vmatprep.subr.bf16.mxu0 0
      %1018 = vmatpush2.bf16.msra.mxu0 %v974
      %1019 = vmatprep.subr.bf16.mxu0 0
      %1020 = vmatpush2.bf16.msra.mxu0 %v973
      %1021 = vmatprep.subr.bf16.mxu0 0
      %1022 = vmatpush2.bf16.msra.mxu0 %v972
      %1023 = vmatprep.mubr.bf16.mxu0 %v989
      %1024 = vmatmul.mubr.bf16.gmra.mxu0 %v913
      %v1025 = vpop.f32.mrf.mxu0
      %v1026 = vadd.f32 0.0, %v1025
      %v1027 = vpop.f32.mrf.mxu0
      %v1028 = vpop.f32.mrf.mxu0
      %v1029 = vadd.f32 0.0, %v1028
      %v1030 = vpop.f32.mrf.mxu0
      %1031 = vdwg.mxu0
      %v1032 = vadd.f32 %v843, %v1026
      %v1033 = vadd.f32 %v844, %v1029
      %v1036 = vcombine.high %v1032, %v1032
      %v1037 = vcombine.high %v1033, %v1033
      %v1040 = vmul.f32 %v1032, 0.01
      %v1041 = vmul.f32 %v1036, 0.01
      %v1042 = vmul.f32 %v1033, 0.01
      %v1043 = vmul.f32 %v1037, 0.01
      %v1044 = vmax.f32 %v1032, %v1040
      %v1045 = vmax.f32 %v1036, %v1041
      %v1046 = vmax.f32 %v1033, %v1042
      %v1047 = vmax.f32 %v1037, %v1043
      %v1048 = vpack.c.bf16 %v1044, %v1044
      %v1049 = vpack.c.bf16 %v1045, %v1045
      %v1050 = vpack.c.bf16 %v1046, %v1046
      %v1051 = vpack.c.bf16 %v1047, %v1047
      %v1053 = vshrl.u32 0, 16
      %v1055 = vrot.slane %v1053, 7
      %v1056 = vshll.u32 0, 16
      %v1058 = vor.u32 %v1055, %v1056
      %v1060 = vshrl.u32 %v1048, 16
      %v1062 = vrot.slane %v1060, 7
      %v1063 = vshll.u32 %v1048, 16
      %v1065 = vor.u32 %v1062, %v1063
      %v1067 = vshrl.u32 %v1049, 16
      %v1069 = vrot.slane %v1067, 7
      %v1070 = vshll.u32 %v1049, 16
      %v1072 = vor.u32 %v1069, %v1070
      %v1074 = vshrl.u32 %v1050, 16
      %v1076 = vrot.slane %v1074, 7
      %v1077 = vshll.u32 %v1050, 16
      %v1079 = vor.u32 %v1076, %v1077
      %v1081 = vshrl.u32 %v1051, 16
      %v1083 = vrot.slane %v1081, 7
      %v1084 = vshll.u32 %v1051, 16
      %v1086 = vor.u32 %v1083, %v1084
      %vm1092 = vcmask 1040384
      %vm1093 = vsmask.f32 256
      %vm1094 = vmand %vm1092, %vm1093
      %v1095 = vsel %vm1094, 0, %v1058
      %v1096 = vsel %vm1094, 0, %v1065
      %v1097 = vsel %vm1094, 0, %v1072
      %v1098 = vsel %vm1094, 0, %v1079
      %v1099 = vsel %vm1094, 0, %v1086
      %vm1100 = vcmask 1042432
      %vm1101 = vsmask.f32 2304
      %vm1102 = vmand %vm1100, %vm1101
      %v1103 = vsel %vm1102, %v1095, 0
      %v1104 = vsel %vm1102, %v1096, 0
      %v1105 = vsel %vm1102, %v1097, 0
      %v1106 = vsel %vm1102, %v1098, 0
      %v1107 = vsel %vm1102, %v1099, 0
      %v1109 = vshrl.u32 %v1103, 16
      %v1111 = vshll.u32 %v1103, 16
      %v1113 = vrot.slane %v1111, 1
      %v1114 = vor.u32 %v1109, %v1113
      %v1116 = vshrl.u32 %v1104, 16
      %v1118 = vshll.u32 %v1104, 16
      %v1120 = vrot.slane %v1118, 1
      %v1121 = vor.u32 %v1116, %v1120
      %v1123 = vshrl.u32 %v1105, 16
      %v1125 = vshll.u32 %v1105, 16
      %v1127 = vrot.slane %v1125, 1
      %v1128 = vor.u32 %v1123, %v1127
      %v1130 = vshrl.u32 %v1106, 16
      %v1132 = vshll.u32 %v1106, 16
      %v1134 = vrot.slane %v1132, 1
      %v1135 = vor.u32 %v1130, %v1134
      %v1137 = vshrl.u32 %v1107, 16
      %v1139 = vshll.u32 %v1107, 16
      %v1141 = vrot.slane %v1139, 1
      %v1142 = vor.u32 %v1137, %v1141
      %1143 = vrot.lane.b32.xlu0 %v1114, 96
      %v1144 = vpop.permute.xlu0 %1143
      %1145 = vrot.lane.b32.xlu0 %v1121, 96
      %v1146 = vpop.permute.xlu0 %1145
      %1147 = vrot.lane.b32.xlu0 %v1128, 96
      %v1148 = vpop.permute.xlu0 %1147
      %1149 = vrot.lane.b32.xlu0 %v1135, 96
      %v1150 = vpop.permute.xlu0 %1149
      %1151 = vrot.lane.b32.xlu0 %v1142, 96
      %v1152 = vpop.permute.xlu0 %1151
      %v1158 = vrot.slane %v1103, 1
      %v1159 = vrot.slane %v1104, 1
      %v1160 = vrot.slane %v1105, 1
      %v1161 = vrot.slane %v1106, 1
      %v1162 = vrot.slane %v1107, 1
      %1163 = vrot.lane.b32.xlu0 %v1158, 64
      %v1164 = vpop.permute.xlu0 %1163
      %1165 = vrot.lane.b32.xlu0 %v1159, 64
      %v1166 = vpop.permute.xlu0 %1165
      %1167 = vrot.lane.b32.xlu0 %v1160, 64
      %v1168 = vpop.permute.xlu0 %1167
      %1169 = vrot.lane.b32.xlu0 %v1161, 64
      %v1170 = vpop.permute.xlu0 %1169
      %1171 = vrot.lane.b32.xlu0 %v1162, 64
      %v1172 = vpop.permute.xlu0 %1171
      %vm1173 = vcmask 785408
      %v1175 = vsel %vm1173, %v1103, %v1144
      %v1177 = vsel %vm1173, %v1104, %v1146
      %v1179 = vsel %vm1173, %v1105, %v1148
      %v1181 = vsel %vm1173, %v1106, %v1150
      %v1183 = vsel %vm1173, %v1107, %v1152
      %v1185 = vsel %vm365, %v1144, %v1164
      %v1187 = vsel %vm365, %v1146, %v1166
      %v1189 = vsel %vm365, %v1148, %v1168
      %v1191 = vsel %vm365, %v1150, %v1170
      %v1193 = vsel %vm365, %v1152, %v1172
      %v1194 = vld [vmem:[%s4] sm:$0x1]
      %v1196 = vlaneseq
      %v1197 = vshrl.u32 %v1196, 7
      %v1198 = vsub.s32 0, %v1197
      %v1199 = vrot.slane %v1194, %v1198
      %v1209 = vcombine.low %v1175, %v1185
      %v1211 = vunpack.c.l.s4 1983009808
      %v1212 = vunpack.c.0.s8 %v1211
      %v1213 = vlaneseq
      %v1214 = vshrl.u32 %v1213, 7
      %v1215 = vsub.s32 %v1212, %v1214
      %v1216 = vrot.slane %v1209, %v1215
      %v1218 = vunpack.c.l.s4 1983009808
      %v1219 = vunpack.c.0.s8 %v1218
      %v1220 = vlaneseq
      %v1221 = vshrl.u32 %v1220, 7
      %v1222 = vsub.s32 %v1219, %v1221
      %v1223 = vrot.slane %v1164, %v1222
      %v1224 = vcombine.low %v1216, %v1223
      %v1225 = vcombine.low %v1177, %v1187
      %v1227 = vunpack.c.l.s4 1983009808
      %v1228 = vunpack.c.0.s8 %v1227
      %v1229 = vlaneseq
      %v1230 = vshrl.u32 %v1229, 7
      %v1231 = vsub.s32 %v1228, %v1230
      %v1232 = vrot.slane %v1225, %v1231
      %v1234 = vunpack.c.l.s4 1983009808
      %v1235 = vunpack.c.0.s8 %v1234
      %v1236 = vlaneseq
      %v1237 = vshrl.u32 %v1236, 7
      %v1238 = vsub.s32 %v1235, %v1237
      %v1239 = vrot.slane %v1166, %v1238
      %v1240 = vcombine.low %v1232, %v1239
      %v1241 = vcombine.low %v1179, %v1189
      %v1243 = vunpack.c.l.s4 1983009808
      %v1244 = vunpack.c.0.s8 %v1243
      %v1245 = vlaneseq
      %v1246 = vshrl.u32 %v1245, 7
      %v1247 = vsub.s32 %v1244, %v1246
      %v1248 = vrot.slane %v1241, %v1247
      %v1250 = vunpack.c.l.s4 1983009808
      %v1251 = vunpack.c.0.s8 %v1250
      %v1252 = vlaneseq
      %v1253 = vshrl.u32 %v1252, 7
      %v1254 = vsub.s32 %v1251, %v1253
      %v1255 = vrot.slane %v1168, %v1254
      %v1256 = vcombine.low %v1248, %v1255
      %v1257 = vcombine.low %v1181, %v1191
      %v1259 = vunpack.c.l.s4 1983009808
      %v1260 = vunpack.c.0.s8 %v1259
      %v1261 = vlaneseq
      %v1262 = vshrl.u32 %v1261, 7
      %v1263 = vsub.s32 %v1260, %v1262
      %v1264 = vrot.slane %v1257, %v1263
      %v1266 = vunpack.c.l.s4 1983009808
      %v1267 = vunpack.c.0.s8 %v1266
      %v1268 = vlaneseq
      %v1269 = vshrl.u32 %v1268, 7
      %v1270 = vsub.s32 %v1267, %v1269
      %v1271 = vrot.slane %v1170, %v1270
      %v1272 = vcombine.low %v1264, %v1271
      %v1273 = vld [vmem:[%s3] sm:$0xf]
      %v1274 = vld [vmem:[%s3 + $0x4] sm:$0xf]
      %v1275 = vld [vmem:[%s3 + $0x8] sm:$0xf]
      %v1276 = vld [vmem:[%s3 + $0xc] sm:$0xf]
      %v1277 = vld [vmem:[%s3 + $0x10] sm:$0xf]
      %v1278 = vld [vmem:[%s3 + $0x14] sm:$0xf]
      %v1279 = vld [vmem:[%s3 + $0x18] sm:$0xf]
      %v1280 = vld [vmem:[%s3 + $0x1c] sm:$0xf]
      %v1281 = vld [vmem:[%s3 + $0x20] sm:$0xf]
      %v1282 = vld [vmem:[%s3 + $0x24] sm:$0xf]
      %v1283 = vld [vmem:[%s3 + $0x28] sm:$0xf]
      %v1284 = vld [vmem:[%s3 + $0x2c] sm:$0xf]
      %v1285 = vld [vmem:[%s3 + $0x30] sm:$0xf]
      %v1286 = vld [vmem:[%s3 + $0x34] sm:$0xf]
      %v1287 = vld [vmem:[%s3 + $0x38] sm:$0xf]
      %v1288 = vld [vmem:[%s3 + $0x3c] sm:$0xf]
      %v1289 = vld [vmem:[%s3 + $0x40] sm:$0xf]
      %v1290 = vld [vmem:[%s3 + $0x44] sm:$0xf]
      %v1291 = vld [vmem:[%s3 + $0x48] sm:$0xf]
      %v1292 = vld [vmem:[%s3 + $0x4c] sm:$0xf]
      %v1293 = vld [vmem:[%s3 + $0x50] sm:$0xf]
      %v1294 = vld [vmem:[%s3 + $0x54] sm:$0xf]
      %v1295 = vld [vmem:[%s3 + $0x58] sm:$0xf]
      %v1296 = vld [vmem:[%s3 + $0x5c] sm:$0xf]
      %v1297 = vld [vmem:[%s3 + $0x60] sm:$0xf]
      %v1298 = vld [vmem:[%s3 + $0x64] sm:$0xf]
      %v1299 = vld [vmem:[%s3 + $0x68] sm:$0xf]
      %v1300 = vld [vmem:[%s3 + $0x6c] sm:$0xf]
      %v1301 = vld [vmem:[%s3 + $0x70] sm:$0xf]
      %v1302 = vld [vmem:[%s3 + $0x74] sm:$0xf]
      %v1303 = vld [vmem:[%s3 + $0x78] sm:$0xf]
      %v1304 = vld [vmem:[%s3 + $0x7c] sm:$0xf]
      %v1305 = vld [vmem:[%s3 + $0x80] sm:$0xf]
      %v1306 = vld [vmem:[%s3 + $0x84] sm:$0xf]
      %v1307 = vld [vmem:[%s3 + $0x88] sm:$0xf]
      %v1308 = vld [vmem:[%s3 + $0x8c] sm:$0xf]
      %v1309 = vcombine.low %v1224, %v1240
      %v1310 = vcombine.high %v1224, %v1240
      %v1311 = vcombine.low %v1256, %v1272
      %v1312 = vcombine.high %v1256, %v1272
      %v1314 = vunpack.c.l.s4 1983009808
      %v1315 = vunpack.c.0.s8 %v1314
      %v1316 = vlaneseq
      %v1317 = vshrl.u32 %v1316, 7
      %v1318 = vsub.s32 %v1315, %v1317
      %v1319 = vrot.slane %v1309, %v1318
      %v1321 = vunpack.c.l.s4 1983009808
      %v1322 = vunpack.c.0.s8 %v1321
      %v1323 = vlaneseq
      %v1324 = vshrl.u32 %v1323, 7
      %v1325 = vsub.s32 %v1322, %v1324
      %v1326 = vrot.slane %v1310, %v1325
      %v1328 = vunpack.c.l.s4 1983009808
      %v1329 = vunpack.c.0.s8 %v1328
      %v1330 = vlaneseq
      %v1331 = vshrl.u32 %v1330, 7
      %v1332 = vsub.s32 %v1329, %v1331
      %v1333 = vrot.slane %v1311, %v1332
      %v1335 = vunpack.c.l.s4 1983009808
      %v1336 = vunpack.c.0.s8 %v1335
      %v1337 = vlaneseq
      %v1338 = vshrl.u32 %v1337, 7
      %v1339 = vsub.s32 %v1336, %v1338
      %v1340 = vrot.slane %v1312, %v1339
      %v1341 = vcombine.low %v1319, %v1333
      %v1342 = vcombine.high %v1319, %v1333
      %v1343 = vcombine.low %v1326, %v1340
      %v1382 = vunpack.c.l.b16 %v1273
      %v1383 = vunpack.c.l.b16 %v1274
      %v1384 = vunpack.c.l.b16 %v1275
      %v1385 = vunpack.c.l.b16 %v1276
      %v1386 = vunpack.c.l.b16 %v1277
      %v1387 = vunpack.c.l.b16 %v1278
      %v1388 = vunpack.c.l.b16 %v1279
      %v1389 = vunpack.c.l.b16 %v1280
      %v1390 = vunpack.c.l.b16 %v1281
      %v1391 = vunpack.c.l.b16 %v1282
      %v1392 = vunpack.c.l.b16 %v1283
      %v1393 = vunpack.c.l.b16 %v1284
      %v1394 = vunpack.c.l.b16 %v1285
      %v1395 = vunpack.c.l.b16 %v1286
      %v1396 = vunpack.c.l.b16 %v1287
      %v1397 = vunpack.c.l.b16 %v1288
      %v1398 = vunpack.c.l.b16 %v1289
      %v1399 = vunpack.c.l.b16 %v1290
      %v1400 = vunpack.c.l.b16 %v1291
      %v1401 = vunpack.c.l.b16 %v1292
      %v1402 = vunpack.c.l.b16 %v1293
      %v1403 = vunpack.c.l.b16 %v1294
      %v1404 = vunpack.c.l.b16 %v1295
      %v1405 = vunpack.c.l.b16 %v1296
      %v1406 = vunpack.c.l.b16 %v1297
      %v1407 = vunpack.c.l.b16 %v1298
      %v1408 = vunpack.c.l.b16 %v1299
      %v1409 = vunpack.c.l.b16 %v1300
      %v1410 = vunpack.c.l.b16 %v1301
      %v1411 = vunpack.c.l.b16 %v1302
      %v1412 = vunpack.c.l.b16 %v1303
      %v1413 = vunpack.c.l.b16 %v1304
      %v1414 = vunpack.c.l.b16 %v1305
      %v1415 = vunpack.c.l.b16 %v1306
      %v1416 = vunpack.c.l.b16 %v1307
      %v1417 = vunpack.c.l.b16 %v1308
      %v1418 = vpack.c.b16 %v1383, %v1382
      %v1419 = vpack.c.b16 %v1385, %v1384
      %v1420 = vpack.c.b16 %v1387, %v1386
      %v1421 = vpack.c.b16 %v1389, %v1388
      %v1422 = vpack.c.b16 %v1391, %v1390
      %v1423 = vpack.c.b16 %v1393, %v1392
      %v1424 = vpack.c.b16 %v1395, %v1394
      %v1425 = vpack.c.b16 %v1397, %v1396
      %v1426 = vpack.c.b16 %v1399, %v1398
      %v1427 = vpack.c.b16 %v1401, %v1400
      %v1428 = vpack.c.b16 %v1403, %v1402
      %v1429 = vpack.c.b16 %v1405, %v1404
      %v1430 = vpack.c.b16 %v1407, %v1406
      %v1431 = vpack.c.b16 %v1409, %v1408
      %v1432 = vpack.c.b16 %v1411, %v1410
      %v1433 = vpack.c.b16 %v1413, %v1412
      %v1434 = vpack.c.b16 %v1415, %v1414
      %v1435 = vpack.c.b16 %v1417, %v1416
      %vm1454 = vcmask 261120
      %v1456 = vsel %vm1454, %v1343, 0
      %1458 = vmatprep.subr.bf16.mxu0 0
      %1459 = vmatpush1.bf16.msra.mxu0 %v1425
      %1460 = vmatprep.subr.bf16.mxu0 0
      %1461 = vmatpush1.bf16.msra.mxu0 %v1424
      %1462 = vmatprep.subr.bf16.mxu0 0
      %1463 = vmatpush1.bf16.msra.mxu0 %v1423
      %1464 = vmatprep.subr.bf16.mxu0 0
      %1465 = vmatpush1.bf16.msra.mxu0 %v1422
      %1466 = vmatprep.subr.bf16.mxu0 0
      %1467 = vmatpush1.bf16.msra.mxu0 %v1421
      %1468 = vmatprep.subr.bf16.mxu0 0
      %1469 = vmatpush1.bf16.msra.mxu0 %v1420
      %1470 = vmatprep.subr.bf16.mxu0 0
      %1471 = vmatpush1.bf16.msra.mxu0 %v1419
      %1472 = vmatprep.subr.bf16.mxu0 0
      %1473 = vmatpush1.bf16.msra.mxu0 %v1418
      %1474 = vmatprep.subr.bf16.mxu0 0
      %1475 = vmatpush2.bf16.msra.mxu0 %v1433
      %1476 = vmatprep.subr.bf16.mxu0 0
      %1477 = vmatpush2.bf16.msra.mxu0 %v1432
      %1478 = vmatprep.subr.bf16.mxu0 0
      %1479 = vmatpush2.bf16.msra.mxu0 %v1431
      %1480 = vmatprep.subr.bf16.mxu0 0
      %1481 = vmatpush2.bf16.msra.mxu0 %v1430
      %1482 = vmatprep.subr.bf16.mxu0 0
      %1483 = vmatpush2.bf16.msra.mxu0 %v1429
      %1484 = vmatprep.subr.bf16.mxu0 0
      %1485 = vmatpush2.bf16.msra.mxu0 %v1428
      %1486 = vmatprep.subr.bf16.mxu0 0
      %1487 = vmatpush2.bf16.msra.mxu0 %v1427
      %1488 = vmatprep.subr.bf16.mxu0 0
      %1489 = vmatpush2.bf16.msra.mxu0 %v1426
      %1490 = vmatprep.mubr.bf16.mxu0 %v1342
      %1491 = vmatmul.mubr.bf16.gmra.mxu0 %v1341
      %v1492 = vpop.f32.mrf.mxu0
      %v1493 = vadd.f32 0.0, %v1492
      %v1494 = vpop.f32.mrf.mxu0
      %v1495 = vpop.f32.mrf.mxu0
      %v1496 = vadd.f32 0.0, %v1495
      %v1497 = vpop.f32.mrf.mxu0
      %1498 = vdwg.mxu0
      %1499 = vmatprep.subr.bf16.mxu0 0
      %1500 = vmatpush1.bf16.msra.mxu0 0
      %1501 = vmatprep.subr.bf16.mxu0 0
      %1502 = vmatpush1.bf16.msra.mxu0 0
      %1503 = vmatprep.subr.bf16.mxu0 0
      %1504 = vmatpush1.bf16.msra.mxu0 0
      %1505 = vmatprep.subr.bf16.mxu0 0
      %1506 = vmatpush1.bf16.msra.mxu0 0
      %1507 = vmatprep.subr.bf16.mxu0 0
      %1508 = vmatpush1.bf16.msra.mxu0 0
      %1509 = vmatprep.subr.bf16.mxu0 0
      %1510 = vmatpush1.bf16.msra.mxu0 0
      %1511 = vmatprep.subr.bf16.mxu0 0
      %1512 = vmatpush1.bf16.msra.mxu0 %v1435
      %1513 = vmatprep.subr.bf16.mxu0 0
      %1514 = vmatpush1.bf16.msra.mxu0 %v1434
      %1515 = vmatprep.subr.bf16.mxu0 0
      %1516 = vmatpush2.bf16.msra.mxu0 0
      %1517 = vmatprep.subr.bf16.mxu0 0
      %1518 = vmatpush2.bf16.msra.mxu0 0
      %1519 = vmatprep.subr.bf16.mxu0 0
      %1520 = vmatpush2.bf16.msra.mxu0 0
      %1521 = vmatprep.subr.bf16.mxu0 0
      %1522 = vmatpush2.bf16.msra.mxu0 0
      %1523 = vmatprep.subr.bf16.mxu0 0
      %1524 = vmatpush2.bf16.msra.mxu0 0
      %1525 = vmatprep.subr.bf16.mxu0 0
      %1526 = vmatpush2.bf16.msra.mxu0 0
      %1527 = vmatprep.subr.bf16.mxu0 0
      %1528 = vmatpush2.bf16.msra.mxu0 0
      %1529 = vmatprep.subr.bf16.mxu0 0
      %1530 = vmatpush2.bf16.msra.mxu0 0
      %1531 = vmatprep.mubr.bf16.mxu0 0
      %1532 = vmatmul.mubr.bf16.gmra.mxu0 %v1456
      %v1533 = vpop.f32.mrf.mxu0
      %v1534 = vadd.f32 %v1493, %v1533
      %v1535 = vpop.f32.mrf.mxu0
      %v1536 = vpop.f32.mrf.mxu0
      %v1537 = vadd.f32 %v1496, %v1536
      %v1538 = vpop.f32.mrf.mxu0
      %1539 = vdwg.mxu0
      %v1540 = vadd.f32 %v1199, %v1534
      %v1541 = vadd.f32 %v1199, %v1537
      %v1544 = vcombine.low %v1183, %v1193
      %v1546 = vunpack.c.l.s4 1983009808
      %v1547 = vunpack.c.0.s8 %v1546
      %v1548 = vlaneseq
      %v1549 = vshrl.u32 %v1548, 7
      %v1550 = vsub.s32 %v1547, %v1549
      %v1551 = vrot.slane %v1544, %v1550
      %v1553 = vunpack.c.l.s4 1983009808
      %v1554 = vunpack.c.0.s8 %v1553
      %v1555 = vlaneseq
      %v1556 = vshrl.u32 %v1555, 7
      %v1557 = vsub.s32 %v1554, %v1556
      %v1558 = vrot.slane %v1172, %v1557
      %v1559 = vcombine.low %v1551, %v1558
      %s1560 = scalar_lea.vmem %s3, 144
      %v1561 = vld [vmem:[%s1560] sm:$0xf]
      %v1562 = vld [vmem:[%s1560 + $0x4] sm:$0xf]
      %v1563 = vld [vmem:[%s1560 + $0x8] sm:$0xf]
      %v1564 = vld [vmem:[%s1560 + $0xc] sm:$0xf]
      %v1565 = vld [vmem:[%s1560 + $0x10] sm:$0xf]
      %v1566 = vld [vmem:[%s1560 + $0x14] sm:$0xf]
      %v1567 = vld [vmem:[%s1560 + $0x18] sm:$0xf]
      %v1568 = vld [vmem:[%s1560 + $0x1c] sm:$0xf]
      %v1569 = vld [vmem:[%s1560 + $0x20] sm:$0xf]
      %v1570 = vld [vmem:[%s1560 + $0x24] sm:$0xf]
      %v1571 = vld [vmem:[%s1560 + $0x28] sm:$0xf]
      %v1572 = vld [vmem:[%s1560 + $0x2c] sm:$0xf]
      %v1573 = vld [vmem:[%s1560 + $0x30] sm:$0xf]
      %v1574 = vld [vmem:[%s1560 + $0x34] sm:$0xf]
      %v1575 = vld [vmem:[%s1560 + $0x38] sm:$0xf]
      %v1576 = vld [vmem:[%s1560 + $0x3c] sm:$0xf]
      %v1577 = vld [vmem:[%s1560 + $0x40] sm:$0xf]
      %v1578 = vld [vmem:[%s1560 + $0x44] sm:$0xf]
      %v1579 = vld [vmem:[%s1560 + $0x48] sm:$0xf]
      %v1580 = vld [vmem:[%s1560 + $0x4c] sm:$0xf]
      %v1581 = vld [vmem:[%s1560 + $0x50] sm:$0xf]
      %v1582 = vld [vmem:[%s1560 + $0x54] sm:$0xf]
      %v1583 = vld [vmem:[%s1560 + $0x58] sm:$0xf]
      %v1584 = vld [vmem:[%s1560 + $0x5c] sm:$0xf]
      %v1585 = vld [vmem:[%s1560 + $0x60] sm:$0xf]
      %v1586 = vld [vmem:[%s1560 + $0x64] sm:$0xf]
      %v1587 = vld [vmem:[%s1560 + $0x68] sm:$0xf]
      %v1588 = vld [vmem:[%s1560 + $0x6c] sm:$0xf]
      %v1589 = vld [vmem:[%s1560 + $0x70] sm:$0xf]
      %v1590 = vld [vmem:[%s1560 + $0x74] sm:$0xf]
      %v1591 = vld [vmem:[%s1560 + $0x78] sm:$0xf]
      %v1592 = vld [vmem:[%s1560 + $0x7c] sm:$0xf]
      %v1593 = vld [vmem:[%s1560 + $0x80] sm:$0xf]
      %v1594 = vld [vmem:[%s1560 + $0x84] sm:$0xf]
      %v1595 = vld [vmem:[%s1560 + $0x88] sm:$0xf]
      %v1596 = vld [vmem:[%s1560 + $0x8c] sm:$0xf]
      %v1597 = vcombine.low %v1240, %v1256
      %v1598 = vcombine.high %v1240, %v1256
      %v1599 = vcombine.low %v1272, %v1559
      %v1600 = vcombine.high %v1272, %v1559
      %v1602 = vunpack.c.l.s4 1983009808
      %v1603 = vunpack.c.0.s8 %v1602
      %v1604 = vlaneseq
      %v1605 = vshrl.u32 %v1604, 7
      %v1606 = vsub.s32 %v1603, %v1605
      %v1607 = vrot.slane %v1597, %v1606
      %v1609 = vunpack.c.l.s4 1983009808
      %v1610 = vunpack.c.0.s8 %v1609
      %v1611 = vlaneseq
      %v1612 = vshrl.u32 %v1611, 7
      %v1613 = vsub.s32 %v1610, %v1612
      %v1614 = vrot.slane %v1598, %v1613
      %v1616 = vunpack.c.l.s4 1983009808
      %v1617 = vunpack.c.0.s8 %v1616
      %v1618 = vlaneseq
      %v1619 = vshrl.u32 %v1618, 7
      %v1620 = vsub.s32 %v1617, %v1619
      %v1621 = vrot.slane %v1599, %v1620
      %v1623 = vunpack.c.l.s4 1983009808
      %v1624 = vunpack.c.0.s8 %v1623
      %v1625 = vlaneseq
      %v1626 = vshrl.u32 %v1625, 7
      %v1627 = vsub.s32 %v1624, %v1626
      %v1628 = vrot.slane %v1600, %v1627
      %v1629 = vcombine.low %v1607, %v1621
      %v1630 = vcombine.high %v1607, %v1621
      %v1631 = vcombine.low %v1614, %v1628
      %v1670 = vunpack.c.l.b16 %v1561
      %v1671 = vunpack.c.l.b16 %v1562
      %v1672 = vunpack.c.l.b16 %v1563
      %v1673 = vunpack.c.l.b16 %v1564
      %v1674 = vunpack.c.l.b16 %v1565
      %v1675 = vunpack.c.l.b16 %v1566
      %v1676 = vunpack.c.l.b16 %v1567
      %v1677 = vunpack.c.l.b16 %v1568
      %v1678 = vunpack.c.l.b16 %v1569
      %v1679 = vunpack.c.l.b16 %v1570
      %v1680 = vunpack.c.l.b16 %v1571
      %v1681 = vunpack.c.l.b16 %v1572
      %v1682 = vunpack.c.l.b16 %v1573
      %v1683 = vunpack.c.l.b16 %v1574
      %v1684 = vunpack.c.l.b16 %v1575
      %v1685 = vunpack.c.l.b16 %v1576
      %v1686 = vunpack.c.l.b16 %v1577
      %v1687 = vunpack.c.l.b16 %v1578
      %v1688 = vunpack.c.l.b16 %v1579
      %v1689 = vunpack.c.l.b16 %v1580
      %v1690 = vunpack.c.l.b16 %v1581
      %v1691 = vunpack.c.l.b16 %v1582
      %v1692 = vunpack.c.l.b16 %v1583
      %v1693 = vunpack.c.l.b16 %v1584
      %v1694 = vunpack.c.l.b16 %v1585
      %v1695 = vunpack.c.l.b16 %v1586
      %v1696 = vunpack.c.l.b16 %v1587
      %v1697 = vunpack.c.l.b16 %v1588
      %v1698 = vunpack.c.l.b16 %v1589
      %v1699 = vunpack.c.l.b16 %v1590
      %v1700 = vunpack.c.l.b16 %v1591
      %v1701 = vunpack.c.l.b16 %v1592
      %v1702 = vunpack.c.l.b16 %v1593
      %v1703 = vunpack.c.l.b16 %v1594
      %v1704 = vunpack.c.l.b16 %v1595
      %v1705 = vunpack.c.l.b16 %v1596
      %v1706 = vpack.c.b16 %v1671, %v1670
      %v1707 = vpack.c.b16 %v1673, %v1672
      %v1708 = vpack.c.b16 %v1675, %v1674
      %v1709 = vpack.c.b16 %v1677, %v1676
      %v1710 = vpack.c.b16 %v1679, %v1678
      %v1711 = vpack.c.b16 %v1681, %v1680
      %v1712 = vpack.c.b16 %v1683, %v1682
      %v1713 = vpack.c.b16 %v1685, %v1684
      %v1714 = vpack.c.b16 %v1687, %v1686
      %v1715 = vpack.c.b16 %v1689, %v1688
      %v1716 = vpack.c.b16 %v1691, %v1690
      %v1717 = vpack.c.b16 %v1693, %v1692
      %v1718 = vpack.c.b16 %v1695, %v1694
      %v1719 = vpack.c.b16 %v1697, %v1696
      %v1720 = vpack.c.b16 %v1699, %v1698
      %v1721 = vpack.c.b16 %v1701, %v1700
      %v1722 = vpack.c.b16 %v1703, %v1702
      %v1723 = vpack.c.b16 %v1705, %v1704
      %v1743 = vsel %vm1454, %v1631, 0
      %1745 = vmatprep.subr.bf16.mxu0 0
      %1746 = vmatpush1.bf16.msra.mxu0 %v1713
      %1747 = vmatprep.subr.bf16.mxu0 0
      %1748 = vmatpush1.bf16.msra.mxu0 %v1712
      %1749 = vmatprep.subr.bf16.mxu0 0
      %1750 = vmatpush1.bf16.msra.mxu0 %v1711
      %1751 = vmatprep.subr.bf16.mxu0 0
      %1752 = vmatpush1.bf16.msra.mxu0 %v1710
      %1753 = vmatprep.subr.bf16.mxu0 0
      %1754 = vmatpush1.bf16.msra.mxu0 %v1709
      %1755 = vmatprep.subr.bf16.mxu0 0
      %1756 = vmatpush1.bf16.msra.mxu0 %v1708
      %1757 = vmatprep.subr.bf16.mxu0 0
      %1758 = vmatpush1.bf16.msra.mxu0 %v1707
      %1759 = vmatprep.subr.bf16.mxu0 0
      %1760 = vmatpush1.bf16.msra.mxu0 %v1706
      %1761 = vmatprep.subr.bf16.mxu0 0
      %1762 = vmatpush2.bf16.msra.mxu0 %v1721
      %1763 = vmatprep.subr.bf16.mxu0 0
      %1764 = vmatpush2.bf16.msra.mxu0 %v1720
      %1765 = vmatprep.subr.bf16.mxu0 0
      %1766 = vmatpush2.bf16.msra.mxu0 %v1719
      %1767 = vmatprep.subr.bf16.mxu0 0
      %1768 = vmatpush2.bf16.msra.mxu0 %v1718
      %1769 = vmatprep.subr.bf16.mxu0 0
      %1770 = vmatpush2.bf16.msra.mxu0 %v1717
      %1771 = vmatprep.subr.bf16.mxu0 0
      %1772 = vmatpush2.bf16.msra.mxu0 %v1716
      %1773 = vmatprep.subr.bf16.mxu0 0
      %1774 = vmatpush2.bf16.msra.mxu0 %v1715
      %1775 = vmatprep.subr.bf16.mxu0 0
      %1776 = vmatpush2.bf16.msra.mxu0 %v1714
      %1777 = vmatprep.mubr.bf16.mxu0 %v1630
      %1778 = vmatmul.mubr.bf16.gmra.mxu0 %v1629
      %v1779 = vpop.f32.mrf.mxu0
      %v1780 = vadd.f32 0.0, %v1779
      %v1781 = vpop.f32.mrf.mxu0
      %v1782 = vpop.f32.mrf.mxu0
      %v1783 = vadd.f32 0.0, %v1782
      %v1784 = vpop.f32.mrf.mxu0
      %1785 = vdwg.mxu0
      %1786 = vmatprep.subr.bf16.mxu0 0
      %1787 = vmatpush1.bf16.msra.mxu0 0
      %1788 = vmatprep.subr.bf16.mxu0 0
      %1789 = vmatpush1.bf16.msra.mxu0 0
      %1790 = vmatprep.subr.bf16.mxu0 0
      %1791 = vmatpush1.bf16.msra.mxu0 0
      %1792 = vmatprep.subr.bf16.mxu0 0
      %1793 = vmatpush1.bf16.msra.mxu0 0
      %1794 = vmatprep.subr.bf16.mxu0 0
      %1795 = vmatpush1.bf16.msra.mxu0 0
      %1796 = vmatprep.subr.bf16.mxu0 0
      %1797 = vmatpush1.bf16.msra.mxu0 0
      %1798 = vmatprep.subr.bf16.mxu0 0
      %1799 = vmatpush1.bf16.msra.mxu0 %v1723
      %1800 = vmatprep.subr.bf16.mxu0 0
      %1801 = vmatpush1.bf16.msra.mxu0 %v1722
      %1802 = vmatprep.subr.bf16.mxu0 0
      %1803 = vmatpush2.bf16.msra.mxu0 0
      %1804 = vmatprep.subr.bf16.mxu0 0
      %1805 = vmatpush2.bf16.msra.mxu0 0
      %1806 = vmatprep.subr.bf16.mxu0 0
      %1807 = vmatpush2.bf16.msra.mxu0 0
      %1808 = vmatprep.subr.bf16.mxu0 0
      %1809 = vmatpush2.bf16.msra.mxu0 0
      %1810 = vmatprep.subr.bf16.mxu0 0
      %1811 = vmatpush2.bf16.msra.mxu0 0
      %1812 = vmatprep.subr.bf16.mxu0 0
      %1813 = vmatpush2.bf16.msra.mxu0 0
      %1814 = vmatprep.subr.bf16.mxu0 0
      %1815 = vmatpush2.bf16.msra.mxu0 0
      %1816 = vmatprep.subr.bf16.mxu0 0
      %1817 = vmatpush2.bf16.msra.mxu0 0
      %1818 = vmatprep.mubr.bf16.mxu0 0
      %1819 = vmatmul.mubr.bf16.gmra.mxu0 %v1743
      %v1820 = vpop.f32.mrf.mxu0
      %v1821 = vadd.f32 %v1780, %v1820
      %v1822 = vpop.f32.mrf.mxu0
      %v1823 = vpop.f32.mrf.mxu0
      %v1824 = vadd.f32 %v1783, %v1823
      %v1825 = vpop.f32.mrf.mxu0
      %1826 = vdwg.mxu0
      %v1827 = vadd.f32 %v1540, %v1821
      %v1828 = vadd.f32 %v1541, %v1824
      %s1829 = scalar_lea.vmem %s3, 288
      %v1830 = vld [vmem:[%s1829] sm:$0xf]
      %v1831 = vld [vmem:[%s1829 + $0x4] sm:$0xf]
      %v1832 = vld [vmem:[%s1829 + $0x8] sm:$0xf]
      %v1833 = vld [vmem:[%s1829 + $0xc] sm:$0xf]
      %v1834 = vld [vmem:[%s1829 + $0x10] sm:$0xf]
      %v1835 = vld [vmem:[%s1829 + $0x14] sm:$0xf]
      %v1836 = vld [vmem:[%s1829 + $0x18] sm:$0xf]
      %v1837 = vld [vmem:[%s1829 + $0x1c] sm:$0xf]
      %v1838 = vld [vmem:[%s1829 + $0x20] sm:$0xf]
      %v1839 = vld [vmem:[%s1829 + $0x24] sm:$0xf]
      %v1840 = vld [vmem:[%s1829 + $0x28] sm:$0xf]
      %v1841 = vld [vmem:[%s1829 + $0x2c] sm:$0xf]
      %v1842 = vld [vmem:[%s1829 + $0x30] sm:$0xf]
      %v1843 = vld [vmem:[%s1829 + $0x34] sm:$0xf]
      %v1844 = vld [vmem:[%s1829 + $0x38] sm:$0xf]
      %v1845 = vld [vmem:[%s1829 + $0x3c] sm:$0xf]
      %v1846 = vld [vmem:[%s1829 + $0x40] sm:$0xf]
      %v1847 = vld [vmem:[%s1829 + $0x44] sm:$0xf]
      %v1848 = vld [vmem:[%s1829 + $0x48] sm:$0xf]
      %v1849 = vld [vmem:[%s1829 + $0x4c] sm:$0xf]
      %v1850 = vld [vmem:[%s1829 + $0x50] sm:$0xf]
      %v1851 = vld [vmem:[%s1829 + $0x54] sm:$0xf]
      %v1852 = vld [vmem:[%s1829 + $0x58] sm:$0xf]
      %v1853 = vld [vmem:[%s1829 + $0x5c] sm:$0xf]
      %v1854 = vld [vmem:[%s1829 + $0x60] sm:$0xf]
      %v1855 = vld [vmem:[%s1829 + $0x64] sm:$0xf]
      %v1856 = vld [vmem:[%s1829 + $0x68] sm:$0xf]
      %v1857 = vld [vmem:[%s1829 + $0x6c] sm:$0xf]
      %v1858 = vld [vmem:[%s1829 + $0x70] sm:$0xf]
      %v1859 = vld [vmem:[%s1829 + $0x74] sm:$0xf]
      %v1860 = vld [vmem:[%s1829 + $0x78] sm:$0xf]
      %v1861 = vld [vmem:[%s1829 + $0x7c] sm:$0xf]
      %v1862 = vld [vmem:[%s1829 + $0x80] sm:$0xf]
      %v1863 = vld [vmem:[%s1829 + $0x84] sm:$0xf]
      %v1864 = vld [vmem:[%s1829 + $0x88] sm:$0xf]
      %v1865 = vld [vmem:[%s1829 + $0x8c] sm:$0xf]
      %v1866 = vcombine.low %v1559, %v1224
      %v1867 = vcombine.high %v1559, %v1224
      %v1869 = vunpack.c.l.s4 1983009808
      %v1870 = vunpack.c.0.s8 %v1869
      %v1871 = vlaneseq
      %v1872 = vshrl.u32 %v1871, 7
      %v1873 = vsub.s32 %v1870, %v1872
      %v1874 = vrot.slane %v1866, %v1873
      %v1876 = vunpack.c.l.s4 1983009808
      %v1877 = vunpack.c.0.s8 %v1876
      %v1878 = vlaneseq
      %v1879 = vshrl.u32 %v1878, 7
      %v1880 = vsub.s32 %v1877, %v1879
      %v1881 = vrot.slane %v1867, %v1880
      %v1882 = vcombine.low %v1333, %v1874
      %v1883 = vcombine.high %v1333, %v1874
      %v1884 = vcombine.low %v1340, %v1881
      %v1923 = vunpack.c.l.b16 %v1830
      %v1924 = vunpack.c.l.b16 %v1831
      %v1925 = vunpack.c.l.b16 %v1832
      %v1926 = vunpack.c.l.b16 %v1833
      %v1927 = vunpack.c.l.b16 %v1834
      %v1928 = vunpack.c.l.b16 %v1835
      %v1929 = vunpack.c.l.b16 %v1836
      %v1930 = vunpack.c.l.b16 %v1837
      %v1931 = vunpack.c.l.b16 %v1838
      %v1932 = vunpack.c.l.b16 %v1839
      %v1933 = vunpack.c.l.b16 %v1840
      %v1934 = vunpack.c.l.b16 %v1841
      %v1935 = vunpack.c.l.b16 %v1842
      %v1936 = vunpack.c.l.b16 %v1843
      %v1937 = vunpack.c.l.b16 %v1844
      %v1938 = vunpack.c.l.b16 %v1845
      %v1939 = vunpack.c.l.b16 %v1846
      %v1940 = vunpack.c.l.b16 %v1847
      %v1941 = vunpack.c.l.b16 %v1848
      %v1942 = vunpack.c.l.b16 %v1849
      %v1943 = vunpack.c.l.b16 %v1850
      %v1944 = vunpack.c.l.b16 %v1851
      %v1945 = vunpack.c.l.b16 %v1852
      %v1946 = vunpack.c.l.b16 %v1853
      %v1947 = vunpack.c.l.b16 %v1854
      %v1948 = vunpack.c.l.b16 %v1855
      %v1949 = vunpack.c.l.b16 %v1856
      %v1950 = vunpack.c.l.b16 %v1857
      %v1951 = vunpack.c.l.b16 %v1858
      %v1952 = vunpack.c.l.b16 %v1859
      %v1953 = vunpack.c.l.b16 %v1860
      %v1954 = vunpack.c.l.b16 %v1861
      %v1955 = vunpack.c.l.b16 %v1862
      %v1956 = vunpack.c.l.b16 %v1863
      %v1957 = vunpack.c.l.b16 %v1864
      %v1958 = vunpack.c.l.b16 %v1865
      %v1959 = vpack.c.b16 %v1924, %v1923
      %v1960 = vpack.c.b16 %v1926, %v1925
      %v1961 = vpack.c.b16 %v1928, %v1927
      %v1962 = vpack.c.b16 %v1930, %v1929
      %v1963 = vpack.c.b16 %v1932, %v1931
      %v1964 = vpack.c.b16 %v1934, %v1933
      %v1965 = vpack.c.b16 %v1936, %v1935
      %v1966 = vpack.c.b16 %v1938, %v1937
      %v1967 = vpack.c.b16 %v1940, %v1939
      %v1968 = vpack.c.b16 %v1942, %v1941
      %v1969 = vpack.c.b16 %v1944, %v1943
      %v1970 = vpack.c.b16 %v1946, %v1945
      %v1971 = vpack.c.b16 %v1948, %v1947
      %v1972 = vpack.c.b16 %v1950, %v1949
      %v1973 = vpack.c.b16 %v1952, %v1951
      %v1974 = vpack.c.b16 %v1954, %v1953
      %v1975 = vpack.c.b16 %v1956, %v1955
      %v1976 = vpack.c.b16 %v1958, %v1957
      %v1996 = vsel %vm1454, %v1884, 0
      %1998 = vmatprep.subr.bf16.mxu0 0
      %1999 = vmatpush1.bf16.msra.mxu0 %v1966
      %2000 = vmatprep.subr.bf16.mxu0 0
      %2001 = vmatpush1.bf16.msra.mxu0 %v1965
      %2002 = vmatprep.subr.bf16.mxu0 0
      %2003 = vmatpush1.bf16.msra.mxu0 %v1964
      %2004 = vmatprep.subr.bf16.mxu0 0
      %2005 = vmatpush1.bf16.msra.mxu0 %v1963
      %2006 = vmatprep.subr.bf16.mxu0 0
      %2007 = vmatpush1.bf16.msra.mxu0 %v1962
      %2008 = vmatprep.subr.bf16.mxu0 0
      %2009 = vmatpush1.bf16.msra.mxu0 %v1961
      %2010 = vmatprep.subr.bf16.mxu0 0
      %2011 = vmatpush1.bf16.msra.mxu0 %v1960
      %2012 = vmatprep.subr.bf16.mxu0 0
      %2013 = vmatpush1.bf16.msra.mxu0 %v1959
      %2014 = vmatprep.subr.bf16.mxu0 0
      %2015 = vmatpush2.bf16.msra.mxu0 %v1974
      %2016 = vmatprep.subr.bf16.mxu0 0
      %2017 = vmatpush2.bf16.msra.mxu0 %v1973
      %2018 = vmatprep.subr.bf16.mxu0 0
      %2019 = vmatpush2.bf16.msra.mxu0 %v1972
      %2020 = vmatprep.subr.bf16.mxu0 0
      %2021 = vmatpush2.bf16.msra.mxu0 %v1971
      %2022 = vmatprep.subr.bf16.mxu0 0
      %2023 = vmatpush2.bf16.msra.mxu0 %v1970
      %2024 = vmatprep.subr.bf16.mxu0 0
      %2025 = vmatpush2.bf16.msra.mxu0 %v1969
      %2026 = vmatprep.subr.bf16.mxu0 0
      %2027 = vmatpush2.bf16.msra.mxu0 %v1968
      %2028 = vmatprep.subr.bf16.mxu0 0
      %2029 = vmatpush2.bf16.msra.mxu0 %v1967
      %2030 = vmatprep.mubr.bf16.mxu0 %v1883
      %2031 = vmatmul.mubr.bf16.gmra.mxu0 %v1882
      %v2032 = vpop.f32.mrf.mxu0
      %v2033 = vadd.f32 0.0, %v2032
      %v2034 = vpop.f32.mrf.mxu0
      %v2035 = vpop.f32.mrf.mxu0
      %v2036 = vadd.f32 0.0, %v2035
      %v2037 = vpop.f32.mrf.mxu0
      %2038 = vdwg.mxu0
      %2039 = vmatprep.subr.bf16.mxu0 0
      %2040 = vmatpush1.bf16.msra.mxu0 0
      %2041 = vmatprep.subr.bf16.mxu0 0
      %2042 = vmatpush1.bf16.msra.mxu0 0
      %2043 = vmatprep.subr.bf16.mxu0 0
      %2044 = vmatpush1.bf16.msra.mxu0 0
      %2045 = vmatprep.subr.bf16.mxu0 0
      %2046 = vmatpush1.bf16.msra.mxu0 0
      %2047 = vmatprep.subr.bf16.mxu0 0
      %2048 = vmatpush1.bf16.msra.mxu0 0
      %2049 = vmatprep.subr.bf16.mxu0 0
      %2050 = vmatpush1.bf16.msra.mxu0 0
      %2051 = vmatprep.subr.bf16.mxu0 0
      %2052 = vmatpush1.bf16.msra.mxu0 %v1976
      %2053 = vmatprep.subr.bf16.mxu0 0
      %2054 = vmatpush1.bf16.msra.mxu0 %v1975
      %2055 = vmatprep.subr.bf16.mxu0 0
      %2056 = vmatpush2.bf16.msra.mxu0 0
      %2057 = vmatprep.subr.bf16.mxu0 0
      %2058 = vmatpush2.bf16.msra.mxu0 0
      %2059 = vmatprep.subr.bf16.mxu0 0
      %2060 = vmatpush2.bf16.msra.mxu0 0
      %2061 = vmatprep.subr.bf16.mxu0 0
      %2062 = vmatpush2.bf16.msra.mxu0 0
      %2063 = vmatprep.subr.bf16.mxu0 0
      %2064 = vmatpush2.bf16.msra.mxu0 0
      %2065 = vmatprep.subr.bf16.mxu0 0
      %2066 = vmatpush2.bf16.msra.mxu0 0
      %2067 = vmatprep.subr.bf16.mxu0 0
      %2068 = vmatpush2.bf16.msra.mxu0 0
      %2069 = vmatprep.subr.bf16.mxu0 0
      %2070 = vmatpush2.bf16.msra.mxu0 0
      %2071 = vmatprep.mubr.bf16.mxu0 0
      %2072 = vmatmul.mubr.bf16.gmra.mxu0 %v1996
      %v2073 = vpop.f32.mrf.mxu0
      %v2074 = vadd.f32 %v2033, %v2073
      %v2075 = vpop.f32.mrf.mxu0
      %v2076 = vpop.f32.mrf.mxu0
      %v2077 = vadd.f32 %v2036, %v2076
      %v2078 = vpop.f32.mrf.mxu0
      %2079 = vdwg.mxu0
      %v2080 = vadd.f32 %v1827, %v2074
      %v2081 = vadd.f32 %v1828, %v2077
      %v2084 = vcombine.high %v2080, %v2080
      %v2085 = vcombine.high %v2081, %v2081
      %v2088 = vmul.f32 %v2080, 0.01
      %v2089 = vmul.f32 %v2084, 0.01
      %v2090 = vmul.f32 %v2081, 0.01
      %v2091 = vmul.f32 %v2085, 0.01
      %v2092 = vmax.f32 %v2080, %v2088
      %v2093 = vmax.f32 %v2084, %v2089
      %v2094 = vmax.f32 %v2081, %v2090
      %v2095 = vmax.f32 %v2085, %v2091
      %v2096 = vpack.c.bf16 %v2092, %v2092
      %v2097 = vpack.c.bf16 %v2093, %v2093
      %v2098 = vpack.c.bf16 %v2094, %v2094
      %v2099 = vpack.c.bf16 %v2095, %v2095
      %v2101 = vshrl.u32 %v2096, 16
      %v2103 = vrot.slane %v2101, 7
      %v2104 = vshll.u32 %v2096, 16
      %v2106 = vor.u32 %v2103, %v2104
      %v2108 = vshrl.u32 %v2097, 16
      %v2110 = vrot.slane %v2108, 7
      %v2111 = vshll.u32 %v2097, 16
      %v2113 = vor.u32 %v2110, %v2111
      %v2115 = vshrl.u32 %v2098, 16
      %v2117 = vrot.slane %v2115, 7
      %v2118 = vshll.u32 %v2098, 16
      %v2120 = vor.u32 %v2117, %v2118
      %v2122 = vshrl.u32 %v2099, 16
      %v2124 = vrot.slane %v2122, 7
      %v2125 = vshll.u32 %v2099, 16
      %v2127 = vor.u32 %v2124, %v2125
      %v2132 = vsel %vm1094, 0, %v2106
      %v2133 = vsel %vm1094, 0, %v2113
      %v2134 = vsel %vm1094, 0, %v2120
      %v2135 = vsel %vm1094, 0, %v2127
      %v2136 = vsel %vm1102, %v2132, 0
      %v2137 = vsel %vm1102, %v2133, 0
      %v2138 = vsel %vm1102, %v2134, 0
      %v2139 = vsel %vm1102, %v2135, 0
      %v2141 = vshrl.u32 %v2136, 16
      %v2143 = vshll.u32 %v2136, 16
      %v2145 = vrot.slane %v2143, 1
      %v2146 = vor.u32 %v2141, %v2145
      %v2148 = vshrl.u32 %v2137, 16
      %v2150 = vshll.u32 %v2137, 16
      %v2152 = vrot.slane %v2150, 1
      %v2153 = vor.u32 %v2148, %v2152
      %v2155 = vshrl.u32 %v2138, 16
      %v2157 = vshll.u32 %v2138, 16
      %v2159 = vrot.slane %v2157, 1
      %v2160 = vor.u32 %v2155, %v2159
      %v2162 = vshrl.u32 %v2139, 16
      %v2164 = vshll.u32 %v2139, 16
      %v2166 = vrot.slane %v2164, 1
      %v2167 = vor.u32 %v2162, %v2166
      %2168 = vrot.lane.b32.xlu0 %v2146, 96
      %v2169 = vpop.permute.xlu0 %2168
      %2170 = vrot.lane.b32.xlu0 %v2153, 96
      %v2171 = vpop.permute.xlu0 %2170
      %2172 = vrot.lane.b32.xlu0 %v2160, 96
      %v2173 = vpop.permute.xlu0 %2172
      %2174 = vrot.lane.b32.xlu0 %v2167, 96
      %v2175 = vpop.permute.xlu0 %2174
      %v2180 = vrot.slane %v2136, 1
      %v2181 = vrot.slane %v2137, 1
      %v2182 = vrot.slane %v2138, 1
      %v2183 = vrot.slane %v2139, 1
      %2184 = vrot.lane.b32.xlu0 %v2180, 64
      %v2185 = vpop.permute.xlu0 %2184
      %2186 = vrot.lane.b32.xlu0 %v2181, 64
      %v2187 = vpop.permute.xlu0 %2186
      %2188 = vrot.lane.b32.xlu0 %v2182, 64
      %v2189 = vpop.permute.xlu0 %2188
      %2190 = vrot.lane.b32.xlu0 %v2183, 64
      %v2191 = vpop.permute.xlu0 %2190
      %v2193 = vsel %vm1173, %v2136, %v2169
      %v2195 = vsel %vm1173, %v2137, %v2171
      %v2197 = vsel %vm1173, %v2138, %v2173
      %v2199 = vsel %vm1173, %v2139, %v2175
      %v2201 = vsel %vm365, %v2169, %v2185
      %v2203 = vsel %vm365, %v2171, %v2187
      %v2205 = vsel %vm365, %v2173, %v2189
      %v2207 = vsel %vm365, %v2175, %v2191
      %v2208 = vld [vmem:[%s6] sm:$0x1]
      %v2210 = vlaneseq
      %v2211 = vshrl.u32 %v2210, 7
      %v2212 = vsub.s32 0, %v2211
      %v2213 = vrot.slane %v2208, %v2212
      %v2221 = vcombine.low %v2193, %v2201
      %v2223 = vunpack.c.l.s4 1983009808
      %v2224 = vunpack.c.0.s8 %v2223
      %v2225 = vlaneseq
      %v2226 = vshrl.u32 %v2225, 7
      %v2227 = vsub.s32 %v2224, %v2226
      %v2228 = vrot.slane %v2221, %v2227
      %v2230 = vunpack.c.l.s4 1983009808
      %v2231 = vunpack.c.0.s8 %v2230
      %v2232 = vlaneseq
      %v2233 = vshrl.u32 %v2232, 7
      %v2234 = vsub.s32 %v2231, %v2233
      %v2235 = vrot.slane %v2185, %v2234
      %v2236 = vcombine.low %v2228, %v2235
      %v2237 = vcombine.low %v2195, %v2203
      %v2239 = vunpack.c.l.s4 1983009808
      %v2240 = vunpack.c.0.s8 %v2239
      %v2241 = vlaneseq
      %v2242 = vshrl.u32 %v2241, 7
      %v2243 = vsub.s32 %v2240, %v2242
      %v2244 = vrot.slane %v2237, %v2243
      %v2246 = vunpack.c.l.s4 1983009808
      %v2247 = vunpack.c.0.s8 %v2246
      %v2248 = vlaneseq
      %v2249 = vshrl.u32 %v2248, 7
      %v2250 = vsub.s32 %v2247, %v2249
      %v2251 = vrot.slane %v2187, %v2250
      %v2252 = vcombine.low %v2244, %v2251
      %v2253 = vcombine.low %v2197, %v2205
      %v2255 = vunpack.c.l.s4 1983009808
      %v2256 = vunpack.c.0.s8 %v2255
      %v2257 = vlaneseq
      %v2258 = vshrl.u32 %v2257, 7
      %v2259 = vsub.s32 %v2256, %v2258
      %v2260 = vrot.slane %v2253, %v2259
      %v2262 = vunpack.c.l.s4 1983009808
      %v2263 = vunpack.c.0.s8 %v2262
      %v2264 = vlaneseq
      %v2265 = vshrl.u32 %v2264, 7
      %v2266 = vsub.s32 %v2263, %v2265
      %v2267 = vrot.slane %v2189, %v2266
      %v2268 = vcombine.low %v2260, %v2267
      %v2269 = vld [vmem:[%s5] sm:$0xf]
      %v2270 = vld [vmem:[%s5 + $0x4] sm:$0xf]
      %v2271 = vld [vmem:[%s5 + $0x8] sm:$0xf]
      %v2272 = vld [vmem:[%s5 + $0xc] sm:$0xf]
      %v2273 = vld [vmem:[%s5 + $0x10] sm:$0xf]
      %v2274 = vld [vmem:[%s5 + $0x14] sm:$0xf]
      %v2275 = vld [vmem:[%s5 + $0x18] sm:$0xf]
      %v2276 = vld [vmem:[%s5 + $0x1c] sm:$0xf]
      %v2277 = vld [vmem:[%s5 + $0x20] sm:$0xf]
      %v2278 = vld [vmem:[%s5 + $0x24] sm:$0xf]
      %v2279 = vld [vmem:[%s5 + $0x28] sm:$0xf]
      %v2280 = vld [vmem:[%s5 + $0x2c] sm:$0xf]
      %v2281 = vld [vmem:[%s5 + $0x30] sm:$0xf]
      %v2282 = vld [vmem:[%s5 + $0x34] sm:$0xf]
      %v2283 = vld [vmem:[%s5 + $0x38] sm:$0xf]
      %v2284 = vld [vmem:[%s5 + $0x3c] sm:$0xf]
      %v2285 = vld [vmem:[%s5 + $0x40] sm:$0xf]
      %v2286 = vld [vmem:[%s5 + $0x44] sm:$0xf]
      %v2287 = vld [vmem:[%s5 + $0x48] sm:$0xf]
      %v2288 = vld [vmem:[%s5 + $0x4c] sm:$0xf]
      %v2289 = vld [vmem:[%s5 + $0x50] sm:$0xf]
      %v2290 = vld [vmem:[%s5 + $0x54] sm:$0xf]
      %v2291 = vld [vmem:[%s5 + $0x58] sm:$0xf]
      %v2292 = vld [vmem:[%s5 + $0x5c] sm:$0xf]
      %v2293 = vld [vmem:[%s5 + $0x60] sm:$0xf]
      %v2294 = vld [vmem:[%s5 + $0x64] sm:$0xf]
      %v2295 = vld [vmem:[%s5 + $0x68] sm:$0xf]
      %v2296 = vld [vmem:[%s5 + $0x6c] sm:$0xf]
      %v2297 = vld [vmem:[%s5 + $0x70] sm:$0xf]
      %v2298 = vld [vmem:[%s5 + $0x74] sm:$0xf]
      %v2299 = vld [vmem:[%s5 + $0x78] sm:$0xf]
      %v2300 = vld [vmem:[%s5 + $0x7c] sm:$0xf]
      %v2301 = vld [vmem:[%s5 + $0x80] sm:$0xf]
      %v2302 = vld [vmem:[%s5 + $0x84] sm:$0xf]
      %v2303 = vld [vmem:[%s5 + $0x88] sm:$0xf]
      %v2304 = vld [vmem:[%s5 + $0x8c] sm:$0xf]
      %v2305 = vcombine.low %v1224, %v2236
      %v2306 = vcombine.high %v1224, %v2236
      %v2307 = vcombine.low %v2252, %v2268
      %v2308 = vcombine.high %v2252, %v2268
      %v2310 = vunpack.c.l.s4 1983009808
      %v2311 = vunpack.c.0.s8 %v2310
      %v2312 = vlaneseq
      %v2313 = vshrl.u32 %v2312, 7
      %v2314 = vsub.s32 %v2311, %v2313
      %v2315 = vrot.slane %v2305, %v2314
      %v2317 = vunpack.c.l.s4 1983009808
      %v2318 = vunpack.c.0.s8 %v2317
      %v2319 = vlaneseq
      %v2320 = vshrl.u32 %v2319, 7
      %v2321 = vsub.s32 %v2318, %v2320
      %v2322 = vrot.slane %v2306, %v2321
      %v2324 = vunpack.c.l.s4 1983009808
      %v2325 = vunpack.c.0.s8 %v2324
      %v2326 = vlaneseq
      %v2327 = vshrl.u32 %v2326, 7
      %v2328 = vsub.s32 %v2325, %v2327
      %v2329 = vrot.slane %v2307, %v2328
      %v2331 = vunpack.c.l.s4 1983009808
      %v2332 = vunpack.c.0.s8 %v2331
      %v2333 = vlaneseq
      %v2334 = vshrl.u32 %v2333, 7
      %v2335 = vsub.s32 %v2332, %v2334
      %v2336 = vrot.slane %v2308, %v2335
      %v2337 = vcombine.low %v2315, %v2329
      %v2338 = vcombine.high %v2315, %v2329
      %v2339 = vcombine.low %v2322, %v2336
      %v2378 = vunpack.c.l.b16 %v2269
      %v2379 = vunpack.c.l.b16 %v2270
      %v2380 = vunpack.c.l.b16 %v2271
      %v2381 = vunpack.c.l.b16 %v2272
      %v2382 = vunpack.c.l.b16 %v2273
      %v2383 = vunpack.c.l.b16 %v2274
      %v2384 = vunpack.c.l.b16 %v2275
      %v2385 = vunpack.c.l.b16 %v2276
      %v2386 = vunpack.c.l.b16 %v2277
      %v2387 = vunpack.c.l.b16 %v2278
      %v2388 = vunpack.c.l.b16 %v2279
      %v2389 = vunpack.c.l.b16 %v2280
      %v2390 = vunpack.c.l.b16 %v2281
      %v2391 = vunpack.c.l.b16 %v2282
      %v2392 = vunpack.c.l.b16 %v2283
      %v2393 = vunpack.c.l.b16 %v2284
      %v2394 = vunpack.c.l.b16 %v2285
      %v2395 = vunpack.c.l.b16 %v2286
      %v2396 = vunpack.c.l.b16 %v2287
      %v2397 = vunpack.c.l.b16 %v2288
      %v2398 = vunpack.c.l.b16 %v2289
      %v2399 = vunpack.c.l.b16 %v2290
      %v2400 = vunpack.c.l.b16 %v2291
      %v2401 = vunpack.c.l.b16 %v2292
      %v2402 = vunpack.c.l.b16 %v2293
      %v2403 = vunpack.c.l.b16 %v2294
      %v2404 = vunpack.c.l.b16 %v2295
      %v2405 = vunpack.c.l.b16 %v2296
      %v2406 = vunpack.c.l.b16 %v2297
      %v2407 = vunpack.c.l.b16 %v2298
      %v2408 = vunpack.c.l.b16 %v2299
      %v2409 = vunpack.c.l.b16 %v2300
      %v2410 = vunpack.c.l.b16 %v2301
      %v2411 = vunpack.c.l.b16 %v2302
      %v2412 = vunpack.c.l.b16 %v2303
      %v2413 = vunpack.c.l.b16 %v2304
      %v2414 = vpack.c.b16 %v2379, %v2378
      %v2415 = vpack.c.b16 %v2381, %v2380
      %v2416 = vpack.c.b16 %v2383, %v2382
      %v2417 = vpack.c.b16 %v2385, %v2384
      %v2418 = vpack.c.b16 %v2387, %v2386
      %v2419 = vpack.c.b16 %v2389, %v2388
      %v2420 = vpack.c.b16 %v2391, %v2390
      %v2421 = vpack.c.b16 %v2393, %v2392
      %v2422 = vpack.c.b16 %v2395, %v2394
      %v2423 = vpack.c.b16 %v2397, %v2396
      %v2424 = vpack.c.b16 %v2399, %v2398
      %v2425 = vpack.c.b16 %v2401, %v2400
      %v2426 = vpack.c.b16 %v2403, %v2402
      %v2427 = vpack.c.b16 %v2405, %v2404
      %v2428 = vpack.c.b16 %v2407, %v2406
      %v2429 = vpack.c.b16 %v2409, %v2408
      %v2430 = vpack.c.b16 %v2411, %v2410
      %v2431 = vpack.c.b16 %v2413, %v2412
      %v2451 = vsel %vm1454, %v2339, 0
      %2453 = vmatprep.subr.bf16.mxu0 0
      %2454 = vmatpush1.bf16.msra.mxu0 %v2421
      %2455 = vmatprep.subr.bf16.mxu0 0
      %2456 = vmatpush1.bf16.msra.mxu0 %v2420
      %2457 = vmatprep.subr.bf16.mxu0 0
      %2458 = vmatpush1.bf16.msra.mxu0 %v2419
      %2459 = vmatprep.subr.bf16.mxu0 0
      %2460 = vmatpush1.bf16.msra.mxu0 %v2418
      %2461 = vmatprep.subr.bf16.mxu0 0
      %2462 = vmatpush1.bf16.msra.mxu0 %v2417
      %2463 = vmatprep.subr.bf16.mxu0 0
      %2464 = vmatpush1.bf16.msra.mxu0 %v2416
      %2465 = vmatprep.subr.bf16.mxu0 0
      %2466 = vmatpush1.bf16.msra.mxu0 %v2415
      %2467 = vmatprep.subr.bf16.mxu0 0
      %2468 = vmatpush1.bf16.msra.mxu0 %v2414
      %2469 = vmatprep.subr.bf16.mxu0 0
      %2470 = vmatpush2.bf16.msra.mxu0 %v2429
      %2471 = vmatprep.subr.bf16.mxu0 0
      %2472 = vmatpush2.bf16.msra.mxu0 %v2428
      %2473 = vmatprep.subr.bf16.mxu0 0
      %2474 = vmatpush2.bf16.msra.mxu0 %v2427
      %2475 = vmatprep.subr.bf16.mxu0 0
      %2476 = vmatpush2.bf16.msra.mxu0 %v2426
      %2477 = vmatprep.subr.bf16.mxu0 0
      %2478 = vmatpush2.bf16.msra.mxu0 %v2425
      %2479 = vmatprep.subr.bf16.mxu0 0
      %2480 = vmatpush2.bf16.msra.mxu0 %v2424
      %2481 = vmatprep.subr.bf16.mxu0 0
      %2482 = vmatpush2.bf16.msra.mxu0 %v2423
      %2483 = vmatprep.subr.bf16.mxu0 0
      %2484 = vmatpush2.bf16.msra.mxu0 %v2422
      %2485 = vmatprep.mubr.bf16.mxu0 %v2338
      %2486 = vmatmul.mubr.bf16.gmra.mxu0 %v2337
      %v2487 = vpop.f32.mrf.mxu0
      %v2488 = vadd.f32 0.0, %v2487
      %v2489 = vpop.f32.mrf.mxu0
      %v2490 = vpop.f32.mrf.mxu0
      %v2491 = vadd.f32 0.0, %v2490
      %v2492 = vpop.f32.mrf.mxu0
      %2493 = vdwg.mxu0
      %2494 = vmatprep.subr.bf16.mxu0 0
      %2495 = vmatpush1.bf16.msra.mxu0 0
      %2496 = vmatprep.subr.bf16.mxu0 0
      %2497 = vmatpush1.bf16.msra.mxu0 0
      %2498 = vmatprep.subr.bf16.mxu0 0
      %2499 = vmatpush1.bf16.msra.mxu0 0
      %2500 = vmatprep.subr.bf16.mxu0 0
      %2501 = vmatpush1.bf16.msra.mxu0 0
      %2502 = vmatprep.subr.bf16.mxu0 0
      %2503 = vmatpush1.bf16.msra.mxu0 0
      %2504 = vmatprep.subr.bf16.mxu0 0
      %2505 = vmatpush1.bf16.msra.mxu0 0
      %2506 = vmatprep.subr.bf16.mxu0 0
      %2507 = vmatpush1.bf16.msra.mxu0 %v2431
      %2508 = vmatprep.subr.bf16.mxu0 0
      %2509 = vmatpush1.bf16.msra.mxu0 %v2430
      %2510 = vmatprep.subr.bf16.mxu0 0
      %2511 = vmatpush2.bf16.msra.mxu0 0
      %2512 = vmatprep.subr.bf16.mxu0 0
      %2513 = vmatpush2.bf16.msra.mxu0 0
      %2514 = vmatprep.subr.bf16.mxu0 0
      %2515 = vmatpush2.bf16.msra.mxu0 0
      %2516 = vmatprep.subr.bf16.mxu0 0
      %2517 = vmatpush2.bf16.msra.mxu0 0
      %2518 = vmatprep.subr.bf16.mxu0 0
      %2519 = vmatpush2.bf16.msra.mxu0 0
      %2520 = vmatprep.subr.bf16.mxu0 0
      %2521 = vmatpush2.bf16.msra.mxu0 0
      %2522 = vmatprep.subr.bf16.mxu0 0
      %2523 = vmatpush2.bf16.msra.mxu0 0
      %2524 = vmatprep.subr.bf16.mxu0 0
      %2525 = vmatpush2.bf16.msra.mxu0 0
      %2526 = vmatprep.mubr.bf16.mxu0 0
      %2527 = vmatmul.mubr.bf16.gmra.mxu0 %v2451
      %v2528 = vpop.f32.mrf.mxu0
      %v2529 = vadd.f32 %v2488, %v2528
      %v2530 = vpop.f32.mrf.mxu0
      %v2531 = vpop.f32.mrf.mxu0
      %v2532 = vadd.f32 %v2491, %v2531
      %v2533 = vpop.f32.mrf.mxu0
      %2534 = vdwg.mxu0
      %v2535 = vadd.f32 %v2213, %v2529
      %v2536 = vadd.f32 %v2213, %v2532
      %v2539 = vcombine.low %v2199, %v2207
      %v2541 = vunpack.c.l.s4 1983009808
      %v2542 = vunpack.c.0.s8 %v2541
      %v2543 = vlaneseq
      %v2544 = vshrl.u32 %v2543, 7
      %v2545 = vsub.s32 %v2542, %v2544
      %v2546 = vrot.slane %v2539, %v2545
      %v2548 = vunpack.c.l.s4 1983009808
      %v2549 = vunpack.c.0.s8 %v2548
      %v2550 = vlaneseq
      %v2551 = vshrl.u32 %v2550, 7
      %v2552 = vsub.s32 %v2549, %v2551
      %v2553 = vrot.slane %v2191, %v2552
      %v2554 = vcombine.low %v2546, %v2553
      %s2555 = scalar_lea.vmem %s5, 144
      %v2556 = vld [vmem:[%s2555] sm:$0xf]
      %v2557 = vld [vmem:[%s2555 + $0x4] sm:$0xf]
      %v2558 = vld [vmem:[%s2555 + $0x8] sm:$0xf]
      %v2559 = vld [vmem:[%s2555 + $0xc] sm:$0xf]
      %v2560 = vld [vmem:[%s2555 + $0x10] sm:$0xf]
      %v2561 = vld [vmem:[%s2555 + $0x14] sm:$0xf]
      %v2562 = vld [vmem:[%s2555 + $0x18] sm:$0xf]
      %v2563 = vld [vmem:[%s2555 + $0x1c] sm:$0xf]
      %v2564 = vld [vmem:[%s2555 + $0x20] sm:$0xf]
      %v2565 = vld [vmem:[%s2555 + $0x24] sm:$0xf]
      %v2566 = vld [vmem:[%s2555 + $0x28] sm:$0xf]
      %v2567 = vld [vmem:[%s2555 + $0x2c] sm:$0xf]
      %v2568 = vld [vmem:[%s2555 + $0x30] sm:$0xf]
      %v2569 = vld [vmem:[%s2555 + $0x34] sm:$0xf]
      %v2570 = vld [vmem:[%s2555 + $0x38] sm:$0xf]
      %v2571 = vld [vmem:[%s2555 + $0x3c] sm:$0xf]
      %v2572 = vld [vmem:[%s2555 + $0x40] sm:$0xf]
      %v2573 = vld [vmem:[%s2555 + $0x44] sm:$0xf]
      %v2574 = vld [vmem:[%s2555 + $0x48] sm:$0xf]
      %v2575 = vld [vmem:[%s2555 + $0x4c] sm:$0xf]
      %v2576 = vld [vmem:[%s2555 + $0x50] sm:$0xf]
      %v2577 = vld [vmem:[%s2555 + $0x54] sm:$0xf]
      %v2578 = vld [vmem:[%s2555 + $0x58] sm:$0xf]
      %v2579 = vld [vmem:[%s2555 + $0x5c] sm:$0xf]
      %v2580 = vld [vmem:[%s2555 + $0x60] sm:$0xf]
      %v2581 = vld [vmem:[%s2555 + $0x64] sm:$0xf]
      %v2582 = vld [vmem:[%s2555 + $0x68] sm:$0xf]
      %v2583 = vld [vmem:[%s2555 + $0x6c] sm:$0xf]
      %v2584 = vld [vmem:[%s2555 + $0x70] sm:$0xf]
      %v2585 = vld [vmem:[%s2555 + $0x74] sm:$0xf]
      %v2586 = vld [vmem:[%s2555 + $0x78] sm:$0xf]
      %v2587 = vld [vmem:[%s2555 + $0x7c] sm:$0xf]
      %v2588 = vld [vmem:[%s2555 + $0x80] sm:$0xf]
      %v2589 = vld [vmem:[%s2555 + $0x84] sm:$0xf]
      %v2590 = vld [vmem:[%s2555 + $0x88] sm:$0xf]
      %v2591 = vld [vmem:[%s2555 + $0x8c] sm:$0xf]
      %v2592 = vcombine.low %v2236, %v2252
      %v2593 = vcombine.high %v2236, %v2252
      %v2594 = vcombine.low %v2268, %v2554
      %v2595 = vcombine.high %v2268, %v2554
      %v2597 = vunpack.c.l.s4 1983009808
      %v2598 = vunpack.c.0.s8 %v2597
      %v2599 = vlaneseq
      %v2600 = vshrl.u32 %v2599, 7
      %v2601 = vsub.s32 %v2598, %v2600
      %v2602 = vrot.slane %v2592, %v2601
      %v2604 = vunpack.c.l.s4 1983009808
      %v2605 = vunpack.c.0.s8 %v2604
      %v2606 = vlaneseq
      %v2607 = vshrl.u32 %v2606, 7
      %v2608 = vsub.s32 %v2605, %v2607
      %v2609 = vrot.slane %v2593, %v2608
      %v2611 = vunpack.c.l.s4 1983009808
      %v2612 = vunpack.c.0.s8 %v2611
      %v2613 = vlaneseq
      %v2614 = vshrl.u32 %v2613, 7
      %v2615 = vsub.s32 %v2612, %v2614
      %v2616 = vrot.slane %v2594, %v2615
      %v2618 = vunpack.c.l.s4 1983009808
      %v2619 = vunpack.c.0.s8 %v2618
      %v2620 = vlaneseq
      %v2621 = vshrl.u32 %v2620, 7
      %v2622 = vsub.s32 %v2619, %v2621
      %v2623 = vrot.slane %v2595, %v2622
      %v2624 = vcombine.low %v2602, %v2616
      %v2625 = vcombine.high %v2602, %v2616
      %v2626 = vcombine.low %v2609, %v2623
      %v2665 = vunpack.c.l.b16 %v2556
      %v2666 = vunpack.c.l.b16 %v2557
      %v2667 = vunpack.c.l.b16 %v2558
      %v2668 = vunpack.c.l.b16 %v2559
      %v2669 = vunpack.c.l.b16 %v2560
      %v2670 = vunpack.c.l.b16 %v2561
      %v2671 = vunpack.c.l.b16 %v2562
      %v2672 = vunpack.c.l.b16 %v2563
      %v2673 = vunpack.c.l.b16 %v2564
      %v2674 = vunpack.c.l.b16 %v2565
      %v2675 = vunpack.c.l.b16 %v2566
      %v2676 = vunpack.c.l.b16 %v2567
      %v2677 = vunpack.c.l.b16 %v2568
      %v2678 = vunpack.c.l.b16 %v2569
      %v2679 = vunpack.c.l.b16 %v2570
      %v2680 = vunpack.c.l.b16 %v2571
      %v2681 = vunpack.c.l.b16 %v2572
      %v2682 = vunpack.c.l.b16 %v2573
      %v2683 = vunpack.c.l.b16 %v2574
      %v2684 = vunpack.c.l.b16 %v2575
      %v2685 = vunpack.c.l.b16 %v2576
      %v2686 = vunpack.c.l.b16 %v2577
      %v2687 = vunpack.c.l.b16 %v2578
      %v2688 = vunpack.c.l.b16 %v2579
      %v2689 = vunpack.c.l.b16 %v2580
      %v2690 = vunpack.c.l.b16 %v2581
      %v2691 = vunpack.c.l.b16 %v2582
      %v2692 = vunpack.c.l.b16 %v2583
      %v2693 = vunpack.c.l.b16 %v2584
      %v2694 = vunpack.c.l.b16 %v2585
      %v2695 = vunpack.c.l.b16 %v2586
      %v2696 = vunpack.c.l.b16 %v2587
      %v2697 = vunpack.c.l.b16 %v2588
      %v2698 = vunpack.c.l.b16 %v2589
      %v2699 = vunpack.c.l.b16 %v2590
      %v2700 = vunpack.c.l.b16 %v2591
      %v2701 = vpack.c.b16 %v2666, %v2665
      %v2702 = vpack.c.b16 %v2668, %v2667
      %v2703 = vpack.c.b16 %v2670, %v2669
      %v2704 = vpack.c.b16 %v2672, %v2671
      %v2705 = vpack.c.b16 %v2674, %v2673
      %v2706 = vpack.c.b16 %v2676, %v2675
      %v2707 = vpack.c.b16 %v2678, %v2677
      %v2708 = vpack.c.b16 %v2680, %v2679
      %v2709 = vpack.c.b16 %v2682, %v2681
      %v2710 = vpack.c.b16 %v2684, %v2683
      %v2711 = vpack.c.b16 %v2686, %v2685
      %v2712 = vpack.c.b16 %v2688, %v2687
      %v2713 = vpack.c.b16 %v2690, %v2689
      %v2714 = vpack.c.b16 %v2692, %v2691
      %v2715 = vpack.c.b16 %v2694, %v2693
      %v2716 = vpack.c.b16 %v2696, %v2695
      %v2717 = vpack.c.b16 %v2698, %v2697
      %v2718 = vpack.c.b16 %v2700, %v2699
      %v2738 = vsel %vm1454, %v2626, 0
      %2740 = vmatprep.subr.bf16.mxu0 0
      %2741 = vmatpush1.bf16.msra.mxu0 %v2708
      %2742 = vmatprep.subr.bf16.mxu0 0
      %2743 = vmatpush1.bf16.msra.mxu0 %v2707
      %2744 = vmatprep.subr.bf16.mxu0 0
      %2745 = vmatpush1.bf16.msra.mxu0 %v2706
      %2746 = vmatprep.subr.bf16.mxu0 0
      %2747 = vmatpush1.bf16.msra.mxu0 %v2705
      %2748 = vmatprep.subr.bf16.mxu0 0
      %2749 = vmatpush1.bf16.msra.mxu0 %v2704
      %2750 = vmatprep.subr.bf16.mxu0 0
      %2751 = vmatpush1.bf16.msra.mxu0 %v2703
      %2752 = vmatprep.subr.bf16.mxu0 0
      %2753 = vmatpush1.bf16.msra.mxu0 %v2702
      %2754 = vmatprep.subr.bf16.mxu0 0
      %2755 = vmatpush1.bf16.msra.mxu0 %v2701
      %2756 = vmatprep.subr.bf16.mxu0 0
      %2757 = vmatpush2.bf16.msra.mxu0 %v2716
      %2758 = vmatprep.subr.bf16.mxu0 0
      %2759 = vmatpush2.bf16.msra.mxu0 %v2715
      %2760 = vmatprep.subr.bf16.mxu0 0
      %2761 = vmatpush2.bf16.msra.mxu0 %v2714
      %2762 = vmatprep.subr.bf16.mxu0 0
      %2763 = vmatpush2.bf16.msra.mxu0 %v2713
      %2764 = vmatprep.subr.bf16.mxu0 0
      %2765 = vmatpush2.bf16.msra.mxu0 %v2712
      %2766 = vmatprep.subr.bf16.mxu0 0
      %2767 = vmatpush2.bf16.msra.mxu0 %v2711
      %2768 = vmatprep.subr.bf16.mxu0 0
      %2769 = vmatpush2.bf16.msra.mxu0 %v2710
      %2770 = vmatprep.subr.bf16.mxu0 0
      %2771 = vmatpush2.bf16.msra.mxu0 %v2709
      %2772 = vmatprep.mubr.bf16.mxu0 %v2625
      %2773 = vmatmul.mubr.bf16.gmra.mxu0 %v2624
      %v2774 = vpop.f32.mrf.mxu0
      %v2775 = vadd.f32 0.0, %v2774
      %v2776 = vpop.f32.mrf.mxu0
      %v2777 = vpop.f32.mrf.mxu0
      %v2778 = vadd.f32 0.0, %v2777
      %v2779 = vpop.f32.mrf.mxu0
      %2780 = vdwg.mxu0
      %2781 = vmatprep.subr.bf16.mxu0 0
      %2782 = vmatpush1.bf16.msra.mxu0 0
      %2783 = vmatprep.subr.bf16.mxu0 0
      %2784 = vmatpush1.bf16.msra.mxu0 0
      %2785 = vmatprep.subr.bf16.mxu0 0
      %2786 = vmatpush1.bf16.msra.mxu0 0
      %2787 = vmatprep.subr.bf16.mxu0 0
      %2788 = vmatpush1.bf16.msra.mxu0 0
      %2789 = vmatprep.subr.bf16.mxu0 0
      %2790 = vmatpush1.bf16.msra.mxu0 0
      %2791 = vmatprep.subr.bf16.mxu0 0
      %2792 = vmatpush1.bf16.msra.mxu0 0
      %2793 = vmatprep.subr.bf16.mxu0 0
      %2794 = vmatpush1.bf16.msra.mxu0 %v2718
      %2795 = vmatprep.subr.bf16.mxu0 0
      %2796 = vmatpush1.bf16.msra.mxu0 %v2717
      %2797 = vmatprep.subr.bf16.mxu0 0
      %2798 = vmatpush2.bf16.msra.mxu0 0
      %2799 = vmatprep.subr.bf16.mxu0 0
      %2800 = vmatpush2.bf16.msra.mxu0 0
      %2801 = vmatprep.subr.bf16.mxu0 0
      %2802 = vmatpush2.bf16.msra.mxu0 0
      %2803 = vmatprep.subr.bf16.mxu0 0
      %2804 = vmatpush2.bf16.msra.mxu0 0
      %2805 = vmatprep.subr.bf16.mxu0 0
      %2806 = vmatpush2.bf16.msra.mxu0 0
      %2807 = vmatprep.subr.bf16.mxu0 0
      %2808 = vmatpush2.bf16.msra.mxu0 0
      %2809 = vmatprep.subr.bf16.mxu0 0
      %2810 = vmatpush2.bf16.msra.mxu0 0
      %2811 = vmatprep.subr.bf16.mxu0 0
      %2812 = vmatpush2.bf16.msra.mxu0 0
      %2813 = vmatprep.mubr.bf16.mxu0 0
      %2814 = vmatmul.mubr.bf16.gmra.mxu0 %v2738
      %v2815 = vpop.f32.mrf.mxu0
      %v2816 = vadd.f32 %v2775, %v2815
      %v2817 = vpop.f32.mrf.mxu0
      %v2818 = vpop.f32.mrf.mxu0
      %v2819 = vadd.f32 %v2778, %v2818
      %v2820 = vpop.f32.mrf.mxu0
      %2821 = vdwg.mxu0
      %v2822 = vadd.f32 %v2535, %v2816
      %v2823 = vadd.f32 %v2536, %v2819
      %s2824 = scalar_lea.vmem %s5, 288
      %v2825 = vld [vmem:[%s2824] sm:$0xf]
      %v2826 = vld [vmem:[%s2824 + $0x4] sm:$0xf]
      %v2827 = vld [vmem:[%s2824 + $0x8] sm:$0xf]
      %v2828 = vld [vmem:[%s2824 + $0xc] sm:$0xf]
      %v2829 = vld [vmem:[%s2824 + $0x10] sm:$0xf]
      %v2830 = vld [vmem:[%s2824 + $0x14] sm:$0xf]
      %v2831 = vld [vmem:[%s2824 + $0x18] sm:$0xf]
      %v2832 = vld [vmem:[%s2824 + $0x1c] sm:$0xf]
      %v2833 = vld [vmem:[%s2824 + $0x20] sm:$0xf]
      %v2834 = vld [vmem:[%s2824 + $0x24] sm:$0xf]
      %v2835 = vld [vmem:[%s2824 + $0x28] sm:$0xf]
      %v2836 = vld [vmem:[%s2824 + $0x2c] sm:$0xf]
      %v2837 = vld [vmem:[%s2824 + $0x30] sm:$0xf]
      %v2838 = vld [vmem:[%s2824 + $0x34] sm:$0xf]
      %v2839 = vld [vmem:[%s2824 + $0x38] sm:$0xf]
      %v2840 = vld [vmem:[%s2824 + $0x3c] sm:$0xf]
      %v2841 = vld [vmem:[%s2824 + $0x40] sm:$0xf]
      %v2842 = vld [vmem:[%s2824 + $0x44] sm:$0xf]
      %v2843 = vld [vmem:[%s2824 + $0x48] sm:$0xf]
      %v2844 = vld [vmem:[%s2824 + $0x4c] sm:$0xf]
      %v2845 = vld [vmem:[%s2824 + $0x50] sm:$0xf]
      %v2846 = vld [vmem:[%s2824 + $0x54] sm:$0xf]
      %v2847 = vld [vmem:[%s2824 + $0x58] sm:$0xf]
      %v2848 = vld [vmem:[%s2824 + $0x5c] sm:$0xf]
      %v2849 = vld [vmem:[%s2824 + $0x60] sm:$0xf]
      %v2850 = vld [vmem:[%s2824 + $0x64] sm:$0xf]
      %v2851 = vld [vmem:[%s2824 + $0x68] sm:$0xf]
      %v2852 = vld [vmem:[%s2824 + $0x6c] sm:$0xf]
      %v2853 = vld [vmem:[%s2824 + $0x70] sm:$0xf]
      %v2854 = vld [vmem:[%s2824 + $0x74] sm:$0xf]
      %v2855 = vld [vmem:[%s2824 + $0x78] sm:$0xf]
      %v2856 = vld [vmem:[%s2824 + $0x7c] sm:$0xf]
      %v2857 = vld [vmem:[%s2824 + $0x80] sm:$0xf]
      %v2858 = vld [vmem:[%s2824 + $0x84] sm:$0xf]
      %v2859 = vld [vmem:[%s2824 + $0x88] sm:$0xf]
      %v2860 = vld [vmem:[%s2824 + $0x8c] sm:$0xf]
      %v2861 = vcombine.low %v2554, %v1224
      %v2862 = vcombine.high %v2554, %v1224
      %v2864 = vunpack.c.l.s4 1983009808
      %v2865 = vunpack.c.0.s8 %v2864
      %v2866 = vlaneseq
      %v2867 = vshrl.u32 %v2866, 7
      %v2868 = vsub.s32 %v2865, %v2867
      %v2869 = vrot.slane %v2861, %v2868
      %v2871 = vunpack.c.l.s4 1983009808
      %v2872 = vunpack.c.0.s8 %v2871
      %v2873 = vlaneseq
      %v2874 = vshrl.u32 %v2873, 7
      %v2875 = vsub.s32 %v2872, %v2874
      %v2876 = vrot.slane %v2862, %v2875
      %v2877 = vcombine.low %v2329, %v2869
      %v2878 = vcombine.high %v2329, %v2869
      %v2879 = vcombine.low %v2336, %v2876
      %v2918 = vunpack.c.l.b16 %v2825
      %v2919 = vunpack.c.l.b16 %v2826
      %v2920 = vunpack.c.l.b16 %v2827
      %v2921 = vunpack.c.l.b16 %v2828
      %v2922 = vunpack.c.l.b16 %v2829
      %v2923 = vunpack.c.l.b16 %v2830
      %v2924 = vunpack.c.l.b16 %v2831
      %v2925 = vunpack.c.l.b16 %v2832
      %v2926 = vunpack.c.l.b16 %v2833
      %v2927 = vunpack.c.l.b16 %v2834
      %v2928 = vunpack.c.l.b16 %v2835
      %v2929 = vunpack.c.l.b16 %v2836
      %v2930 = vunpack.c.l.b16 %v2837
      %v2931 = vunpack.c.l.b16 %v2838
      %v2932 = vunpack.c.l.b16 %v2839
      %v2933 = vunpack.c.l.b16 %v2840
      %v2934 = vunpack.c.l.b16 %v2841
      %v2935 = vunpack.c.l.b16 %v2842
      %v2936 = vunpack.c.l.b16 %v2843
      %v2937 = vunpack.c.l.b16 %v2844
      %v2938 = vunpack.c.l.b16 %v2845
      %v2939 = vunpack.c.l.b16 %v2846
      %v2940 = vunpack.c.l.b16 %v2847
      %v2941 = vunpack.c.l.b16 %v2848
      %v2942 = vunpack.c.l.b16 %v2849
      %v2943 = vunpack.c.l.b16 %v2850
      %v2944 = vunpack.c.l.b16 %v2851
      %v2945 = vunpack.c.l.b16 %v2852
      %v2946 = vunpack.c.l.b16 %v2853
      %v2947 = vunpack.c.l.b16 %v2854
      %v2948 = vunpack.c.l.b16 %v2855
      %v2949 = vunpack.c.l.b16 %v2856
      %v2950 = vunpack.c.l.b16 %v2857
      %v2951 = vunpack.c.l.b16 %v2858
      %v2952 = vunpack.c.l.b16 %v2859
      %v2953 = vunpack.c.l.b16 %v2860
      %v2954 = vpack.c.b16 %v2919, %v2918
      %v2955 = vpack.c.b16 %v2921, %v2920
      %v2956 = vpack.c.b16 %v2923, %v2922
      %v2957 = vpack.c.b16 %v2925, %v2924
      %v2958 = vpack.c.b16 %v2927, %v2926
      %v2959 = vpack.c.b16 %v2929, %v2928
      %v2960 = vpack.c.b16 %v2931, %v2930
      %v2961 = vpack.c.b16 %v2933, %v2932
      %v2962 = vpack.c.b16 %v2935, %v2934
      %v2963 = vpack.c.b16 %v2937, %v2936
      %v2964 = vpack.c.b16 %v2939, %v2938
      %v2965 = vpack.c.b16 %v2941, %v2940
      %v2966 = vpack.c.b16 %v2943, %v2942
      %v2967 = vpack.c.b16 %v2945, %v2944
      %v2968 = vpack.c.b16 %v2947, %v2946
      %v2969 = vpack.c.b16 %v2949, %v2948
      %v2970 = vpack.c.b16 %v2951, %v2950
      %v2971 = vpack.c.b16 %v2953, %v2952
      %v2991 = vsel %vm1454, %v2879, 0
      %2993 = vmatprep.subr.bf16.mxu0 0
      %2994 = vmatpush1.bf16.msra.mxu0 %v2961
      %2995 = vmatprep.subr.bf16.mxu0 0
      %2996 = vmatpush1.bf16.msra.mxu0 %v2960
      %2997 = vmatprep.subr.bf16.mxu0 0
      %2998 = vmatpush1.bf16.msra.mxu0 %v2959
      %2999 = vmatprep.subr.bf16.mxu0 0
      %3000 = vmatpush1.bf16.msra.mxu0 %v2958
      %3001 = vmatprep.subr.bf16.mxu0 0
      %3002 = vmatpush1.bf16.msra.mxu0 %v2957
      %3003 = vmatprep.subr.bf16.mxu0 0
      %3004 = vmatpush1.bf16.msra.mxu0 %v2956
      %3005 = vmatprep.subr.bf16.mxu0 0
      %3006 = vmatpush1.bf16.msra.mxu0 %v2955
      %3007 = vmatprep.subr.bf16.mxu0 0
      %3008 = vmatpush1.bf16.msra.mxu0 %v2954
      %3009 = vmatprep.subr.bf16.mxu0 0
      %3010 = vmatpush2.bf16.msra.mxu0 %v2969
      %3011 = vmatprep.subr.bf16.mxu0 0
      %3012 = vmatpush2.bf16.msra.mxu0 %v2968
      %3013 = vmatprep.subr.bf16.mxu0 0
      %3014 = vmatpush2.bf16.msra.mxu0 %v2967
      %3015 = vmatprep.subr.bf16.mxu0 0
      %3016 = vmatpush2.bf16.msra.mxu0 %v2966
      %3017 = vmatprep.subr.bf16.mxu0 0
      %3018 = vmatpush2.bf16.msra.mxu0 %v2965
      %3019 = vmatprep.subr.bf16.mxu0 0
      %3020 = vmatpush2.bf16.msra.mxu0 %v2964
      %3021 = vmatprep.subr.bf16.mxu0 0
      %3022 = vmatpush2.bf16.msra.mxu0 %v2963
      %3023 = vmatprep.subr.bf16.mxu0 0
      %3024 = vmatpush2.bf16.msra.mxu0 %v2962
      %3025 = vmatprep.mubr.bf16.mxu0 %v2878
      %3026 = vmatmul.mubr.bf16.gmra.mxu0 %v2877
      %v3027 = vpop.f32.mrf.mxu0
      %v3028 = vadd.f32 0.0, %v3027
      %v3029 = vpop.f32.mrf.mxu0
      %v3030 = vpop.f32.mrf.mxu0
      %v3031 = vadd.f32 0.0, %v3030
      %v3032 = vpop.f32.mrf.mxu0
      %3033 = vdwg.mxu0
      %3034 = vmatprep.subr.bf16.mxu0 0
      %3035 = vmatpush1.bf16.msra.mxu0 0
      %3036 = vmatprep.subr.bf16.mxu0 0
      %3037 = vmatpush1.bf16.msra.mxu0 0
      %3038 = vmatprep.subr.bf16.mxu0 0
      %3039 = vmatpush1.bf16.msra.mxu0 0
      %3040 = vmatprep.subr.bf16.mxu0 0
      %3041 = vmatpush1.bf16.msra.mxu0 0
      %3042 = vmatprep.subr.bf16.mxu0 0
      %3043 = vmatpush1.bf16.msra.mxu0 0
      %3044 = vmatprep.subr.bf16.mxu0 0
      %3045 = vmatpush1.bf16.msra.mxu0 0
      %3046 = vmatprep.subr.bf16.mxu0 0
      %3047 = vmatpush1.bf16.msra.mxu0 %v2971
      %3048 = vmatprep.subr.bf16.mxu0 0
      %3049 = vmatpush1.bf16.msra.mxu0 %v2970
      %3050 = vmatprep.subr.bf16.mxu0 0
      %3051 = vmatpush2.bf16.msra.mxu0 0
      %3052 = vmatprep.subr.bf16.mxu0 0
      %3053 = vmatpush2.bf16.msra.mxu0 0
      %3054 = vmatprep.subr.bf16.mxu0 0
      %3055 = vmatpush2.bf16.msra.mxu0 0
      %3056 = vmatprep.subr.bf16.mxu0 0
      %3057 = vmatpush2.bf16.msra.mxu0 0
      %3058 = vmatprep.subr.bf16.mxu0 0
      %3059 = vmatpush2.bf16.msra.mxu0 0
      %3060 = vmatprep.subr.bf16.mxu0 0
      %3061 = vmatpush2.bf16.msra.mxu0 0
      %3062 = vmatprep.subr.bf16.mxu0 0
      %3063 = vmatpush2.bf16.msra.mxu0 0
      %3064 = vmatprep.subr.bf16.mxu0 0
      %3065 = vmatpush2.bf16.msra.mxu0 0
      %3066 = vmatprep.mubr.bf16.mxu0 0
      %3067 = vmatmul.mubr.bf16.gmra.mxu0 %v2991
      %v3068 = vpop.f32.mrf.mxu0
      %v3069 = vadd.f32 %v3028, %v3068
      %v3070 = vpop.f32.mrf.mxu0
      %v3071 = vpop.f32.mrf.mxu0
      %v3072 = vadd.f32 %v3031, %v3071
      %v3073 = vpop.f32.mrf.mxu0
      %3074 = vdwg.mxu0
      %v3075 = vadd.f32 %v2822, %v3069
      %v3076 = vadd.f32 %v2823, %v3072
      %v3079 = vcombine.high %v3075, %v3075
      %v3080 = vcombine.high %v3076, %v3076
      %v3083 = vadd.f32 %v3075, %v1032
      %v3084 = vadd.f32 %v3079, %v1036
      %v3085 = vadd.f32 %v3076, %v1033
      %v3086 = vadd.f32 %v3080, %v1037
      %v3087 = vpack.c.bf16 %v3083, %v3083
      %v3088 = vpack.c.bf16 %v3084, %v3084
      %v3089 = vpack.c.bf16 %v3085, %v3085
      %v3090 = vpack.c.bf16 %v3086, %v3086
      %vm3091 = vcmask 779264
      %3092 = vst.msk [vmem:[%s278] sm:$0x3] %vm3091, %v3087
      %3093 = vst.msk [vmem:[%s278 + $0x2] sm:$0x3] %vm3091, %v3088
      %3094 = vst.msk [vmem:[%s278 + $0x4] sm:$0x3] %vm3091, %v3089
      %3095 = vst.msk [vmem:[%s278 + $0x6] sm:$0x3] %vm3091, %v3090
      %p3096 = scmp.lt.s32.totalorder %s18, 1
      %s3097 = scalar_select %p3096, %s18, 1
      %s3098 = smul.addr %s3097, 4
      %s3099 = smul.addr %s3098, 2
      %s3100 = scalar_lea.vmem %s7, %s3099
      // Predicated region
      $region49: #{feature_extractor.5} parent=47 // pred_check
        %p3101 = pneg %p188
      $region50: #{feature_extractor.5} parent=47 // pred_check_branch
        %3103 = sbr.rel (%p3101) target = $region52
      $region51: #{feature_extractor.5} parent=47 // pred_region
        _
      $region52: #{feature_extractor.5} parent=47 // pred_fallthru
        _
    $region48: #{feature_extractor.5} parent=5 // pred_fallthru
      _
    %p3104 = scmp.le.s32.totalorder 2, %s13
    // Predicated region
    $region53: #{feature_extractor.5} parent=5 // pred_check
      %p3105 = pneg %p3104
    $region54: #{feature_extractor.5} parent=5 // pred_check_branch
      %3107 = sbr.rel (%p3105) target = $region56
    $region55: #{feature_extractor.5} parent=5 // pred_region
      %s3108 = ssub.s32 %s13, 2
      // Predicated region
      $region57: #{feature_extractor.5} parent=55 // pred_check
        %p3109 = pneg %p194
      $region58: #{feature_extractor.5} parent=55 // pred_check_branch
        %3111 = sbr.rel (%p3109) target = $region60
      $region59: #{feature_extractor.5} parent=55 // pred_region
        %p3112 = scmp.lt.s32.totalorder %s19, 1
        %s3113 = scalar_select %p3112, %s19, 1
        %s3114 = smul.addr %s3113, 4
        %s3115 = smul.addr %s3114, 2
        %s3116 = scalar_lea.vmem %s7, %s3115
      $region60: #{feature_extractor.5} parent=55 // pred_fallthru
        _
    $region56: #{feature_extractor.5} parent=5 // pred_fallthru
      _
  $region6: #{feature_extractor.5} parent=0 // loop_footer
    %s17 = sadd.s32 1, %s13
  $region7: #{feature_extractor.5} parent=0 // loop_footer_branch
    %12 = sbr.rel target = $region3
  $region8: #{feature_extractor.5} parent=0 // loop_exit
    _

</llo_original>
